<compile_context>
chip_gen: v5e
topology: v5e:2x2
jax: 0.10.0
libtpu: 0.0.40
codegen_flags: <defaults>
</compile_context>

<pallas_src>
import functools

import jax
import jax.numpy as jnp
from jax.experimental import pallas as pl
from jax.experimental.pallas import tpu as pltpu

BN_EPS = 1e-5

_COMPILER_PARAMS = pltpu.CompilerParams(vmem_limit_bytes=32 * 1024 * 1024)


# ----------------------------- Pallas kernels --------------------------------

def _conv_block_kernel(mp_pad, p_ref, w_ref, shift_ref, o_ref):
    """conv3x3 (+ folded BN scale) + 2x2 max-pool + bias/BN shift + ReLU.

    p_ref:     (4*mp_pad, 9*Cin) bf16 quadrant-stacked im2col patches
    w_ref:     (9*Cin, Cout)     bf16, BN scale pre-folded
    shift_ref: (1, Cout)         f32 folded conv-bias + BN shift
    o_ref:     (mp_pad, Cout)    bf16 pooled activations
    """
    y = jnp.dot(p_ref[...], w_ref[...], preferred_element_type=jnp.float32)
    # 2x2 max-pool == max over the 4 quadrant row chunks (sublane-aligned).
    m = jnp.maximum(jnp.maximum(y[0 * mp_pad:1 * mp_pad], y[1 * mp_pad:2 * mp_pad]),
                    jnp.maximum(y[2 * mp_pad:3 * mp_pad], y[3 * mp_pad:4 * mp_pad]))
    # shift is per-channel, so it commutes with the max; ReLU is monotone.
    o_ref[...] = jnp.maximum(m + shift_ref[...], 0.0).astype(o_ref.dtype)


def _conv_block_fc_kernel(mp, n_samples, p_ref, w_ref, shift_ref,
                          wfc_ref, bfc_ref, o_ref):
    """Last conv stage with the FC head fused as an f32 epilogue.

    Patch rows (within each quadrant chunk) are ordered (ph, pw, n), so each
    spatial position's samples form a contiguous row chunk of `pooled`.
    """
    y = jnp.dot(p_ref[...], w_ref[...], preferred_element_type=jnp.float32)
    m = jnp.maximum(jnp.maximum(y[0 * mp:1 * mp], y[1 * mp:2 * mp]),
                    jnp.maximum(y[2 * mp:3 * mp], y[3 * mp:4 * mp]))
    pooled = jnp.maximum(m + shift_ref[...], 0.0)       # (mp, Cout) f32
    cout = pooled.shape[1]
    wfc = wfc_ref[...]                                   # (n_spatial*Cout, out_dim) f32
    n_spatial = mp // n_samples
    acc = bfc_ref[...]                                   # (1, out_dim), broadcasts
    for j in range(n_spatial):                           # tiny static loop (4 iters)
        acc = acc + jnp.dot(pooled[j * n_samples:(j + 1) * n_samples, :],
                            wfc[j * cout:(j + 1) * cout, :],
                            preferred_element_type=jnp.float32)
    o_ref[...] = acc                                     # single (N, out_dim) store


# ----------------------------- wrapper-side im2col ----------------------------

def _pool_quadrant_patches(x, *, sample_major=True, k=3):
    """Quadrant-grouped im2col for valid conv3x3 followed by 2x2/2 max-pool.

    x: (N, H, W, C).  Returns (patches (4*Mp_pad, k*k*C) in x.dtype,
    (N, PH, PW, Mp, Mp_pad)).  Quadrant q=(qi,qj)'s row block contains the
    conv patch at output position (2*ph+qi, 2*pw+qj); feature order is
    (di, dj, c), matching the reshaped weight layout.  Row order within a
    quadrant is (n, ph, pw) if sample_major else (ph, pw, n).
    """
    N, H, W, C = x.shape
    OH, OW = H - k + 1, W - k + 1
    PH, PW = OH // 2, OW // 2                            # PyTorch floor-mode pooling
    taps = [x[:, di:di + OH, dj:dj + OW, :] for di in range(k) for dj in range(k)]
    t = jnp.stack(taps, axis=3).reshape(N, OH, OW, k * k * C)
    quads = []
    for qi in range(2):
        for qj in range(2):
            q = t[:, qi:qi + 2 * PH:2, qj:qj + 2 * PW:2, :]   # (N, PH, PW, k*k*C)
            if not sample_major:
                q = jnp.transpose(q, (1, 2, 0, 3))            # (PH, PW, N, k*k*C)
            quads.append(q.reshape(N * PH * PW, k * k * C))
    mp = N * PH * PW
    mp_pad = -(-mp // 8) * 8                             # sublane-aligned chunk size
    p = jnp.stack(quads, axis=0)                         # (4, mp, K)
    if mp_pad != mp:
        p = jnp.pad(p, ((0, 0), (0, mp_pad - mp), (0, 0)))
    return p.reshape(4 * mp_pad, k * k * C), (N, PH, PW, mp, mp_pad)


# ----------------------------- parameter setup --------------------------------

def init_convnet4_params(key, in_channels, filt_size, output_dim, conv_out_size):
    """Deterministic synthetic parameters mirroring ConvNet4.__init__ shapes."""
    params = {"conv": []}
    c_in = in_channels
    for _ in range(4):
        key, kw, kb, kg, kbt = jax.random.split(key, 5)
        w = 0.1 * jax.random.normal(kw, (filt_size, c_in, 3, 3), jnp.float32)  # torch OIHW
        b = 0.1 * jax.random.normal(kb, (filt_size,), jnp.float32)
        gamma = 1.0 + 0.1 * jax.random.normal(kg, (filt_size,), jnp.float32)
        beta = 0.1 * jax.random.normal(kbt, (filt_size,), jnp.float32)
        run_mean = jnp.zeros((filt_size,), jnp.float32)
        run_var = jnp.ones((filt_size,), jnp.float32)
        # Fold conv bias + (inference-mode) BN into per-channel scale/shift.
        scale = gamma / jnp.sqrt(run_var + BN_EPS)
        shift = (b - run_mean) * scale + beta
        # OIHW -> (kh, kw, Cin, Cout) -> (kh*kw*Cin, Cout); fold the scale into
        # the weight BEFORE the one-time bf16 cast so the kernel is add-only.
        w2d = jnp.transpose(w, (2, 3, 1, 0)).reshape(9 * c_in, filt_size)
        w2d = (w2d * scale[None, :]).astype(jnp.bfloat16)
        params["conv"].append((w2d, shift[None, :]))
        c_in = filt_size
    key, kw, kb = jax.random.split(key, 3)
    fc_w = 0.1 * jax.random.normal(kw, (output_dim, conv_out_size), jnp.float32)  # torch (out,in)
    fc_b = 0.1 * jax.random.normal(kb, (output_dim,), jnp.float32)
    # Permute FC rows from torch's NCHW flatten order (c, ph, pw) to the
    # kernel's spatial-major pooled order (ph, pw, c).
    n_spatial = conv_out_size // filt_size
    wfc = (fc_w.T.reshape(filt_size, n_spatial, output_dim)
                 .transpose(1, 0, 2)
                 .reshape(conv_out_size, output_dim))
    params["fc"] = (wfc, fc_b[None, :])
    return params


# ----------------------------- forward pass ------------------------------------

@jax.jit
def convnet4_forward(x_nchw, params):
    # NCHW -> NHWC; bf16 activations/weights feed the MXU, epilogues stay f32.
    x = jnp.transpose(x_nchw, (0, 2, 3, 1)).astype(jnp.bfloat16)

    conv_params = params["conv"]
    for (w2d, shift) in conv_params[:-1]:
        patches, (N, PH, PW, mp, mp_pad) = _pool_quadrant_patches(x)
        cout = w2d.shape[1]
        y = pl.pallas_call(
            functools.partial(_conv_block_kernel, mp_pad),
            out_shape=jax.ShapeDtypeStruct((mp_pad, cout), jnp.bfloat16),
            compiler_params=_COMPILER_PARAMS,
        )(patches, w2d, shift)
        if mp_pad != mp:
            y = y[:mp]
        x = y.reshape(N, PH, PW, cout)                   # row order (n, ph, pw) == NHWC

    # Last conv stage, with the FC head fused into the kernel epilogue.
    w2d, shift = conv_params[-1]
    patches, (N, PH, PW, mp, mp_pad) = _pool_quadrant_patches(x, sample_major=False)
    assert mp == mp_pad, "last-stage pooled rows expected sublane-aligned"
    wfc, bfc = params["fc"]
    out_dim = wfc.shape[1]
    return pl.pallas_call(
        functools.partial(_conv_block_fc_kernel, mp_pad, N),
        out_shape=jax.ShapeDtypeStruct((N, out_dim), jnp.float32),
        compiler_params=_COMPILER_PARAMS,
    )(patches, w2d, shift, wfc, bfc)


# ----------------------------- main ---------------------------------------------

if __name__ == "__main__":
    key = jax.random.PRNGKey(0)
    key, kx, kp = jax.random.split(key, 3)

    # input_shape = (3, 64, 64): smallest-ish spatial size that survives 4
    # conv+pool stages (64 -> 62 -> 31 -> 29 -> 14 -> 12 -> 6 -> 4 -> 2).
    N, C, H, W = 2, 3, 64, 64
    filt_size = 32
    output_dim = 10

    # conv_out_size as computed by get_size_of_conv_output: filt_size * 2 * 2
    conv_out_size = filt_size * 2 * 2

    x = jax.random.normal(kx, (N, C, H, W), jnp.float32)
    params = init_convnet4_params(kp, C, filt_size, output_dim, conv_out_size)

    out = convnet4_forward(x, params)
    jax.block_until_ready(out)
    assert out.shape == (N, output_dim), out.shape
    print("KERNEL_OK")
</pallas_src>

<mosaic_0001>
module attributes {stable_mosaic.version = 11 : i64} {
  func.func @_conv_block_kernel(%arg0: memref<7712x27xbf16, #tpu.memory_space<vmem>>, %arg1: memref<27x32xbf16, #tpu.memory_space<vmem>>, %arg2: memref<1x32xf32, #tpu.memory_space<vmem>>, %arg3: memref<1928x32xbf16, #tpu.memory_space<vmem>>) attributes {dimension_semantics = [], scalar_prefetch = 0 : i64, scratch_operands = 0 : i64, tpu.core_type = #tpu.core_type<tc>} {
    %c0 = arith.constant 0 : index
    %c0_0 = arith.constant 0 : index
    %0 = vector.load %arg0[%c0, %c0_0] : memref<7712x27xbf16, #tpu.memory_space<vmem>>, vector<7712x27xbf16>
    %c0_1 = arith.constant 0 : index
    %c0_2 = arith.constant 0 : index
    %1 = vector.load %arg1[%c0_1, %c0_2] : memref<27x32xbf16, #tpu.memory_space<vmem>>, vector<27x32xbf16>
    %cst = arith.constant dense<0.000000e+00> : vector<7712x32xf32>
    %2 = tpu.matmul %0, %1, %cst {dimension_numbers = #tpu.dot_dimension_numbers<[1], [0], [0], [1], [0, 0, 1, 1], [], []>} : vector<7712x27xbf16>, vector<27x32xbf16>, vector<7712x32xf32> -> vector<7712x32xf32>
    %3 = vector.extract_strided_slice %2 {offsets = [0, 0], sizes = [1928, 32], strides = [1, 1]} : vector<7712x32xf32> to vector<1928x32xf32>
    %4 = vector.extract_strided_slice %2 {offsets = [1928, 0], sizes = [1928, 32], strides = [1, 1]} : vector<7712x32xf32> to vector<1928x32xf32>
    %5 = arith.maximumf %3, %4 : vector<1928x32xf32>
    %6 = vector.extract_strided_slice %2 {offsets = [3856, 0], sizes = [1928, 32], strides = [1, 1]} : vector<7712x32xf32> to vector<1928x32xf32>
    %7 = vector.extract_strided_slice %2 {offsets = [5784, 0], sizes = [1928, 32], strides = [1, 1]} : vector<7712x32xf32> to vector<1928x32xf32>
    %8 = arith.maximumf %6, %7 : vector<1928x32xf32>
    %9 = arith.maximumf %5, %8 : vector<1928x32xf32>
    %c0_3 = arith.constant 0 : index
    %c0_4 = arith.constant 0 : index
    %10 = vector.load %arg2[%c0_3, %c0_4] : memref<1x32xf32, #tpu.memory_space<vmem>>, vector<1x32xf32>
    %11 = vector.broadcast %10 : vector<1x32xf32> to vector<1928x32xf32>
    %12 = arith.addf %9, %11 : vector<1928x32xf32>
    %cst_5 = arith.constant 0.000000e+00 : f32
    %13 = vector.broadcast %cst_5 : f32 to vector<1928x32xf32>
    %14 = arith.maximumf %12, %13 : vector<1928x32xf32>
    %15 = arith.truncf %14 : vector<1928x32xf32> to vector<1928x32xbf16>
    %c0_6 = arith.constant 0 : index
    %c0_7 = arith.constant 0 : index
    %16 = vector.load %arg3[%c0_6, %c0_7] : memref<1928x32xbf16, #tpu.memory_space<vmem>>, vector<1928x32xbf16>
    tpu.vector_store %arg3[%c0_6, %c0_7], %15 {strides = array<i32>} : memref<1928x32xbf16, #tpu.memory_space<vmem>>, vector<1928x32xbf16>,
    return
  }
}

module attributes {stable_mosaic.version = 11 : i64} {
  func.func @_conv_block_kernel(%arg0: memref<1568x288xbf16, #tpu.memory_space<vmem>>, %arg1: memref<288x32xbf16, #tpu.memory_space<vmem>>, %arg2: memref<1x32xf32, #tpu.memory_space<vmem>>, %arg3: memref<392x32xbf16, #tpu.memory_space<vmem>>) attributes {dimension_semantics = [], scalar_prefetch = 0 : i64, scratch_operands = 0 : i64, tpu.core_type = #tpu.core_type<tc>} {
    %c0 = arith.constant 0 : index
    %c0_0 = arith.constant 0 : index
    %0 = vector.load %arg0[%c0, %c0_0] : memref<1568x288xbf16, #tpu.memory_space<vmem>>, vector<1568x288xbf16>
    %c0_1 = arith.constant 0 : index
    %c0_2 = arith.constant 0 : index
    %1 = vector.load %arg1[%c0_1, %c0_2] : memref<288x32xbf16, #tpu.memory_space<vmem>>, vector<288x32xbf16>
    %cst = arith.constant dense<0.000000e+00> : vector<1568x32xf32>
    %2 = tpu.matmul %0, %1, %cst {dimension_numbers = #tpu.dot_dimension_numbers<[1], [0], [0], [1], [0, 0, 1, 1], [], []>} : vector<1568x288xbf16>, vector<288x32xbf16>, vector<1568x32xf32> -> vector<1568x32xf32>
    %3 = vector.extract_strided_slice %2 {offsets = [0, 0], sizes = [392, 32], strides = [1, 1]} : vector<1568x32xf32> to vector<392x32xf32>
    %4 = vector.extract_strided_slice %2 {offsets = [392, 0], sizes = [392, 32], strides = [1, 1]} : vector<1568x32xf32> to vector<392x32xf32>
    %5 = arith.maximumf %3, %4 : vector<392x32xf32>
    %6 = vector.extract_strided_slice %2 {offsets = [784, 0], sizes = [392, 32], strides = [1, 1]} : vector<1568x32xf32> to vector<392x32xf32>
    %7 = vector.extract_strided_slice %2 {offsets = [1176, 0], sizes = [392, 32], strides = [1, 1]} : vector<1568x32xf32> to vector<392x32xf32>
    %8 = arith.maximumf %6, %7 : vector<392x32xf32>
    %9 = arith.maximumf %5, %8 : vector<392x32xf32>
    %c0_3 = arith.constant 0 : index
    %c0_4 = arith.constant 0 : index
    %10 = vector.load %arg2[%c0_3, %c0_4] : memref<1x32xf32, #tpu.memory_space<vmem>>, vector<1x32xf32>
    %11 = vector.broadcast %10 : vector<1x32xf32> to vector<392x32xf32>
    %12 = arith.addf %9, %11 : vector<392x32xf32>
    %cst_5 = arith.constant 0.000000e+00 : f32
    %13 = vector.broadcast %cst_5 : f32 to vector<392x32xf32>
    %14 = arith.maximumf %12, %13 : vector<392x32xf32>
    %15 = arith.truncf %14 : vector<392x32xf32> to vector<392x32xbf16>
    %c0_6 = arith.constant 0 : index
    %c0_7 = arith.constant 0 : index
    %16 = vector.load %arg3[%c0_6, %c0_7] : memref<392x32xbf16, #tpu.memory_space<vmem>>, vector<392x32xbf16>
    tpu.vector_store %arg3[%c0_6, %c0_7], %15 {strides = array<i32>} : memref<392x32xbf16, #tpu.memory_space<vmem>>, vector<392x32xbf16>,
    return
  }
}

module attributes {stable_mosaic.version = 11 : i64} {
  func.func @_conv_block_kernel(%arg0: memref<288x288xbf16, #tpu.memory_space<vmem>>, %arg1: memref<288x32xbf16, #tpu.memory_space<vmem>>, %arg2: memref<1x32xf32, #tpu.memory_space<vmem>>, %arg3: memref<72x32xbf16, #tpu.memory_space<vmem>>) attributes {dimension_semantics = [], scalar_prefetch = 0 : i64, scratch_operands = 0 : i64, tpu.core_type = #tpu.core_type<tc>} {
    %c0 = arith.constant 0 : index
    %c0_0 = arith.constant 0 : index
    %0 = vector.load %arg0[%c0, %c0_0] : memref<288x288xbf16, #tpu.memory_space<vmem>>, vector<288x288xbf16>
    %c0_1 = arith.constant 0 : index
    %c0_2 = arith.constant 0 : index
    %1 = vector.load %arg1[%c0_1, %c0_2] : memref<288x32xbf16, #tpu.memory_space<vmem>>, vector<288x32xbf16>
    %cst = arith.constant dense<0.000000e+00> : vector<288x32xf32>
    %2 = tpu.matmul %0, %1, %cst {dimension_numbers = #tpu.dot_dimension_numbers<[1], [0], [0], [1], [0, 0, 1, 1], [], []>} : vector<288x288xbf16>, vector<288x32xbf16>, vector<288x32xf32> -> vector<288x32xf32>
    %3 = vector.extract_strided_slice %2 {offsets = [0, 0], sizes = [72, 32], strides = [1, 1]} : vector<288x32xf32> to vector<72x32xf32>
    %4 = vector.extract_strided_slice %2 {offsets = [72, 0], sizes = [72, 32], strides = [1, 1]} : vector<288x32xf32> to vector<72x32xf32>
    %5 = arith.maximumf %3, %4 : vector<72x32xf32>
    %6 = vector.extract_strided_slice %2 {offsets = [144, 0], sizes = [72, 32], strides = [1, 1]} : vector<288x32xf32> to vector<72x32xf32>
    %7 = vector.extract_strided_slice %2 {offsets = [216, 0], sizes = [72, 32], strides = [1, 1]} : vector<288x32xf32> to vector<72x32xf32>
    %8 = arith.maximumf %6, %7 : vector<72x32xf32>
    %9 = arith.maximumf %5, %8 : vector<72x32xf32>
    %c0_3 = arith.constant 0 : index
    %c0_4 = arith.constant 0 : index
    %10 = vector.load %arg2[%c0_3, %c0_4] : memref<1x32xf32, #tpu.memory_space<vmem>>, vector<1x32xf32>
    %11 = vector.broadcast %10 : vector<1x32xf32> to vector<72x32xf32>
    %12 = arith.addf %9, %11 : vector<72x32xf32>
    %cst_5 = arith.constant 0.000000e+00 : f32
    %13 = vector.broadcast %cst_5 : f32 to vector<72x32xf32>
    %14 = arith.maximumf %12, %13 : vector<72x32xf32>
    %15 = arith.truncf %14 : vector<72x32xf32> to vector<72x32xbf16>
    %c0_6 = arith.constant 0 : index
    %c0_7 = arith.constant 0 : index
    %16 = vector.load %arg3[%c0_6, %c0_7] : memref<72x32xbf16, #tpu.memory_space<vmem>>, vector<72x32xbf16>
    tpu.vector_store %arg3[%c0_6, %c0_7], %15 {strides = array<i32>} : memref<72x32xbf16, #tpu.memory_space<vmem>>, vector<72x32xbf16>,
    return
  }
}

module attributes {stable_mosaic.version = 11 : i64} {
  func.func @_conv_block_fc_kernel(%arg0: memref<32x288xbf16, #tpu.memory_space<vmem>>, %arg1: memref<288x32xbf16, #tpu.memory_space<vmem>>, %arg2: memref<1x32xf32, #tpu.memory_space<vmem>>, %arg3: memref<128x10xf32, #tpu.memory_space<vmem>>, %arg4: memref<1x10xf32, #tpu.memory_space<vmem>>, %arg5: memref<2x10xf32, #tpu.memory_space<vmem>>) attributes {dimension_semantics = [], scalar_prefetch = 0 : i64, scratch_operands = 0 : i64, tpu.core_type = #tpu.core_type<tc>} {
    %c0 = arith.constant 0 : index
    %c0_0 = arith.constant 0 : index
    %0 = vector.load %arg0[%c0, %c0_0] : memref<32x288xbf16, #tpu.memory_space<vmem>>, vector<32x288xbf16>
    %c0_1 = arith.constant 0 : index
    %c0_2 = arith.constant 0 : index
    %1 = vector.load %arg1[%c0_1, %c0_2] : memref<288x32xbf16, #tpu.memory_space<vmem>>, vector<288x32xbf16>
    %cst = arith.constant dense<0.000000e+00> : vector<32x32xf32>
    %2 = tpu.matmul %0, %1, %cst {dimension_numbers = #tpu.dot_dimension_numbers<[1], [0], [0], [1], [0, 0, 1, 1], [], []>} : vector<32x288xbf16>, vector<288x32xbf16>, vector<32x32xf32> -> vector<32x32xf32>
    %3 = vector.extract_strided_slice %2 {offsets = [0, 0], sizes = [8, 32], strides = [1, 1]} : vector<32x32xf32> to vector<8x32xf32>
    %4 = vector.extract_strided_slice %2 {offsets = [8, 0], sizes = [8, 32], strides = [1, 1]} : vector<32x32xf32> to vector<8x32xf32>
    %5 = arith.maximumf %3, %4 : vector<8x32xf32>
    %6 = vector.extract_strided_slice %2 {offsets = [16, 0], sizes = [8, 32], strides = [1, 1]} : vector<32x32xf32> to vector<8x32xf32>
    %7 = vector.extract_strided_slice %2 {offsets = [24, 0], sizes = [8, 32], strides = [1, 1]} : vector<32x32xf32> to vector<8x32xf32>
    %8 = arith.maximumf %6, %7 : vector<8x32xf32>
    %9 = arith.maximumf %5, %8 : vector<8x32xf32>
    %c0_3 = arith.constant 0 : index
    %c0_4 = arith.constant 0 : index
    %10 = vector.load %arg2[%c0_3, %c0_4] : memref<1x32xf32, #tpu.memory_space<vmem>>, vector<1x32xf32>
    %11 = vector.broadcast %10 : vector<1x32xf32> to vector<8x32xf32>
    %12 = arith.addf %9, %11 : vector<8x32xf32>
    %cst_5 = arith.constant 0.000000e+00 : f32
    %13 = vector.broadcast %cst_5 : f32 to vector<8x32xf32>
    %14 = arith.maximumf %12, %13 : vector<8x32xf32>
    %c0_6 = arith.constant 0 : index
    %c0_7 = arith.constant 0 : index
    %15 = vector.load %arg3[%c0_6, %c0_7] : memref<128x10xf32, #tpu.memory_space<vmem>>, vector<128x10xf32>
    %c0_8 = arith.constant 0 : index
    %c0_9 = arith.constant 0 : index
    %16 = vector.load %arg4[%c0_8, %c0_9] : memref<1x10xf32, #tpu.memory_space<vmem>>, vector<1x10xf32>
    %17 = vector.extract_strided_slice %14 {offsets = [0, 0], sizes = [2, 32], strides = [1, 1]} : vector<8x32xf32> to vector<2x32xf32>
    %18 = vector.extract_strided_slice %15 {offsets = [0, 0], sizes = [32, 10], strides = [1, 1]} : vector<128x10xf32> to vector<32x10xf32>
    %cst_10 = arith.constant dense<0.000000e+00> : vector<2x10xf32>
    %19 = tpu.matmul %17, %18, %cst_10 {dimension_numbers = #tpu.dot_dimension_numbers<[1], [0], [0], [1], [0, 0, 1, 1], [], []>} : vector<2x32xf32>, vector<32x10xf32>, vector<2x10xf32> -> vector<2x10xf32>
    %20 = vector.broadcast %16 : vector<1x10xf32> to vector<2x10xf32>
    %21 = arith.addf %20, %19 : vector<2x10xf32>
    %22 = vector.extract_strided_slice %14 {offsets = [2, 0], sizes = [2, 32], strides = [1, 1]} : vector<8x32xf32> to vector<2x32xf32>
    %23 = vector.extract_strided_slice %15 {offsets = [32, 0], sizes = [32, 10], strides = [1, 1]} : vector<128x10xf32> to vector<32x10xf32>
    %cst_11 = arith.constant dense<0.000000e+00> : vector<2x10xf32>
    %24 = tpu.matmul %22, %23, %cst_11 {dimension_numbers = #tpu.dot_dimension_numbers<[1], [0], [0], [1], [0, 0, 1, 1], [], []>} : vector<2x32xf32>, vector<32x10xf32>, vector<2x10xf32> -> vector<2x10xf32>
    %25 = arith.addf %21, %24 : vector<2x10xf32>
    %26 = vector.extract_strided_slice %14 {offsets = [4, 0], sizes = [2, 32], strides = [1, 1]} : vector<8x32xf32> to vector<2x32xf32>
    %27 = vector.extract_strided_slice %15 {offsets = [64, 0], sizes = [32, 10], strides = [1, 1]} : vector<128x10xf32> to vector<32x10xf32>
    %cst_12 = arith.constant dense<0.000000e+00> : vector<2x10xf32>
    %28 = tpu.matmul %26, %27, %cst_12 {dimension_numbers = #tpu.dot_dimension_numbers<[1], [0], [0], [1], [0, 0, 1, 1], [], []>} : vector<2x32xf32>, vector<32x10xf32>, vector<2x10xf32> -> vector<2x10xf32>
    %29 = arith.addf %25, %28 : vector<2x10xf32>
    %30 = vector.extract_strided_slice %14 {offsets = [6, 0], sizes = [2, 32], strides = [1, 1]} : vector<8x32xf32> to vector<2x32xf32>
    %31 = vector.extract_strided_slice %15 {offsets = [96, 0], sizes = [32, 10], strides = [1, 1]} : vector<128x10xf32> to vector<32x10xf32>
    %cst_13 = arith.constant dense<0.000000e+00> : vector<2x10xf32>
    %32 = tpu.matmul %30, %31, %cst_13 {dimension_numbers = #tpu.dot_dimension_numbers<[1], [0], [0], [1], [0, 0, 1, 1], [], []>} : vector<2x32xf32>, vector<32x10xf32>, vector<2x10xf32> -> vector<2x10xf32>
    %33 = arith.addf %29, %32 : vector<2x10xf32>
    %c0_14 = arith.constant 0 : index
    %c0_15 = arith.constant 0 : index
    %34 = vector.load %arg5[%c0_14, %c0_15] : memref<2x10xf32, #tpu.memory_space<vmem>>, vector<2x10xf32>
    tpu.vector_store %arg5[%c0_14, %c0_15], %33 {strides = array<i32>} : memref<2x10xf32, #tpu.memory_space<vmem>>, vector<2x10xf32>,
    return
  }
}

</mosaic_0001>

<llo_original>
// kernel: convnet4_forward.4
$region0: #{convnet4_forward.4}
  #allocation0 [shape = 'u32[]', space=smem, size = 0x4, offset = 0x4, fixed_abs, tag = 'smem constant byte address 0x4 - core index']
  #allocation1 [shape = 'u32[72,128]{1,0:T(1,128)}', space=vmem, size = 0x9000, scoped, tag = 'internal scratch']
  %s0 = inlined_call_operand.vmem [shape: bf16[7712,27], index: 0, kind: input, shape index: {}]
  %s1 = inlined_call_operand.vmem [shape: bf16[27,32], index: 1, kind: input, shape index: {}]
  %s2 = inlined_call_operand.vmem [shape: f32[1,32], index: 2, kind: input, shape index: {}]
  %s3 = inlined_call_operand.vmem [shape: bf16[1928,32], index: 3, kind: output, shape index: {}]
  %s4 = sld [smem:[#allocation0]]
  $region22: #{convnet4_forward.4} parent=0
    _
  %s6 = ssub.s32 1, %s4
  %s7 = scalar_select 0, %s6, %s4
  // Predicated region
  $region2: #{convnet4_forward.4} parent=0 // pred_check
    _
  $region3: #{convnet4_forward.4} parent=0 // pred_check_branch
    %9 = sbr.rel (0) target = $region5
  $region4: #{convnet4_forward.4} parent=0 // pred_region
    _
  $region5: #{convnet4_forward.4} parent=0 // pred_fallthru
    _
  // Predicated region
  $region6: #{convnet4_forward.4} parent=0 // pred_check
    _
  $region7: #{convnet4_forward.4} parent=0 // pred_check_branch
    %11 = sbr.rel (0) target = $region9
  $region8: #{convnet4_forward.4} parent=0 // pred_region
    _
  $region9: #{convnet4_forward.4} parent=0 // pred_fallthru
    _
  // Predicated region
  $region10: #{convnet4_forward.4} parent=0 // pred_check
    _
  $region11: #{convnet4_forward.4} parent=0 // pred_check_branch
    %13 = sbr.rel (0) target = $region13
  $region12: #{convnet4_forward.4} parent=0 // pred_region
    _
  $region13: #{convnet4_forward.4} parent=0 // pred_fallthru
    _
  %v15 = vld [vmem:[%s0] sm:$0xf]
  %v16 = vld [vmem:[%s0 + $0x4] sm:$0xf]
  %v17 = vld [vmem:[%s0 + $0x8] sm:$0xf]
  %v18 = vld [vmem:[%s0 + $0xc] sm:$0xf]
  %v19 = vld [vmem:[%s0 + $0x10] sm:$0xf]
  %v20 = vld [vmem:[%s0 + $0x14] sm:$0xf]
  %v21 = vld [vmem:[%s0 + $0x18] sm:$0xf]
  %v22 = vld [vmem:[%s0 + $0x1c] sm:$0xf]
  %v23 = vld [vmem:[%s0 + $0x20] sm:$0xf]
  %v24 = vld [vmem:[%s0 + $0x24] sm:$0xf]
  %v25 = vld [vmem:[%s0 + $0x28] sm:$0xf]
  %v26 = vld [vmem:[%s0 + $0x2c] sm:$0xf]
  %v27 = vld [vmem:[%s0 + $0x30] sm:$0xf]
  %v28 = vld [vmem:[%s0 + $0x34] sm:$0xf]
  %v29 = vld [vmem:[%s0 + $0x38] sm:$0xf]
  %v30 = vld [vmem:[%s0 + $0x3c] sm:$0xf]
  %v31 = vld [vmem:[%s0 + $0x40] sm:$0xf]
  %v32 = vld [vmem:[%s0 + $0x44] sm:$0xf]
  %v33 = vld [vmem:[%s0 + $0x48] sm:$0xf]
  %v34 = vld [vmem:[%s0 + $0x4c] sm:$0xf]
  %v35 = vld [vmem:[%s0 + $0x50] sm:$0xf]
  %v36 = vld [vmem:[%s0 + $0x54] sm:$0xf]
  %v37 = vld [vmem:[%s0 + $0x58] sm:$0xf]
  %v38 = vld [vmem:[%s0 + $0x5c] sm:$0xf]
  %v39 = vld [vmem:[%s0 + $0x60] sm:$0xf]
  %v40 = vld [vmem:[%s0 + $0x64] sm:$0xf]
  %v41 = vld [vmem:[%s0 + $0x68] sm:$0xf]
  %v42 = vld [vmem:[%s0 + $0x6c] sm:$0xf]
  %v43 = vld [vmem:[%s0 + $0x70] sm:$0xf]
  %v44 = vld [vmem:[%s0 + $0x74] sm:$0xf]
  %v45 = vld [vmem:[%s0 + $0x78] sm:$0xf]
  %v46 = vld [vmem:[%s0 + $0x7c] sm:$0xf]
  %v47 = vld [vmem:[%s0 + $0x80] sm:$0xf]
  %v48 = vld [vmem:[%s0 + $0x84] sm:$0xf]
  %v49 = vld [vmem:[%s0 + $0x88] sm:$0xf]
  %v50 = vld [vmem:[%s0 + $0x8c] sm:$0xf]
  %v51 = vld [vmem:[%s0 + $0x90] sm:$0xf]
  %v52 = vld [vmem:[%s0 + $0x94] sm:$0xf]
  %v53 = vld [vmem:[%s0 + $0x98] sm:$0xf]
  %v54 = vld [vmem:[%s0 + $0x9c] sm:$0xf]
  %v55 = vld [vmem:[%s0 + $0xa0] sm:$0xf]
  %v56 = vld [vmem:[%s0 + $0xa4] sm:$0xf]
  %v57 = vld [vmem:[%s0 + $0xa8] sm:$0xf]
  %v58 = vld [vmem:[%s0 + $0xac] sm:$0xf]
  %v59 = vld [vmem:[%s0 + $0xb0] sm:$0xf]
  %v60 = vld [vmem:[%s0 + $0xb4] sm:$0xf]
  %v61 = vld [vmem:[%s0 + $0xb8] sm:$0xf]
  %v62 = vld [vmem:[%s0 + $0xbc] sm:$0xf]
  %v63 = vld [vmem:[%s0 + $0xc0] sm:$0xf]
  %v64 = vld [vmem:[%s0 + $0xc4] sm:$0xf]
  %v65 = vld [vmem:[%s0 + $0xc8] sm:$0xf]
  %v66 = vld [vmem:[%s0 + $0xcc] sm:$0xf]
  %v67 = vld [vmem:[%s0 + $0xd0] sm:$0xf]
  %v68 = vld [vmem:[%s0 + $0xd4] sm:$0xf]
  %v69 = vld [vmem:[%s0 + $0xd8] sm:$0xf]
  %v70 = vld [vmem:[%s0 + $0xdc] sm:$0xf]
  %v71 = vld [vmem:[%s0 + $0xe0] sm:$0xf]
  %v72 = vld [vmem:[%s0 + $0xe4] sm:$0xf]
  %v73 = vld [vmem:[%s0 + $0xe8] sm:$0xf]
  %v74 = vld [vmem:[%s0 + $0xec] sm:$0xf]
  %v75 = vld [vmem:[%s0 + $0xf0] sm:$0xf]
  %v76 = vld [vmem:[%s0 + $0xf4] sm:$0xf]
  %v77 = vld [vmem:[%s0 + $0xf8] sm:$0xf]
  %v78 = vld [vmem:[%s0 + $0xfc] sm:$0xf]
  %v79 = vld [vmem:[%s0 + $0x100] sm:$0xf]
  %v80 = vld [vmem:[%s0 + $0x104] sm:$0xf]
  %v81 = vld [vmem:[%s0 + $0x108] sm:$0xf]
  %v82 = vld [vmem:[%s0 + $0x10c] sm:$0xf]
  %v83 = vld [vmem:[%s0 + $0x110] sm:$0xf]
  %v84 = vld [vmem:[%s0 + $0x114] sm:$0xf]
  %v85 = vld [vmem:[%s0 + $0x118] sm:$0xf]
  %v86 = vld [vmem:[%s0 + $0x11c] sm:$0xf]
  %v87 = vld [vmem:[%s0 + $0x120] sm:$0xf]
  %v88 = vld [vmem:[%s0 + $0x124] sm:$0xf]
  %v89 = vld [vmem:[%s0 + $0x128] sm:$0xf]
  %v90 = vld [vmem:[%s0 + $0x12c] sm:$0xf]
  %v91 = vld [vmem:[%s0 + $0x130] sm:$0xf]
  %v92 = vld [vmem:[%s0 + $0x134] sm:$0xf]
  %v93 = vld [vmem:[%s0 + $0x138] sm:$0xf]
  %v94 = vld [vmem:[%s0 + $0x13c] sm:$0xf]
  %v95 = vld [vmem:[%s0 + $0x140] sm:$0xf]
  %v96 = vld [vmem:[%s0 + $0x144] sm:$0xf]
  %v97 = vld [vmem:[%s0 + $0x148] sm:$0xf]
  %v98 = vld [vmem:[%s0 + $0x14c] sm:$0xf]
  %v99 = vld [vmem:[%s0 + $0x150] sm:$0xf]
  %v100 = vld [vmem:[%s0 + $0x154] sm:$0xf]
  %v101 = vld [vmem:[%s0 + $0x158] sm:$0xf]
  %v102 = vld [vmem:[%s0 + $0x15c] sm:$0xf]
  %v103 = vld [vmem:[%s0 + $0x160] sm:$0xf]
  %v104 = vld [vmem:[%s0 + $0x164] sm:$0xf]
  %v105 = vld [vmem:[%s0 + $0x168] sm:$0xf]
  %v106 = vld [vmem:[%s0 + $0x16c] sm:$0xf]
  %v107 = vld [vmem:[%s0 + $0x170] sm:$0xf]
  %v108 = vld [vmem:[%s0 + $0x174] sm:$0xf]
  %v109 = vld [vmem:[%s0 + $0x178] sm:$0xf]
  %v110 = vld [vmem:[%s0 + $0x17c] sm:$0xf]
  %v111 = vld [vmem:[%s0 + $0x180] sm:$0xf]
  %v112 = vld [vmem:[%s0 + $0x184] sm:$0xf]
  %v113 = vld [vmem:[%s0 + $0x188] sm:$0xf]
  %v114 = vld [vmem:[%s0 + $0x18c] sm:$0xf]
  %v115 = vld [vmem:[%s0 + $0x190] sm:$0xf]
  %v116 = vld [vmem:[%s0 + $0x194] sm:$0xf]
  %v117 = vld [vmem:[%s0 + $0x198] sm:$0xf]
  %v118 = vld [vmem:[%s0 + $0x19c] sm:$0xf]
  %v119 = vld [vmem:[%s0 + $0x1a0] sm:$0xf]
  %v120 = vld [vmem:[%s0 + $0x1a4] sm:$0xf]
  %v121 = vld [vmem:[%s0 + $0x1a8] sm:$0xf]
  %v122 = vld [vmem:[%s0 + $0x1ac] sm:$0xf]
  %v123 = vld [vmem:[%s0 + $0x1b0] sm:$0xf]
  %v124 = vld [vmem:[%s0 + $0x1b4] sm:$0xf]
  %v125 = vld [vmem:[%s0 + $0x1b8] sm:$0xf]
  %v126 = vld [vmem:[%s0 + $0x1bc] sm:$0xf]
  %v127 = vld [vmem:[%s0 + $0x1c0] sm:$0xf]
  %v128 = vld [vmem:[%s0 + $0x1c4] sm:$0xf]
  %v129 = vld [vmem:[%s0 + $0x1c8] sm:$0xf]
  %v130 = vld [vmem:[%s0 + $0x1cc] sm:$0xf]
  %v131 = vld [vmem:[%s0 + $0x1d0] sm:$0xf]
  %v132 = vld [vmem:[%s0 + $0x1d4] sm:$0xf]
  %v133 = vld [vmem:[%s0 + $0x1d8] sm:$0xf]
  %v134 = vld [vmem:[%s0 + $0x1dc] sm:$0xf]
  %v135 = vld [vmem:[%s0 + $0x1e0] sm:$0xf]
  %v136 = vld [vmem:[%s0 + $0x1e4] sm:$0xf]
  %v137 = vld [vmem:[%s0 + $0x1e8] sm:$0xf]
  %v138 = vld [vmem:[%s0 + $0x1ec] sm:$0xf]
  %v139 = vld [vmem:[%s0 + $0x1f0] sm:$0xf]
  %v140 = vld [vmem:[%s0 + $0x1f4] sm:$0xf]
  %v141 = vld [vmem:[%s0 + $0x1f8] sm:$0xf]
  %v142 = vld [vmem:[%s0 + $0x1fc] sm:$0xf]
  %v143 = vld [vmem:[%s0 + $0x200] sm:$0xf]
  %v144 = vld [vmem:[%s0 + $0x204] sm:$0xf]
  %v145 = vld [vmem:[%s0 + $0x208] sm:$0xf]
  %v146 = vld [vmem:[%s0 + $0x20c] sm:$0xf]
  %v147 = vld [vmem:[%s0 + $0x210] sm:$0xf]
  %v148 = vld [vmem:[%s0 + $0x214] sm:$0xf]
  %v149 = vld [vmem:[%s0 + $0x218] sm:$0xf]
  %v150 = vld [vmem:[%s0 + $0x21c] sm:$0xf]
  %v151 = vld [vmem:[%s0 + $0x220] sm:$0xf]
  %v152 = vld [vmem:[%s0 + $0x224] sm:$0xf]
  %v153 = vld [vmem:[%s0 + $0x228] sm:$0xf]
  %v154 = vld [vmem:[%s0 + $0x22c] sm:$0xf]
  %v155 = vld [vmem:[%s0 + $0x230] sm:$0xf]
  %v156 = vld [vmem:[%s0 + $0x234] sm:$0xf]
  %v157 = vld [vmem:[%s0 + $0x238] sm:$0xf]
  %v158 = vld [vmem:[%s0 + $0x23c] sm:$0xf]
  %v159 = vld [vmem:[%s0 + $0x240] sm:$0xf]
  %v160 = vld [vmem:[%s0 + $0x244] sm:$0xf]
  %v161 = vld [vmem:[%s0 + $0x248] sm:$0xf]
  %v162 = vld [vmem:[%s0 + $0x24c] sm:$0xf]
  %v163 = vld [vmem:[%s0 + $0x250] sm:$0xf]
  %v164 = vld [vmem:[%s0 + $0x254] sm:$0xf]
  %v165 = vld [vmem:[%s0 + $0x258] sm:$0xf]
  %v166 = vld [vmem:[%s0 + $0x25c] sm:$0xf]
  %v167 = vld [vmem:[%s0 + $0x260] sm:$0xf]
  %v168 = vld [vmem:[%s0 + $0x264] sm:$0xf]
  %v169 = vld [vmem:[%s0 + $0x268] sm:$0xf]
  %v170 = vld [vmem:[%s0 + $0x26c] sm:$0xf]
  %v171 = vld [vmem:[%s0 + $0x270] sm:$0xf]
  %v172 = vld [vmem:[%s0 + $0x274] sm:$0xf]
  %v173 = vld [vmem:[%s0 + $0x278] sm:$0xf]
  %v174 = vld [vmem:[%s0 + $0x27c] sm:$0xf]
  %v175 = vld [vmem:[%s0 + $0x280] sm:$0xf]
  %v176 = vld [vmem:[%s0 + $0x284] sm:$0xf]
  %v177 = vld [vmem:[%s0 + $0x288] sm:$0xf]
  %v178 = vld [vmem:[%s0 + $0x28c] sm:$0xf]
  %v179 = vld [vmem:[%s0 + $0x290] sm:$0xf]
  %v180 = vld [vmem:[%s0 + $0x294] sm:$0xf]
  %v181 = vld [vmem:[%s0 + $0x298] sm:$0xf]
  %v182 = vld [vmem:[%s0 + $0x29c] sm:$0xf]
  %v183 = vld [vmem:[%s0 + $0x2a0] sm:$0xf]
  %v184 = vld [vmem:[%s0 + $0x2a4] sm:$0xf]
  %v185 = vld [vmem:[%s0 + $0x2a8] sm:$0xf]
  %v186 = vld [vmem:[%s0 + $0x2ac] sm:$0xf]
  %v187 = vld [vmem:[%s0 + $0x2b0] sm:$0xf]
  %v188 = vld [vmem:[%s0 + $0x2b4] sm:$0xf]
  %v189 = vld [vmem:[%s0 + $0x2b8] sm:$0xf]
  %v190 = vld [vmem:[%s0 + $0x2bc] sm:$0xf]
  %v191 = vld [vmem:[%s0 + $0x2c0] sm:$0xf]
  %v192 = vld [vmem:[%s0 + $0x2c4] sm:$0xf]
  %v193 = vld [vmem:[%s0 + $0x2c8] sm:$0xf]
  %v194 = vld [vmem:[%s0 + $0x2cc] sm:$0xf]
  %v195 = vld [vmem:[%s0 + $0x2d0] sm:$0xf]
  %v196 = vld [vmem:[%s0 + $0x2d4] sm:$0xf]
  %v197 = vld [vmem:[%s0 + $0x2d8] sm:$0xf]
  %v198 = vld [vmem:[%s0 + $0x2dc] sm:$0xf]
  %v199 = vld [vmem:[%s0 + $0x2e0] sm:$0xf]
  %v200 = vld [vmem:[%s0 + $0x2e4] sm:$0xf]
  %v201 = vld [vmem:[%s0 + $0x2e8] sm:$0xf]
  %v202 = vld [vmem:[%s0 + $0x2ec] sm:$0xf]
  %v203 = vld [vmem:[%s0 + $0x2f0] sm:$0xf]
  %v204 = vld [vmem:[%s0 + $0x2f4] sm:$0xf]
  %v205 = vld [vmem:[%s0 + $0x2f8] sm:$0xf]
  %v206 = vld [vmem:[%s0 + $0x2fc] sm:$0xf]
  %v207 = vld [vmem:[%s0 + $0x300] sm:$0xf]
  %v208 = vld [vmem:[%s0 + $0x304] sm:$0xf]
  %v209 = vld [vmem:[%s0 + $0x308] sm:$0xf]
  %v210 = vld [vmem:[%s0 + $0x30c] sm:$0xf]
  %v211 = vld [vmem:[%s0 + $0x310] sm:$0xf]
  %v212 = vld [vmem:[%s0 + $0x314] sm:$0xf]
  %v213 = vld [vmem:[%s0 + $0x318] sm:$0xf]
  %v214 = vld [vmem:[%s0 + $0x31c] sm:$0xf]
  %v215 = vld [vmem:[%s0 + $0x320] sm:$0xf]
  %v216 = vld [vmem:[%s0 + $0x324] sm:$0xf]
  %v217 = vld [vmem:[%s0 + $0x328] sm:$0xf]
  %v218 = vld [vmem:[%s0 + $0x32c] sm:$0xf]
  %v219 = vld [vmem:[%s0 + $0x330] sm:$0xf]
  %v220 = vld [vmem:[%s0 + $0x334] sm:$0xf]
  %v221 = vld [vmem:[%s0 + $0x338] sm:$0xf]
  %v222 = vld [vmem:[%s0 + $0x33c] sm:$0xf]
  %v223 = vld [vmem:[%s0 + $0x340] sm:$0xf]
  %v224 = vld [vmem:[%s0 + $0x344] sm:$0xf]
  %v225 = vld [vmem:[%s0 + $0x348] sm:$0xf]
  %v226 = vld [vmem:[%s0 + $0x34c] sm:$0xf]
  %v227 = vld [vmem:[%s0 + $0x350] sm:$0xf]
  %v228 = vld [vmem:[%s0 + $0x354] sm:$0xf]
  %v229 = vld [vmem:[%s0 + $0x358] sm:$0xf]
  %v230 = vld [vmem:[%s0 + $0x35c] sm:$0xf]
  %v231 = vld [vmem:[%s0 + $0x360] sm:$0xf]
  %v232 = vld [vmem:[%s0 + $0x364] sm:$0xf]
  %v233 = vld [vmem:[%s0 + $0x368] sm:$0xf]
  %v234 = vld [vmem:[%s0 + $0x36c] sm:$0xf]
  %v235 = vld [vmem:[%s0 + $0x370] sm:$0xf]
  %v236 = vld [vmem:[%s0 + $0x374] sm:$0xf]
  %v237 = vld [vmem:[%s0 + $0x378] sm:$0xf]
  %v238 = vld [vmem:[%s0 + $0x37c] sm:$0xf]
  %v239 = vld [vmem:[%s0 + $0x380] sm:$0xf]
  %v240 = vld [vmem:[%s0 + $0x384] sm:$0xf]
  %v241 = vld [vmem:[%s0 + $0x388] sm:$0xf]
  %v242 = vld [vmem:[%s0 + $0x38c] sm:$0xf]
  %v243 = vld [vmem:[%s0 + $0x390] sm:$0xf]
  %v244 = vld [vmem:[%s0 + $0x394] sm:$0xf]
  %v245 = vld [vmem:[%s0 + $0x398] sm:$0xf]
  %v246 = vld [vmem:[%s0 + $0x39c] sm:$0xf]
  %v247 = vld [vmem:[%s0 + $0x3a0] sm:$0xf]
  %v248 = vld [vmem:[%s0 + $0x3a4] sm:$0xf]
  %v249 = vld [vmem:[%s0 + $0x3a8] sm:$0xf]
  %v250 = vld [vmem:[%s0 + $0x3ac] sm:$0xf]
  %v251 = vld [vmem:[%s0 + $0x3b0] sm:$0xf]
  %v252 = vld [vmem:[%s0 + $0x3b4] sm:$0xf]
  %v253 = vld [vmem:[%s0 + $0x3b8] sm:$0xf]
  %v254 = vld [vmem:[%s0 + $0x3bc] sm:$0xf]
  %v255 = vld [vmem:[%s0 + $0x3c0] sm:$0xf]
  %v256 = vld [vmem:[%s0 + $0x3c4] sm:$0xf]
  %v257 = vld [vmem:[%s0 + $0x3c8] sm:$0xf]
  %v258 = vld [vmem:[%s0 + $0x3cc] sm:$0xf]
  %v259 = vld [vmem:[%s0 + $0x3d0] sm:$0xf]
  %v260 = vld [vmem:[%s0 + $0x3d4] sm:$0xf]
  %v261 = vld [vmem:[%s0 + $0x3d8] sm:$0xf]
  %v262 = vld [vmem:[%s0 + $0x3dc] sm:$0xf]
  %v263 = vld [vmem:[%s0 + $0x3e0] sm:$0xf]
  %v264 = vld [vmem:[%s0 + $0x3e4] sm:$0xf]
  %v265 = vld [vmem:[%s0 + $0x3e8] sm:$0xf]
  %v266 = vld [vmem:[%s0 + $0x3ec] sm:$0xf]
  %v267 = vld [vmem:[%s0 + $0x3f0] sm:$0xf]
  %v268 = vld [vmem:[%s0 + $0x3f4] sm:$0xf]
  %v269 = vld [vmem:[%s0 + $0x3f8] sm:$0xf]
  %v270 = vld [vmem:[%s0 + $0x3fc] sm:$0xf]
  %v271 = vld [vmem:[%s0 + $0x400] sm:$0xf]
  %v272 = vld [vmem:[%s0 + $0x404] sm:$0xf]
  %v273 = vld [vmem:[%s0 + $0x408] sm:$0xf]
  %v274 = vld [vmem:[%s0 + $0x40c] sm:$0xf]
  %v275 = vld [vmem:[%s0 + $0x410] sm:$0xf]
  %v276 = vld [vmem:[%s0 + $0x414] sm:$0xf]
  %v277 = vld [vmem:[%s0 + $0x418] sm:$0xf]
  %v278 = vld [vmem:[%s0 + $0x41c] sm:$0xf]
  %v279 = vld [vmem:[%s0 + $0x420] sm:$0xf]
  %v280 = vld [vmem:[%s0 + $0x424] sm:$0xf]
  %v281 = vld [vmem:[%s0 + $0x428] sm:$0xf]
  %v282 = vld [vmem:[%s0 + $0x42c] sm:$0xf]
  %v283 = vld [vmem:[%s0 + $0x430] sm:$0xf]
  %v284 = vld [vmem:[%s0 + $0x434] sm:$0xf]
  %v285 = vld [vmem:[%s0 + $0x438] sm:$0xf]
  %v286 = vld [vmem:[%s0 + $0x43c] sm:$0xf]
  %v287 = vld [vmem:[%s0 + $0x440] sm:$0xf]
  %v288 = vld [vmem:[%s0 + $0x444] sm:$0xf]
  %v289 = vld [vmem:[%s0 + $0x448] sm:$0xf]
  %v290 = vld [vmem:[%s0 + $0x44c] sm:$0xf]
  %v291 = vld [vmem:[%s0 + $0x450] sm:$0xf]
  %v292 = vld [vmem:[%s0 + $0x454] sm:$0xf]
  %v293 = vld [vmem:[%s0 + $0x458] sm:$0xf]
  %v294 = vld [vmem:[%s0 + $0x45c] sm:$0xf]
  %v295 = vld [vmem:[%s0 + $0x460] sm:$0xf]
  %v296 = vld [vmem:[%s0 + $0x464] sm:$0xf]
  %v297 = vld [vmem:[%s0 + $0x468] sm:$0xf]
  %v298 = vld [vmem:[%s0 + $0x46c] sm:$0xf]
  %v299 = vld [vmem:[%s0 + $0x470] sm:$0xf]
  %v300 = vld [vmem:[%s0 + $0x474] sm:$0xf]
  %v301 = vld [vmem:[%s0 + $0x478] sm:$0xf]
  %v302 = vld [vmem:[%s0 + $0x47c] sm:$0xf]
  %v303 = vld [vmem:[%s0 + $0x480] sm:$0xf]
  %v304 = vld [vmem:[%s0 + $0x484] sm:$0xf]
  %v305 = vld [vmem:[%s0 + $0x488] sm:$0xf]
  %v306 = vld [vmem:[%s0 + $0x48c] sm:$0xf]
  %v307 = vld [vmem:[%s0 + $0x490] sm:$0xf]
  %v308 = vld [vmem:[%s0 + $0x494] sm:$0xf]
  %v309 = vld [vmem:[%s0 + $0x498] sm:$0xf]
  %v310 = vld [vmem:[%s0 + $0x49c] sm:$0xf]
  %v311 = vld [vmem:[%s0 + $0x4a0] sm:$0xf]
  %v312 = vld [vmem:[%s0 + $0x4a4] sm:$0xf]
  %v313 = vld [vmem:[%s0 + $0x4a8] sm:$0xf]
  %v314 = vld [vmem:[%s0 + $0x4ac] sm:$0xf]
  %v315 = vld [vmem:[%s0 + $0x4b0] sm:$0xf]
  %v316 = vld [vmem:[%s0 + $0x4b4] sm:$0xf]
  %v317 = vld [vmem:[%s0 + $0x4b8] sm:$0xf]
  %v318 = vld [vmem:[%s0 + $0x4bc] sm:$0xf]
  %v319 = vld [vmem:[%s0 + $0x4c0] sm:$0xf]
  %v320 = vld [vmem:[%s0 + $0x4c4] sm:$0xf]
  %v321 = vld [vmem:[%s0 + $0x4c8] sm:$0xf]
  %v322 = vld [vmem:[%s0 + $0x4cc] sm:$0xf]
  %v323 = vld [vmem:[%s0 + $0x4d0] sm:$0xf]
  %v324 = vld [vmem:[%s0 + $0x4d4] sm:$0xf]
  %v325 = vld [vmem:[%s0 + $0x4d8] sm:$0xf]
  %v326 = vld [vmem:[%s0 + $0x4dc] sm:$0xf]
  %v327 = vld [vmem:[%s0 + $0x4e0] sm:$0xf]
  %v328 = vld [vmem:[%s0 + $0x4e4] sm:$0xf]
  %v329 = vld [vmem:[%s0 + $0x4e8] sm:$0xf]
  %v330 = vld [vmem:[%s0 + $0x4ec] sm:$0xf]
  %v331 = vld [vmem:[%s0 + $0x4f0] sm:$0xf]
  %v332 = vld [vmem:[%s0 + $0x4f4] sm:$0xf]
  %v333 = vld [vmem:[%s0 + $0x4f8] sm:$0xf]
  %v334 = vld [vmem:[%s0 + $0x4fc] sm:$0xf]
  %v335 = vld [vmem:[%s0 + $0x500] sm:$0xf]
  %v336 = vld [vmem:[%s0 + $0x504] sm:$0xf]
  %v337 = vld [vmem:[%s0 + $0x508] sm:$0xf]
  %v338 = vld [vmem:[%s0 + $0x50c] sm:$0xf]
  %v339 = vld [vmem:[%s0 + $0x510] sm:$0xf]
  %v340 = vld [vmem:[%s0 + $0x514] sm:$0xf]
  %v341 = vld [vmem:[%s0 + $0x518] sm:$0xf]
  %v342 = vld [vmem:[%s0 + $0x51c] sm:$0xf]
  %v343 = vld [vmem:[%s0 + $0x520] sm:$0xf]
  %v344 = vld [vmem:[%s0 + $0x524] sm:$0xf]
  %v345 = vld [vmem:[%s0 + $0x528] sm:$0xf]
  %v346 = vld [vmem:[%s0 + $0x52c] sm:$0xf]
  %v347 = vld [vmem:[%s0 + $0x530] sm:$0xf]
  %v348 = vld [vmem:[%s0 + $0x534] sm:$0xf]
  %v349 = vld [vmem:[%s0 + $0x538] sm:$0xf]
  %v350 = vld [vmem:[%s0 + $0x53c] sm:$0xf]
  %v351 = vld [vmem:[%s0 + $0x540] sm:$0xf]
  %v352 = vld [vmem:[%s0 + $0x544] sm:$0xf]
  %v353 = vld [vmem:[%s0 + $0x548] sm:$0xf]
  %v354 = vld [vmem:[%s0 + $0x54c] sm:$0xf]
  %v355 = vld [vmem:[%s0 + $0x550] sm:$0xf]
  %v356 = vld [vmem:[%s0 + $0x554] sm:$0xf]
  %v357 = vld [vmem:[%s0 + $0x558] sm:$0xf]
  %v358 = vld [vmem:[%s0 + $0x55c] sm:$0xf]
  %v359 = vld [vmem:[%s0 + $0x560] sm:$0xf]
  %v360 = vld [vmem:[%s0 + $0x564] sm:$0xf]
  %v361 = vld [vmem:[%s0 + $0x568] sm:$0xf]
  %v362 = vld [vmem:[%s0 + $0x56c] sm:$0xf]
  %v363 = vld [vmem:[%s0 + $0x570] sm:$0xf]
  %v364 = vld [vmem:[%s0 + $0x574] sm:$0xf]
  %v365 = vld [vmem:[%s0 + $0x578] sm:$0xf]
  %v366 = vld [vmem:[%s0 + $0x57c] sm:$0xf]
  %v367 = vld [vmem:[%s0 + $0x580] sm:$0xf]
  %v368 = vld [vmem:[%s0 + $0x584] sm:$0xf]
  %v369 = vld [vmem:[%s0 + $0x588] sm:$0xf]
  %v370 = vld [vmem:[%s0 + $0x58c] sm:$0xf]
  %v371 = vld [vmem:[%s0 + $0x590] sm:$0xf]
  %v372 = vld [vmem:[%s0 + $0x594] sm:$0xf]
  %v373 = vld [vmem:[%s0 + $0x598] sm:$0xf]
  %v374 = vld [vmem:[%s0 + $0x59c] sm:$0xf]
  %v375 = vld [vmem:[%s0 + $0x5a0] sm:$0xf]
  %v376 = vld [vmem:[%s0 + $0x5a4] sm:$0xf]
  %v377 = vld [vmem:[%s0 + $0x5a8] sm:$0xf]
  %v378 = vld [vmem:[%s0 + $0x5ac] sm:$0xf]
  %v379 = vld [vmem:[%s0 + $0x5b0] sm:$0xf]
  %v380 = vld [vmem:[%s0 + $0x5b4] sm:$0xf]
  %v381 = vld [vmem:[%s0 + $0x5b8] sm:$0xf]
  %v382 = vld [vmem:[%s0 + $0x5bc] sm:$0xf]
  %v383 = vld [vmem:[%s0 + $0x5c0] sm:$0xf]
  %v384 = vld [vmem:[%s0 + $0x5c4] sm:$0xf]
  %v385 = vld [vmem:[%s0 + $0x5c8] sm:$0xf]
  %v386 = vld [vmem:[%s0 + $0x5cc] sm:$0xf]
  %v387 = vld [vmem:[%s0 + $0x5d0] sm:$0xf]
  %v388 = vld [vmem:[%s0 + $0x5d4] sm:$0xf]
  %v389 = vld [vmem:[%s0 + $0x5d8] sm:$0xf]
  %v390 = vld [vmem:[%s0 + $0x5dc] sm:$0xf]
  %v391 = vld [vmem:[%s0 + $0x5e0] sm:$0xf]
  %v392 = vld [vmem:[%s0 + $0x5e4] sm:$0xf]
  %v393 = vld [vmem:[%s0 + $0x5e8] sm:$0xf]
  %v394 = vld [vmem:[%s0 + $0x5ec] sm:$0xf]
  %v395 = vld [vmem:[%s0 + $0x5f0] sm:$0xf]
  %v396 = vld [vmem:[%s0 + $0x5f4] sm:$0xf]
  %v397 = vld [vmem:[%s0 + $0x5f8] sm:$0xf]
  %v398 = vld [vmem:[%s0 + $0x5fc] sm:$0xf]
  %v399 = vld [vmem:[%s0 + $0x600] sm:$0xf]
  %v400 = vld [vmem:[%s0 + $0x604] sm:$0xf]
  %v401 = vld [vmem:[%s0 + $0x608] sm:$0xf]
  %v402 = vld [vmem:[%s0 + $0x60c] sm:$0xf]
  %v403 = vld [vmem:[%s0 + $0x610] sm:$0xf]
  %v404 = vld [vmem:[%s0 + $0x614] sm:$0xf]
  %v405 = vld [vmem:[%s0 + $0x618] sm:$0xf]
  %v406 = vld [vmem:[%s0 + $0x61c] sm:$0xf]
  %v407 = vld [vmem:[%s0 + $0x620] sm:$0xf]
  %v408 = vld [vmem:[%s0 + $0x624] sm:$0xf]
  %v409 = vld [vmem:[%s0 + $0x628] sm:$0xf]
  %v410 = vld [vmem:[%s0 + $0x62c] sm:$0xf]
  %v411 = vld [vmem:[%s0 + $0x630] sm:$0xf]
  %v412 = vld [vmem:[%s0 + $0x634] sm:$0xf]
  %v413 = vld [vmem:[%s0 + $0x638] sm:$0xf]
  %v414 = vld [vmem:[%s0 + $0x63c] sm:$0xf]
  %v415 = vld [vmem:[%s0 + $0x640] sm:$0xf]
  %v416 = vld [vmem:[%s0 + $0x644] sm:$0xf]
  %v417 = vld [vmem:[%s0 + $0x648] sm:$0xf]
  %v418 = vld [vmem:[%s0 + $0x64c] sm:$0xf]
  %v419 = vld [vmem:[%s0 + $0x650] sm:$0xf]
  %v420 = vld [vmem:[%s0 + $0x654] sm:$0xf]
  %v421 = vld [vmem:[%s0 + $0x658] sm:$0xf]
  %v422 = vld [vmem:[%s0 + $0x65c] sm:$0xf]
  %v423 = vld [vmem:[%s0 + $0x660] sm:$0xf]
  %v424 = vld [vmem:[%s0 + $0x664] sm:$0xf]
  %v425 = vld [vmem:[%s0 + $0x668] sm:$0xf]
  %v426 = vld [vmem:[%s0 + $0x66c] sm:$0xf]
  %v427 = vld [vmem:[%s0 + $0x670] sm:$0xf]
  %v428 = vld [vmem:[%s0 + $0x674] sm:$0xf]
  %v429 = vld [vmem:[%s0 + $0x678] sm:$0xf]
  %v430 = vld [vmem:[%s0 + $0x67c] sm:$0xf]
  %v431 = vld [vmem:[%s0 + $0x680] sm:$0xf]
  %v432 = vld [vmem:[%s0 + $0x684] sm:$0xf]
  %v433 = vld [vmem:[%s0 + $0x688] sm:$0xf]
  %v434 = vld [vmem:[%s0 + $0x68c] sm:$0xf]
  %v435 = vld [vmem:[%s0 + $0x690] sm:$0xf]
  %v436 = vld [vmem:[%s0 + $0x694] sm:$0xf]
  %v437 = vld [vmem:[%s0 + $0x698] sm:$0xf]
  %v438 = vld [vmem:[%s0 + $0x69c] sm:$0xf]
  %v439 = vld [vmem:[%s0 + $0x6a0] sm:$0xf]
  %v440 = vld [vmem:[%s0 + $0x6a4] sm:$0xf]
  %v441 = vld [vmem:[%s0 + $0x6a8] sm:$0xf]
  %v442 = vld [vmem:[%s0 + $0x6ac] sm:$0xf]
  %v443 = vld [vmem:[%s0 + $0x6b0] sm:$0xf]
  %v444 = vld [vmem:[%s0 + $0x6b4] sm:$0xf]
  %v445 = vld [vmem:[%s0 + $0x6b8] sm:$0xf]
  %v446 = vld [vmem:[%s0 + $0x6bc] sm:$0xf]
  %v447 = vld [vmem:[%s0 + $0x6c0] sm:$0xf]
  %v448 = vld [vmem:[%s0 + $0x6c4] sm:$0xf]
  %v449 = vld [vmem:[%s0 + $0x6c8] sm:$0xf]
  %v450 = vld [vmem:[%s0 + $0x6cc] sm:$0xf]
  %v451 = vld [vmem:[%s0 + $0x6d0] sm:$0xf]
  %v452 = vld [vmem:[%s0 + $0x6d4] sm:$0xf]
  %v453 = vld [vmem:[%s0 + $0x6d8] sm:$0xf]
  %v454 = vld [vmem:[%s0 + $0x6dc] sm:$0xf]
  %v455 = vld [vmem:[%s0 + $0x6e0] sm:$0xf]
  %v456 = vld [vmem:[%s0 + $0x6e4] sm:$0xf]
  %v457 = vld [vmem:[%s0 + $0x6e8] sm:$0xf]
  %v458 = vld [vmem:[%s0 + $0x6ec] sm:$0xf]
  %v459 = vld [vmem:[%s0 + $0x6f0] sm:$0xf]
  %v460 = vld [vmem:[%s0 + $0x6f4] sm:$0xf]
  %v461 = vld [vmem:[%s0 + $0x6f8] sm:$0xf]
  %v462 = vld [vmem:[%s0 + $0x6fc] sm:$0xf]
  %v463 = vld [vmem:[%s0 + $0x700] sm:$0xf]
  %v464 = vld [vmem:[%s0 + $0x704] sm:$0xf]
  %v465 = vld [vmem:[%s0 + $0x708] sm:$0xf]
  %v466 = vld [vmem:[%s0 + $0x70c] sm:$0xf]
  %v467 = vld [vmem:[%s0 + $0x710] sm:$0xf]
  %v468 = vld [vmem:[%s0 + $0x714] sm:$0xf]
  %v469 = vld [vmem:[%s0 + $0x718] sm:$0xf]
  %v470 = vld [vmem:[%s0 + $0x71c] sm:$0xf]
  %v471 = vld [vmem:[%s0 + $0x720] sm:$0xf]
  %v472 = vld [vmem:[%s0 + $0x724] sm:$0xf]
  %v473 = vld [vmem:[%s0 + $0x728] sm:$0xf]
  %v474 = vld [vmem:[%s0 + $0x72c] sm:$0xf]
  %v475 = vld [vmem:[%s0 + $0x730] sm:$0xf]
  %v476 = vld [vmem:[%s0 + $0x734] sm:$0xf]
  %v477 = vld [vmem:[%s0 + $0x738] sm:$0xf]
  %v478 = vld [vmem:[%s0 + $0x73c] sm:$0xf]
  %v479 = vld [vmem:[%s0 + $0x740] sm:$0xf]
  %v480 = vld [vmem:[%s0 + $0x744] sm:$0xf]
  %v481 = vld [vmem:[%s0 + $0x748] sm:$0xf]
  %v482 = vld [vmem:[%s0 + $0x74c] sm:$0xf]
  %v483 = vld [vmem:[%s0 + $0x750] sm:$0xf]
  %v484 = vld [vmem:[%s0 + $0x754] sm:$0xf]
  %v485 = vld [vmem:[%s0 + $0x758] sm:$0xf]
  %v486 = vld [vmem:[%s0 + $0x75c] sm:$0xf]
  %v487 = vld [vmem:[%s0 + $0x760] sm:$0xf]
  %v488 = vld [vmem:[%s0 + $0x764] sm:$0xf]
  %v489 = vld [vmem:[%s0 + $0x768] sm:$0xf]
  %v490 = vld [vmem:[%s0 + $0x76c] sm:$0xf]
  %v491 = vld [vmem:[%s0 + $0x770] sm:$0xf]
  %v492 = vld [vmem:[%s0 + $0x774] sm:$0xf]
  %v493 = vld [vmem:[%s0 + $0x778] sm:$0xf]
  %v494 = vld [vmem:[%s0 + $0x77c] sm:$0xf]
  %v495 = vld [vmem:[%s0 + $0x780] sm:$0xf]
  %v496 = vld [vmem:[%s0 + $0x784] sm:$0xf]
  %v497 = vld [vmem:[%s0 + $0x788] sm:$0xf]
  %v498 = vld [vmem:[%s0 + $0x78c] sm:$0xf]
  %v499 = vld [vmem:[%s0 + $0x790] sm:$0xf]
  %v500 = vld [vmem:[%s0 + $0x794] sm:$0xf]
  %v501 = vld [vmem:[%s0 + $0x798] sm:$0xf]
  %v502 = vld [vmem:[%s0 + $0x79c] sm:$0xf]
  %v503 = vld [vmem:[%s0 + $0x7a0] sm:$0xf]
  %v504 = vld [vmem:[%s0 + $0x7a4] sm:$0xf]
  %v505 = vld [vmem:[%s0 + $0x7a8] sm:$0xf]
  %v506 = vld [vmem:[%s0 + $0x7ac] sm:$0xf]
  %v507 = vld [vmem:[%s0 + $0x7b0] sm:$0xf]
  %v508 = vld [vmem:[%s0 + $0x7b4] sm:$0xf]
  %v509 = vld [vmem:[%s0 + $0x7b8] sm:$0xf]
  %v510 = vld [vmem:[%s0 + $0x7bc] sm:$0xf]
  %v511 = vld [vmem:[%s0 + $0x7c0] sm:$0xf]
  %v512 = vld [vmem:[%s0 + $0x7c4] sm:$0xf]
  %v513 = vld [vmem:[%s0 + $0x7c8] sm:$0xf]
  %v514 = vld [vmem:[%s0 + $0x7cc] sm:$0xf]
  %v515 = vld [vmem:[%s0 + $0x7d0] sm:$0xf]
  %v516 = vld [vmem:[%s0 + $0x7d4] sm:$0xf]
  %v517 = vld [vmem:[%s0 + $0x7d8] sm:$0xf]
  %v518 = vld [vmem:[%s0 + $0x7dc] sm:$0xf]
  %v519 = vld [vmem:[%s0 + $0x7e0] sm:$0xf]
  %v520 = vld [vmem:[%s0 + $0x7e4] sm:$0xf]
  %v521 = vld [vmem:[%s0 + $0x7e8] sm:$0xf]
  %v522 = vld [vmem:[%s0 + $0x7ec] sm:$0xf]
  %v523 = vld [vmem:[%s0 + $0x7f0] sm:$0xf]
  %v524 = vld [vmem:[%s0 + $0x7f4] sm:$0xf]
  %v525 = vld [vmem:[%s0 + $0x7f8] sm:$0xf]
  %v526 = vld [vmem:[%s0 + $0x7fc] sm:$0xf]
  %v527 = vld [vmem:[%s0 + $0x800] sm:$0xf]
  %v528 = vld [vmem:[%s0 + $0x804] sm:$0xf]
  %v529 = vld [vmem:[%s0 + $0x808] sm:$0xf]
  %v530 = vld [vmem:[%s0 + $0x80c] sm:$0xf]
  %v531 = vld [vmem:[%s0 + $0x810] sm:$0xf]
  %v532 = vld [vmem:[%s0 + $0x814] sm:$0xf]
  %v533 = vld [vmem:[%s0 + $0x818] sm:$0xf]
  %v534 = vld [vmem:[%s0 + $0x81c] sm:$0xf]
  %v535 = vld [vmem:[%s0 + $0x820] sm:$0xf]
  %v536 = vld [vmem:[%s0 + $0x824] sm:$0xf]
  %v537 = vld [vmem:[%s0 + $0x828] sm:$0xf]
  %v538 = vld [vmem:[%s0 + $0x82c] sm:$0xf]
  %v539 = vld [vmem:[%s0 + $0x830] sm:$0xf]
  %v540 = vld [vmem:[%s0 + $0x834] sm:$0xf]
  %v541 = vld [vmem:[%s0 + $0x838] sm:$0xf]
  %v542 = vld [vmem:[%s0 + $0x83c] sm:$0xf]
  %v543 = vld [vmem:[%s0 + $0x840] sm:$0xf]
  %v544 = vld [vmem:[%s0 + $0x844] sm:$0xf]
  %v545 = vld [vmem:[%s0 + $0x848] sm:$0xf]
  %v546 = vld [vmem:[%s0 + $0x84c] sm:$0xf]
  %v547 = vld [vmem:[%s0 + $0x850] sm:$0xf]
  %v548 = vld [vmem:[%s0 + $0x854] sm:$0xf]
  %v549 = vld [vmem:[%s0 + $0x858] sm:$0xf]
  %v550 = vld [vmem:[%s0 + $0x85c] sm:$0xf]
  %v551 = vld [vmem:[%s0 + $0x860] sm:$0xf]
  %v552 = vld [vmem:[%s0 + $0x864] sm:$0xf]
  %v553 = vld [vmem:[%s0 + $0x868] sm:$0xf]
  %v554 = vld [vmem:[%s0 + $0x86c] sm:$0xf]
  %v555 = vld [vmem:[%s0 + $0x870] sm:$0xf]
  %v556 = vld [vmem:[%s0 + $0x874] sm:$0xf]
  %v557 = vld [vmem:[%s0 + $0x878] sm:$0xf]
  %v558 = vld [vmem:[%s0 + $0x87c] sm:$0xf]
  %v559 = vld [vmem:[%s0 + $0x880] sm:$0xf]
  %v560 = vld [vmem:[%s0 + $0x884] sm:$0xf]
  %v561 = vld [vmem:[%s0 + $0x888] sm:$0xf]
  %v562 = vld [vmem:[%s0 + $0x88c] sm:$0xf]
  %v563 = vld [vmem:[%s0 + $0x890] sm:$0xf]
  %v564 = vld [vmem:[%s0 + $0x894] sm:$0xf]
  %v565 = vld [vmem:[%s0 + $0x898] sm:$0xf]
  %v566 = vld [vmem:[%s0 + $0x89c] sm:$0xf]
  %v567 = vld [vmem:[%s0 + $0x8a0] sm:$0xf]
  %v568 = vld [vmem:[%s0 + $0x8a4] sm:$0xf]
  %v569 = vld [vmem:[%s0 + $0x8a8] sm:$0xf]
  %v570 = vld [vmem:[%s0 + $0x8ac] sm:$0xf]
  %v571 = vld [vmem:[%s0 + $0x8b0] sm:$0xf]
  %v572 = vld [vmem:[%s0 + $0x8b4] sm:$0xf]
  %v573 = vld [vmem:[%s0 + $0x8b8] sm:$0xf]
  %v574 = vld [vmem:[%s0 + $0x8bc] sm:$0xf]
  %v575 = vld [vmem:[%s0 + $0x8c0] sm:$0xf]
  %v576 = vld [vmem:[%s0 + $0x8c4] sm:$0xf]
  %v577 = vld [vmem:[%s0 + $0x8c8] sm:$0xf]
  %v578 = vld [vmem:[%s0 + $0x8cc] sm:$0xf]
  %v579 = vld [vmem:[%s0 + $0x8d0] sm:$0xf]
  %v580 = vld [vmem:[%s0 + $0x8d4] sm:$0xf]
  %v581 = vld [vmem:[%s0 + $0x8d8] sm:$0xf]
  %v582 = vld [vmem:[%s0 + $0x8dc] sm:$0xf]
  %v583 = vld [vmem:[%s0 + $0x8e0] sm:$0xf]
  %v584 = vld [vmem:[%s0 + $0x8e4] sm:$0xf]
  %v585 = vld [vmem:[%s0 + $0x8e8] sm:$0xf]
  %v586 = vld [vmem:[%s0 + $0x8ec] sm:$0xf]
  %v587 = vld [vmem:[%s0 + $0x8f0] sm:$0xf]
  %v588 = vld [vmem:[%s0 + $0x8f4] sm:$0xf]
  %v589 = vld [vmem:[%s0 + $0x8f8] sm:$0xf]
  %v590 = vld [vmem:[%s0 + $0x8fc] sm:$0xf]
  %v591 = vld [vmem:[%s0 + $0x900] sm:$0xf]
  %v592 = vld [vmem:[%s0 + $0x904] sm:$0xf]
  %v593 = vld [vmem:[%s0 + $0x908] sm:$0xf]
  %v594 = vld [vmem:[%s0 + $0x90c] sm:$0xf]
  %v595 = vld [vmem:[%s0 + $0x910] sm:$0xf]
  %v596 = vld [vmem:[%s0 + $0x914] sm:$0xf]
  %v597 = vld [vmem:[%s0 + $0x918] sm:$0xf]
  %v598 = vld [vmem:[%s0 + $0x91c] sm:$0xf]
  %v599 = vld [vmem:[%s0 + $0x920] sm:$0xf]
  %v600 = vld [vmem:[%s0 + $0x924] sm:$0xf]
  %v601 = vld [vmem:[%s0 + $0x928] sm:$0xf]
  %v602 = vld [vmem:[%s0 + $0x92c] sm:$0xf]
  %v603 = vld [vmem:[%s0 + $0x930] sm:$0xf]
  %v604 = vld [vmem:[%s0 + $0x934] sm:$0xf]
  %v605 = vld [vmem:[%s0 + $0x938] sm:$0xf]
  %v606 = vld [vmem:[%s0 + $0x93c] sm:$0xf]
  %v607 = vld [vmem:[%s0 + $0x940] sm:$0xf]
  %v608 = vld [vmem:[%s0 + $0x944] sm:$0xf]
  %v609 = vld [vmem:[%s0 + $0x948] sm:$0xf]
  %v610 = vld [vmem:[%s0 + $0x94c] sm:$0xf]
  %v611 = vld [vmem:[%s0 + $0x950] sm:$0xf]
  %v612 = vld [vmem:[%s0 + $0x954] sm:$0xf]
  %v613 = vld [vmem:[%s0 + $0x958] sm:$0xf]
  %v614 = vld [vmem:[%s0 + $0x95c] sm:$0xf]
  %v615 = vld [vmem:[%s0 + $0x960] sm:$0xf]
  %v616 = vld [vmem:[%s0 + $0x964] sm:$0xf]
  %v617 = vld [vmem:[%s0 + $0x968] sm:$0xf]
  %v618 = vld [vmem:[%s0 + $0x96c] sm:$0xf]
  %v619 = vld [vmem:[%s0 + $0x970] sm:$0xf]
  %v620 = vld [vmem:[%s0 + $0x974] sm:$0xf]
  %v621 = vld [vmem:[%s0 + $0x978] sm:$0xf]
  %v622 = vld [vmem:[%s0 + $0x97c] sm:$0xf]
  %v623 = vld [vmem:[%s0 + $0x980] sm:$0xf]
  %v624 = vld [vmem:[%s0 + $0x984] sm:$0xf]
  %v625 = vld [vmem:[%s0 + $0x988] sm:$0xf]
  %v626 = vld [vmem:[%s0 + $0x98c] sm:$0xf]
  %v627 = vld [vmem:[%s0 + $0x990] sm:$0xf]
  %v628 = vld [vmem:[%s0 + $0x994] sm:$0xf]
  %v629 = vld [vmem:[%s0 + $0x998] sm:$0xf]
  %v630 = vld [vmem:[%s0 + $0x99c] sm:$0xf]
  %v631 = vld [vmem:[%s0 + $0x9a0] sm:$0xf]
  %v632 = vld [vmem:[%s0 + $0x9a4] sm:$0xf]
  %v633 = vld [vmem:[%s0 + $0x9a8] sm:$0xf]
  %v634 = vld [vmem:[%s0 + $0x9ac] sm:$0xf]
  %v635 = vld [vmem:[%s0 + $0x9b0] sm:$0xf]
  %v636 = vld [vmem:[%s0 + $0x9b4] sm:$0xf]
  %v637 = vld [vmem:[%s0 + $0x9b8] sm:$0xf]
  %v638 = vld [vmem:[%s0 + $0x9bc] sm:$0xf]
  %v639 = vld [vmem:[%s0 + $0x9c0] sm:$0xf]
  %v640 = vld [vmem:[%s0 + $0x9c4] sm:$0xf]
  %v641 = vld [vmem:[%s0 + $0x9c8] sm:$0xf]
  %v642 = vld [vmem:[%s0 + $0x9cc] sm:$0xf]
  %v643 = vld [vmem:[%s0 + $0x9d0] sm:$0xf]
  %v644 = vld [vmem:[%s0 + $0x9d4] sm:$0xf]
  %v645 = vld [vmem:[%s0 + $0x9d8] sm:$0xf]
  %v646 = vld [vmem:[%s0 + $0x9dc] sm:$0xf]
  %v647 = vld [vmem:[%s0 + $0x9e0] sm:$0xf]
  %v648 = vld [vmem:[%s0 + $0x9e4] sm:$0xf]
  %v649 = vld [vmem:[%s0 + $0x9e8] sm:$0xf]
  %v650 = vld [vmem:[%s0 + $0x9ec] sm:$0xf]
  %v651 = vld [vmem:[%s0 + $0x9f0] sm:$0xf]
  %v652 = vld [vmem:[%s0 + $0x9f4] sm:$0xf]
  %v653 = vld [vmem:[%s0 + $0x9f8] sm:$0xf]
  %v654 = vld [vmem:[%s0 + $0x9fc] sm:$0xf]
  %v655 = vld [vmem:[%s0 + $0xa00] sm:$0xf]
  %v656 = vld [vmem:[%s0 + $0xa04] sm:$0xf]
  %v657 = vld [vmem:[%s0 + $0xa08] sm:$0xf]
  %v658 = vld [vmem:[%s0 + $0xa0c] sm:$0xf]
  %v659 = vld [vmem:[%s0 + $0xa10] sm:$0xf]
  %v660 = vld [vmem:[%s0 + $0xa14] sm:$0xf]
  %v661 = vld [vmem:[%s0 + $0xa18] sm:$0xf]
  %v662 = vld [vmem:[%s0 + $0xa1c] sm:$0xf]
  %v663 = vld [vmem:[%s0 + $0xa20] sm:$0xf]
  %v664 = vld [vmem:[%s0 + $0xa24] sm:$0xf]
  %v665 = vld [vmem:[%s0 + $0xa28] sm:$0xf]
  %v666 = vld [vmem:[%s0 + $0xa2c] sm:$0xf]
  %v667 = vld [vmem:[%s0 + $0xa30] sm:$0xf]
  %v668 = vld [vmem:[%s0 + $0xa34] sm:$0xf]
  %v669 = vld [vmem:[%s0 + $0xa38] sm:$0xf]
  %v670 = vld [vmem:[%s0 + $0xa3c] sm:$0xf]
  %v671 = vld [vmem:[%s0 + $0xa40] sm:$0xf]
  %v672 = vld [vmem:[%s0 + $0xa44] sm:$0xf]
  %v673 = vld [vmem:[%s0 + $0xa48] sm:$0xf]
  %v674 = vld [vmem:[%s0 + $0xa4c] sm:$0xf]
  %v675 = vld [vmem:[%s0 + $0xa50] sm:$0xf]
  %v676 = vld [vmem:[%s0 + $0xa54] sm:$0xf]
  %v677 = vld [vmem:[%s0 + $0xa58] sm:$0xf]
  %v678 = vld [vmem:[%s0 + $0xa5c] sm:$0xf]
  %v679 = vld [vmem:[%s0 + $0xa60] sm:$0xf]
  %v680 = vld [vmem:[%s0 + $0xa64] sm:$0xf]
  %v681 = vld [vmem:[%s0 + $0xa68] sm:$0xf]
  %v682 = vld [vmem:[%s0 + $0xa6c] sm:$0xf]
  %v683 = vld [vmem:[%s0 + $0xa70] sm:$0xf]
  %v684 = vld [vmem:[%s0 + $0xa74] sm:$0xf]
  %v685 = vld [vmem:[%s0 + $0xa78] sm:$0xf]
  %v686 = vld [vmem:[%s0 + $0xa7c] sm:$0xf]
  %v687 = vld [vmem:[%s0 + $0xa80] sm:$0xf]
  %v688 = vld [vmem:[%s0 + $0xa84] sm:$0xf]
  %v689 = vld [vmem:[%s0 + $0xa88] sm:$0xf]
  %v690 = vld [vmem:[%s0 + $0xa8c] sm:$0xf]
  %v691 = vld [vmem:[%s0 + $0xa90] sm:$0xf]
  %v692 = vld [vmem:[%s0 + $0xa94] sm:$0xf]
  %v693 = vld [vmem:[%s0 + $0xa98] sm:$0xf]
  %v694 = vld [vmem:[%s0 + $0xa9c] sm:$0xf]
  %v695 = vld [vmem:[%s0 + $0xaa0] sm:$0xf]
  %v696 = vld [vmem:[%s0 + $0xaa4] sm:$0xf]
  %v697 = vld [vmem:[%s0 + $0xaa8] sm:$0xf]
  %v698 = vld [vmem:[%s0 + $0xaac] sm:$0xf]
  %v699 = vld [vmem:[%s0 + $0xab0] sm:$0xf]
  %v700 = vld [vmem:[%s0 + $0xab4] sm:$0xf]
  %v701 = vld [vmem:[%s0 + $0xab8] sm:$0xf]
  %v702 = vld [vmem:[%s0 + $0xabc] sm:$0xf]
  %v703 = vld [vmem:[%s0 + $0xac0] sm:$0xf]
  %v704 = vld [vmem:[%s0 + $0xac4] sm:$0xf]
  %v705 = vld [vmem:[%s0 + $0xac8] sm:$0xf]
  %v706 = vld [vmem:[%s0 + $0xacc] sm:$0xf]
  %v707 = vld [vmem:[%s0 + $0xad0] sm:$0xf]
  %v708 = vld [vmem:[%s0 + $0xad4] sm:$0xf]
  %v709 = vld [vmem:[%s0 + $0xad8] sm:$0xf]
  %v710 = vld [vmem:[%s0 + $0xadc] sm:$0xf]
  %v711 = vld [vmem:[%s0 + $0xae0] sm:$0xf]
  %v712 = vld [vmem:[%s0 + $0xae4] sm:$0xf]
  %v713 = vld [vmem:[%s0 + $0xae8] sm:$0xf]
  %v714 = vld [vmem:[%s0 + $0xaec] sm:$0xf]
  %v715 = vld [vmem:[%s0 + $0xaf0] sm:$0xf]
  %v716 = vld [vmem:[%s0 + $0xaf4] sm:$0xf]
  %v717 = vld [vmem:[%s0 + $0xaf8] sm:$0xf]
  %v718 = vld [vmem:[%s0 + $0xafc] sm:$0xf]
  %v719 = vld [vmem:[%s0 + $0xb00] sm:$0xf]
  %v720 = vld [vmem:[%s0 + $0xb04] sm:$0xf]
  %v721 = vld [vmem:[%s0 + $0xb08] sm:$0xf]
  %v722 = vld [vmem:[%s0 + $0xb0c] sm:$0xf]
  %v723 = vld [vmem:[%s0 + $0xb10] sm:$0xf]
  %v724 = vld [vmem:[%s0 + $0xb14] sm:$0xf]
  %v725 = vld [vmem:[%s0 + $0xb18] sm:$0xf]
  %v726 = vld [vmem:[%s0 + $0xb1c] sm:$0xf]
  %v727 = vld [vmem:[%s0 + $0xb20] sm:$0xf]
  %v728 = vld [vmem:[%s0 + $0xb24] sm:$0xf]
  %v729 = vld [vmem:[%s0 + $0xb28] sm:$0xf]
  %v730 = vld [vmem:[%s0 + $0xb2c] sm:$0xf]
  %v731 = vld [vmem:[%s0 + $0xb30] sm:$0xf]
  %v732 = vld [vmem:[%s0 + $0xb34] sm:$0xf]
  %v733 = vld [vmem:[%s0 + $0xb38] sm:$0xf]
  %v734 = vld [vmem:[%s0 + $0xb3c] sm:$0xf]
  %v735 = vld [vmem:[%s0 + $0xb40] sm:$0xf]
  %v736 = vld [vmem:[%s0 + $0xb44] sm:$0xf]
  %v737 = vld [vmem:[%s0 + $0xb48] sm:$0xf]
  %v738 = vld [vmem:[%s0 + $0xb4c] sm:$0xf]
  %v739 = vld [vmem:[%s0 + $0xb50] sm:$0xf]
  %v740 = vld [vmem:[%s0 + $0xb54] sm:$0xf]
  %v741 = vld [vmem:[%s0 + $0xb58] sm:$0xf]
  %v742 = vld [vmem:[%s0 + $0xb5c] sm:$0xf]
  %v743 = vld [vmem:[%s0 + $0xb60] sm:$0xf]
  %v744 = vld [vmem:[%s0 + $0xb64] sm:$0xf]
  %v745 = vld [vmem:[%s0 + $0xb68] sm:$0xf]
  %v746 = vld [vmem:[%s0 + $0xb6c] sm:$0xf]
  %v747 = vld [vmem:[%s0 + $0xb70] sm:$0xf]
  %v748 = vld [vmem:[%s0 + $0xb74] sm:$0xf]
  %v749 = vld [vmem:[%s0 + $0xb78] sm:$0xf]
  %v750 = vld [vmem:[%s0 + $0xb7c] sm:$0xf]
  %v751 = vld [vmem:[%s0 + $0xb80] sm:$0xf]
  %v752 = vld [vmem:[%s0 + $0xb84] sm:$0xf]
  %v753 = vld [vmem:[%s0 + $0xb88] sm:$0xf]
  %v754 = vld [vmem:[%s0 + $0xb8c] sm:$0xf]
  %v755 = vld [vmem:[%s0 + $0xb90] sm:$0xf]
  %v756 = vld [vmem:[%s0 + $0xb94] sm:$0xf]
  %v757 = vld [vmem:[%s0 + $0xb98] sm:$0xf]
  %v758 = vld [vmem:[%s0 + $0xb9c] sm:$0xf]
  %v759 = vld [vmem:[%s0 + $0xba0] sm:$0xf]
  %v760 = vld [vmem:[%s0 + $0xba4] sm:$0xf]
  %v761 = vld [vmem:[%s0 + $0xba8] sm:$0xf]
  %v762 = vld [vmem:[%s0 + $0xbac] sm:$0xf]
  %v763 = vld [vmem:[%s0 + $0xbb0] sm:$0xf]
  %v764 = vld [vmem:[%s0 + $0xbb4] sm:$0xf]
  %v765 = vld [vmem:[%s0 + $0xbb8] sm:$0xf]
  %v766 = vld [vmem:[%s0 + $0xbbc] sm:$0xf]
  %v767 = vld [vmem:[%s0 + $0xbc0] sm:$0xf]
  %v768 = vld [vmem:[%s0 + $0xbc4] sm:$0xf]
  %v769 = vld [vmem:[%s0 + $0xbc8] sm:$0xf]
  %v770 = vld [vmem:[%s0 + $0xbcc] sm:$0xf]
  %v771 = vld [vmem:[%s0 + $0xbd0] sm:$0xf]
  %v772 = vld [vmem:[%s0 + $0xbd4] sm:$0xf]
  %v773 = vld [vmem:[%s0 + $0xbd8] sm:$0xf]
  %v774 = vld [vmem:[%s0 + $0xbdc] sm:$0xf]
  %v775 = vld [vmem:[%s0 + $0xbe0] sm:$0xf]
  %v776 = vld [vmem:[%s0 + $0xbe4] sm:$0xf]
  %v777 = vld [vmem:[%s0 + $0xbe8] sm:$0xf]
  %v778 = vld [vmem:[%s0 + $0xbec] sm:$0xf]
  %v779 = vld [vmem:[%s0 + $0xbf0] sm:$0xf]
  %v780 = vld [vmem:[%s0 + $0xbf4] sm:$0xf]
  %v781 = vld [vmem:[%s0 + $0xbf8] sm:$0xf]
  %v782 = vld [vmem:[%s0 + $0xbfc] sm:$0xf]
  %v783 = vld [vmem:[%s0 + $0xc00] sm:$0xf]
  %v784 = vld [vmem:[%s0 + $0xc04] sm:$0xf]
  %v785 = vld [vmem:[%s0 + $0xc08] sm:$0xf]
  %v786 = vld [vmem:[%s0 + $0xc0c] sm:$0xf]
  %v787 = vld [vmem:[%s0 + $0xc10] sm:$0xf]
  %v788 = vld [vmem:[%s0 + $0xc14] sm:$0xf]
  %v789 = vld [vmem:[%s0 + $0xc18] sm:$0xf]
  %v790 = vld [vmem:[%s0 + $0xc1c] sm:$0xf]
  %v791 = vld [vmem:[%s0 + $0xc20] sm:$0xf]
  %v792 = vld [vmem:[%s0 + $0xc24] sm:$0xf]
  %v793 = vld [vmem:[%s0 + $0xc28] sm:$0xf]
  %v794 = vld [vmem:[%s0 + $0xc2c] sm:$0xf]
  %v795 = vld [vmem:[%s0 + $0xc30] sm:$0xf]
  %v796 = vld [vmem:[%s0 + $0xc34] sm:$0xf]
  %v797 = vld [vmem:[%s0 + $0xc38] sm:$0xf]
  %v798 = vld [vmem:[%s0 + $0xc3c] sm:$0xf]
  %v799 = vld [vmem:[%s0 + $0xc40] sm:$0xf]
  %v800 = vld [vmem:[%s0 + $0xc44] sm:$0xf]
  %v801 = vld [vmem:[%s0 + $0xc48] sm:$0xf]
  %v802 = vld [vmem:[%s0 + $0xc4c] sm:$0xf]
  %v803 = vld [vmem:[%s0 + $0xc50] sm:$0xf]
  %v804 = vld [vmem:[%s0 + $0xc54] sm:$0xf]
  %v805 = vld [vmem:[%s0 + $0xc58] sm:$0xf]
  %v806 = vld [vmem:[%s0 + $0xc5c] sm:$0xf]
  %v807 = vld [vmem:[%s0 + $0xc60] sm:$0xf]
  %v808 = vld [vmem:[%s0 + $0xc64] sm:$0xf]
  %v809 = vld [vmem:[%s0 + $0xc68] sm:$0xf]
  %v810 = vld [vmem:[%s0 + $0xc6c] sm:$0xf]
  %v811 = vld [vmem:[%s0 + $0xc70] sm:$0xf]
  %v812 = vld [vmem:[%s0 + $0xc74] sm:$0xf]
  %v813 = vld [vmem:[%s0 + $0xc78] sm:$0xf]
  %v814 = vld [vmem:[%s0 + $0xc7c] sm:$0xf]
  %v815 = vld [vmem:[%s0 + $0xc80] sm:$0xf]
  %v816 = vld [vmem:[%s0 + $0xc84] sm:$0xf]
  %v817 = vld [vmem:[%s0 + $0xc88] sm:$0xf]
  %v818 = vld [vmem:[%s0 + $0xc8c] sm:$0xf]
  %v819 = vld [vmem:[%s0 + $0xc90] sm:$0xf]
  %v820 = vld [vmem:[%s0 + $0xc94] sm:$0xf]
  %v821 = vld [vmem:[%s0 + $0xc98] sm:$0xf]
  %v822 = vld [vmem:[%s0 + $0xc9c] sm:$0xf]
  %v823 = vld [vmem:[%s0 + $0xca0] sm:$0xf]
  %v824 = vld [vmem:[%s0 + $0xca4] sm:$0xf]
  %v825 = vld [vmem:[%s0 + $0xca8] sm:$0xf]
  %v826 = vld [vmem:[%s0 + $0xcac] sm:$0xf]
  %v827 = vld [vmem:[%s0 + $0xcb0] sm:$0xf]
  %v828 = vld [vmem:[%s0 + $0xcb4] sm:$0xf]
  %v829 = vld [vmem:[%s0 + $0xcb8] sm:$0xf]
  %v830 = vld [vmem:[%s0 + $0xcbc] sm:$0xf]
  %v831 = vld [vmem:[%s0 + $0xcc0] sm:$0xf]
  %v832 = vld [vmem:[%s0 + $0xcc4] sm:$0xf]
  %v833 = vld [vmem:[%s0 + $0xcc8] sm:$0xf]
  %v834 = vld [vmem:[%s0 + $0xccc] sm:$0xf]
  %v835 = vld [vmem:[%s0 + $0xcd0] sm:$0xf]
  %v836 = vld [vmem:[%s0 + $0xcd4] sm:$0xf]
  %v837 = vld [vmem:[%s0 + $0xcd8] sm:$0xf]
  %v838 = vld [vmem:[%s0 + $0xcdc] sm:$0xf]
  %v839 = vld [vmem:[%s0 + $0xce0] sm:$0xf]
  %v840 = vld [vmem:[%s0 + $0xce4] sm:$0xf]
  %v841 = vld [vmem:[%s0 + $0xce8] sm:$0xf]
  %v842 = vld [vmem:[%s0 + $0xcec] sm:$0xf]
  %v843 = vld [vmem:[%s0 + $0xcf0] sm:$0xf]
  %v844 = vld [vmem:[%s0 + $0xcf4] sm:$0xf]
  %v845 = vld [vmem:[%s0 + $0xcf8] sm:$0xf]
  %v846 = vld [vmem:[%s0 + $0xcfc] sm:$0xf]
  %v847 = vld [vmem:[%s0 + $0xd00] sm:$0xf]
  %v848 = vld [vmem:[%s0 + $0xd04] sm:$0xf]
  %v849 = vld [vmem:[%s0 + $0xd08] sm:$0xf]
  %v850 = vld [vmem:[%s0 + $0xd0c] sm:$0xf]
  %v851 = vld [vmem:[%s0 + $0xd10] sm:$0xf]
  %v852 = vld [vmem:[%s0 + $0xd14] sm:$0xf]
  %v853 = vld [vmem:[%s0 + $0xd18] sm:$0xf]
  %v854 = vld [vmem:[%s0 + $0xd1c] sm:$0xf]
  %v855 = vld [vmem:[%s0 + $0xd20] sm:$0xf]
  %v856 = vld [vmem:[%s0 + $0xd24] sm:$0xf]
  %v857 = vld [vmem:[%s0 + $0xd28] sm:$0xf]
  %v858 = vld [vmem:[%s0 + $0xd2c] sm:$0xf]
  %v859 = vld [vmem:[%s0 + $0xd30] sm:$0xf]
  %v860 = vld [vmem:[%s0 + $0xd34] sm:$0xf]
  %v861 = vld [vmem:[%s0 + $0xd38] sm:$0xf]
  %v862 = vld [vmem:[%s0 + $0xd3c] sm:$0xf]
  %v863 = vld [vmem:[%s0 + $0xd40] sm:$0xf]
  %v864 = vld [vmem:[%s0 + $0xd44] sm:$0xf]
  %v865 = vld [vmem:[%s0 + $0xd48] sm:$0xf]
  %v866 = vld [vmem:[%s0 + $0xd4c] sm:$0xf]
  %v867 = vld [vmem:[%s0 + $0xd50] sm:$0xf]
  %v868 = vld [vmem:[%s0 + $0xd54] sm:$0xf]
  %v869 = vld [vmem:[%s0 + $0xd58] sm:$0xf]
  %v870 = vld [vmem:[%s0 + $0xd5c] sm:$0xf]
  %v871 = vld [vmem:[%s0 + $0xd60] sm:$0xf]
  %v872 = vld [vmem:[%s0 + $0xd64] sm:$0xf]
  %v873 = vld [vmem:[%s0 + $0xd68] sm:$0xf]
  %v874 = vld [vmem:[%s0 + $0xd6c] sm:$0xf]
  %v875 = vld [vmem:[%s0 + $0xd70] sm:$0xf]
  %v876 = vld [vmem:[%s0 + $0xd74] sm:$0xf]
  %v877 = vld [vmem:[%s0 + $0xd78] sm:$0xf]
  %v878 = vld [vmem:[%s0 + $0xd7c] sm:$0xf]
  %v879 = vld [vmem:[%s0 + $0xd80] sm:$0xf]
  %v880 = vld [vmem:[%s0 + $0xd84] sm:$0xf]
  %v881 = vld [vmem:[%s0 + $0xd88] sm:$0xf]
  %v882 = vld [vmem:[%s0 + $0xd8c] sm:$0xf]
  %v883 = vld [vmem:[%s0 + $0xd90] sm:$0xf]
  %v884 = vld [vmem:[%s0 + $0xd94] sm:$0xf]
  %v885 = vld [vmem:[%s0 + $0xd98] sm:$0xf]
  %v886 = vld [vmem:[%s0 + $0xd9c] sm:$0xf]
  %v887 = vld [vmem:[%s0 + $0xda0] sm:$0xf]
  %v888 = vld [vmem:[%s0 + $0xda4] sm:$0xf]
  %v889 = vld [vmem:[%s0 + $0xda8] sm:$0xf]
  %v890 = vld [vmem:[%s0 + $0xdac] sm:$0xf]
  %v891 = vld [vmem:[%s0 + $0xdb0] sm:$0xf]
  %v892 = vld [vmem:[%s0 + $0xdb4] sm:$0xf]
  %v893 = vld [vmem:[%s0 + $0xdb8] sm:$0xf]
  %v894 = vld [vmem:[%s0 + $0xdbc] sm:$0xf]
  %v895 = vld [vmem:[%s0 + $0xdc0] sm:$0xf]
  %v896 = vld [vmem:[%s0 + $0xdc4] sm:$0xf]
  %v897 = vld [vmem:[%s0 + $0xdc8] sm:$0xf]
  %v898 = vld [vmem:[%s0 + $0xdcc] sm:$0xf]
  %v899 = vld [vmem:[%s0 + $0xdd0] sm:$0xf]
  %v900 = vld [vmem:[%s0 + $0xdd4] sm:$0xf]
  %v901 = vld [vmem:[%s0 + $0xdd8] sm:$0xf]
  %v902 = vld [vmem:[%s0 + $0xddc] sm:$0xf]
  %v903 = vld [vmem:[%s0 + $0xde0] sm:$0xf]
  %v904 = vld [vmem:[%s0 + $0xde4] sm:$0xf]
  %v905 = vld [vmem:[%s0 + $0xde8] sm:$0xf]
  %v906 = vld [vmem:[%s0 + $0xdec] sm:$0xf]
  %v907 = vld [vmem:[%s0 + $0xdf0] sm:$0xf]
  %v908 = vld [vmem:[%s0 + $0xdf4] sm:$0xf]
  %v909 = vld [vmem:[%s0 + $0xdf8] sm:$0xf]
  %v910 = vld [vmem:[%s0 + $0xdfc] sm:$0xf]
  %v911 = vld [vmem:[%s0 + $0xe00] sm:$0xf]
  %v912 = vld [vmem:[%s0 + $0xe04] sm:$0xf]
  %v913 = vld [vmem:[%s0 + $0xe08] sm:$0xf]
  %v914 = vld [vmem:[%s0 + $0xe0c] sm:$0xf]
  %v915 = vld [vmem:[%s0 + $0xe10] sm:$0xf]
  %v916 = vld [vmem:[%s0 + $0xe14] sm:$0xf]
  %v917 = vld [vmem:[%s0 + $0xe18] sm:$0xf]
  %v918 = vld [vmem:[%s0 + $0xe1c] sm:$0xf]
  %v919 = vld [vmem:[%s0 + $0xe20] sm:$0xf]
  %v920 = vld [vmem:[%s0 + $0xe24] sm:$0xf]
  %v921 = vld [vmem:[%s0 + $0xe28] sm:$0xf]
  %v922 = vld [vmem:[%s0 + $0xe2c] sm:$0xf]
  %v923 = vld [vmem:[%s0 + $0xe30] sm:$0xf]
  %v924 = vld [vmem:[%s0 + $0xe34] sm:$0xf]
  %v925 = vld [vmem:[%s0 + $0xe38] sm:$0xf]
  %v926 = vld [vmem:[%s0 + $0xe3c] sm:$0xf]
  %v927 = vld [vmem:[%s0 + $0xe40] sm:$0xf]
  %v928 = vld [vmem:[%s0 + $0xe44] sm:$0xf]
  %v929 = vld [vmem:[%s0 + $0xe48] sm:$0xf]
  %v930 = vld [vmem:[%s0 + $0xe4c] sm:$0xf]
  %v931 = vld [vmem:[%s0 + $0xe50] sm:$0xf]
  %v932 = vld [vmem:[%s0 + $0xe54] sm:$0xf]
  %v933 = vld [vmem:[%s0 + $0xe58] sm:$0xf]
  %v934 = vld [vmem:[%s0 + $0xe5c] sm:$0xf]
  %v935 = vld [vmem:[%s0 + $0xe60] sm:$0xf]
  %v936 = vld [vmem:[%s0 + $0xe64] sm:$0xf]
  %v937 = vld [vmem:[%s0 + $0xe68] sm:$0xf]
  %v938 = vld [vmem:[%s0 + $0xe6c] sm:$0xf]
  %v939 = vld [vmem:[%s0 + $0xe70] sm:$0xf]
  %v940 = vld [vmem:[%s0 + $0xe74] sm:$0xf]
  %v941 = vld [vmem:[%s0 + $0xe78] sm:$0xf]
  %v942 = vld [vmem:[%s0 + $0xe7c] sm:$0xf]
  %v943 = vld [vmem:[%s0 + $0xe80] sm:$0xf]
  %v944 = vld [vmem:[%s0 + $0xe84] sm:$0xf]
  %v945 = vld [vmem:[%s0 + $0xe88] sm:$0xf]
  %v946 = vld [vmem:[%s0 + $0xe8c] sm:$0xf]
  %v947 = vld [vmem:[%s0 + $0xe90] sm:$0xf]
  %v948 = vld [vmem:[%s0 + $0xe94] sm:$0xf]
  %v949 = vld [vmem:[%s0 + $0xe98] sm:$0xf]
  %v950 = vld [vmem:[%s0 + $0xe9c] sm:$0xf]
  %v951 = vld [vmem:[%s0 + $0xea0] sm:$0xf]
  %v952 = vld [vmem:[%s0 + $0xea4] sm:$0xf]
  %v953 = vld [vmem:[%s0 + $0xea8] sm:$0xf]
  %v954 = vld [vmem:[%s0 + $0xeac] sm:$0xf]
  %v955 = vld [vmem:[%s0 + $0xeb0] sm:$0xf]
  %v956 = vld [vmem:[%s0 + $0xeb4] sm:$0xf]
  %v957 = vld [vmem:[%s0 + $0xeb8] sm:$0xf]
  %v958 = vld [vmem:[%s0 + $0xebc] sm:$0xf]
  %v959 = vld [vmem:[%s0 + $0xec0] sm:$0xf]
  %v960 = vld [vmem:[%s0 + $0xec4] sm:$0xf]
  %v961 = vld [vmem:[%s0 + $0xec8] sm:$0xf]
  %v962 = vld [vmem:[%s0 + $0xecc] sm:$0xf]
  %v963 = vld [vmem:[%s0 + $0xed0] sm:$0xf]
  %v964 = vld [vmem:[%s0 + $0xed4] sm:$0xf]
  %v965 = vld [vmem:[%s0 + $0xed8] sm:$0xf]
  %v966 = vld [vmem:[%s0 + $0xedc] sm:$0xf]
  %v967 = vld [vmem:[%s0 + $0xee0] sm:$0xf]
  %v968 = vld [vmem:[%s0 + $0xee4] sm:$0xf]
  %v969 = vld [vmem:[%s0 + $0xee8] sm:$0xf]
  %v970 = vld [vmem:[%s0 + $0xeec] sm:$0xf]
  %v971 = vld [vmem:[%s0 + $0xef0] sm:$0xf]
  %v972 = vld [vmem:[%s0 + $0xef4] sm:$0xf]
  %v973 = vld [vmem:[%s0 + $0xef8] sm:$0xf]
  %v974 = vld [vmem:[%s0 + $0xefc] sm:$0xf]
  %v975 = vld [vmem:[%s0 + $0xf00] sm:$0xf]
  %v976 = vld [vmem:[%s0 + $0xf04] sm:$0xf]
  %v977 = vld [vmem:[%s0 + $0xf08] sm:$0xf]
  %v978 = vld [vmem:[%s0 + $0xf0c] sm:$0xf]
  %v979 = vld [vmem:[%s1] sm:$0xf]
  %v980 = vld [vmem:[%s1 + $0x4] sm:$0xf]
  %v981 = vld [vmem:[%s1 + $0x8] sm:$0xf]
  %v982 = vld [vmem:[%s1 + $0xc] sm:$0x3]
  %v1947 = vunpack.c.l.b16 %v15
  %v1948 = vunpack.c.l.b16 %v16
  %v1949 = vunpack.c.l.b16 %v17
  %v1950 = vunpack.c.l.b16 %v18
  %v1951 = vunpack.c.l.b16 %v19
  %v1952 = vunpack.c.l.b16 %v20
  %v1953 = vunpack.c.l.b16 %v21
  %v1954 = vunpack.c.l.b16 %v22
  %v1955 = vunpack.c.l.b16 %v23
  %v1956 = vunpack.c.l.b16 %v24
  %v1957 = vunpack.c.l.b16 %v25
  %v1958 = vunpack.c.l.b16 %v26
  %v1959 = vunpack.c.l.b16 %v27
  %v1960 = vunpack.c.l.b16 %v28
  %v1961 = vunpack.c.l.b16 %v29
  %v1962 = vunpack.c.l.b16 %v30
  %v1963 = vunpack.c.l.b16 %v31
  %v1964 = vunpack.c.l.b16 %v32
  %v1965 = vunpack.c.l.b16 %v33
  %v1966 = vunpack.c.l.b16 %v34
  %v1967 = vunpack.c.l.b16 %v35
  %v1968 = vunpack.c.l.b16 %v36
  %v1969 = vunpack.c.l.b16 %v37
  %v1970 = vunpack.c.l.b16 %v38
  %v1971 = vunpack.c.l.b16 %v39
  %v1972 = vunpack.c.l.b16 %v40
  %v1973 = vunpack.c.l.b16 %v41
  %v1974 = vunpack.c.l.b16 %v42
  %v1975 = vunpack.c.l.b16 %v43
  %v1976 = vunpack.c.l.b16 %v44
  %v1977 = vunpack.c.l.b16 %v45
  %v1978 = vunpack.c.l.b16 %v46
  %v1979 = vunpack.c.l.b16 %v47
  %v1980 = vunpack.c.l.b16 %v48
  %v1981 = vunpack.c.l.b16 %v49
  %v1982 = vunpack.c.l.b16 %v50
  %v1983 = vunpack.c.l.b16 %v51
  %v1984 = vunpack.c.l.b16 %v52
  %v1985 = vunpack.c.l.b16 %v53
  %v1986 = vunpack.c.l.b16 %v54
  %v1987 = vunpack.c.l.b16 %v55
  %v1988 = vunpack.c.l.b16 %v56
  %v1989 = vunpack.c.l.b16 %v57
  %v1990 = vunpack.c.l.b16 %v58
  %v1991 = vunpack.c.l.b16 %v59
  %v1992 = vunpack.c.l.b16 %v60
  %v1993 = vunpack.c.l.b16 %v61
  %v1994 = vunpack.c.l.b16 %v62
  %v1995 = vunpack.c.l.b16 %v63
  %v1996 = vunpack.c.l.b16 %v64
  %v1997 = vunpack.c.l.b16 %v65
  %v1998 = vunpack.c.l.b16 %v66
  %v1999 = vunpack.c.l.b16 %v67
  %v2000 = vunpack.c.l.b16 %v68
  %v2001 = vunpack.c.l.b16 %v69
  %v2002 = vunpack.c.l.b16 %v70
  %v2003 = vunpack.c.l.b16 %v71
  %v2004 = vunpack.c.l.b16 %v72
  %v2005 = vunpack.c.l.b16 %v73
  %v2006 = vunpack.c.l.b16 %v74
  %v2007 = vunpack.c.l.b16 %v75
  %v2008 = vunpack.c.l.b16 %v76
  %v2009 = vunpack.c.l.b16 %v77
  %v2010 = vunpack.c.l.b16 %v78
  %v2011 = vunpack.c.l.b16 %v79
  %v2012 = vunpack.c.l.b16 %v80
  %v2013 = vunpack.c.l.b16 %v81
  %v2014 = vunpack.c.l.b16 %v82
  %v2015 = vunpack.c.l.b16 %v83
  %v2016 = vunpack.c.l.b16 %v84
  %v2017 = vunpack.c.l.b16 %v85
  %v2018 = vunpack.c.l.b16 %v86
  %v2019 = vunpack.c.l.b16 %v87
  %v2020 = vunpack.c.l.b16 %v88
  %v2021 = vunpack.c.l.b16 %v89
  %v2022 = vunpack.c.l.b16 %v90
  %v2023 = vunpack.c.l.b16 %v91
  %v2024 = vunpack.c.l.b16 %v92
  %v2025 = vunpack.c.l.b16 %v93
  %v2026 = vunpack.c.l.b16 %v94
  %v2027 = vunpack.c.l.b16 %v95
  %v2028 = vunpack.c.l.b16 %v96
  %v2029 = vunpack.c.l.b16 %v97
  %v2030 = vunpack.c.l.b16 %v98
  %v2031 = vunpack.c.l.b16 %v99
  %v2032 = vunpack.c.l.b16 %v100
  %v2033 = vunpack.c.l.b16 %v101
  %v2034 = vunpack.c.l.b16 %v102
  %v2035 = vunpack.c.l.b16 %v103
  %v2036 = vunpack.c.l.b16 %v104
  %v2037 = vunpack.c.l.b16 %v105
  %v2038 = vunpack.c.l.b16 %v106
  %v2039 = vunpack.c.l.b16 %v107
  %v2040 = vunpack.c.l.b16 %v108
  %v2041 = vunpack.c.l.b16 %v109
  %v2042 = vunpack.c.l.b16 %v110
  %v2043 = vunpack.c.l.b16 %v111
  %v2044 = vunpack.c.l.b16 %v112
  %v2045 = vunpack.c.l.b16 %v113
  %v2046 = vunpack.c.l.b16 %v114
  %v2047 = vunpack.c.l.b16 %v115
  %v2048 = vunpack.c.l.b16 %v116
  %v2049 = vunpack.c.l.b16 %v117
  %v2050 = vunpack.c.l.b16 %v118
  %v2051 = vunpack.c.l.b16 %v119
  %v2052 = vunpack.c.l.b16 %v120
  %v2053 = vunpack.c.l.b16 %v121
  %v2054 = vunpack.c.l.b16 %v122
  %v2055 = vunpack.c.l.b16 %v123
  %v2056 = vunpack.c.l.b16 %v124
  %v2057 = vunpack.c.l.b16 %v125
  %v2058 = vunpack.c.l.b16 %v126
  %v2059 = vunpack.c.l.b16 %v127
  %v2060 = vunpack.c.l.b16 %v128
  %v2061 = vunpack.c.l.b16 %v129
  %v2062 = vunpack.c.l.b16 %v130
  %v2063 = vunpack.c.l.b16 %v131
  %v2064 = vunpack.c.l.b16 %v132
  %v2065 = vunpack.c.l.b16 %v133
  %v2066 = vunpack.c.l.b16 %v134
  %v2067 = vunpack.c.l.b16 %v135
  %v2068 = vunpack.c.l.b16 %v136
  %v2069 = vunpack.c.l.b16 %v137
  %v2070 = vunpack.c.l.b16 %v138
  %v2071 = vunpack.c.l.b16 %v139
  %v2072 = vunpack.c.l.b16 %v140
  %v2073 = vunpack.c.l.b16 %v141
  %v2074 = vunpack.c.l.b16 %v142
  %v2075 = vunpack.c.l.b16 %v143
  %v2076 = vunpack.c.l.b16 %v144
  %v2077 = vunpack.c.l.b16 %v145
  %v2078 = vunpack.c.l.b16 %v146
  %v2079 = vunpack.c.l.b16 %v147
  %v2080 = vunpack.c.l.b16 %v148
  %v2081 = vunpack.c.l.b16 %v149
  %v2082 = vunpack.c.l.b16 %v150
  %v2083 = vunpack.c.l.b16 %v151
  %v2084 = vunpack.c.l.b16 %v152
  %v2085 = vunpack.c.l.b16 %v153
  %v2086 = vunpack.c.l.b16 %v154
  %v2087 = vunpack.c.l.b16 %v155
  %v2088 = vunpack.c.l.b16 %v156
  %v2089 = vunpack.c.l.b16 %v157
  %v2090 = vunpack.c.l.b16 %v158
  %v2091 = vunpack.c.l.b16 %v159
  %v2092 = vunpack.c.l.b16 %v160
  %v2093 = vunpack.c.l.b16 %v161
  %v2094 = vunpack.c.l.b16 %v162
  %v2095 = vunpack.c.l.b16 %v163
  %v2096 = vunpack.c.l.b16 %v164
  %v2097 = vunpack.c.l.b16 %v165
  %v2098 = vunpack.c.l.b16 %v166
  %v2099 = vunpack.c.l.b16 %v167
  %v2100 = vunpack.c.l.b16 %v168
  %v2101 = vunpack.c.l.b16 %v169
  %v2102 = vunpack.c.l.b16 %v170
  %v2103 = vunpack.c.l.b16 %v171
  %v2104 = vunpack.c.l.b16 %v172
  %v2105 = vunpack.c.l.b16 %v173
  %v2106 = vunpack.c.l.b16 %v174
  %v2107 = vunpack.c.l.b16 %v175
  %v2108 = vunpack.c.l.b16 %v176
  %v2109 = vunpack.c.l.b16 %v177
  %v2110 = vunpack.c.l.b16 %v178
  %v2111 = vunpack.c.l.b16 %v179
  %v2112 = vunpack.c.l.b16 %v180
  %v2113 = vunpack.c.l.b16 %v181
  %v2114 = vunpack.c.l.b16 %v182
  %v2115 = vunpack.c.l.b16 %v183
  %v2116 = vunpack.c.l.b16 %v184
  %v2117 = vunpack.c.l.b16 %v185
  %v2118 = vunpack.c.l.b16 %v186
  %v2119 = vunpack.c.l.b16 %v187
  %v2120 = vunpack.c.l.b16 %v188
  %v2121 = vunpack.c.l.b16 %v189
  %v2122 = vunpack.c.l.b16 %v190
  %v2123 = vunpack.c.l.b16 %v191
  %v2124 = vunpack.c.l.b16 %v192
  %v2125 = vunpack.c.l.b16 %v193
  %v2126 = vunpack.c.l.b16 %v194
  %v2127 = vunpack.c.l.b16 %v195
  %v2128 = vunpack.c.l.b16 %v196
  %v2129 = vunpack.c.l.b16 %v197
  %v2130 = vunpack.c.l.b16 %v198
  %v2131 = vunpack.c.l.b16 %v199
  %v2132 = vunpack.c.l.b16 %v200
  %v2133 = vunpack.c.l.b16 %v201
  %v2134 = vunpack.c.l.b16 %v202
  %v2135 = vunpack.c.l.b16 %v203
  %v2136 = vunpack.c.l.b16 %v204
  %v2137 = vunpack.c.l.b16 %v205
  %v2138 = vunpack.c.l.b16 %v206
  %v2139 = vunpack.c.l.b16 %v207
  %v2140 = vunpack.c.l.b16 %v208
  %v2141 = vunpack.c.l.b16 %v209
  %v2142 = vunpack.c.l.b16 %v210
  %v2143 = vunpack.c.l.b16 %v211
  %v2144 = vunpack.c.l.b16 %v212
  %v2145 = vunpack.c.l.b16 %v213
  %v2146 = vunpack.c.l.b16 %v214
  %v2147 = vunpack.c.l.b16 %v215
  %v2148 = vunpack.c.l.b16 %v216
  %v2149 = vunpack.c.l.b16 %v217
  %v2150 = vunpack.c.l.b16 %v218
  %v2151 = vunpack.c.l.b16 %v219
  %v2152 = vunpack.c.l.b16 %v220
  %v2153 = vunpack.c.l.b16 %v221
  %v2154 = vunpack.c.l.b16 %v222
  %v2155 = vunpack.c.l.b16 %v223
  %v2156 = vunpack.c.l.b16 %v224
  %v2157 = vunpack.c.l.b16 %v225
  %v2158 = vunpack.c.l.b16 %v226
  %v2159 = vunpack.c.l.b16 %v227
  %v2160 = vunpack.c.l.b16 %v228
  %v2161 = vunpack.c.l.b16 %v229
  %v2162 = vunpack.c.l.b16 %v230
  %v2163 = vunpack.c.l.b16 %v231
  %v2164 = vunpack.c.l.b16 %v232
  %v2165 = vunpack.c.l.b16 %v233
  %v2166 = vunpack.c.l.b16 %v234
  %v2167 = vunpack.c.l.b16 %v235
  %v2168 = vunpack.c.l.b16 %v236
  %v2169 = vunpack.c.l.b16 %v237
  %v2170 = vunpack.c.l.b16 %v238
  %v2171 = vunpack.c.l.b16 %v239
  %v2172 = vunpack.c.l.b16 %v240
  %v2173 = vunpack.c.l.b16 %v241
  %v2174 = vunpack.c.l.b16 %v242
  %v2175 = vunpack.c.l.b16 %v243
  %v2176 = vunpack.c.l.b16 %v244
  %v2177 = vunpack.c.l.b16 %v245
  %v2178 = vunpack.c.l.b16 %v246
  %v2179 = vunpack.c.l.b16 %v247
  %v2180 = vunpack.c.l.b16 %v248
  %v2181 = vunpack.c.l.b16 %v249
  %v2182 = vunpack.c.l.b16 %v250
  %v2183 = vunpack.c.l.b16 %v251
  %v2184 = vunpack.c.l.b16 %v252
  %v2185 = vunpack.c.l.b16 %v253
  %v2186 = vunpack.c.l.b16 %v254
  %v2187 = vunpack.c.l.b16 %v255
  %v2188 = vunpack.c.l.b16 %v256
  %v2189 = vunpack.c.l.b16 %v257
  %v2190 = vunpack.c.l.b16 %v258
  %v2191 = vunpack.c.l.b16 %v259
  %v2192 = vunpack.c.l.b16 %v260
  %v2193 = vunpack.c.l.b16 %v261
  %v2194 = vunpack.c.l.b16 %v262
  %v2195 = vunpack.c.l.b16 %v263
  %v2196 = vunpack.c.l.b16 %v264
  %v2197 = vunpack.c.l.b16 %v265
  %v2198 = vunpack.c.l.b16 %v266
  %v2199 = vunpack.c.l.b16 %v267
  %v2200 = vunpack.c.l.b16 %v268
  %v2201 = vunpack.c.l.b16 %v269
  %v2202 = vunpack.c.l.b16 %v270
  %v2203 = vunpack.c.l.b16 %v271
  %v2204 = vunpack.c.l.b16 %v272
  %v2205 = vunpack.c.l.b16 %v273
  %v2206 = vunpack.c.l.b16 %v274
  %v2207 = vunpack.c.l.b16 %v275
  %v2208 = vunpack.c.l.b16 %v276
  %v2209 = vunpack.c.l.b16 %v277
  %v2210 = vunpack.c.l.b16 %v278
  %v2211 = vunpack.c.l.b16 %v279
  %v2212 = vunpack.c.l.b16 %v280
  %v2213 = vunpack.c.l.b16 %v281
  %v2214 = vunpack.c.l.b16 %v282
  %v2215 = vunpack.c.l.b16 %v283
  %v2216 = vunpack.c.l.b16 %v284
  %v2217 = vunpack.c.l.b16 %v285
  %v2218 = vunpack.c.l.b16 %v286
  %v2219 = vunpack.c.l.b16 %v287
  %v2220 = vunpack.c.l.b16 %v288
  %v2221 = vunpack.c.l.b16 %v289
  %v2222 = vunpack.c.l.b16 %v290
  %v2223 = vunpack.c.l.b16 %v291
  %v2224 = vunpack.c.l.b16 %v292
  %v2225 = vunpack.c.l.b16 %v293
  %v2226 = vunpack.c.l.b16 %v294
  %v2227 = vunpack.c.l.b16 %v295
  %v2228 = vunpack.c.l.b16 %v296
  %v2229 = vunpack.c.l.b16 %v297
  %v2230 = vunpack.c.l.b16 %v298
  %v2231 = vunpack.c.l.b16 %v299
  %v2232 = vunpack.c.l.b16 %v300
  %v2233 = vunpack.c.l.b16 %v301
  %v2234 = vunpack.c.l.b16 %v302
  %v2235 = vunpack.c.l.b16 %v303
  %v2236 = vunpack.c.l.b16 %v304
  %v2237 = vunpack.c.l.b16 %v305
  %v2238 = vunpack.c.l.b16 %v306
  %v2239 = vunpack.c.l.b16 %v307
  %v2240 = vunpack.c.l.b16 %v308
  %v2241 = vunpack.c.l.b16 %v309
  %v2242 = vunpack.c.l.b16 %v310
  %v2243 = vunpack.c.l.b16 %v311
  %v2244 = vunpack.c.l.b16 %v312
  %v2245 = vunpack.c.l.b16 %v313
  %v2246 = vunpack.c.l.b16 %v314
  %v2247 = vunpack.c.l.b16 %v315
  %v2248 = vunpack.c.l.b16 %v316
  %v2249 = vunpack.c.l.b16 %v317
  %v2250 = vunpack.c.l.b16 %v318
  %v2251 = vunpack.c.l.b16 %v319
  %v2252 = vunpack.c.l.b16 %v320
  %v2253 = vunpack.c.l.b16 %v321
  %v2254 = vunpack.c.l.b16 %v322
  %v2255 = vunpack.c.l.b16 %v323
  %v2256 = vunpack.c.l.b16 %v324
  %v2257 = vunpack.c.l.b16 %v325
  %v2258 = vunpack.c.l.b16 %v326
  %v2259 = vunpack.c.l.b16 %v327
  %v2260 = vunpack.c.l.b16 %v328
  %v2261 = vunpack.c.l.b16 %v329
  %v2262 = vunpack.c.l.b16 %v330
  %v2263 = vunpack.c.l.b16 %v331
  %v2264 = vunpack.c.l.b16 %v332
  %v2265 = vunpack.c.l.b16 %v333
  %v2266 = vunpack.c.l.b16 %v334
  %v2267 = vunpack.c.l.b16 %v335
  %v2268 = vunpack.c.l.b16 %v336
  %v2269 = vunpack.c.l.b16 %v337
  %v2270 = vunpack.c.l.b16 %v338
  %v2271 = vunpack.c.l.b16 %v339
  %v2272 = vunpack.c.l.b16 %v340
  %v2273 = vunpack.c.l.b16 %v341
  %v2274 = vunpack.c.l.b16 %v342
  %v2275 = vunpack.c.l.b16 %v343
  %v2276 = vunpack.c.l.b16 %v344
  %v2277 = vunpack.c.l.b16 %v345
  %v2278 = vunpack.c.l.b16 %v346
  %v2279 = vunpack.c.l.b16 %v347
  %v2280 = vunpack.c.l.b16 %v348
  %v2281 = vunpack.c.l.b16 %v349
  %v2282 = vunpack.c.l.b16 %v350
  %v2283 = vunpack.c.l.b16 %v351
  %v2284 = vunpack.c.l.b16 %v352
  %v2285 = vunpack.c.l.b16 %v353
  %v2286 = vunpack.c.l.b16 %v354
  %v2287 = vunpack.c.l.b16 %v355
  %v2288 = vunpack.c.l.b16 %v356
  %v2289 = vunpack.c.l.b16 %v357
  %v2290 = vunpack.c.l.b16 %v358
  %v2291 = vunpack.c.l.b16 %v359
  %v2292 = vunpack.c.l.b16 %v360
  %v2293 = vunpack.c.l.b16 %v361
  %v2294 = vunpack.c.l.b16 %v362
  %v2295 = vunpack.c.l.b16 %v363
  %v2296 = vunpack.c.l.b16 %v364
  %v2297 = vunpack.c.l.b16 %v365
  %v2298 = vunpack.c.l.b16 %v366
  %v2299 = vunpack.c.l.b16 %v367
  %v2300 = vunpack.c.l.b16 %v368
  %v2301 = vunpack.c.l.b16 %v369
  %v2302 = vunpack.c.l.b16 %v370
  %v2303 = vunpack.c.l.b16 %v371
  %v2304 = vunpack.c.l.b16 %v372
  %v2305 = vunpack.c.l.b16 %v373
  %v2306 = vunpack.c.l.b16 %v374
  %v2307 = vunpack.c.l.b16 %v375
  %v2308 = vunpack.c.l.b16 %v376
  %v2309 = vunpack.c.l.b16 %v377
  %v2310 = vunpack.c.l.b16 %v378
  %v2311 = vunpack.c.l.b16 %v379
  %v2312 = vunpack.c.l.b16 %v380
  %v2313 = vunpack.c.l.b16 %v381
  %v2314 = vunpack.c.l.b16 %v382
  %v2315 = vunpack.c.l.b16 %v383
  %v2316 = vunpack.c.l.b16 %v384
  %v2317 = vunpack.c.l.b16 %v385
  %v2318 = vunpack.c.l.b16 %v386
  %v2319 = vunpack.c.l.b16 %v387
  %v2320 = vunpack.c.l.b16 %v388
  %v2321 = vunpack.c.l.b16 %v389
  %v2322 = vunpack.c.l.b16 %v390
  %v2323 = vunpack.c.l.b16 %v391
  %v2324 = vunpack.c.l.b16 %v392
  %v2325 = vunpack.c.l.b16 %v393
  %v2326 = vunpack.c.l.b16 %v394
  %v2327 = vunpack.c.l.b16 %v395
  %v2328 = vunpack.c.l.b16 %v396
  %v2329 = vunpack.c.l.b16 %v397
  %v2330 = vunpack.c.l.b16 %v398
  %v2331 = vunpack.c.l.b16 %v399
  %v2332 = vunpack.c.l.b16 %v400
  %v2333 = vunpack.c.l.b16 %v401
  %v2334 = vunpack.c.l.b16 %v402
  %v2335 = vunpack.c.l.b16 %v403
  %v2336 = vunpack.c.l.b16 %v404
  %v2337 = vunpack.c.l.b16 %v405
  %v2338 = vunpack.c.l.b16 %v406
  %v2339 = vunpack.c.l.b16 %v407
  %v2340 = vunpack.c.l.b16 %v408
  %v2341 = vunpack.c.l.b16 %v409
  %v2342 = vunpack.c.l.b16 %v410
  %v2343 = vunpack.c.l.b16 %v411
  %v2344 = vunpack.c.l.b16 %v412
  %v2345 = vunpack.c.l.b16 %v413
  %v2346 = vunpack.c.l.b16 %v414
  %v2347 = vunpack.c.l.b16 %v415
  %v2348 = vunpack.c.l.b16 %v416
  %v2349 = vunpack.c.l.b16 %v417
  %v2350 = vunpack.c.l.b16 %v418
  %v2351 = vunpack.c.l.b16 %v419
  %v2352 = vunpack.c.l.b16 %v420
  %v2353 = vunpack.c.l.b16 %v421
  %v2354 = vunpack.c.l.b16 %v422
  %v2355 = vunpack.c.l.b16 %v423
  %v2356 = vunpack.c.l.b16 %v424
  %v2357 = vunpack.c.l.b16 %v425
  %v2358 = vunpack.c.l.b16 %v426
  %v2359 = vunpack.c.l.b16 %v427
  %v2360 = vunpack.c.l.b16 %v428
  %v2361 = vunpack.c.l.b16 %v429
  %v2362 = vunpack.c.l.b16 %v430
  %v2363 = vunpack.c.l.b16 %v431
  %v2364 = vunpack.c.l.b16 %v432
  %v2365 = vunpack.c.l.b16 %v433
  %v2366 = vunpack.c.l.b16 %v434
  %v2367 = vunpack.c.l.b16 %v435
  %v2368 = vunpack.c.l.b16 %v436
  %v2369 = vunpack.c.l.b16 %v437
  %v2370 = vunpack.c.l.b16 %v438
  %v2371 = vunpack.c.l.b16 %v439
  %v2372 = vunpack.c.l.b16 %v440
  %v2373 = vunpack.c.l.b16 %v441
  %v2374 = vunpack.c.l.b16 %v442
  %v2375 = vunpack.c.l.b16 %v443
  %v2376 = vunpack.c.l.b16 %v444
  %v2377 = vunpack.c.l.b16 %v445
  %v2378 = vunpack.c.l.b16 %v446
  %v2379 = vunpack.c.l.b16 %v447
  %v2380 = vunpack.c.l.b16 %v448
  %v2381 = vunpack.c.l.b16 %v449
  %v2382 = vunpack.c.l.b16 %v450
  %v2383 = vunpack.c.l.b16 %v451
  %v2384 = vunpack.c.l.b16 %v452
  %v2385 = vunpack.c.l.b16 %v453
  %v2386 = vunpack.c.l.b16 %v454
  %v2387 = vunpack.c.l.b16 %v455
  %v2388 = vunpack.c.l.b16 %v456
  %v2389 = vunpack.c.l.b16 %v457
  %v2390 = vunpack.c.l.b16 %v458
  %v2391 = vunpack.c.l.b16 %v459
  %v2392 = vunpack.c.l.b16 %v460
  %v2393 = vunpack.c.l.b16 %v461
  %v2394 = vunpack.c.l.b16 %v462
  %v2395 = vunpack.c.l.b16 %v463
  %v2396 = vunpack.c.l.b16 %v464
  %v2397 = vunpack.c.l.b16 %v465
  %v2398 = vunpack.c.l.b16 %v466
  %v2399 = vunpack.c.l.b16 %v467
  %v2400 = vunpack.c.l.b16 %v468
  %v2401 = vunpack.c.l.b16 %v469
  %v2402 = vunpack.c.l.b16 %v470
  %v2403 = vunpack.c.l.b16 %v471
  %v2404 = vunpack.c.l.b16 %v472
  %v2405 = vunpack.c.l.b16 %v473
  %v2406 = vunpack.c.l.b16 %v474
  %v2407 = vunpack.c.l.b16 %v475
  %v2408 = vunpack.c.l.b16 %v476
  %v2409 = vunpack.c.l.b16 %v477
  %v2410 = vunpack.c.l.b16 %v478
  %v2411 = vunpack.c.l.b16 %v479
  %v2412 = vunpack.c.l.b16 %v480
  %v2413 = vunpack.c.l.b16 %v481
  %v2414 = vunpack.c.l.b16 %v482
  %v2415 = vunpack.c.l.b16 %v483
  %v2416 = vunpack.c.l.b16 %v484
  %v2417 = vunpack.c.l.b16 %v485
  %v2418 = vunpack.c.l.b16 %v486
  %v2419 = vunpack.c.l.b16 %v487
  %v2420 = vunpack.c.l.b16 %v488
  %v2421 = vunpack.c.l.b16 %v489
  %v2422 = vunpack.c.l.b16 %v490
  %v2423 = vunpack.c.l.b16 %v491
  %v2424 = vunpack.c.l.b16 %v492
  %v2425 = vunpack.c.l.b16 %v493
  %v2426 = vunpack.c.l.b16 %v494
  %v2427 = vunpack.c.l.b16 %v495
  %v2428 = vunpack.c.l.b16 %v496
  %v2429 = vunpack.c.l.b16 %v497
  %v2430 = vunpack.c.l.b16 %v498
  %v2431 = vunpack.c.l.b16 %v499
  %v2432 = vunpack.c.l.b16 %v500
  %v2433 = vunpack.c.l.b16 %v501
  %v2434 = vunpack.c.l.b16 %v502
  %v2435 = vunpack.c.l.b16 %v503
  %v2436 = vunpack.c.l.b16 %v504
  %v2437 = vunpack.c.l.b16 %v505
  %v2438 = vunpack.c.l.b16 %v506
  %v2439 = vunpack.c.l.b16 %v507
  %v2440 = vunpack.c.l.b16 %v508
  %v2441 = vunpack.c.l.b16 %v509
  %v2442 = vunpack.c.l.b16 %v510
  %v2443 = vunpack.c.l.b16 %v511
  %v2444 = vunpack.c.l.b16 %v512
  %v2445 = vunpack.c.l.b16 %v513
  %v2446 = vunpack.c.l.b16 %v514
  %v2447 = vunpack.c.l.b16 %v515
  %v2448 = vunpack.c.l.b16 %v516
  %v2449 = vunpack.c.l.b16 %v517
  %v2450 = vunpack.c.l.b16 %v518
  %v2451 = vunpack.c.l.b16 %v519
  %v2452 = vunpack.c.l.b16 %v520
  %v2453 = vunpack.c.l.b16 %v521
  %v2454 = vunpack.c.l.b16 %v522
  %v2455 = vunpack.c.l.b16 %v523
  %v2456 = vunpack.c.l.b16 %v524
  %v2457 = vunpack.c.l.b16 %v525
  %v2458 = vunpack.c.l.b16 %v526
  %v2459 = vunpack.c.l.b16 %v527
  %v2460 = vunpack.c.l.b16 %v528
  %v2461 = vunpack.c.l.b16 %v529
  %v2462 = vunpack.c.l.b16 %v530
  %v2463 = vunpack.c.l.b16 %v531
  %v2464 = vunpack.c.l.b16 %v532
  %v2465 = vunpack.c.l.b16 %v533
  %v2466 = vunpack.c.l.b16 %v534
  %v2467 = vunpack.c.l.b16 %v535
  %v2468 = vunpack.c.l.b16 %v536
  %v2469 = vunpack.c.l.b16 %v537
  %v2470 = vunpack.c.l.b16 %v538
  %v2471 = vunpack.c.l.b16 %v539
  %v2472 = vunpack.c.l.b16 %v540
  %v2473 = vunpack.c.l.b16 %v541
  %v2474 = vunpack.c.l.b16 %v542
  %v2475 = vunpack.c.l.b16 %v543
  %v2476 = vunpack.c.l.b16 %v544
  %v2477 = vunpack.c.l.b16 %v545
  %v2478 = vunpack.c.l.b16 %v546
  %v2479 = vunpack.c.l.b16 %v547
  %v2480 = vunpack.c.l.b16 %v548
  %v2481 = vunpack.c.l.b16 %v549
  %v2482 = vunpack.c.l.b16 %v550
  %v2483 = vunpack.c.l.b16 %v551
  %v2484 = vunpack.c.l.b16 %v552
  %v2485 = vunpack.c.l.b16 %v553
  %v2486 = vunpack.c.l.b16 %v554
  %v2487 = vunpack.c.l.b16 %v555
  %v2488 = vunpack.c.l.b16 %v556
  %v2489 = vunpack.c.l.b16 %v557
  %v2490 = vunpack.c.l.b16 %v558
  %v2491 = vunpack.c.l.b16 %v559
  %v2492 = vunpack.c.l.b16 %v560
  %v2493 = vunpack.c.l.b16 %v561
  %v2494 = vunpack.c.l.b16 %v562
  %v2495 = vunpack.c.l.b16 %v563
  %v2496 = vunpack.c.l.b16 %v564
  %v2497 = vunpack.c.l.b16 %v565
  %v2498 = vunpack.c.l.b16 %v566
  %v2499 = vunpack.c.l.b16 %v567
  %v2500 = vunpack.c.l.b16 %v568
  %v2501 = vunpack.c.l.b16 %v569
  %v2502 = vunpack.c.l.b16 %v570
  %v2503 = vunpack.c.l.b16 %v571
  %v2504 = vunpack.c.l.b16 %v572
  %v2505 = vunpack.c.l.b16 %v573
  %v2506 = vunpack.c.l.b16 %v574
  %v2507 = vunpack.c.l.b16 %v575
  %v2508 = vunpack.c.l.b16 %v576
  %v2509 = vunpack.c.l.b16 %v577
  %v2510 = vunpack.c.l.b16 %v578
  %v2511 = vunpack.c.l.b16 %v579
  %v2512 = vunpack.c.l.b16 %v580
  %v2513 = vunpack.c.l.b16 %v581
  %v2514 = vunpack.c.l.b16 %v582
  %v2515 = vunpack.c.l.b16 %v583
  %v2516 = vunpack.c.l.b16 %v584
  %v2517 = vunpack.c.l.b16 %v585
  %v2518 = vunpack.c.l.b16 %v586
  %v2519 = vunpack.c.l.b16 %v587
  %v2520 = vunpack.c.l.b16 %v588
  %v2521 = vunpack.c.l.b16 %v589
  %v2522 = vunpack.c.l.b16 %v590
  %v2523 = vunpack.c.l.b16 %v591
  %v2524 = vunpack.c.l.b16 %v592
  %v2525 = vunpack.c.l.b16 %v593
  %v2526 = vunpack.c.l.b16 %v594
  %v2527 = vunpack.c.l.b16 %v595
  %v2528 = vunpack.c.l.b16 %v596
  %v2529 = vunpack.c.l.b16 %v597
  %v2530 = vunpack.c.l.b16 %v598
  %v2531 = vunpack.c.l.b16 %v599
  %v2532 = vunpack.c.l.b16 %v600
  %v2533 = vunpack.c.l.b16 %v601
  %v2534 = vunpack.c.l.b16 %v602
  %v2535 = vunpack.c.l.b16 %v603
  %v2536 = vunpack.c.l.b16 %v604
  %v2537 = vunpack.c.l.b16 %v605
  %v2538 = vunpack.c.l.b16 %v606
  %v2539 = vunpack.c.l.b16 %v607
  %v2540 = vunpack.c.l.b16 %v608
  %v2541 = vunpack.c.l.b16 %v609
  %v2542 = vunpack.c.l.b16 %v610
  %v2543 = vunpack.c.l.b16 %v611
  %v2544 = vunpack.c.l.b16 %v612
  %v2545 = vunpack.c.l.b16 %v613
  %v2546 = vunpack.c.l.b16 %v614
  %v2547 = vunpack.c.l.b16 %v615
  %v2548 = vunpack.c.l.b16 %v616
  %v2549 = vunpack.c.l.b16 %v617
  %v2550 = vunpack.c.l.b16 %v618
  %v2551 = vunpack.c.l.b16 %v619
  %v2552 = vunpack.c.l.b16 %v620
  %v2553 = vunpack.c.l.b16 %v621
  %v2554 = vunpack.c.l.b16 %v622
  %v2555 = vunpack.c.l.b16 %v623
  %v2556 = vunpack.c.l.b16 %v624
  %v2557 = vunpack.c.l.b16 %v625
  %v2558 = vunpack.c.l.b16 %v626
  %v2559 = vunpack.c.l.b16 %v627
  %v2560 = vunpack.c.l.b16 %v628
  %v2561 = vunpack.c.l.b16 %v629
  %v2562 = vunpack.c.l.b16 %v630
  %v2563 = vunpack.c.l.b16 %v631
  %v2564 = vunpack.c.l.b16 %v632
  %v2565 = vunpack.c.l.b16 %v633
  %v2566 = vunpack.c.l.b16 %v634
  %v2567 = vunpack.c.l.b16 %v635
  %v2568 = vunpack.c.l.b16 %v636
  %v2569 = vunpack.c.l.b16 %v637
  %v2570 = vunpack.c.l.b16 %v638
  %v2571 = vunpack.c.l.b16 %v639
  %v2572 = vunpack.c.l.b16 %v640
  %v2573 = vunpack.c.l.b16 %v641
  %v2574 = vunpack.c.l.b16 %v642
  %v2575 = vunpack.c.l.b16 %v643
  %v2576 = vunpack.c.l.b16 %v644
  %v2577 = vunpack.c.l.b16 %v645
  %v2578 = vunpack.c.l.b16 %v646
  %v2579 = vunpack.c.l.b16 %v647
  %v2580 = vunpack.c.l.b16 %v648
  %v2581 = vunpack.c.l.b16 %v649
  %v2582 = vunpack.c.l.b16 %v650
  %v2583 = vunpack.c.l.b16 %v651
  %v2584 = vunpack.c.l.b16 %v652
  %v2585 = vunpack.c.l.b16 %v653
  %v2586 = vunpack.c.l.b16 %v654
  %v2587 = vunpack.c.l.b16 %v655
  %v2588 = vunpack.c.l.b16 %v656
  %v2589 = vunpack.c.l.b16 %v657
  %v2590 = vunpack.c.l.b16 %v658
  %v2591 = vunpack.c.l.b16 %v659
  %v2592 = vunpack.c.l.b16 %v660
  %v2593 = vunpack.c.l.b16 %v661
  %v2594 = vunpack.c.l.b16 %v662
  %v2595 = vunpack.c.l.b16 %v663
  %v2596 = vunpack.c.l.b16 %v664
  %v2597 = vunpack.c.l.b16 %v665
  %v2598 = vunpack.c.l.b16 %v666
  %v2599 = vunpack.c.l.b16 %v667
  %v2600 = vunpack.c.l.b16 %v668
  %v2601 = vunpack.c.l.b16 %v669
  %v2602 = vunpack.c.l.b16 %v670
  %v2603 = vunpack.c.l.b16 %v671
  %v2604 = vunpack.c.l.b16 %v672
  %v2605 = vunpack.c.l.b16 %v673
  %v2606 = vunpack.c.l.b16 %v674
  %v2607 = vunpack.c.l.b16 %v675
  %v2608 = vunpack.c.l.b16 %v676
  %v2609 = vunpack.c.l.b16 %v677
  %v2610 = vunpack.c.l.b16 %v678
  %v2611 = vunpack.c.l.b16 %v679
  %v2612 = vunpack.c.l.b16 %v680
  %v2613 = vunpack.c.l.b16 %v681
  %v2614 = vunpack.c.l.b16 %v682
  %v2615 = vunpack.c.l.b16 %v683
  %v2616 = vunpack.c.l.b16 %v684
  %v2617 = vunpack.c.l.b16 %v685
  %v2618 = vunpack.c.l.b16 %v686
  %v2619 = vunpack.c.l.b16 %v687
  %v2620 = vunpack.c.l.b16 %v688
  %v2621 = vunpack.c.l.b16 %v689
  %v2622 = vunpack.c.l.b16 %v690
  %v2623 = vunpack.c.l.b16 %v691
  %v2624 = vunpack.c.l.b16 %v692
  %v2625 = vunpack.c.l.b16 %v693
  %v2626 = vunpack.c.l.b16 %v694
  %v2627 = vunpack.c.l.b16 %v695
  %v2628 = vunpack.c.l.b16 %v696
  %v2629 = vunpack.c.l.b16 %v697
  %v2630 = vunpack.c.l.b16 %v698
  %v2631 = vunpack.c.l.b16 %v699
  %v2632 = vunpack.c.l.b16 %v700
  %v2633 = vunpack.c.l.b16 %v701
  %v2634 = vunpack.c.l.b16 %v702
  %v2635 = vunpack.c.l.b16 %v703
  %v2636 = vunpack.c.l.b16 %v704
  %v2637 = vunpack.c.l.b16 %v705
  %v2638 = vunpack.c.l.b16 %v706
  %v2639 = vunpack.c.l.b16 %v707
  %v2640 = vunpack.c.l.b16 %v708
  %v2641 = vunpack.c.l.b16 %v709
  %v2642 = vunpack.c.l.b16 %v710
  %v2643 = vunpack.c.l.b16 %v711
  %v2644 = vunpack.c.l.b16 %v712
  %v2645 = vunpack.c.l.b16 %v713
  %v2646 = vunpack.c.l.b16 %v714
  %v2647 = vunpack.c.l.b16 %v715
  %v2648 = vunpack.c.l.b16 %v716
  %v2649 = vunpack.c.l.b16 %v717
  %v2650 = vunpack.c.l.b16 %v718
  %v2651 = vunpack.c.l.b16 %v719
  %v2652 = vunpack.c.l.b16 %v720
  %v2653 = vunpack.c.l.b16 %v721
  %v2654 = vunpack.c.l.b16 %v722
  %v2655 = vunpack.c.l.b16 %v723
  %v2656 = vunpack.c.l.b16 %v724
  %v2657 = vunpack.c.l.b16 %v725
  %v2658 = vunpack.c.l.b16 %v726
  %v2659 = vunpack.c.l.b16 %v727
  %v2660 = vunpack.c.l.b16 %v728
  %v2661 = vunpack.c.l.b16 %v729
  %v2662 = vunpack.c.l.b16 %v730
  %v2663 = vunpack.c.l.b16 %v731
  %v2664 = vunpack.c.l.b16 %v732
  %v2665 = vunpack.c.l.b16 %v733
  %v2666 = vunpack.c.l.b16 %v734
  %v2667 = vunpack.c.l.b16 %v735
  %v2668 = vunpack.c.l.b16 %v736
  %v2669 = vunpack.c.l.b16 %v737
  %v2670 = vunpack.c.l.b16 %v738
  %v2671 = vunpack.c.l.b16 %v739
  %v2672 = vunpack.c.l.b16 %v740
  %v2673 = vunpack.c.l.b16 %v741
  %v2674 = vunpack.c.l.b16 %v742
  %v2675 = vunpack.c.l.b16 %v743
  %v2676 = vunpack.c.l.b16 %v744
  %v2677 = vunpack.c.l.b16 %v745
  %v2678 = vunpack.c.l.b16 %v746
  %v2679 = vunpack.c.l.b16 %v747
  %v2680 = vunpack.c.l.b16 %v748
  %v2681 = vunpack.c.l.b16 %v749
  %v2682 = vunpack.c.l.b16 %v750
  %v2683 = vunpack.c.l.b16 %v751
  %v2684 = vunpack.c.l.b16 %v752
  %v2685 = vunpack.c.l.b16 %v753
  %v2686 = vunpack.c.l.b16 %v754
  %v2687 = vunpack.c.l.b16 %v755
  %v2688 = vunpack.c.l.b16 %v756
  %v2689 = vunpack.c.l.b16 %v757
  %v2690 = vunpack.c.l.b16 %v758
  %v2691 = vunpack.c.l.b16 %v759
  %v2692 = vunpack.c.l.b16 %v760
  %v2693 = vunpack.c.l.b16 %v761
  %v2694 = vunpack.c.l.b16 %v762
  %v2695 = vunpack.c.l.b16 %v763
  %v2696 = vunpack.c.l.b16 %v764
  %v2697 = vunpack.c.l.b16 %v765
  %v2698 = vunpack.c.l.b16 %v766
  %v2699 = vunpack.c.l.b16 %v767
  %v2700 = vunpack.c.l.b16 %v768
  %v2701 = vunpack.c.l.b16 %v769
  %v2702 = vunpack.c.l.b16 %v770
  %v2703 = vunpack.c.l.b16 %v771
  %v2704 = vunpack.c.l.b16 %v772
  %v2705 = vunpack.c.l.b16 %v773
  %v2706 = vunpack.c.l.b16 %v774
  %v2707 = vunpack.c.l.b16 %v775
  %v2708 = vunpack.c.l.b16 %v776
  %v2709 = vunpack.c.l.b16 %v777
  %v2710 = vunpack.c.l.b16 %v778
  %v2711 = vunpack.c.l.b16 %v779
  %v2712 = vunpack.c.l.b16 %v780
  %v2713 = vunpack.c.l.b16 %v781
  %v2714 = vunpack.c.l.b16 %v782
  %v2715 = vunpack.c.l.b16 %v783
  %v2716 = vunpack.c.l.b16 %v784
  %v2717 = vunpack.c.l.b16 %v785
  %v2718 = vunpack.c.l.b16 %v786
  %v2719 = vunpack.c.l.b16 %v787
  %v2720 = vunpack.c.l.b16 %v788
  %v2721 = vunpack.c.l.b16 %v789
  %v2722 = vunpack.c.l.b16 %v790
  %v2723 = vunpack.c.l.b16 %v791
  %v2724 = vunpack.c.l.b16 %v792
  %v2725 = vunpack.c.l.b16 %v793
  %v2726 = vunpack.c.l.b16 %v794
  %v2727 = vunpack.c.l.b16 %v795
  %v2728 = vunpack.c.l.b16 %v796
  %v2729 = vunpack.c.l.b16 %v797
  %v2730 = vunpack.c.l.b16 %v798
  %v2731 = vunpack.c.l.b16 %v799
  %v2732 = vunpack.c.l.b16 %v800
  %v2733 = vunpack.c.l.b16 %v801
  %v2734 = vunpack.c.l.b16 %v802
  %v2735 = vunpack.c.l.b16 %v803
  %v2736 = vunpack.c.l.b16 %v804
  %v2737 = vunpack.c.l.b16 %v805
  %v2738 = vunpack.c.l.b16 %v806
  %v2739 = vunpack.c.l.b16 %v807
  %v2740 = vunpack.c.l.b16 %v808
  %v2741 = vunpack.c.l.b16 %v809
  %v2742 = vunpack.c.l.b16 %v810
  %v2743 = vunpack.c.l.b16 %v811
  %v2744 = vunpack.c.l.b16 %v812
  %v2745 = vunpack.c.l.b16 %v813
  %v2746 = vunpack.c.l.b16 %v814
  %v2747 = vunpack.c.l.b16 %v815
  %v2748 = vunpack.c.l.b16 %v816
  %v2749 = vunpack.c.l.b16 %v817
  %v2750 = vunpack.c.l.b16 %v818
  %v2751 = vunpack.c.l.b16 %v819
  %v2752 = vunpack.c.l.b16 %v820
  %v2753 = vunpack.c.l.b16 %v821
  %v2754 = vunpack.c.l.b16 %v822
  %v2755 = vunpack.c.l.b16 %v823
  %v2756 = vunpack.c.l.b16 %v824
  %v2757 = vunpack.c.l.b16 %v825
  %v2758 = vunpack.c.l.b16 %v826
  %v2759 = vunpack.c.l.b16 %v827
  %v2760 = vunpack.c.l.b16 %v828
  %v2761 = vunpack.c.l.b16 %v829
  %v2762 = vunpack.c.l.b16 %v830
  %v2763 = vunpack.c.l.b16 %v831
  %v2764 = vunpack.c.l.b16 %v832
  %v2765 = vunpack.c.l.b16 %v833
  %v2766 = vunpack.c.l.b16 %v834
  %v2767 = vunpack.c.l.b16 %v835
  %v2768 = vunpack.c.l.b16 %v836
  %v2769 = vunpack.c.l.b16 %v837
  %v2770 = vunpack.c.l.b16 %v838
  %v2771 = vunpack.c.l.b16 %v839
  %v2772 = vunpack.c.l.b16 %v840
  %v2773 = vunpack.c.l.b16 %v841
  %v2774 = vunpack.c.l.b16 %v842
  %v2775 = vunpack.c.l.b16 %v843
  %v2776 = vunpack.c.l.b16 %v844
  %v2777 = vunpack.c.l.b16 %v845
  %v2778 = vunpack.c.l.b16 %v846
  %v2779 = vunpack.c.l.b16 %v847
  %v2780 = vunpack.c.l.b16 %v848
  %v2781 = vunpack.c.l.b16 %v849
  %v2782 = vunpack.c.l.b16 %v850
  %v2783 = vunpack.c.l.b16 %v851
  %v2784 = vunpack.c.l.b16 %v852
  %v2785 = vunpack.c.l.b16 %v853
  %v2786 = vunpack.c.l.b16 %v854
  %v2787 = vunpack.c.l.b16 %v855
  %v2788 = vunpack.c.l.b16 %v856
  %v2789 = vunpack.c.l.b16 %v857
  %v2790 = vunpack.c.l.b16 %v858
  %v2791 = vunpack.c.l.b16 %v859
  %v2792 = vunpack.c.l.b16 %v860
  %v2793 = vunpack.c.l.b16 %v861
  %v2794 = vunpack.c.l.b16 %v862
  %v2795 = vunpack.c.l.b16 %v863
  %v2796 = vunpack.c.l.b16 %v864
  %v2797 = vunpack.c.l.b16 %v865
  %v2798 = vunpack.c.l.b16 %v866
  %v2799 = vunpack.c.l.b16 %v867
  %v2800 = vunpack.c.l.b16 %v868
  %v2801 = vunpack.c.l.b16 %v869
  %v2802 = vunpack.c.l.b16 %v870
  %v2803 = vunpack.c.l.b16 %v871
  %v2804 = vunpack.c.l.b16 %v872
  %v2805 = vunpack.c.l.b16 %v873
  %v2806 = vunpack.c.l.b16 %v874
  %v2807 = vunpack.c.l.b16 %v875
  %v2808 = vunpack.c.l.b16 %v876
  %v2809 = vunpack.c.l.b16 %v877
  %v2810 = vunpack.c.l.b16 %v878
  %v2811 = vunpack.c.l.b16 %v879
  %v2812 = vunpack.c.l.b16 %v880
  %v2813 = vunpack.c.l.b16 %v881
  %v2814 = vunpack.c.l.b16 %v882
  %v2815 = vunpack.c.l.b16 %v883
  %v2816 = vunpack.c.l.b16 %v884
  %v2817 = vunpack.c.l.b16 %v885
  %v2818 = vunpack.c.l.b16 %v886
  %v2819 = vunpack.c.l.b16 %v887
  %v2820 = vunpack.c.l.b16 %v888
  %v2821 = vunpack.c.l.b16 %v889
  %v2822 = vunpack.c.l.b16 %v890
  %v2823 = vunpack.c.l.b16 %v891
  %v2824 = vunpack.c.l.b16 %v892
  %v2825 = vunpack.c.l.b16 %v893
  %v2826 = vunpack.c.l.b16 %v894
  %v2827 = vunpack.c.l.b16 %v895
  %v2828 = vunpack.c.l.b16 %v896
  %v2829 = vunpack.c.l.b16 %v897
  %v2830 = vunpack.c.l.b16 %v898
  %v2831 = vunpack.c.l.b16 %v899
  %v2832 = vunpack.c.l.b16 %v900
  %v2833 = vunpack.c.l.b16 %v901
  %v2834 = vunpack.c.l.b16 %v902
  %v2835 = vunpack.c.l.b16 %v903
  %v2836 = vunpack.c.l.b16 %v904
  %v2837 = vunpack.c.l.b16 %v905
  %v2838 = vunpack.c.l.b16 %v906
  %v2839 = vunpack.c.l.b16 %v907
  %v2840 = vunpack.c.l.b16 %v908
  %v2841 = vunpack.c.l.b16 %v909
  %v2842 = vunpack.c.l.b16 %v910
  %v2843 = vunpack.c.l.b16 %v911
  %v2844 = vunpack.c.l.b16 %v912
  %v2845 = vunpack.c.l.b16 %v913
  %v2846 = vunpack.c.l.b16 %v914
  %v2847 = vunpack.c.l.b16 %v915
  %v2848 = vunpack.c.l.b16 %v916
  %v2849 = vunpack.c.l.b16 %v917
  %v2850 = vunpack.c.l.b16 %v918
  %v2851 = vunpack.c.l.b16 %v919
  %v2852 = vunpack.c.l.b16 %v920
  %v2853 = vunpack.c.l.b16 %v921
  %v2854 = vunpack.c.l.b16 %v922
  %v2855 = vunpack.c.l.b16 %v923
  %v2856 = vunpack.c.l.b16 %v924
  %v2857 = vunpack.c.l.b16 %v925
  %v2858 = vunpack.c.l.b16 %v926
  %v2859 = vunpack.c.l.b16 %v927
  %v2860 = vunpack.c.l.b16 %v928
  %v2861 = vunpack.c.l.b16 %v929
  %v2862 = vunpack.c.l.b16 %v930
  %v2863 = vunpack.c.l.b16 %v931
  %v2864 = vunpack.c.l.b16 %v932
  %v2865 = vunpack.c.l.b16 %v933
  %v2866 = vunpack.c.l.b16 %v934
  %v2867 = vunpack.c.l.b16 %v935
  %v2868 = vunpack.c.l.b16 %v936
  %v2869 = vunpack.c.l.b16 %v937
  %v2870 = vunpack.c.l.b16 %v938
  %v2871 = vunpack.c.l.b16 %v939
  %v2872 = vunpack.c.l.b16 %v940
  %v2873 = vunpack.c.l.b16 %v941
  %v2874 = vunpack.c.l.b16 %v942
  %v2875 = vunpack.c.l.b16 %v943
  %v2876 = vunpack.c.l.b16 %v944
  %v2877 = vunpack.c.l.b16 %v945
  %v2878 = vunpack.c.l.b16 %v946
  %v2879 = vunpack.c.l.b16 %v947
  %v2880 = vunpack.c.l.b16 %v948
  %v2881 = vunpack.c.l.b16 %v949
  %v2882 = vunpack.c.l.b16 %v950
  %v2883 = vunpack.c.l.b16 %v951
  %v2884 = vunpack.c.l.b16 %v952
  %v2885 = vunpack.c.l.b16 %v953
  %v2886 = vunpack.c.l.b16 %v954
  %v2887 = vunpack.c.l.b16 %v955
  %v2888 = vunpack.c.l.b16 %v956
  %v2889 = vunpack.c.l.b16 %v957
  %v2890 = vunpack.c.l.b16 %v958
  %v2891 = vunpack.c.l.b16 %v959
  %v2892 = vunpack.c.l.b16 %v960
  %v2893 = vunpack.c.l.b16 %v961
  %v2894 = vunpack.c.l.b16 %v962
  %v2895 = vunpack.c.l.b16 %v963
  %v2896 = vunpack.c.l.b16 %v964
  %v2897 = vunpack.c.l.b16 %v965
  %v2898 = vunpack.c.l.b16 %v966
  %v2899 = vunpack.c.l.b16 %v967
  %v2900 = vunpack.c.l.b16 %v968
  %v2901 = vunpack.c.l.b16 %v969
  %v2902 = vunpack.c.l.b16 %v970
  %v2903 = vunpack.c.l.b16 %v971
  %v2904 = vunpack.c.l.b16 %v972
  %v2905 = vunpack.c.l.b16 %v973
  %v2906 = vunpack.c.l.b16 %v974
  %v2907 = vunpack.c.l.b16 %v975
  %v2908 = vunpack.c.l.b16 %v976
  %v2909 = vunpack.c.l.b16 %v977
  %v2910 = vunpack.c.l.b16 %v978
  %v2911 = vpack.c.b16 %v1948, %v1947
  %v2912 = vpack.c.b16 %v1950, %v1949
  %v2913 = vpack.c.b16 %v1952, %v1951
  %v2914 = vpack.c.b16 %v1954, %v1953
  %v2915 = vpack.c.b16 %v1956, %v1955
  %v2916 = vpack.c.b16 %v1958, %v1957
  %v2917 = vpack.c.b16 %v1960, %v1959
  %v2918 = vpack.c.b16 %v1962, %v1961
  %v2919 = vpack.c.b16 %v1964, %v1963
  %v2920 = vpack.c.b16 %v1966, %v1965
  %v2921 = vpack.c.b16 %v1968, %v1967
  %v2922 = vpack.c.b16 %v1970, %v1969
  %v2923 = vpack.c.b16 %v1972, %v1971
  %v2924 = vpack.c.b16 %v1974, %v1973
  %v2925 = vpack.c.b16 %v1976, %v1975
  %v2926 = vpack.c.b16 %v1978, %v1977
  %v2927 = vpack.c.b16 %v1980, %v1979
  %v2928 = vpack.c.b16 %v1982, %v1981
  %v2929 = vpack.c.b16 %v1984, %v1983
  %v2930 = vpack.c.b16 %v1986, %v1985
  %v2931 = vpack.c.b16 %v1988, %v1987
  %v2932 = vpack.c.b16 %v1990, %v1989
  %v2933 = vpack.c.b16 %v1992, %v1991
  %v2934 = vpack.c.b16 %v1994, %v1993
  %v2935 = vpack.c.b16 %v1996, %v1995
  %v2936 = vpack.c.b16 %v1998, %v1997
  %v2937 = vpack.c.b16 %v2000, %v1999
  %v2938 = vpack.c.b16 %v2002, %v2001
  %v2939 = vpack.c.b16 %v2004, %v2003
  %v2940 = vpack.c.b16 %v2006, %v2005
  %v2941 = vpack.c.b16 %v2008, %v2007
  %v2942 = vpack.c.b16 %v2010, %v2009
  %v2943 = vpack.c.b16 %v2012, %v2011
  %v2944 = vpack.c.b16 %v2014, %v2013
  %v2945 = vpack.c.b16 %v2016, %v2015
  %v2946 = vpack.c.b16 %v2018, %v2017
  %v2947 = vpack.c.b16 %v2020, %v2019
  %v2948 = vpack.c.b16 %v2022, %v2021
  %v2949 = vpack.c.b16 %v2024, %v2023
  %v2950 = vpack.c.b16 %v2026, %v2025
  %v2951 = vpack.c.b16 %v2028, %v2027
  %v2952 = vpack.c.b16 %v2030, %v2029
  %v2953 = vpack.c.b16 %v2032, %v2031
  %v2954 = vpack.c.b16 %v2034, %v2033
  %v2955 = vpack.c.b16 %v2036, %v2035
  %v2956 = vpack.c.b16 %v2038, %v2037
  %v2957 = vpack.c.b16 %v2040, %v2039
  %v2958 = vpack.c.b16 %v2042, %v2041
  %v2959 = vpack.c.b16 %v2044, %v2043
  %v2960 = vpack.c.b16 %v2046, %v2045
  %v2961 = vpack.c.b16 %v2048, %v2047
  %v2962 = vpack.c.b16 %v2050, %v2049
  %v2963 = vpack.c.b16 %v2052, %v2051
  %v2964 = vpack.c.b16 %v2054, %v2053
  %v2965 = vpack.c.b16 %v2056, %v2055
  %v2966 = vpack.c.b16 %v2058, %v2057
  %v2967 = vpack.c.b16 %v2060, %v2059
  %v2968 = vpack.c.b16 %v2062, %v2061
  %v2969 = vpack.c.b16 %v2064, %v2063
  %v2970 = vpack.c.b16 %v2066, %v2065
  %v2971 = vpack.c.b16 %v2068, %v2067
  %v2972 = vpack.c.b16 %v2070, %v2069
  %v2973 = vpack.c.b16 %v2072, %v2071
  %v2974 = vpack.c.b16 %v2074, %v2073
  %v2975 = vpack.c.b16 %v2076, %v2075
  %v2976 = vpack.c.b16 %v2078, %v2077
  %v2977 = vpack.c.b16 %v2080, %v2079
  %v2978 = vpack.c.b16 %v2082, %v2081
  %v2979 = vpack.c.b16 %v2084, %v2083
  %v2980 = vpack.c.b16 %v2086, %v2085
  %v2981 = vpack.c.b16 %v2088, %v2087
  %v2982 = vpack.c.b16 %v2090, %v2089
  %v2983 = vpack.c.b16 %v2092, %v2091
  %v2984 = vpack.c.b16 %v2094, %v2093
  %v2985 = vpack.c.b16 %v2096, %v2095
  %v2986 = vpack.c.b16 %v2098, %v2097
  %v2987 = vpack.c.b16 %v2100, %v2099
  %v2988 = vpack.c.b16 %v2102, %v2101
  %v2989 = vpack.c.b16 %v2104, %v2103
  %v2990 = vpack.c.b16 %v2106, %v2105
  %v2991 = vpack.c.b16 %v2108, %v2107
  %v2992 = vpack.c.b16 %v2110, %v2109
  %v2993 = vpack.c.b16 %v2112, %v2111
  %v2994 = vpack.c.b16 %v2114, %v2113
  %v2995 = vpack.c.b16 %v2116, %v2115
  %v2996 = vpack.c.b16 %v2118, %v2117
  %v2997 = vpack.c.b16 %v2120, %v2119
  %v2998 = vpack.c.b16 %v2122, %v2121
  %v2999 = vpack.c.b16 %v2124, %v2123
  %v3000 = vpack.c.b16 %v2126, %v2125
  %v3001 = vpack.c.b16 %v2128, %v2127
  %v3002 = vpack.c.b16 %v2130, %v2129
  %v3003 = vpack.c.b16 %v2132, %v2131
  %v3004 = vpack.c.b16 %v2134, %v2133
  %v3005 = vpack.c.b16 %v2136, %v2135
  %v3006 = vpack.c.b16 %v2138, %v2137
  %v3007 = vpack.c.b16 %v2140, %v2139
  %v3008 = vpack.c.b16 %v2142, %v2141
  %v3009 = vpack.c.b16 %v2144, %v2143
  %v3010 = vpack.c.b16 %v2146, %v2145
  %v3011 = vpack.c.b16 %v2148, %v2147
  %v3012 = vpack.c.b16 %v2150, %v2149
  %v3013 = vpack.c.b16 %v2152, %v2151
  %v3014 = vpack.c.b16 %v2154, %v2153
  %v3015 = vpack.c.b16 %v2156, %v2155
  %v3016 = vpack.c.b16 %v2158, %v2157
  %v3017 = vpack.c.b16 %v2160, %v2159
  %v3018 = vpack.c.b16 %v2162, %v2161
  %v3019 = vpack.c.b16 %v2164, %v2163
  %v3020 = vpack.c.b16 %v2166, %v2165
  %v3021 = vpack.c.b16 %v2168, %v2167
  %v3022 = vpack.c.b16 %v2170, %v2169
  %v3023 = vpack.c.b16 %v2172, %v2171
  %v3024 = vpack.c.b16 %v2174, %v2173
  %v3025 = vpack.c.b16 %v2176, %v2175
  %v3026 = vpack.c.b16 %v2178, %v2177
  %v3027 = vpack.c.b16 %v2180, %v2179
  %v3028 = vpack.c.b16 %v2182, %v2181
  %v3029 = vpack.c.b16 %v2184, %v2183
  %v3030 = vpack.c.b16 %v2186, %v2185
  %v3031 = vpack.c.b16 %v2188, %v2187
  %v3032 = vpack.c.b16 %v2190, %v2189
  %v3033 = vpack.c.b16 %v2192, %v2191
  %v3034 = vpack.c.b16 %v2194, %v2193
  %v3035 = vpack.c.b16 %v2196, %v2195
  %v3036 = vpack.c.b16 %v2198, %v2197
  %v3037 = vpack.c.b16 %v2200, %v2199
  %v3038 = vpack.c.b16 %v2202, %v2201
  %v3039 = vpack.c.b16 %v2204, %v2203
  %v3040 = vpack.c.b16 %v2206, %v2205
  %v3041 = vpack.c.b16 %v2208, %v2207
  %v3042 = vpack.c.b16 %v2210, %v2209
  %v3043 = vpack.c.b16 %v2212, %v2211
  %v3044 = vpack.c.b16 %v2214, %v2213
  %v3045 = vpack.c.b16 %v2216, %v2215
  %v3046 = vpack.c.b16 %v2218, %v2217
  %v3047 = vpack.c.b16 %v2220, %v2219
  %v3048 = vpack.c.b16 %v2222, %v2221
  %v3049 = vpack.c.b16 %v2224, %v2223
  %v3050 = vpack.c.b16 %v2226, %v2225
  %v3051 = vpack.c.b16 %v2228, %v2227
  %v3052 = vpack.c.b16 %v2230, %v2229
  %v3053 = vpack.c.b16 %v2232, %v2231
  %v3054 = vpack.c.b16 %v2234, %v2233
  %v3055 = vpack.c.b16 %v2236, %v2235
  %v3056 = vpack.c.b16 %v2238, %v2237
  %v3057 = vpack.c.b16 %v2240, %v2239
  %v3058 = vpack.c.b16 %v2242, %v2241
  %v3059 = vpack.c.b16 %v2244, %v2243
  %v3060 = vpack.c.b16 %v2246, %v2245
  %v3061 = vpack.c.b16 %v2248, %v2247
  %v3062 = vpack.c.b16 %v2250, %v2249
  %v3063 = vpack.c.b16 %v2252, %v2251
  %v3064 = vpack.c.b16 %v2254, %v2253
  %v3065 = vpack.c.b16 %v2256, %v2255
  %v3066 = vpack.c.b16 %v2258, %v2257
  %v3067 = vpack.c.b16 %v2260, %v2259
  %v3068 = vpack.c.b16 %v2262, %v2261
  %v3069 = vpack.c.b16 %v2264, %v2263
  %v3070 = vpack.c.b16 %v2266, %v2265
  %v3071 = vpack.c.b16 %v2268, %v2267
  %v3072 = vpack.c.b16 %v2270, %v2269
  %v3073 = vpack.c.b16 %v2272, %v2271
  %v3074 = vpack.c.b16 %v2274, %v2273
  %v3075 = vpack.c.b16 %v2276, %v2275
  %v3076 = vpack.c.b16 %v2278, %v2277
  %v3077 = vpack.c.b16 %v2280, %v2279
  %v3078 = vpack.c.b16 %v2282, %v2281
  %v3079 = vpack.c.b16 %v2284, %v2283
  %v3080 = vpack.c.b16 %v2286, %v2285
  %v3081 = vpack.c.b16 %v2288, %v2287
  %v3082 = vpack.c.b16 %v2290, %v2289
  %v3083 = vpack.c.b16 %v2292, %v2291
  %v3084 = vpack.c.b16 %v2294, %v2293
  %v3085 = vpack.c.b16 %v2296, %v2295
  %v3086 = vpack.c.b16 %v2298, %v2297
  %v3087 = vpack.c.b16 %v2300, %v2299
  %v3088 = vpack.c.b16 %v2302, %v2301
  %v3089 = vpack.c.b16 %v2304, %v2303
  %v3090 = vpack.c.b16 %v2306, %v2305
  %v3091 = vpack.c.b16 %v2308, %v2307
  %v3092 = vpack.c.b16 %v2310, %v2309
  %v3093 = vpack.c.b16 %v2312, %v2311
  %v3094 = vpack.c.b16 %v2314, %v2313
  %v3095 = vpack.c.b16 %v2316, %v2315
  %v3096 = vpack.c.b16 %v2318, %v2317
  %v3097 = vpack.c.b16 %v2320, %v2319
  %v3098 = vpack.c.b16 %v2322, %v2321
  %v3099 = vpack.c.b16 %v2324, %v2323
  %v3100 = vpack.c.b16 %v2326, %v2325
  %v3101 = vpack.c.b16 %v2328, %v2327
  %v3102 = vpack.c.b16 %v2330, %v2329
  %v3103 = vpack.c.b16 %v2332, %v2331
  %v3104 = vpack.c.b16 %v2334, %v2333
  %v3105 = vpack.c.b16 %v2336, %v2335
  %v3106 = vpack.c.b16 %v2338, %v2337
  %v3107 = vpack.c.b16 %v2340, %v2339
  %v3108 = vpack.c.b16 %v2342, %v2341
  %v3109 = vpack.c.b16 %v2344, %v2343
  %v3110 = vpack.c.b16 %v2346, %v2345
  %v3111 = vpack.c.b16 %v2348, %v2347
  %v3112 = vpack.c.b16 %v2350, %v2349
  %v3113 = vpack.c.b16 %v2352, %v2351
  %v3114 = vpack.c.b16 %v2354, %v2353
  %v3115 = vpack.c.b16 %v2356, %v2355
  %v3116 = vpack.c.b16 %v2358, %v2357
  %v3117 = vpack.c.b16 %v2360, %v2359
  %v3118 = vpack.c.b16 %v2362, %v2361
  %v3119 = vpack.c.b16 %v2364, %v2363
  %v3120 = vpack.c.b16 %v2366, %v2365
  %v3121 = vpack.c.b16 %v2368, %v2367
  %v3122 = vpack.c.b16 %v2370, %v2369
  %v3123 = vpack.c.b16 %v2372, %v2371
  %v3124 = vpack.c.b16 %v2374, %v2373
  %v3125 = vpack.c.b16 %v2376, %v2375
  %v3126 = vpack.c.b16 %v2378, %v2377
  %v3127 = vpack.c.b16 %v2380, %v2379
  %v3128 = vpack.c.b16 %v2382, %v2381
  %v3129 = vpack.c.b16 %v2384, %v2383
  %v3130 = vpack.c.b16 %v2386, %v2385
  %v3131 = vpack.c.b16 %v2388, %v2387
  %v3132 = vpack.c.b16 %v2390, %v2389
  %v3133 = vpack.c.b16 %v2392, %v2391
  %v3134 = vpack.c.b16 %v2394, %v2393
  %v3135 = vpack.c.b16 %v2396, %v2395
  %v3136 = vpack.c.b16 %v2398, %v2397
  %v3137 = vpack.c.b16 %v2400, %v2399
  %v3138 = vpack.c.b16 %v2402, %v2401
  %v3139 = vpack.c.b16 %v2404, %v2403
  %v3140 = vpack.c.b16 %v2406, %v2405
  %v3141 = vpack.c.b16 %v2408, %v2407
  %v3142 = vpack.c.b16 %v2410, %v2409
  %v3143 = vpack.c.b16 %v2412, %v2411
  %v3144 = vpack.c.b16 %v2414, %v2413
  %v3145 = vpack.c.b16 %v2416, %v2415
  %v3146 = vpack.c.b16 %v2418, %v2417
  %v3147 = vpack.c.b16 %v2420, %v2419
  %v3148 = vpack.c.b16 %v2422, %v2421
  %v3149 = vpack.c.b16 %v2424, %v2423
  %v3150 = vpack.c.b16 %v2426, %v2425
  %v3151 = vpack.c.b16 %v2428, %v2427
  %v3152 = vpack.c.b16 %v2430, %v2429
  %v3153 = vpack.c.b16 %v2432, %v2431
  %v3154 = vpack.c.b16 %v2434, %v2433
  %v3155 = vpack.c.b16 %v2436, %v2435
  %v3156 = vpack.c.b16 %v2438, %v2437
  %v3157 = vpack.c.b16 %v2440, %v2439
  %v3158 = vpack.c.b16 %v2442, %v2441
  %v3159 = vpack.c.b16 %v2444, %v2443
  %v3160 = vpack.c.b16 %v2446, %v2445
  %v3161 = vpack.c.b16 %v2448, %v2447
  %v3162 = vpack.c.b16 %v2450, %v2449
  %v3163 = vpack.c.b16 %v2452, %v2451
  %v3164 = vpack.c.b16 %v2454, %v2453
  %v3165 = vpack.c.b16 %v2456, %v2455
  %v3166 = vpack.c.b16 %v2458, %v2457
  %v3167 = vpack.c.b16 %v2460, %v2459
  %v3168 = vpack.c.b16 %v2462, %v2461
  %v3169 = vpack.c.b16 %v2464, %v2463
  %v3170 = vpack.c.b16 %v2466, %v2465
  %v3171 = vpack.c.b16 %v2468, %v2467
  %v3172 = vpack.c.b16 %v2470, %v2469
  %v3173 = vpack.c.b16 %v2472, %v2471
  %v3174 = vpack.c.b16 %v2474, %v2473
  %v3175 = vpack.c.b16 %v2476, %v2475
  %v3176 = vpack.c.b16 %v2478, %v2477
  %v3177 = vpack.c.b16 %v2480, %v2479
  %v3178 = vpack.c.b16 %v2482, %v2481
  %v3179 = vpack.c.b16 %v2484, %v2483
  %v3180 = vpack.c.b16 %v2486, %v2485
  %v3181 = vpack.c.b16 %v2488, %v2487
  %v3182 = vpack.c.b16 %v2490, %v2489
  %v3183 = vpack.c.b16 %v2492, %v2491
  %v3184 = vpack.c.b16 %v2494, %v2493
  %v3185 = vpack.c.b16 %v2496, %v2495
  %v3186 = vpack.c.b16 %v2498, %v2497
  %v3187 = vpack.c.b16 %v2500, %v2499
  %v3188 = vpack.c.b16 %v2502, %v2501
  %v3189 = vpack.c.b16 %v2504, %v2503
  %v3190 = vpack.c.b16 %v2506, %v2505
  %v3191 = vpack.c.b16 %v2508, %v2507
  %v3192 = vpack.c.b16 %v2510, %v2509
  %v3193 = vpack.c.b16 %v2512, %v2511
  %v3194 = vpack.c.b16 %v2514, %v2513
  %v3195 = vpack.c.b16 %v2516, %v2515
  %v3196 = vpack.c.b16 %v2518, %v2517
  %v3197 = vpack.c.b16 %v2520, %v2519
  %v3198 = vpack.c.b16 %v2522, %v2521
  %v3199 = vpack.c.b16 %v2524, %v2523
  %v3200 = vpack.c.b16 %v2526, %v2525
  %v3201 = vpack.c.b16 %v2528, %v2527
  %v3202 = vpack.c.b16 %v2530, %v2529
  %v3203 = vpack.c.b16 %v2532, %v2531
  %v3204 = vpack.c.b16 %v2534, %v2533
  %v3205 = vpack.c.b16 %v2536, %v2535
  %v3206 = vpack.c.b16 %v2538, %v2537
  %v3207 = vpack.c.b16 %v2540, %v2539
  %v3208 = vpack.c.b16 %v2542, %v2541
  %v3209 = vpack.c.b16 %v2544, %v2543
  %v3210 = vpack.c.b16 %v2546, %v2545
  %v3211 = vpack.c.b16 %v2548, %v2547
  %v3212 = vpack.c.b16 %v2550, %v2549
  %v3213 = vpack.c.b16 %v2552, %v2551
  %v3214 = vpack.c.b16 %v2554, %v2553
  %v3215 = vpack.c.b16 %v2556, %v2555
  %v3216 = vpack.c.b16 %v2558, %v2557
  %v3217 = vpack.c.b16 %v2560, %v2559
  %v3218 = vpack.c.b16 %v2562, %v2561
  %v3219 = vpack.c.b16 %v2564, %v2563
  %v3220 = vpack.c.b16 %v2566, %v2565
  %v3221 = vpack.c.b16 %v2568, %v2567
  %v3222 = vpack.c.b16 %v2570, %v2569
  %v3223 = vpack.c.b16 %v2572, %v2571
  %v3224 = vpack.c.b16 %v2574, %v2573
  %v3225 = vpack.c.b16 %v2576, %v2575
  %v3226 = vpack.c.b16 %v2578, %v2577
  %v3227 = vpack.c.b16 %v2580, %v2579
  %v3228 = vpack.c.b16 %v2582, %v2581
  %v3229 = vpack.c.b16 %v2584, %v2583
  %v3230 = vpack.c.b16 %v2586, %v2585
  %v3231 = vpack.c.b16 %v2588, %v2587
  %v3232 = vpack.c.b16 %v2590, %v2589
  %v3233 = vpack.c.b16 %v2592, %v2591
  %v3234 = vpack.c.b16 %v2594, %v2593
  %v3235 = vpack.c.b16 %v2596, %v2595
  %v3236 = vpack.c.b16 %v2598, %v2597
  %v3237 = vpack.c.b16 %v2600, %v2599
  %v3238 = vpack.c.b16 %v2602, %v2601
  %v3239 = vpack.c.b16 %v2604, %v2603
  %v3240 = vpack.c.b16 %v2606, %v2605
  %v3241 = vpack.c.b16 %v2608, %v2607
  %v3242 = vpack.c.b16 %v2610, %v2609
  %v3243 = vpack.c.b16 %v2612, %v2611
  %v3244 = vpack.c.b16 %v2614, %v2613
  %v3245 = vpack.c.b16 %v2616, %v2615
  %v3246 = vpack.c.b16 %v2618, %v2617
  %v3247 = vpack.c.b16 %v2620, %v2619
  %v3248 = vpack.c.b16 %v2622, %v2621
  %v3249 = vpack.c.b16 %v2624, %v2623
  %v3250 = vpack.c.b16 %v2626, %v2625
  %v3251 = vpack.c.b16 %v2628, %v2627
  %v3252 = vpack.c.b16 %v2630, %v2629
  %v3253 = vpack.c.b16 %v2632, %v2631
  %v3254 = vpack.c.b16 %v2634, %v2633
  %v3255 = vpack.c.b16 %v2636, %v2635
  %v3256 = vpack.c.b16 %v2638, %v2637
  %v3257 = vpack.c.b16 %v2640, %v2639
  %v3258 = vpack.c.b16 %v2642, %v2641
  %v3259 = vpack.c.b16 %v2644, %v2643
  %v3260 = vpack.c.b16 %v2646, %v2645
  %v3261 = vpack.c.b16 %v2648, %v2647
  %v3262 = vpack.c.b16 %v2650, %v2649
  %v3263 = vpack.c.b16 %v2652, %v2651
  %v3264 = vpack.c.b16 %v2654, %v2653
  %v3265 = vpack.c.b16 %v2656, %v2655
  %v3266 = vpack.c.b16 %v2658, %v2657
  %v3267 = vpack.c.b16 %v2660, %v2659
  %v3268 = vpack.c.b16 %v2662, %v2661
  %v3269 = vpack.c.b16 %v2664, %v2663
  %v3270 = vpack.c.b16 %v2666, %v2665
  %v3271 = vpack.c.b16 %v2668, %v2667
  %v3272 = vpack.c.b16 %v2670, %v2669
  %v3273 = vpack.c.b16 %v2672, %v2671
  %v3274 = vpack.c.b16 %v2674, %v2673
  %v3275 = vpack.c.b16 %v2676, %v2675
  %v3276 = vpack.c.b16 %v2678, %v2677
  %v3277 = vpack.c.b16 %v2680, %v2679
  %v3278 = vpack.c.b16 %v2682, %v2681
  %v3279 = vpack.c.b16 %v2684, %v2683
  %v3280 = vpack.c.b16 %v2686, %v2685
  %v3281 = vpack.c.b16 %v2688, %v2687
  %v3282 = vpack.c.b16 %v2690, %v2689
  %v3283 = vpack.c.b16 %v2692, %v2691
  %v3284 = vpack.c.b16 %v2694, %v2693
  %v3285 = vpack.c.b16 %v2696, %v2695
  %v3286 = vpack.c.b16 %v2698, %v2697
  %v3287 = vpack.c.b16 %v2700, %v2699
  %v3288 = vpack.c.b16 %v2702, %v2701
  %v3289 = vpack.c.b16 %v2704, %v2703
  %v3290 = vpack.c.b16 %v2706, %v2705
  %v3291 = vpack.c.b16 %v2708, %v2707
  %v3292 = vpack.c.b16 %v2710, %v2709
  %v3293 = vpack.c.b16 %v2712, %v2711
  %v3294 = vpack.c.b16 %v2714, %v2713
  %v3295 = vpack.c.b16 %v2716, %v2715
  %v3296 = vpack.c.b16 %v2718, %v2717
  %v3297 = vpack.c.b16 %v2720, %v2719
  %v3298 = vpack.c.b16 %v2722, %v2721
  %v3299 = vpack.c.b16 %v2724, %v2723
  %v3300 = vpack.c.b16 %v2726, %v2725
  %v3301 = vpack.c.b16 %v2728, %v2727
  %v3302 = vpack.c.b16 %v2730, %v2729
  %v3303 = vpack.c.b16 %v2732, %v2731
  %v3304 = vpack.c.b16 %v2734, %v2733
  %v3305 = vpack.c.b16 %v2736, %v2735
  %v3306 = vpack.c.b16 %v2738, %v2737
  %v3307 = vpack.c.b16 %v2740, %v2739
  %v3308 = vpack.c.b16 %v2742, %v2741
  %v3309 = vpack.c.b16 %v2744, %v2743
  %v3310 = vpack.c.b16 %v2746, %v2745
  %v3311 = vpack.c.b16 %v2748, %v2747
  %v3312 = vpack.c.b16 %v2750, %v2749
  %v3313 = vpack.c.b16 %v2752, %v2751
  %v3314 = vpack.c.b16 %v2754, %v2753
  %v3315 = vpack.c.b16 %v2756, %v2755
  %v3316 = vpack.c.b16 %v2758, %v2757
  %v3317 = vpack.c.b16 %v2760, %v2759
  %v3318 = vpack.c.b16 %v2762, %v2761
  %v3319 = vpack.c.b16 %v2764, %v2763
  %v3320 = vpack.c.b16 %v2766, %v2765
  %v3321 = vpack.c.b16 %v2768, %v2767
  %v3322 = vpack.c.b16 %v2770, %v2769
  %v3323 = vpack.c.b16 %v2772, %v2771
  %v3324 = vpack.c.b16 %v2774, %v2773
  %v3325 = vpack.c.b16 %v2776, %v2775
  %v3326 = vpack.c.b16 %v2778, %v2777
  %v3327 = vpack.c.b16 %v2780, %v2779
  %v3328 = vpack.c.b16 %v2782, %v2781
  %v3329 = vpack.c.b16 %v2784, %v2783
  %v3330 = vpack.c.b16 %v2786, %v2785
  %v3331 = vpack.c.b16 %v2788, %v2787
  %v3332 = vpack.c.b16 %v2790, %v2789
  %v3333 = vpack.c.b16 %v2792, %v2791
  %v3334 = vpack.c.b16 %v2794, %v2793
  %v3335 = vpack.c.b16 %v2796, %v2795
  %v3336 = vpack.c.b16 %v2798, %v2797
  %v3337 = vpack.c.b16 %v2800, %v2799
  %v3338 = vpack.c.b16 %v2802, %v2801
  %v3339 = vpack.c.b16 %v2804, %v2803
  %v3340 = vpack.c.b16 %v2806, %v2805
  %v3341 = vpack.c.b16 %v2808, %v2807
  %v3342 = vpack.c.b16 %v2810, %v2809
  %v3343 = vpack.c.b16 %v2812, %v2811
  %v3344 = vpack.c.b16 %v2814, %v2813
  %v3345 = vpack.c.b16 %v2816, %v2815
  %v3346 = vpack.c.b16 %v2818, %v2817
  %v3347 = vpack.c.b16 %v2820, %v2819
  %v3348 = vpack.c.b16 %v2822, %v2821
  %v3349 = vpack.c.b16 %v2824, %v2823
  %v3350 = vpack.c.b16 %v2826, %v2825
  %v3351 = vpack.c.b16 %v2828, %v2827
  %v3352 = vpack.c.b16 %v2830, %v2829
  %v3353 = vpack.c.b16 %v2832, %v2831
  %v3354 = vpack.c.b16 %v2834, %v2833
  %v3355 = vpack.c.b16 %v2836, %v2835
  %v3356 = vpack.c.b16 %v2838, %v2837
  %v3357 = vpack.c.b16 %v2840, %v2839
  %v3358 = vpack.c.b16 %v2842, %v2841
  %v3359 = vpack.c.b16 %v2844, %v2843
  %v3360 = vpack.c.b16 %v2846, %v2845
  %v3361 = vpack.c.b16 %v2848, %v2847
  %v3362 = vpack.c.b16 %v2850, %v2849
  %v3363 = vpack.c.b16 %v2852, %v2851
  %v3364 = vpack.c.b16 %v2854, %v2853
  %v3365 = vpack.c.b16 %v2856, %v2855
  %v3366 = vpack.c.b16 %v2858, %v2857
  %v3367 = vpack.c.b16 %v2860, %v2859
  %v3368 = vpack.c.b16 %v2862, %v2861
  %v3369 = vpack.c.b16 %v2864, %v2863
  %v3370 = vpack.c.b16 %v2866, %v2865
  %v3371 = vpack.c.b16 %v2868, %v2867
  %v3372 = vpack.c.b16 %v2870, %v2869
  %v3373 = vpack.c.b16 %v2872, %v2871
  %v3374 = vpack.c.b16 %v2874, %v2873
  %v3375 = vpack.c.b16 %v2876, %v2875
  %v3376 = vpack.c.b16 %v2878, %v2877
  %v3377 = vpack.c.b16 %v2880, %v2879
  %v3378 = vpack.c.b16 %v2882, %v2881
  %v3379 = vpack.c.b16 %v2884, %v2883
  %v3380 = vpack.c.b16 %v2886, %v2885
  %v3381 = vpack.c.b16 %v2888, %v2887
  %v3382 = vpack.c.b16 %v2890, %v2889
  %v3383 = vpack.c.b16 %v2892, %v2891
  %v3384 = vpack.c.b16 %v2894, %v2893
  %v3385 = vpack.c.b16 %v2896, %v2895
  %v3386 = vpack.c.b16 %v2898, %v2897
  %v3387 = vpack.c.b16 %v2900, %v2899
  %v3388 = vpack.c.b16 %v2902, %v2901
  %v3389 = vpack.c.b16 %v2904, %v2903
  %v3390 = vpack.c.b16 %v2906, %v2905
  %v3391 = vpack.c.b16 %v2908, %v2907
  %v3392 = vpack.c.b16 %v2910, %v2909
  %v3397 = vunpack.c.l.b16 %v979
  %v3398 = vunpack.c.l.b16 %v980
  %v3399 = vunpack.c.l.b16 %v981
  %v3400 = vunpack.c.l.b16 %v982
  %v3401 = vpack.c.b16 %v3398, %v3397
  %v3402 = vpack.c.b16 %v3400, %v3399
  %vm3404 = vcmask 220160
  %v3406 = vsel %vm3404, %v2911, 0
  %v3409 = vsel %vm3404, %v2912, 0
  %v3412 = vsel %vm3404, %v2913, 0
  %v3415 = vsel %vm3404, %v2914, 0
  %v3418 = vsel %vm3404, %v2915, 0
  %v3421 = vsel %vm3404, %v2916, 0
  %v3424 = vsel %vm3404, %v2917, 0
  %v3427 = vsel %vm3404, %v2918, 0
  %v3430 = vsel %vm3404, %v2919, 0
  %v3433 = vsel %vm3404, %v2920, 0
  %v3436 = vsel %vm3404, %v2921, 0
  %v3439 = vsel %vm3404, %v2922, 0
  %v3442 = vsel %vm3404, %v2923, 0
  %v3445 = vsel %vm3404, %v2924, 0
  %v3448 = vsel %vm3404, %v2925, 0
  %v3451 = vsel %vm3404, %v2926, 0
  %v3454 = vsel %vm3404, %v2927, 0
  %v3457 = vsel %vm3404, %v2928, 0
  %v3460 = vsel %vm3404, %v2929, 0
  %v3463 = vsel %vm3404, %v2930, 0
  %v3466 = vsel %vm3404, %v2931, 0
  %v3469 = vsel %vm3404, %v2932, 0
  %v3472 = vsel %vm3404, %v2933, 0
  %v3475 = vsel %vm3404, %v2934, 0
  %v3478 = vsel %vm3404, %v2935, 0
  %v3481 = vsel %vm3404, %v2936, 0
  %v3484 = vsel %vm3404, %v2937, 0
  %v3487 = vsel %vm3404, %v2938, 0
  %v3490 = vsel %vm3404, %v2939, 0
  %v3493 = vsel %vm3404, %v2940, 0
  %v3496 = vsel %vm3404, %v2941, 0
  %v3499 = vsel %vm3404, %v2942, 0
  %v3502 = vsel %vm3404, %v2943, 0
  %v3505 = vsel %vm3404, %v2944, 0
  %v3508 = vsel %vm3404, %v2945, 0
  %v3511 = vsel %vm3404, %v2946, 0
  %v3514 = vsel %vm3404, %v2947, 0
  %v3517 = vsel %vm3404, %v2948, 0
  %v3520 = vsel %vm3404, %v2949, 0
  %v3523 = vsel %vm3404, %v2950, 0
  %v3526 = vsel %vm3404, %v2951, 0
  %v3529 = vsel %vm3404, %v2952, 0
  %v3532 = vsel %vm3404, %v2953, 0
  %v3535 = vsel %vm3404, %v2954, 0
  %v3538 = vsel %vm3404, %v2955, 0
  %v3541 = vsel %vm3404, %v2956, 0
  %v3544 = vsel %vm3404, %v2957, 0
  %v3547 = vsel %vm3404, %v2958, 0
  %v3550 = vsel %vm3404, %v2959, 0
  %v3553 = vsel %vm3404, %v2960, 0
  %v3556 = vsel %vm3404, %v2961, 0
  %v3559 = vsel %vm3404, %v2962, 0
  %v3562 = vsel %vm3404, %v2963, 0
  %v3565 = vsel %vm3404, %v2964, 0
  %v3568 = vsel %vm3404, %v2965, 0
  %v3571 = vsel %vm3404, %v2966, 0
  %v3574 = vsel %vm3404, %v2967, 0
  %v3577 = vsel %vm3404, %v2968, 0
  %v3580 = vsel %vm3404, %v2969, 0
  %v3583 = vsel %vm3404, %v2970, 0
  %v3586 = vsel %vm3404, %v2971, 0
  %v3589 = vsel %vm3404, %v2972, 0
  %v3592 = vsel %vm3404, %v2973, 0
  %v3595 = vsel %vm3404, %v2974, 0
  %v3598 = vsel %vm3404, %v2975, 0
  %v3601 = vsel %vm3404, %v2976, 0
  %v3604 = vsel %vm3404, %v2977, 0
  %v3607 = vsel %vm3404, %v2978, 0
  %v3610 = vsel %vm3404, %v2979, 0
  %v3613 = vsel %vm3404, %v2980, 0
  %v3616 = vsel %vm3404, %v2981, 0
  %v3619 = vsel %vm3404, %v2982, 0
  %v3622 = vsel %vm3404, %v2983, 0
  %v3625 = vsel %vm3404, %v2984, 0
  %v3628 = vsel %vm3404, %v2985, 0
  %v3631 = vsel %vm3404, %v2986, 0
  %v3634 = vsel %vm3404, %v2987, 0
  %v3637 = vsel %vm3404, %v2988, 0
  %v3640 = vsel %vm3404, %v2989, 0
  %v3643 = vsel %vm3404, %v2990, 0
  %v3646 = vsel %vm3404, %v2991, 0
  %v3649 = vsel %vm3404, %v2992, 0
  %v3652 = vsel %vm3404, %v2993, 0
  %v3655 = vsel %vm3404, %v2994, 0
  %v3658 = vsel %vm3404, %v2995, 0
  %v3661 = vsel %vm3404, %v2996, 0
  %v3664 = vsel %vm3404, %v2997, 0
  %v3667 = vsel %vm3404, %v2998, 0
  %v3670 = vsel %vm3404, %v2999, 0
  %v3673 = vsel %vm3404, %v3000, 0
  %v3676 = vsel %vm3404, %v3001, 0
  %v3679 = vsel %vm3404, %v3002, 0
  %v3682 = vsel %vm3404, %v3003, 0
  %v3685 = vsel %vm3404, %v3004, 0
  %v3688 = vsel %vm3404, %v3005, 0
  %v3691 = vsel %vm3404, %v3006, 0
  %v3694 = vsel %vm3404, %v3007, 0
  %v3697 = vsel %vm3404, %v3008, 0
  %v3700 = vsel %vm3404, %v3009, 0
  %v3703 = vsel %vm3404, %v3010, 0
  %v3706 = vsel %vm3404, %v3011, 0
  %v3709 = vsel %vm3404, %v3012, 0
  %v3712 = vsel %vm3404, %v3013, 0
  %v3715 = vsel %vm3404, %v3014, 0
  %v3718 = vsel %vm3404, %v3015, 0
  %v3721 = vsel %vm3404, %v3016, 0
  %v3724 = vsel %vm3404, %v3017, 0
  %v3727 = vsel %vm3404, %v3018, 0
  %v3730 = vsel %vm3404, %v3019, 0
  %v3733 = vsel %vm3404, %v3020, 0
  %v3736 = vsel %vm3404, %v3021, 0
  %v3739 = vsel %vm3404, %v3022, 0
  %v3742 = vsel %vm3404, %v3023, 0
  %v3745 = vsel %vm3404, %v3024, 0
  %v3748 = vsel %vm3404, %v3025, 0
  %v3751 = vsel %vm3404, %v3026, 0
  %v3754 = vsel %vm3404, %v3027, 0
  %v3757 = vsel %vm3404, %v3028, 0
  %v3760 = vsel %vm3404, %v3029, 0
  %v3763 = vsel %vm3404, %v3030, 0
  %v3766 = vsel %vm3404, %v3031, 0
  %v3769 = vsel %vm3404, %v3032, 0
  %v3772 = vsel %vm3404, %v3033, 0
  %v3775 = vsel %vm3404, %v3034, 0
  %v3778 = vsel %vm3404, %v3035, 0
  %v3781 = vsel %vm3404, %v3036, 0
  %v3784 = vsel %vm3404, %v3037, 0
  %v3787 = vsel %vm3404, %v3038, 0
  %v3790 = vsel %vm3404, %v3039, 0
  %v3793 = vsel %vm3404, %v3040, 0
  %v3796 = vsel %vm3404, %v3041, 0
  %v3799 = vsel %vm3404, %v3042, 0
  %v3802 = vsel %vm3404, %v3043, 0
  %v3805 = vsel %vm3404, %v3044, 0
  %v3808 = vsel %vm3404, %v3045, 0
  %v3811 = vsel %vm3404, %v3046, 0
  %v3814 = vsel %vm3404, %v3047, 0
  %v3817 = vsel %vm3404, %v3048, 0
  %v3820 = vsel %vm3404, %v3049, 0
  %v3823 = vsel %vm3404, %v3050, 0
  %v3826 = vsel %vm3404, %v3051, 0
  %v3829 = vsel %vm3404, %v3052, 0
  %v3832 = vsel %vm3404, %v3053, 0
  %v3835 = vsel %vm3404, %v3054, 0
  %v3838 = vsel %vm3404, %v3055, 0
  %v3841 = vsel %vm3404, %v3056, 0
  %v3844 = vsel %vm3404, %v3057, 0
  %v3847 = vsel %vm3404, %v3058, 0
  %v3850 = vsel %vm3404, %v3059, 0
  %v3853 = vsel %vm3404, %v3060, 0
  %v3856 = vsel %vm3404, %v3061, 0
  %v3859 = vsel %vm3404, %v3062, 0
  %v3862 = vsel %vm3404, %v3063, 0
  %v3865 = vsel %vm3404, %v3064, 0
  %v3868 = vsel %vm3404, %v3065, 0
  %v3871 = vsel %vm3404, %v3066, 0
  %v3874 = vsel %vm3404, %v3067, 0
  %v3877 = vsel %vm3404, %v3068, 0
  %v3880 = vsel %vm3404, %v3069, 0
  %v3883 = vsel %vm3404, %v3070, 0
  %v3886 = vsel %vm3404, %v3071, 0
  %v3889 = vsel %vm3404, %v3072, 0
  %v3892 = vsel %vm3404, %v3073, 0
  %v3895 = vsel %vm3404, %v3074, 0
  %v3898 = vsel %vm3404, %v3075, 0
  %v3901 = vsel %vm3404, %v3076, 0
  %v3904 = vsel %vm3404, %v3077, 0
  %v3907 = vsel %vm3404, %v3078, 0
  %v3910 = vsel %vm3404, %v3079, 0
  %v3913 = vsel %vm3404, %v3080, 0
  %v3916 = vsel %vm3404, %v3081, 0
  %v3919 = vsel %vm3404, %v3082, 0
  %v3922 = vsel %vm3404, %v3083, 0
  %v3925 = vsel %vm3404, %v3084, 0
  %v3928 = vsel %vm3404, %v3085, 0
  %v3931 = vsel %vm3404, %v3086, 0
  %v3934 = vsel %vm3404, %v3087, 0
  %v3937 = vsel %vm3404, %v3088, 0
  %v3940 = vsel %vm3404, %v3089, 0
  %v3943 = vsel %vm3404, %v3090, 0
  %v3946 = vsel %vm3404, %v3091, 0
  %v3949 = vsel %vm3404, %v3092, 0
  %v3952 = vsel %vm3404, %v3093, 0
  %v3955 = vsel %vm3404, %v3094, 0
  %v3958 = vsel %vm3404, %v3095, 0
  %v3961 = vsel %vm3404, %v3096, 0
  %v3964 = vsel %vm3404, %v3097, 0
  %v3967 = vsel %vm3404, %v3098, 0
  %v3970 = vsel %vm3404, %v3099, 0
  %v3973 = vsel %vm3404, %v3100, 0
  %v3976 = vsel %vm3404, %v3101, 0
  %v3979 = vsel %vm3404, %v3102, 0
  %v3982 = vsel %vm3404, %v3103, 0
  %v3985 = vsel %vm3404, %v3104, 0
  %v3988 = vsel %vm3404, %v3105, 0
  %v3991 = vsel %vm3404, %v3106, 0
  %v3994 = vsel %vm3404, %v3107, 0
  %v3997 = vsel %vm3404, %v3108, 0
  %v4000 = vsel %vm3404, %v3109, 0
  %v4003 = vsel %vm3404, %v3110, 0
  %v4006 = vsel %vm3404, %v3111, 0
  %v4009 = vsel %vm3404, %v3112, 0
  %v4012 = vsel %vm3404, %v3113, 0
  %v4015 = vsel %vm3404, %v3114, 0
  %v4018 = vsel %vm3404, %v3115, 0
  %v4021 = vsel %vm3404, %v3116, 0
  %v4024 = vsel %vm3404, %v3117, 0
  %v4027 = vsel %vm3404, %v3118, 0
  %v4030 = vsel %vm3404, %v3119, 0
  %v4033 = vsel %vm3404, %v3120, 0
  %v4036 = vsel %vm3404, %v3121, 0
  %v4039 = vsel %vm3404, %v3122, 0
  %v4042 = vsel %vm3404, %v3123, 0
  %v4045 = vsel %vm3404, %v3124, 0
  %v4048 = vsel %vm3404, %v3125, 0
  %v4051 = vsel %vm3404, %v3126, 0
  %v4054 = vsel %vm3404, %v3127, 0
  %v4057 = vsel %vm3404, %v3128, 0
  %v4060 = vsel %vm3404, %v3129, 0
  %v4063 = vsel %vm3404, %v3130, 0
  %v4066 = vsel %vm3404, %v3131, 0
  %v4069 = vsel %vm3404, %v3132, 0
  %v4072 = vsel %vm3404, %v3133, 0
  %v4075 = vsel %vm3404, %v3134, 0
  %v4078 = vsel %vm3404, %v3135, 0
  %v4081 = vsel %vm3404, %v3136, 0
  %v4084 = vsel %vm3404, %v3137, 0
  %v4087 = vsel %vm3404, %v3138, 0
  %v4090 = vsel %vm3404, %v3139, 0
  %v4093 = vsel %vm3404, %v3140, 0
  %v4096 = vsel %vm3404, %v3141, 0
  %v4099 = vsel %vm3404, %v3142, 0
  %v4102 = vsel %vm3404, %v3143, 0
  %v4105 = vsel %vm3404, %v3144, 0
  %v4108 = vsel %vm3404, %v3145, 0
  %v4111 = vsel %vm3404, %v3146, 0
  %v4114 = vsel %vm3404, %v3147, 0
  %v4117 = vsel %vm3404, %v3148, 0
  %v4120 = vsel %vm3404, %v3149, 0
  %v4123 = vsel %vm3404, %v3150, 0
  %v4126 = vsel %vm3404, %v3151, 0
  %v4129 = vsel %vm3404, %v3152, 0
  %v4132 = vsel %vm3404, %v3153, 0
  %v4135 = vsel %vm3404, %v3154, 0
  %v4138 = vsel %vm3404, %v3155, 0
  %v4141 = vsel %vm3404, %v3156, 0
  %v4144 = vsel %vm3404, %v3157, 0
  %v4147 = vsel %vm3404, %v3158, 0
  %v4150 = vsel %vm3404, %v3159, 0
  %v4153 = vsel %vm3404, %v3160, 0
  %v4156 = vsel %vm3404, %v3161, 0
  %v4159 = vsel %vm3404, %v3162, 0
  %v4162 = vsel %vm3404, %v3163, 0
  %v4165 = vsel %vm3404, %v3164, 0
  %v4168 = vsel %vm3404, %v3165, 0
  %v4171 = vsel %vm3404, %v3166, 0
  %v4174 = vsel %vm3404, %v3167, 0
  %v4177 = vsel %vm3404, %v3168, 0
  %v4180 = vsel %vm3404, %v3169, 0
  %v4183 = vsel %vm3404, %v3170, 0
  %v4186 = vsel %vm3404, %v3171, 0
  %v4189 = vsel %vm3404, %v3172, 0
  %v4192 = vsel %vm3404, %v3173, 0
  %v4195 = vsel %vm3404, %v3174, 0
  %v4198 = vsel %vm3404, %v3175, 0
  %v4201 = vsel %vm3404, %v3176, 0
  %v4204 = vsel %vm3404, %v3177, 0
  %v4207 = vsel %vm3404, %v3178, 0
  %v4210 = vsel %vm3404, %v3179, 0
  %v4213 = vsel %vm3404, %v3180, 0
  %v4216 = vsel %vm3404, %v3181, 0
  %v4219 = vsel %vm3404, %v3182, 0
  %v4222 = vsel %vm3404, %v3183, 0
  %v4225 = vsel %vm3404, %v3184, 0
  %v4228 = vsel %vm3404, %v3185, 0
  %v4231 = vsel %vm3404, %v3186, 0
  %v4234 = vsel %vm3404, %v3187, 0
  %v4237 = vsel %vm3404, %v3188, 0
  %v4240 = vsel %vm3404, %v3189, 0
  %v4243 = vsel %vm3404, %v3190, 0
  %v4246 = vsel %vm3404, %v3191, 0
  %v4249 = vsel %vm3404, %v3192, 0
  %v4252 = vsel %vm3404, %v3193, 0
  %v4255 = vsel %vm3404, %v3194, 0
  %v4258 = vsel %vm3404, %v3195, 0
  %v4261 = vsel %vm3404, %v3196, 0
  %v4264 = vsel %vm3404, %v3197, 0
  %v4267 = vsel %vm3404, %v3198, 0
  %v4270 = vsel %vm3404, %v3199, 0
  %v4273 = vsel %vm3404, %v3200, 0
  %v4276 = vsel %vm3404, %v3201, 0
  %v4279 = vsel %vm3404, %v3202, 0
  %v4282 = vsel %vm3404, %v3203, 0
  %v4285 = vsel %vm3404, %v3204, 0
  %v4288 = vsel %vm3404, %v3205, 0
  %v4291 = vsel %vm3404, %v3206, 0
  %v4294 = vsel %vm3404, %v3207, 0
  %v4297 = vsel %vm3404, %v3208, 0
  %v4300 = vsel %vm3404, %v3209, 0
  %v4303 = vsel %vm3404, %v3210, 0
  %v4306 = vsel %vm3404, %v3211, 0
  %v4309 = vsel %vm3404, %v3212, 0
  %v4312 = vsel %vm3404, %v3213, 0
  %v4315 = vsel %vm3404, %v3214, 0
  %v4318 = vsel %vm3404, %v3215, 0
  %v4321 = vsel %vm3404, %v3216, 0
  %v4324 = vsel %vm3404, %v3217, 0
  %v4327 = vsel %vm3404, %v3218, 0
  %v4330 = vsel %vm3404, %v3219, 0
  %v4333 = vsel %vm3404, %v3220, 0
  %v4336 = vsel %vm3404, %v3221, 0
  %v4339 = vsel %vm3404, %v3222, 0
  %v4342 = vsel %vm3404, %v3223, 0
  %v4345 = vsel %vm3404, %v3224, 0
  %v4348 = vsel %vm3404, %v3225, 0
  %v4351 = vsel %vm3404, %v3226, 0
  %v4354 = vsel %vm3404, %v3227, 0
  %v4357 = vsel %vm3404, %v3228, 0
  %v4360 = vsel %vm3404, %v3229, 0
  %v4363 = vsel %vm3404, %v3230, 0
  %v4366 = vsel %vm3404, %v3231, 0
  %v4369 = vsel %vm3404, %v3232, 0
  %v4372 = vsel %vm3404, %v3233, 0
  %v4375 = vsel %vm3404, %v3234, 0
  %v4378 = vsel %vm3404, %v3235, 0
  %v4381 = vsel %vm3404, %v3236, 0
  %v4384 = vsel %vm3404, %v3237, 0
  %v4387 = vsel %vm3404, %v3238, 0
  %v4390 = vsel %vm3404, %v3239, 0
  %v4393 = vsel %vm3404, %v3240, 0
  %v4396 = vsel %vm3404, %v3241, 0
  %v4399 = vsel %vm3404, %v3242, 0
  %v4402 = vsel %vm3404, %v3243, 0
  %v4405 = vsel %vm3404, %v3244, 0
  %v4408 = vsel %vm3404, %v3245, 0
  %v4411 = vsel %vm3404, %v3246, 0
  %v4414 = vsel %vm3404, %v3247, 0
  %v4417 = vsel %vm3404, %v3248, 0
  %v4420 = vsel %vm3404, %v3249, 0
  %v4423 = vsel %vm3404, %v3250, 0
  %v4426 = vsel %vm3404, %v3251, 0
  %v4429 = vsel %vm3404, %v3252, 0
  %v4432 = vsel %vm3404, %v3253, 0
  %v4435 = vsel %vm3404, %v3254, 0
  %v4438 = vsel %vm3404, %v3255, 0
  %v4441 = vsel %vm3404, %v3256, 0
  %v4444 = vsel %vm3404, %v3257, 0
  %v4447 = vsel %vm3404, %v3258, 0
  %v4450 = vsel %vm3404, %v3259, 0
  %v4453 = vsel %vm3404, %v3260, 0
  %v4456 = vsel %vm3404, %v3261, 0
  %v4459 = vsel %vm3404, %v3262, 0
  %v4462 = vsel %vm3404, %v3263, 0
  %v4465 = vsel %vm3404, %v3264, 0
  %v4468 = vsel %vm3404, %v3265, 0
  %v4471 = vsel %vm3404, %v3266, 0
  %v4474 = vsel %vm3404, %v3267, 0
  %v4477 = vsel %vm3404, %v3268, 0
  %v4480 = vsel %vm3404, %v3269, 0
  %v4483 = vsel %vm3404, %v3270, 0
  %v4486 = vsel %vm3404, %v3271, 0
  %v4489 = vsel %vm3404, %v3272, 0
  %v4492 = vsel %vm3404, %v3273, 0
  %v4495 = vsel %vm3404, %v3274, 0
  %v4498 = vsel %vm3404, %v3275, 0
  %v4501 = vsel %vm3404, %v3276, 0
  %v4504 = vsel %vm3404, %v3277, 0
  %v4507 = vsel %vm3404, %v3278, 0
  %v4510 = vsel %vm3404, %v3279, 0
  %v4513 = vsel %vm3404, %v3280, 0
  %v4516 = vsel %vm3404, %v3281, 0
  %v4519 = vsel %vm3404, %v3282, 0
  %v4522 = vsel %vm3404, %v3283, 0
  %v4525 = vsel %vm3404, %v3284, 0
  %v4528 = vsel %vm3404, %v3285, 0
  %v4531 = vsel %vm3404, %v3286, 0
  %v4534 = vsel %vm3404, %v3287, 0
  %v4537 = vsel %vm3404, %v3288, 0
  %v4540 = vsel %vm3404, %v3289, 0
  %v4543 = vsel %vm3404, %v3290, 0
  %v4546 = vsel %vm3404, %v3291, 0
  %v4549 = vsel %vm3404, %v3292, 0
  %v4552 = vsel %vm3404, %v3293, 0
  %v4555 = vsel %vm3404, %v3294, 0
  %v4558 = vsel %vm3404, %v3295, 0
  %v4561 = vsel %vm3404, %v3296, 0
  %v4564 = vsel %vm3404, %v3297, 0
  %v4567 = vsel %vm3404, %v3298, 0
  %v4570 = vsel %vm3404, %v3299, 0
  %v4573 = vsel %vm3404, %v3300, 0
  %v4576 = vsel %vm3404, %v3301, 0
  %v4579 = vsel %vm3404, %v3302, 0
  %v4582 = vsel %vm3404, %v3303, 0
  %v4585 = vsel %vm3404, %v3304, 0
  %v4588 = vsel %vm3404, %v3305, 0
  %v4591 = vsel %vm3404, %v3306, 0
  %v4594 = vsel %vm3404, %v3307, 0
  %v4597 = vsel %vm3404, %v3308, 0
  %v4600 = vsel %vm3404, %v3309, 0
  %v4603 = vsel %vm3404, %v3310, 0
  %v4606 = vsel %vm3404, %v3311, 0
  %v4609 = vsel %vm3404, %v3312, 0
  %v4612 = vsel %vm3404, %v3313, 0
  %v4615 = vsel %vm3404, %v3314, 0
  %v4618 = vsel %vm3404, %v3315, 0
  %v4621 = vsel %vm3404, %v3316, 0
  %v4624 = vsel %vm3404, %v3317, 0
  %v4627 = vsel %vm3404, %v3318, 0
  %v4630 = vsel %vm3404, %v3319, 0
  %v4633 = vsel %vm3404, %v3320, 0
  %v4636 = vsel %vm3404, %v3321, 0
  %v4639 = vsel %vm3404, %v3322, 0
  %v4642 = vsel %vm3404, %v3323, 0
  %v4645 = vsel %vm3404, %v3324, 0
  %v4648 = vsel %vm3404, %v3325, 0
  %v4651 = vsel %vm3404, %v3326, 0
  %v4654 = vsel %vm3404, %v3327, 0
  %v4657 = vsel %vm3404, %v3328, 0
  %v4660 = vsel %vm3404, %v3329, 0
  %v4663 = vsel %vm3404, %v3330, 0
  %v4666 = vsel %vm3404, %v3331, 0
  %v4669 = vsel %vm3404, %v3332, 0
  %v4672 = vsel %vm3404, %v3333, 0
  %v4675 = vsel %vm3404, %v3334, 0
  %v4678 = vsel %vm3404, %v3335, 0
  %v4681 = vsel %vm3404, %v3336, 0
  %v4684 = vsel %vm3404, %v3337, 0
  %v4687 = vsel %vm3404, %v3338, 0
  %v4690 = vsel %vm3404, %v3339, 0
  %v4693 = vsel %vm3404, %v3340, 0
  %v4696 = vsel %vm3404, %v3341, 0
  %v4699 = vsel %vm3404, %v3342, 0
  %v4702 = vsel %vm3404, %v3343, 0
  %v4705 = vsel %vm3404, %v3344, 0
  %v4708 = vsel %vm3404, %v3345, 0
  %v4711 = vsel %vm3404, %v3346, 0
  %v4714 = vsel %vm3404, %v3347, 0
  %v4717 = vsel %vm3404, %v3348, 0
  %v4720 = vsel %vm3404, %v3349, 0
  %v4723 = vsel %vm3404, %v3350, 0
  %v4726 = vsel %vm3404, %v3351, 0
  %v4729 = vsel %vm3404, %v3352, 0
  %v4732 = vsel %vm3404, %v3353, 0
  %v4735 = vsel %vm3404, %v3354, 0
  %v4738 = vsel %vm3404, %v3355, 0
  %v4741 = vsel %vm3404, %v3356, 0
  %v4744 = vsel %vm3404, %v3357, 0
  %v4747 = vsel %vm3404, %v3358, 0
  %v4750 = vsel %vm3404, %v3359, 0
  %v4753 = vsel %vm3404, %v3360, 0
  %v4756 = vsel %vm3404, %v3361, 0
  %v4759 = vsel %vm3404, %v3362, 0
  %v4762 = vsel %vm3404, %v3363, 0
  %v4765 = vsel %vm3404, %v3364, 0
  %v4768 = vsel %vm3404, %v3365, 0
  %v4771 = vsel %vm3404, %v3366, 0
  %v4774 = vsel %vm3404, %v3367, 0
  %v4777 = vsel %vm3404, %v3368, 0
  %v4780 = vsel %vm3404, %v3369, 0
  %v4783 = vsel %vm3404, %v3370, 0
  %v4786 = vsel %vm3404, %v3371, 0
  %v4789 = vsel %vm3404, %v3372, 0
  %v4792 = vsel %vm3404, %v3373, 0
  %v4795 = vsel %vm3404, %v3374, 0
  %v4798 = vsel %vm3404, %v3375, 0
  %v4801 = vsel %vm3404, %v3376, 0
  %v4804 = vsel %vm3404, %v3377, 0
  %v4807 = vsel %vm3404, %v3378, 0
  %v4810 = vsel %vm3404, %v3379, 0
  %v4813 = vsel %vm3404, %v3380, 0
  %v4816 = vsel %vm3404, %v3381, 0
  %v4819 = vsel %vm3404, %v3382, 0
  %v4822 = vsel %vm3404, %v3383, 0
  %v4825 = vsel %vm3404, %v3384, 0
  %v4828 = vsel %vm3404, %v3385, 0
  %v4831 = vsel %vm3404, %v3386, 0
  %v4834 = vsel %vm3404, %v3387, 0
  %v4837 = vsel %vm3404, %v3388, 0
  %v4840 = vsel %vm3404, %v3389, 0
  %v4843 = vsel %vm3404, %v3390, 0
  %v4846 = vsel %vm3404, %v3391, 0
  %v4849 = vsel %vm3404, %v3392, 0
  %vm4851 = vcmask 1044480
  %vm4852 = vcmask 1045504
  %v4853 = vsel %vm4851, 4294967295, 65535
  %v4854 = vsel %vm4852, %v4853, 0
  %v4856 = vand.u32 %v3402, %v4854
  %4858 = vmatpush.bf16.msra.mxu0 0
  %4859 = vmatpush.bf16.msra.mxu0 0
  %4860 = vmatpush.bf16.msra.mxu0 0
  %4861 = vmatpush.bf16.msra.mxu0 0
  %4862 = vmatpush.bf16.msra.mxu0 0
  %4863 = vmatpush.bf16.msra.mxu0 0
  %4864 = vmatpush.bf16.msra.mxu0 %v4856
  %4865 = vmatpush.bf16.msra.mxu0 %v3401
  %4866 = vmatmul.bf16.gmra.mxu0 %v3406
  %v4867 = vpop.f32.mrf.mxu0
  %v4868 = vadd.f32 0.0, %v4867
  %v4869 = vpop.f32.mrf.mxu0
  %v4870 = vadd.f32 0.0, %v4869
  %4871 = vmatmul.bf16.gmra.mxu0 %v3409
  %v4872 = vpop.f32.mrf.mxu0
  %v4873 = vadd.f32 0.0, %v4872
  %v4874 = vpop.f32.mrf.mxu0
  %v4875 = vadd.f32 0.0, %v4874
  %4876 = vmatmul.bf16.gmra.mxu0 %v3412
  %v4877 = vpop.f32.mrf.mxu0
  %v4878 = vadd.f32 0.0, %v4877
  %v4879 = vpop.f32.mrf.mxu0
  %v4880 = vadd.f32 0.0, %v4879
  %4881 = vmatmul.bf16.gmra.mxu0 %v3415
  %v4882 = vpop.f32.mrf.mxu0
  %v4883 = vadd.f32 0.0, %v4882
  %v4884 = vpop.f32.mrf.mxu0
  %v4885 = vadd.f32 0.0, %v4884
  %4886 = vmatmul.bf16.gmra.mxu0 %v3418
  %v4887 = vpop.f32.mrf.mxu0
  %v4888 = vadd.f32 0.0, %v4887
  %v4889 = vpop.f32.mrf.mxu0
  %v4890 = vadd.f32 0.0, %v4889
  %4891 = vmatmul.bf16.gmra.mxu0 %v3421
  %v4892 = vpop.f32.mrf.mxu0
  %v4893 = vadd.f32 0.0, %v4892
  %v4894 = vpop.f32.mrf.mxu0
  %v4895 = vadd.f32 0.0, %v4894
  %4896 = vmatmul.bf16.gmra.mxu0 %v3424
  %v4897 = vpop.f32.mrf.mxu0
  %v4898 = vadd.f32 0.0, %v4897
  %v4899 = vpop.f32.mrf.mxu0
  %v4900 = vadd.f32 0.0, %v4899
  %4901 = vmatmul.bf16.gmra.mxu0 %v3427
  %v4902 = vpop.f32.mrf.mxu0
  %v4903 = vadd.f32 0.0, %v4902
  %v4904 = vpop.f32.mrf.mxu0
  %v4905 = vadd.f32 0.0, %v4904
  %4906 = vmatmul.bf16.gmra.mxu0 %v3430
  %v4907 = vpop.f32.mrf.mxu0
  %v4908 = vadd.f32 0.0, %v4907
  %v4909 = vpop.f32.mrf.mxu0
  %v4910 = vadd.f32 0.0, %v4909
  %4911 = vmatmul.bf16.gmra.mxu0 %v3433
  %v4912 = vpop.f32.mrf.mxu0
  %v4913 = vadd.f32 0.0, %v4912
  %v4914 = vpop.f32.mrf.mxu0
  %v4915 = vadd.f32 0.0, %v4914
  %4916 = vmatmul.bf16.gmra.mxu0 %v3436
  %v4917 = vpop.f32.mrf.mxu0
  %v4918 = vadd.f32 0.0, %v4917
  %v4919 = vpop.f32.mrf.mxu0
  %v4920 = vadd.f32 0.0, %v4919
  %4921 = vmatmul.bf16.gmra.mxu0 %v3439
  %v4922 = vpop.f32.mrf.mxu0
  %v4923 = vadd.f32 0.0, %v4922
  %v4924 = vpop.f32.mrf.mxu0
  %v4925 = vadd.f32 0.0, %v4924
  %4926 = vmatmul.bf16.gmra.mxu0 %v3442
  %v4927 = vpop.f32.mrf.mxu0
  %v4928 = vadd.f32 0.0, %v4927
  %v4929 = vpop.f32.mrf.mxu0
  %v4930 = vadd.f32 0.0, %v4929
  %4931 = vmatmul.bf16.gmra.mxu0 %v3445
  %v4932 = vpop.f32.mrf.mxu0
  %v4933 = vadd.f32 0.0, %v4932
  %v4934 = vpop.f32.mrf.mxu0
  %v4935 = vadd.f32 0.0, %v4934
  %4936 = vmatmul.bf16.gmra.mxu0 %v3448
  %v4937 = vpop.f32.mrf.mxu0
  %v4938 = vadd.f32 0.0, %v4937
  %v4939 = vpop.f32.mrf.mxu0
  %v4940 = vadd.f32 0.0, %v4939
  %4941 = vmatmul.bf16.gmra.mxu0 %v3451
  %v4942 = vpop.f32.mrf.mxu0
  %v4943 = vadd.f32 0.0, %v4942
  %v4944 = vpop.f32.mrf.mxu0
  %v4945 = vadd.f32 0.0, %v4944
  %4946 = vmatmul.bf16.gmra.mxu0 %v3454
  %v4947 = vpop.f32.mrf.mxu0
  %v4948 = vadd.f32 0.0, %v4947
  %v4949 = vpop.f32.mrf.mxu0
  %v4950 = vadd.f32 0.0, %v4949
  %4951 = vmatmul.bf16.gmra.mxu0 %v3457
  %v4952 = vpop.f32.mrf.mxu0
  %v4953 = vadd.f32 0.0, %v4952
  %v4954 = vpop.f32.mrf.mxu0
  %v4955 = vadd.f32 0.0, %v4954
  %4956 = vmatmul.bf16.gmra.mxu0 %v3460
  %v4957 = vpop.f32.mrf.mxu0
  %v4958 = vadd.f32 0.0, %v4957
  %v4959 = vpop.f32.mrf.mxu0
  %v4960 = vadd.f32 0.0, %v4959
  %4961 = vmatmul.bf16.gmra.mxu0 %v3463
  %v4962 = vpop.f32.mrf.mxu0
  %v4963 = vadd.f32 0.0, %v4962
  %v4964 = vpop.f32.mrf.mxu0
  %v4965 = vadd.f32 0.0, %v4964
  %4966 = vmatmul.bf16.gmra.mxu0 %v3466
  %v4967 = vpop.f32.mrf.mxu0
  %v4968 = vadd.f32 0.0, %v4967
  %v4969 = vpop.f32.mrf.mxu0
  %v4970 = vadd.f32 0.0, %v4969
  %4971 = vmatmul.bf16.gmra.mxu0 %v3469
  %v4972 = vpop.f32.mrf.mxu0
  %v4973 = vadd.f32 0.0, %v4972
  %v4974 = vpop.f32.mrf.mxu0
  %v4975 = vadd.f32 0.0, %v4974
  %4976 = vmatmul.bf16.gmra.mxu0 %v3472
  %v4977 = vpop.f32.mrf.mxu0
  %v4978 = vadd.f32 0.0, %v4977
  %v4979 = vpop.f32.mrf.mxu0
  %v4980 = vadd.f32 0.0, %v4979
  %4981 = vmatmul.bf16.gmra.mxu0 %v3475
  %v4982 = vpop.f32.mrf.mxu0
  %v4983 = vadd.f32 0.0, %v4982
  %v4984 = vpop.f32.mrf.mxu0
  %v4985 = vadd.f32 0.0, %v4984
  %4986 = vmatmul.bf16.gmra.mxu0 %v3478
  %v4987 = vpop.f32.mrf.mxu0
  %v4988 = vadd.f32 0.0, %v4987
  %v4989 = vpop.f32.mrf.mxu0
  %v4990 = vadd.f32 0.0, %v4989
  %4991 = vmatmul.bf16.gmra.mxu0 %v3481
  %v4992 = vpop.f32.mrf.mxu0
  %v4993 = vadd.f32 0.0, %v4992
  %v4994 = vpop.f32.mrf.mxu0
  %v4995 = vadd.f32 0.0, %v4994
  %4996 = vmatmul.bf16.gmra.mxu0 %v3484
  %v4997 = vpop.f32.mrf.mxu0
  %v4998 = vadd.f32 0.0, %v4997
  %v4999 = vpop.f32.mrf.mxu0
  %v5000 = vadd.f32 0.0, %v4999
  %5001 = vmatmul.bf16.gmra.mxu0 %v3487
  %v5002 = vpop.f32.mrf.mxu0
  %v5003 = vadd.f32 0.0, %v5002
  %v5004 = vpop.f32.mrf.mxu0
  %v5005 = vadd.f32 0.0, %v5004
  %5006 = vmatmul.bf16.gmra.mxu0 %v3490
  %v5007 = vpop.f32.mrf.mxu0
  %v5008 = vadd.f32 0.0, %v5007
  %v5009 = vpop.f32.mrf.mxu0
  %v5010 = vadd.f32 0.0, %v5009
  %5011 = vmatmul.bf16.gmra.mxu0 %v3493
  %v5012 = vpop.f32.mrf.mxu0
  %v5013 = vadd.f32 0.0, %v5012
  %v5014 = vpop.f32.mrf.mxu0
  %v5015 = vadd.f32 0.0, %v5014
  %5016 = vmatmul.bf16.gmra.mxu0 %v3496
  %v5017 = vpop.f32.mrf.mxu0
  %v5018 = vadd.f32 0.0, %v5017
  %v5019 = vpop.f32.mrf.mxu0
  %v5020 = vadd.f32 0.0, %v5019
  %5021 = vmatmul.bf16.gmra.mxu0 %v3499
  %v5022 = vpop.f32.mrf.mxu0
  %v5023 = vadd.f32 0.0, %v5022
  %v5024 = vpop.f32.mrf.mxu0
  %v5025 = vadd.f32 0.0, %v5024
  %5026 = vmatmul.bf16.gmra.mxu0 %v3502
  %v5027 = vpop.f32.mrf.mxu0
  %v5028 = vadd.f32 0.0, %v5027
  %v5029 = vpop.f32.mrf.mxu0
  %v5030 = vadd.f32 0.0, %v5029
  %5031 = vmatmul.bf16.gmra.mxu0 %v3505
  %v5032 = vpop.f32.mrf.mxu0
  %v5033 = vadd.f32 0.0, %v5032
  %v5034 = vpop.f32.mrf.mxu0
  %v5035 = vadd.f32 0.0, %v5034
  %5036 = vmatmul.bf16.gmra.mxu0 %v3508
  %v5037 = vpop.f32.mrf.mxu0
  %v5038 = vadd.f32 0.0, %v5037
  %v5039 = vpop.f32.mrf.mxu0
  %v5040 = vadd.f32 0.0, %v5039
  %5041 = vmatmul.bf16.gmra.mxu0 %v3511
  %v5042 = vpop.f32.mrf.mxu0
  %v5043 = vadd.f32 0.0, %v5042
  %v5044 = vpop.f32.mrf.mxu0
  %v5045 = vadd.f32 0.0, %v5044
  %5046 = vmatmul.bf16.gmra.mxu0 %v3514
  %v5047 = vpop.f32.mrf.mxu0
  %v5048 = vadd.f32 0.0, %v5047
  %v5049 = vpop.f32.mrf.mxu0
  %v5050 = vadd.f32 0.0, %v5049
  %5051 = vmatmul.bf16.gmra.mxu0 %v3517
  %v5052 = vpop.f32.mrf.mxu0
  %v5053 = vadd.f32 0.0, %v5052
  %v5054 = vpop.f32.mrf.mxu0
  %v5055 = vadd.f32 0.0, %v5054
  %5056 = vmatmul.bf16.gmra.mxu0 %v3520
  %v5057 = vpop.f32.mrf.mxu0
  %v5058 = vadd.f32 0.0, %v5057
  %v5059 = vpop.f32.mrf.mxu0
  %v5060 = vadd.f32 0.0, %v5059
  %5061 = vmatmul.bf16.gmra.mxu0 %v3523
  %v5062 = vpop.f32.mrf.mxu0
  %v5063 = vadd.f32 0.0, %v5062
  %v5064 = vpop.f32.mrf.mxu0
  %v5065 = vadd.f32 0.0, %v5064
  %5066 = vmatmul.bf16.gmra.mxu0 %v3526
  %v5067 = vpop.f32.mrf.mxu0
  %v5068 = vadd.f32 0.0, %v5067
  %v5069 = vpop.f32.mrf.mxu0
  %v5070 = vadd.f32 0.0, %v5069
  %5071 = vmatmul.bf16.gmra.mxu0 %v3529
  %v5072 = vpop.f32.mrf.mxu0
  %v5073 = vadd.f32 0.0, %v5072
  %v5074 = vpop.f32.mrf.mxu0
  %v5075 = vadd.f32 0.0, %v5074
  %5076 = vmatmul.bf16.gmra.mxu0 %v3532
  %v5077 = vpop.f32.mrf.mxu0
  %v5078 = vadd.f32 0.0, %v5077
  %v5079 = vpop.f32.mrf.mxu0
  %v5080 = vadd.f32 0.0, %v5079
  %5081 = vmatmul.bf16.gmra.mxu0 %v3535
  %v5082 = vpop.f32.mrf.mxu0
  %v5083 = vadd.f32 0.0, %v5082
  %v5084 = vpop.f32.mrf.mxu0
  %v5085 = vadd.f32 0.0, %v5084
  %5086 = vmatmul.bf16.gmra.mxu0 %v3538
  %v5087 = vpop.f32.mrf.mxu0
  %v5088 = vadd.f32 0.0, %v5087
  %v5089 = vpop.f32.mrf.mxu0
  %v5090 = vadd.f32 0.0, %v5089
  %5091 = vmatmul.bf16.gmra.mxu0 %v3541
  %v5092 = vpop.f32.mrf.mxu0
  %v5093 = vadd.f32 0.0, %v5092
  %v5094 = vpop.f32.mrf.mxu0
  %v5095 = vadd.f32 0.0, %v5094
  %5096 = vmatmul.bf16.gmra.mxu0 %v3544
  %v5097 = vpop.f32.mrf.mxu0
  %v5098 = vadd.f32 0.0, %v5097
  %v5099 = vpop.f32.mrf.mxu0
  %v5100 = vadd.f32 0.0, %v5099
  %5101 = vmatmul.bf16.gmra.mxu0 %v3547
  %v5102 = vpop.f32.mrf.mxu0
  %v5103 = vadd.f32 0.0, %v5102
  %v5104 = vpop.f32.mrf.mxu0
  %v5105 = vadd.f32 0.0, %v5104
  %5106 = vmatmul.bf16.gmra.mxu0 %v3550
  %v5107 = vpop.f32.mrf.mxu0
  %v5108 = vadd.f32 0.0, %v5107
  %v5109 = vpop.f32.mrf.mxu0
  %v5110 = vadd.f32 0.0, %v5109
  %5111 = vmatmul.bf16.gmra.mxu0 %v3553
  %v5112 = vpop.f32.mrf.mxu0
  %v5113 = vadd.f32 0.0, %v5112
  %v5114 = vpop.f32.mrf.mxu0
  %v5115 = vadd.f32 0.0, %v5114
  %5116 = vmatmul.bf16.gmra.mxu0 %v3556
  %v5117 = vpop.f32.mrf.mxu0
  %v5118 = vadd.f32 0.0, %v5117
  %v5119 = vpop.f32.mrf.mxu0
  %v5120 = vadd.f32 0.0, %v5119
  %5121 = vmatmul.bf16.gmra.mxu0 %v3559
  %v5122 = vpop.f32.mrf.mxu0
  %v5123 = vadd.f32 0.0, %v5122
  %v5124 = vpop.f32.mrf.mxu0
  %v5125 = vadd.f32 0.0, %v5124
  %5126 = vmatmul.bf16.gmra.mxu0 %v3562
  %v5127 = vpop.f32.mrf.mxu0
  %v5128 = vadd.f32 0.0, %v5127
  %v5129 = vpop.f32.mrf.mxu0
  %v5130 = vadd.f32 0.0, %v5129
  %5131 = vmatmul.bf16.gmra.mxu0 %v3565
  %v5132 = vpop.f32.mrf.mxu0
  %v5133 = vadd.f32 0.0, %v5132
  %v5134 = vpop.f32.mrf.mxu0
  %v5135 = vadd.f32 0.0, %v5134
  %5136 = vmatmul.bf16.gmra.mxu0 %v3568
  %v5137 = vpop.f32.mrf.mxu0
  %v5138 = vadd.f32 0.0, %v5137
  %v5139 = vpop.f32.mrf.mxu0
  %v5140 = vadd.f32 0.0, %v5139
  %5141 = vmatmul.bf16.gmra.mxu0 %v3571
  %v5142 = vpop.f32.mrf.mxu0
  %v5143 = vadd.f32 0.0, %v5142
  %v5144 = vpop.f32.mrf.mxu0
  %v5145 = vadd.f32 0.0, %v5144
  %5146 = vmatmul.bf16.gmra.mxu0 %v3574
  %v5147 = vpop.f32.mrf.mxu0
  %v5148 = vadd.f32 0.0, %v5147
  %v5149 = vpop.f32.mrf.mxu0
  %v5150 = vadd.f32 0.0, %v5149
  %5151 = vmatmul.bf16.gmra.mxu0 %v3577
  %v5152 = vpop.f32.mrf.mxu0
  %v5153 = vadd.f32 0.0, %v5152
  %v5154 = vpop.f32.mrf.mxu0
  %v5155 = vadd.f32 0.0, %v5154
  %5156 = vmatmul.bf16.gmra.mxu0 %v3580
  %v5157 = vpop.f32.mrf.mxu0
  %v5158 = vadd.f32 0.0, %v5157
  %v5159 = vpop.f32.mrf.mxu0
  %v5160 = vadd.f32 0.0, %v5159
  %5161 = vmatmul.bf16.gmra.mxu0 %v3583
  %v5162 = vpop.f32.mrf.mxu0
  %v5163 = vadd.f32 0.0, %v5162
  %v5164 = vpop.f32.mrf.mxu0
  %v5165 = vadd.f32 0.0, %v5164
  %5166 = vmatmul.bf16.gmra.mxu0 %v3586
  %v5167 = vpop.f32.mrf.mxu0
  %v5168 = vadd.f32 0.0, %v5167
  %v5169 = vpop.f32.mrf.mxu0
  %v5170 = vadd.f32 0.0, %v5169
  %5171 = vmatmul.bf16.gmra.mxu0 %v3589
  %v5172 = vpop.f32.mrf.mxu0
  %v5173 = vadd.f32 0.0, %v5172
  %v5174 = vpop.f32.mrf.mxu0
  %v5175 = vadd.f32 0.0, %v5174
  %5176 = vmatmul.bf16.gmra.mxu0 %v3592
  %v5177 = vpop.f32.mrf.mxu0
  %v5178 = vadd.f32 0.0, %v5177
  %v5179 = vpop.f32.mrf.mxu0
  %v5180 = vadd.f32 0.0, %v5179
  %5181 = vmatmul.bf16.gmra.mxu0 %v3595
  %v5182 = vpop.f32.mrf.mxu0
  %v5183 = vadd.f32 0.0, %v5182
  %v5184 = vpop.f32.mrf.mxu0
  %v5185 = vadd.f32 0.0, %v5184
  %5186 = vmatmul.bf16.gmra.mxu0 %v3598
  %v5187 = vpop.f32.mrf.mxu0
  %v5188 = vadd.f32 0.0, %v5187
  %v5189 = vpop.f32.mrf.mxu0
  %v5190 = vadd.f32 0.0, %v5189
  %5191 = vmatmul.bf16.gmra.mxu0 %v3601
  %v5192 = vpop.f32.mrf.mxu0
  %v5193 = vadd.f32 0.0, %v5192
  %v5194 = vpop.f32.mrf.mxu0
  %v5195 = vadd.f32 0.0, %v5194
  %5196 = vmatmul.bf16.gmra.mxu0 %v3604
  %v5197 = vpop.f32.mrf.mxu0
  %v5198 = vadd.f32 0.0, %v5197
  %v5199 = vpop.f32.mrf.mxu0
  %v5200 = vadd.f32 0.0, %v5199
  %5201 = vmatmul.bf16.gmra.mxu0 %v3607
  %v5202 = vpop.f32.mrf.mxu0
  %v5203 = vadd.f32 0.0, %v5202
  %v5204 = vpop.f32.mrf.mxu0
  %v5205 = vadd.f32 0.0, %v5204
  %5206 = vmatmul.bf16.gmra.mxu0 %v3610
  %v5207 = vpop.f32.mrf.mxu0
  %v5208 = vadd.f32 0.0, %v5207
  %v5209 = vpop.f32.mrf.mxu0
  %v5210 = vadd.f32 0.0, %v5209
  %5211 = vmatmul.bf16.gmra.mxu0 %v3613
  %v5212 = vpop.f32.mrf.mxu0
  %v5213 = vadd.f32 0.0, %v5212
  %v5214 = vpop.f32.mrf.mxu0
  %v5215 = vadd.f32 0.0, %v5214
  %5216 = vmatmul.bf16.gmra.mxu0 %v3616
  %v5217 = vpop.f32.mrf.mxu0
  %v5218 = vadd.f32 0.0, %v5217
  %v5219 = vpop.f32.mrf.mxu0
  %v5220 = vadd.f32 0.0, %v5219
  %5221 = vmatmul.bf16.gmra.mxu0 %v3619
  %v5222 = vpop.f32.mrf.mxu0
  %v5223 = vadd.f32 0.0, %v5222
  %v5224 = vpop.f32.mrf.mxu0
  %v5225 = vadd.f32 0.0, %v5224
  %5226 = vmatmul.bf16.gmra.mxu0 %v3622
  %v5227 = vpop.f32.mrf.mxu0
  %v5228 = vadd.f32 0.0, %v5227
  %v5229 = vpop.f32.mrf.mxu0
  %v5230 = vadd.f32 0.0, %v5229
  %5231 = vmatmul.bf16.gmra.mxu0 %v3625
  %v5232 = vpop.f32.mrf.mxu0
  %v5233 = vadd.f32 0.0, %v5232
  %v5234 = vpop.f32.mrf.mxu0
  %v5235 = vadd.f32 0.0, %v5234
  %5236 = vmatmul.bf16.gmra.mxu0 %v3628
  %v5237 = vpop.f32.mrf.mxu0
  %v5238 = vadd.f32 0.0, %v5237
  %v5239 = vpop.f32.mrf.mxu0
  %v5240 = vadd.f32 0.0, %v5239
  %5241 = vmatmul.bf16.gmra.mxu0 %v3631
  %v5242 = vpop.f32.mrf.mxu0
  %v5243 = vadd.f32 0.0, %v5242
  %v5244 = vpop.f32.mrf.mxu0
  %v5245 = vadd.f32 0.0, %v5244
  %5246 = vmatmul.bf16.gmra.mxu0 %v3634
  %v5247 = vpop.f32.mrf.mxu0
  %v5248 = vadd.f32 0.0, %v5247
  %v5249 = vpop.f32.mrf.mxu0
  %v5250 = vadd.f32 0.0, %v5249
  %5251 = vmatmul.bf16.gmra.mxu0 %v3637
  %v5252 = vpop.f32.mrf.mxu0
  %v5253 = vadd.f32 0.0, %v5252
  %v5254 = vpop.f32.mrf.mxu0
  %v5255 = vadd.f32 0.0, %v5254
  %5256 = vmatmul.bf16.gmra.mxu0 %v3640
  %v5257 = vpop.f32.mrf.mxu0
  %v5258 = vadd.f32 0.0, %v5257
  %v5259 = vpop.f32.mrf.mxu0
  %v5260 = vadd.f32 0.0, %v5259
  %5261 = vmatmul.bf16.gmra.mxu0 %v3643
  %v5262 = vpop.f32.mrf.mxu0
  %v5263 = vadd.f32 0.0, %v5262
  %v5264 = vpop.f32.mrf.mxu0
  %v5265 = vadd.f32 0.0, %v5264
  %5266 = vmatmul.bf16.gmra.mxu0 %v3646
  %v5267 = vpop.f32.mrf.mxu0
  %v5268 = vadd.f32 0.0, %v5267
  %v5269 = vpop.f32.mrf.mxu0
  %v5270 = vadd.f32 0.0, %v5269
  %5271 = vmatmul.bf16.gmra.mxu0 %v3649
  %v5272 = vpop.f32.mrf.mxu0
  %v5273 = vadd.f32 0.0, %v5272
  %v5274 = vpop.f32.mrf.mxu0
  %v5275 = vadd.f32 0.0, %v5274
  %5276 = vmatmul.bf16.gmra.mxu0 %v3652
  %v5277 = vpop.f32.mrf.mxu0
  %v5278 = vadd.f32 0.0, %v5277
  %v5279 = vpop.f32.mrf.mxu0
  %v5280 = vadd.f32 0.0, %v5279
  %5281 = vmatmul.bf16.gmra.mxu0 %v3655
  %v5282 = vpop.f32.mrf.mxu0
  %v5283 = vadd.f32 0.0, %v5282
  %v5284 = vpop.f32.mrf.mxu0
  %v5285 = vadd.f32 0.0, %v5284
  %5286 = vmatmul.bf16.gmra.mxu0 %v3658
  %v5287 = vpop.f32.mrf.mxu0
  %v5288 = vadd.f32 0.0, %v5287
  %v5289 = vpop.f32.mrf.mxu0
  %v5290 = vadd.f32 0.0, %v5289
  %5291 = vmatmul.bf16.gmra.mxu0 %v3661
  %v5292 = vpop.f32.mrf.mxu0
  %v5293 = vadd.f32 0.0, %v5292
  %v5294 = vpop.f32.mrf.mxu0
  %v5295 = vadd.f32 0.0, %v5294
  %5296 = vmatmul.bf16.gmra.mxu0 %v3664
  %v5297 = vpop.f32.mrf.mxu0
  %v5298 = vadd.f32 0.0, %v5297
  %v5299 = vpop.f32.mrf.mxu0
  %v5300 = vadd.f32 0.0, %v5299
  %5301 = vmatmul.bf16.gmra.mxu0 %v3667
  %v5302 = vpop.f32.mrf.mxu0
  %v5303 = vadd.f32 0.0, %v5302
  %v5304 = vpop.f32.mrf.mxu0
  %v5305 = vadd.f32 0.0, %v5304
  %5306 = vmatmul.bf16.gmra.mxu0 %v3670
  %v5307 = vpop.f32.mrf.mxu0
  %v5308 = vadd.f32 0.0, %v5307
  %v5309 = vpop.f32.mrf.mxu0
  %v5310 = vadd.f32 0.0, %v5309
  %5311 = vmatmul.bf16.gmra.mxu0 %v3673
  %v5312 = vpop.f32.mrf.mxu0
  %v5313 = vadd.f32 0.0, %v5312
  %v5314 = vpop.f32.mrf.mxu0
  %v5315 = vadd.f32 0.0, %v5314
  %5316 = vmatmul.bf16.gmra.mxu0 %v3676
  %v5317 = vpop.f32.mrf.mxu0
  %v5318 = vadd.f32 0.0, %v5317
  %v5319 = vpop.f32.mrf.mxu0
  %v5320 = vadd.f32 0.0, %v5319
  %5321 = vmatmul.bf16.gmra.mxu0 %v3679
  %v5322 = vpop.f32.mrf.mxu0
  %v5323 = vadd.f32 0.0, %v5322
  %v5324 = vpop.f32.mrf.mxu0
  %v5325 = vadd.f32 0.0, %v5324
  %5326 = vmatmul.bf16.gmra.mxu0 %v3682
  %v5327 = vpop.f32.mrf.mxu0
  %v5328 = vadd.f32 0.0, %v5327
  %v5329 = vpop.f32.mrf.mxu0
  %v5330 = vadd.f32 0.0, %v5329
  %5331 = vmatmul.bf16.gmra.mxu0 %v3685
  %v5332 = vpop.f32.mrf.mxu0
  %v5333 = vadd.f32 0.0, %v5332
  %v5334 = vpop.f32.mrf.mxu0
  %v5335 = vadd.f32 0.0, %v5334
  %5336 = vmatmul.bf16.gmra.mxu0 %v3688
  %v5337 = vpop.f32.mrf.mxu0
  %v5338 = vadd.f32 0.0, %v5337
  %v5339 = vpop.f32.mrf.mxu0
  %v5340 = vadd.f32 0.0, %v5339
  %5341 = vmatmul.bf16.gmra.mxu0 %v3691
  %v5342 = vpop.f32.mrf.mxu0
  %v5343 = vadd.f32 0.0, %v5342
  %v5344 = vpop.f32.mrf.mxu0
  %v5345 = vadd.f32 0.0, %v5344
  %5346 = vmatmul.bf16.gmra.mxu0 %v3694
  %v5347 = vpop.f32.mrf.mxu0
  %v5348 = vadd.f32 0.0, %v5347
  %v5349 = vpop.f32.mrf.mxu0
  %v5350 = vadd.f32 0.0, %v5349
  %5351 = vmatmul.bf16.gmra.mxu0 %v3697
  %v5352 = vpop.f32.mrf.mxu0
  %v5353 = vadd.f32 0.0, %v5352
  %v5354 = vpop.f32.mrf.mxu0
  %v5355 = vadd.f32 0.0, %v5354
  %5356 = vmatmul.bf16.gmra.mxu0 %v3700
  %v5357 = vpop.f32.mrf.mxu0
  %v5358 = vadd.f32 0.0, %v5357
  %v5359 = vpop.f32.mrf.mxu0
  %v5360 = vadd.f32 0.0, %v5359
  %5361 = vmatmul.bf16.gmra.mxu0 %v3703
  %v5362 = vpop.f32.mrf.mxu0
  %v5363 = vadd.f32 0.0, %v5362
  %v5364 = vpop.f32.mrf.mxu0
  %v5365 = vadd.f32 0.0, %v5364
  %5366 = vmatmul.bf16.gmra.mxu0 %v3706
  %v5367 = vpop.f32.mrf.mxu0
  %v5368 = vadd.f32 0.0, %v5367
  %v5369 = vpop.f32.mrf.mxu0
  %v5370 = vadd.f32 0.0, %v5369
  %5371 = vmatmul.bf16.gmra.mxu0 %v3709
  %v5372 = vpop.f32.mrf.mxu0
  %v5373 = vadd.f32 0.0, %v5372
  %v5374 = vpop.f32.mrf.mxu0
  %v5375 = vadd.f32 0.0, %v5374
  %5376 = vmatmul.bf16.gmra.mxu0 %v3712
  %v5377 = vpop.f32.mrf.mxu0
  %v5378 = vadd.f32 0.0, %v5377
  %v5379 = vpop.f32.mrf.mxu0
  %v5380 = vadd.f32 0.0, %v5379
  %5381 = vmatmul.bf16.gmra.mxu0 %v3715
  %v5382 = vpop.f32.mrf.mxu0
  %v5383 = vadd.f32 0.0, %v5382
  %v5384 = vpop.f32.mrf.mxu0
  %v5385 = vadd.f32 0.0, %v5384
  %5386 = vmatmul.bf16.gmra.mxu0 %v3718
  %v5387 = vpop.f32.mrf.mxu0
  %v5388 = vadd.f32 0.0, %v5387
  %v5389 = vpop.f32.mrf.mxu0
  %v5390 = vadd.f32 0.0, %v5389
  %5391 = vmatmul.bf16.gmra.mxu0 %v3721
  %v5392 = vpop.f32.mrf.mxu0
  %v5393 = vadd.f32 0.0, %v5392
  %v5394 = vpop.f32.mrf.mxu0
  %v5395 = vadd.f32 0.0, %v5394
  %5396 = vmatmul.bf16.gmra.mxu0 %v3724
  %v5397 = vpop.f32.mrf.mxu0
  %v5398 = vadd.f32 0.0, %v5397
  %v5399 = vpop.f32.mrf.mxu0
  %v5400 = vadd.f32 0.0, %v5399
  %5401 = vmatmul.bf16.gmra.mxu0 %v3727
  %v5402 = vpop.f32.mrf.mxu0
  %v5403 = vadd.f32 0.0, %v5402
  %v5404 = vpop.f32.mrf.mxu0
  %v5405 = vadd.f32 0.0, %v5404
  %5406 = vmatmul.bf16.gmra.mxu0 %v3730
  %v5407 = vpop.f32.mrf.mxu0
  %v5408 = vadd.f32 0.0, %v5407
  %v5409 = vpop.f32.mrf.mxu0
  %v5410 = vadd.f32 0.0, %v5409
  %5411 = vmatmul.bf16.gmra.mxu0 %v3733
  %v5412 = vpop.f32.mrf.mxu0
  %v5413 = vadd.f32 0.0, %v5412
  %v5414 = vpop.f32.mrf.mxu0
  %v5415 = vadd.f32 0.0, %v5414
  %5416 = vmatmul.bf16.gmra.mxu0 %v3736
  %v5417 = vpop.f32.mrf.mxu0
  %v5418 = vadd.f32 0.0, %v5417
  %v5419 = vpop.f32.mrf.mxu0
  %v5420 = vadd.f32 0.0, %v5419
  %5421 = vmatmul.bf16.gmra.mxu0 %v3739
  %v5422 = vpop.f32.mrf.mxu0
  %v5423 = vadd.f32 0.0, %v5422
  %v5424 = vpop.f32.mrf.mxu0
  %v5425 = vadd.f32 0.0, %v5424
  %5426 = vmatmul.bf16.gmra.mxu0 %v3742
  %v5427 = vpop.f32.mrf.mxu0
  %v5428 = vadd.f32 0.0, %v5427
  %v5429 = vpop.f32.mrf.mxu0
  %v5430 = vadd.f32 0.0, %v5429
  %5431 = vmatmul.bf16.gmra.mxu0 %v3745
  %v5432 = vpop.f32.mrf.mxu0
  %v5433 = vadd.f32 0.0, %v5432
  %v5434 = vpop.f32.mrf.mxu0
  %v5435 = vadd.f32 0.0, %v5434
  %5436 = vmatmul.bf16.gmra.mxu0 %v3748
  %v5437 = vpop.f32.mrf.mxu0
  %v5438 = vadd.f32 0.0, %v5437
  %v5439 = vpop.f32.mrf.mxu0
  %v5440 = vadd.f32 0.0, %v5439
  %5441 = vmatmul.bf16.gmra.mxu0 %v3751
  %v5442 = vpop.f32.mrf.mxu0
  %v5443 = vadd.f32 0.0, %v5442
  %v5444 = vpop.f32.mrf.mxu0
  %v5445 = vadd.f32 0.0, %v5444
  %5446 = vmatmul.bf16.gmra.mxu0 %v3754
  %v5447 = vpop.f32.mrf.mxu0
  %v5448 = vadd.f32 0.0, %v5447
  %v5449 = vpop.f32.mrf.mxu0
  %v5450 = vadd.f32 0.0, %v5449
  %5451 = vmatmul.bf16.gmra.mxu0 %v3757
  %v5452 = vpop.f32.mrf.mxu0
  %v5453 = vadd.f32 0.0, %v5452
  %v5454 = vpop.f32.mrf.mxu0
  %v5455 = vadd.f32 0.0, %v5454
  %5456 = vmatmul.bf16.gmra.mxu0 %v3760
  %v5457 = vpop.f32.mrf.mxu0
  %v5458 = vadd.f32 0.0, %v5457
  %v5459 = vpop.f32.mrf.mxu0
  %v5460 = vadd.f32 0.0, %v5459
  %5461 = vmatmul.bf16.gmra.mxu0 %v3763
  %v5462 = vpop.f32.mrf.mxu0
  %v5463 = vadd.f32 0.0, %v5462
  %v5464 = vpop.f32.mrf.mxu0
  %v5465 = vadd.f32 0.0, %v5464
  %5466 = vmatmul.bf16.gmra.mxu0 %v3766
  %v5467 = vpop.f32.mrf.mxu0
  %v5468 = vadd.f32 0.0, %v5467
  %v5469 = vpop.f32.mrf.mxu0
  %v5470 = vadd.f32 0.0, %v5469
  %5471 = vmatmul.bf16.gmra.mxu0 %v3769
  %v5472 = vpop.f32.mrf.mxu0
  %v5473 = vadd.f32 0.0, %v5472
  %v5474 = vpop.f32.mrf.mxu0
  %v5475 = vadd.f32 0.0, %v5474
  %5476 = vmatmul.bf16.gmra.mxu0 %v3772
  %v5477 = vpop.f32.mrf.mxu0
  %v5478 = vadd.f32 0.0, %v5477
  %v5479 = vpop.f32.mrf.mxu0
  %v5480 = vadd.f32 0.0, %v5479
  %5481 = vmatmul.bf16.gmra.mxu0 %v3775
  %v5482 = vpop.f32.mrf.mxu0
  %v5483 = vadd.f32 0.0, %v5482
  %v5484 = vpop.f32.mrf.mxu0
  %v5485 = vadd.f32 0.0, %v5484
  %5486 = vmatmul.bf16.gmra.mxu0 %v3778
  %v5487 = vpop.f32.mrf.mxu0
  %v5488 = vadd.f32 0.0, %v5487
  %v5489 = vpop.f32.mrf.mxu0
  %v5490 = vadd.f32 0.0, %v5489
  %5491 = vmatmul.bf16.gmra.mxu0 %v3781
  %v5492 = vpop.f32.mrf.mxu0
  %v5493 = vadd.f32 0.0, %v5492
  %v5494 = vpop.f32.mrf.mxu0
  %v5495 = vadd.f32 0.0, %v5494
  %5496 = vmatmul.bf16.gmra.mxu0 %v3784
  %v5497 = vpop.f32.mrf.mxu0
  %v5498 = vadd.f32 0.0, %v5497
  %v5499 = vpop.f32.mrf.mxu0
  %v5500 = vadd.f32 0.0, %v5499
  %5501 = vmatmul.bf16.gmra.mxu0 %v3787
  %v5502 = vpop.f32.mrf.mxu0
  %v5503 = vadd.f32 0.0, %v5502
  %v5504 = vpop.f32.mrf.mxu0
  %v5505 = vadd.f32 0.0, %v5504
  %5506 = vmatmul.bf16.gmra.mxu0 %v3790
  %v5507 = vpop.f32.mrf.mxu0
  %v5508 = vadd.f32 0.0, %v5507
  %v5509 = vpop.f32.mrf.mxu0
  %v5510 = vadd.f32 0.0, %v5509
  %5511 = vmatmul.bf16.gmra.mxu0 %v3793
  %v5512 = vpop.f32.mrf.mxu0
  %v5513 = vadd.f32 0.0, %v5512
  %v5514 = vpop.f32.mrf.mxu0
  %v5515 = vadd.f32 0.0, %v5514
  %5516 = vmatmul.bf16.gmra.mxu0 %v3796
  %v5517 = vpop.f32.mrf.mxu0
  %v5518 = vadd.f32 0.0, %v5517
  %v5519 = vpop.f32.mrf.mxu0
  %v5520 = vadd.f32 0.0, %v5519
  %5521 = vmatmul.bf16.gmra.mxu0 %v3799
  %v5522 = vpop.f32.mrf.mxu0
  %v5523 = vadd.f32 0.0, %v5522
  %v5524 = vpop.f32.mrf.mxu0
  %v5525 = vadd.f32 0.0, %v5524
  %5526 = vmatmul.bf16.gmra.mxu0 %v3802
  %v5527 = vpop.f32.mrf.mxu0
  %v5528 = vadd.f32 0.0, %v5527
  %v5529 = vpop.f32.mrf.mxu0
  %v5530 = vadd.f32 0.0, %v5529
  %5531 = vmatmul.bf16.gmra.mxu0 %v3805
  %v5532 = vpop.f32.mrf.mxu0
  %v5533 = vadd.f32 0.0, %v5532
  %v5534 = vpop.f32.mrf.mxu0
  %v5535 = vadd.f32 0.0, %v5534
  %5536 = vmatmul.bf16.gmra.mxu0 %v3808
  %v5537 = vpop.f32.mrf.mxu0
  %v5538 = vadd.f32 0.0, %v5537
  %v5539 = vpop.f32.mrf.mxu0
  %v5540 = vadd.f32 0.0, %v5539
  %5541 = vmatmul.bf16.gmra.mxu0 %v3811
  %v5542 = vpop.f32.mrf.mxu0
  %v5543 = vadd.f32 0.0, %v5542
  %v5544 = vpop.f32.mrf.mxu0
  %v5545 = vadd.f32 0.0, %v5544
  %5546 = vmatmul.bf16.gmra.mxu0 %v3814
  %v5547 = vpop.f32.mrf.mxu0
  %v5548 = vadd.f32 0.0, %v5547
  %v5549 = vpop.f32.mrf.mxu0
  %v5550 = vadd.f32 0.0, %v5549
  %5551 = vmatmul.bf16.gmra.mxu0 %v3817
  %v5552 = vpop.f32.mrf.mxu0
  %v5553 = vadd.f32 0.0, %v5552
  %v5554 = vpop.f32.mrf.mxu0
  %v5555 = vadd.f32 0.0, %v5554
  %5556 = vmatmul.bf16.gmra.mxu0 %v3820
  %v5557 = vpop.f32.mrf.mxu0
  %v5558 = vadd.f32 0.0, %v5557
  %v5559 = vpop.f32.mrf.mxu0
  %v5560 = vadd.f32 0.0, %v5559
  %5561 = vmatmul.bf16.gmra.mxu0 %v3823
  %v5562 = vpop.f32.mrf.mxu0
  %v5563 = vadd.f32 0.0, %v5562
  %v5564 = vpop.f32.mrf.mxu0
  %v5565 = vadd.f32 0.0, %v5564
  %5566 = vmatmul.bf16.gmra.mxu0 %v3826
  %v5567 = vpop.f32.mrf.mxu0
  %v5568 = vadd.f32 0.0, %v5567
  %v5569 = vpop.f32.mrf.mxu0
  %v5570 = vadd.f32 0.0, %v5569
  %5571 = vmatmul.bf16.gmra.mxu0 %v3829
  %v5572 = vpop.f32.mrf.mxu0
  %v5573 = vadd.f32 0.0, %v5572
  %v5574 = vpop.f32.mrf.mxu0
  %v5575 = vadd.f32 0.0, %v5574
  %5576 = vmatmul.bf16.gmra.mxu0 %v3832
  %v5577 = vpop.f32.mrf.mxu0
  %v5578 = vadd.f32 0.0, %v5577
  %v5579 = vpop.f32.mrf.mxu0
  %v5580 = vadd.f32 0.0, %v5579
  %5581 = vmatmul.bf16.gmra.mxu0 %v3835
  %v5582 = vpop.f32.mrf.mxu0
  %v5583 = vadd.f32 0.0, %v5582
  %v5584 = vpop.f32.mrf.mxu0
  %v5585 = vadd.f32 0.0, %v5584
  %5586 = vmatmul.bf16.gmra.mxu0 %v3838
  %v5587 = vpop.f32.mrf.mxu0
  %v5588 = vadd.f32 0.0, %v5587
  %v5589 = vpop.f32.mrf.mxu0
  %v5590 = vadd.f32 0.0, %v5589
  %5591 = vmatmul.bf16.gmra.mxu0 %v3841
  %v5592 = vpop.f32.mrf.mxu0
  %v5593 = vadd.f32 0.0, %v5592
  %v5594 = vpop.f32.mrf.mxu0
  %v5595 = vadd.f32 0.0, %v5594
  %5596 = vmatmul.bf16.gmra.mxu0 %v3844
  %v5597 = vpop.f32.mrf.mxu0
  %v5598 = vadd.f32 0.0, %v5597
  %v5599 = vpop.f32.mrf.mxu0
  %v5600 = vadd.f32 0.0, %v5599
  %5601 = vmatmul.bf16.gmra.mxu0 %v3847
  %v5602 = vpop.f32.mrf.mxu0
  %v5603 = vadd.f32 0.0, %v5602
  %v5604 = vpop.f32.mrf.mxu0
  %v5605 = vadd.f32 0.0, %v5604
  %5606 = vmatmul.bf16.gmra.mxu0 %v3850
  %v5607 = vpop.f32.mrf.mxu0
  %v5608 = vadd.f32 0.0, %v5607
  %v5609 = vpop.f32.mrf.mxu0
  %v5610 = vadd.f32 0.0, %v5609
  %5611 = vmatmul.bf16.gmra.mxu0 %v3853
  %v5612 = vpop.f32.mrf.mxu0
  %v5613 = vadd.f32 0.0, %v5612
  %v5614 = vpop.f32.mrf.mxu0
  %v5615 = vadd.f32 0.0, %v5614
  %5616 = vmatmul.bf16.gmra.mxu0 %v3856
  %v5617 = vpop.f32.mrf.mxu0
  %v5618 = vadd.f32 0.0, %v5617
  %v5619 = vpop.f32.mrf.mxu0
  %v5620 = vadd.f32 0.0, %v5619
  %5621 = vmatmul.bf16.gmra.mxu0 %v3859
  %v5622 = vpop.f32.mrf.mxu0
  %v5623 = vadd.f32 0.0, %v5622
  %v5624 = vpop.f32.mrf.mxu0
  %v5625 = vadd.f32 0.0, %v5624
  %5626 = vmatmul.bf16.gmra.mxu0 %v3862
  %v5627 = vpop.f32.mrf.mxu0
  %v5628 = vadd.f32 0.0, %v5627
  %v5629 = vpop.f32.mrf.mxu0
  %v5630 = vadd.f32 0.0, %v5629
  %5631 = vmatmul.bf16.gmra.mxu0 %v3865
  %v5632 = vpop.f32.mrf.mxu0
  %v5633 = vadd.f32 0.0, %v5632
  %v5634 = vpop.f32.mrf.mxu0
  %v5635 = vadd.f32 0.0, %v5634
  %5636 = vmatmul.bf16.gmra.mxu0 %v3868
  %v5637 = vpop.f32.mrf.mxu0
  %v5638 = vadd.f32 0.0, %v5637
  %v5639 = vpop.f32.mrf.mxu0
  %v5640 = vadd.f32 0.0, %v5639
  %5641 = vmatmul.bf16.gmra.mxu0 %v3871
  %v5642 = vpop.f32.mrf.mxu0
  %v5643 = vadd.f32 0.0, %v5642
  %v5644 = vpop.f32.mrf.mxu0
  %v5645 = vadd.f32 0.0, %v5644
  %5646 = vmatmul.bf16.gmra.mxu0 %v3874
  %v5647 = vpop.f32.mrf.mxu0
  %v5648 = vadd.f32 0.0, %v5647
  %v5649 = vpop.f32.mrf.mxu0
  %v5650 = vadd.f32 0.0, %v5649
  %5651 = vmatmul.bf16.gmra.mxu0 %v3877
  %v5652 = vpop.f32.mrf.mxu0
  %v5653 = vadd.f32 0.0, %v5652
  %v5654 = vpop.f32.mrf.mxu0
  %v5655 = vadd.f32 0.0, %v5654
  %5656 = vmatmul.bf16.gmra.mxu0 %v3880
  %v5657 = vpop.f32.mrf.mxu0
  %v5658 = vadd.f32 0.0, %v5657
  %v5659 = vpop.f32.mrf.mxu0
  %v5660 = vadd.f32 0.0, %v5659
  %5661 = vmatmul.bf16.gmra.mxu0 %v3883
  %v5662 = vpop.f32.mrf.mxu0
  %v5663 = vadd.f32 0.0, %v5662
  %v5664 = vpop.f32.mrf.mxu0
  %v5665 = vadd.f32 0.0, %v5664
  %5666 = vmatmul.bf16.gmra.mxu0 %v3886
  %v5667 = vpop.f32.mrf.mxu0
  %v5668 = vadd.f32 0.0, %v5667
  %v5669 = vpop.f32.mrf.mxu0
  %v5670 = vadd.f32 0.0, %v5669
  %5671 = vmatmul.bf16.gmra.mxu0 %v3889
  %v5672 = vpop.f32.mrf.mxu0
  %v5673 = vadd.f32 0.0, %v5672
  %v5674 = vpop.f32.mrf.mxu0
  %v5675 = vadd.f32 0.0, %v5674
  %5676 = vmatmul.bf16.gmra.mxu0 %v3892
  %v5677 = vpop.f32.mrf.mxu0
  %v5678 = vadd.f32 0.0, %v5677
  %v5679 = vpop.f32.mrf.mxu0
  %v5680 = vadd.f32 0.0, %v5679
  %5681 = vmatmul.bf16.gmra.mxu0 %v3895
  %v5682 = vpop.f32.mrf.mxu0
  %v5683 = vadd.f32 0.0, %v5682
  %v5684 = vpop.f32.mrf.mxu0
  %v5685 = vadd.f32 0.0, %v5684
  %5686 = vmatmul.bf16.gmra.mxu0 %v3898
  %v5687 = vpop.f32.mrf.mxu0
  %v5688 = vadd.f32 0.0, %v5687
  %v5689 = vpop.f32.mrf.mxu0
  %v5690 = vadd.f32 0.0, %v5689
  %5691 = vmatmul.bf16.gmra.mxu0 %v3901
  %v5692 = vpop.f32.mrf.mxu0
  %v5693 = vadd.f32 0.0, %v5692
  %v5694 = vpop.f32.mrf.mxu0
  %v5695 = vadd.f32 0.0, %v5694
  %5696 = vmatmul.bf16.gmra.mxu0 %v3904
  %v5697 = vpop.f32.mrf.mxu0
  %v5698 = vadd.f32 0.0, %v5697
  %v5699 = vpop.f32.mrf.mxu0
  %v5700 = vadd.f32 0.0, %v5699
  %5701 = vmatmul.bf16.gmra.mxu0 %v3907
  %v5702 = vpop.f32.mrf.mxu0
  %v5703 = vadd.f32 0.0, %v5702
  %v5704 = vpop.f32.mrf.mxu0
  %v5705 = vadd.f32 0.0, %v5704
  %5706 = vmatmul.bf16.gmra.mxu0 %v3910
  %v5707 = vpop.f32.mrf.mxu0
  %v5708 = vadd.f32 0.0, %v5707
  %v5709 = vpop.f32.mrf.mxu0
  %v5710 = vadd.f32 0.0, %v5709
  %5711 = vmatmul.bf16.gmra.mxu0 %v3913
  %v5712 = vpop.f32.mrf.mxu0
  %v5713 = vadd.f32 0.0, %v5712
  %v5714 = vpop.f32.mrf.mxu0
  %v5715 = vadd.f32 0.0, %v5714
  %5716 = vmatmul.bf16.gmra.mxu0 %v3916
  %v5717 = vpop.f32.mrf.mxu0
  %v5718 = vadd.f32 0.0, %v5717
  %v5719 = vpop.f32.mrf.mxu0
  %v5720 = vadd.f32 0.0, %v5719
  %5721 = vmatmul.bf16.gmra.mxu0 %v3919
  %v5722 = vpop.f32.mrf.mxu0
  %v5723 = vadd.f32 0.0, %v5722
  %v5724 = vpop.f32.mrf.mxu0
  %v5725 = vadd.f32 0.0, %v5724
  %5726 = vmatmul.bf16.gmra.mxu0 %v3922
  %v5727 = vpop.f32.mrf.mxu0
  %v5728 = vadd.f32 0.0, %v5727
  %v5729 = vpop.f32.mrf.mxu0
  %v5730 = vadd.f32 0.0, %v5729
  %5731 = vmatmul.bf16.gmra.mxu0 %v3925
  %v5732 = vpop.f32.mrf.mxu0
  %v5733 = vadd.f32 0.0, %v5732
  %v5734 = vpop.f32.mrf.mxu0
  %v5735 = vadd.f32 0.0, %v5734
  %5736 = vmatmul.bf16.gmra.mxu0 %v3928
  %v5737 = vpop.f32.mrf.mxu0
  %v5738 = vadd.f32 0.0, %v5737
  %v5739 = vpop.f32.mrf.mxu0
  %v5740 = vadd.f32 0.0, %v5739
  %5741 = vmatmul.bf16.gmra.mxu0 %v3931
  %v5742 = vpop.f32.mrf.mxu0
  %v5743 = vadd.f32 0.0, %v5742
  %v5744 = vpop.f32.mrf.mxu0
  %v5745 = vadd.f32 0.0, %v5744
  %5746 = vmatmul.bf16.gmra.mxu0 %v3934
  %v5747 = vpop.f32.mrf.mxu0
  %v5748 = vadd.f32 0.0, %v5747
  %v5749 = vpop.f32.mrf.mxu0
  %v5750 = vadd.f32 0.0, %v5749
  %5751 = vmatmul.bf16.gmra.mxu0 %v3937
  %v5752 = vpop.f32.mrf.mxu0
  %v5753 = vadd.f32 0.0, %v5752
  %v5754 = vpop.f32.mrf.mxu0
  %v5755 = vadd.f32 0.0, %v5754
  %5756 = vmatmul.bf16.gmra.mxu0 %v3940
  %v5757 = vpop.f32.mrf.mxu0
  %v5758 = vadd.f32 0.0, %v5757
  %v5759 = vpop.f32.mrf.mxu0
  %v5760 = vadd.f32 0.0, %v5759
  %5761 = vmatmul.bf16.gmra.mxu0 %v3943
  %v5762 = vpop.f32.mrf.mxu0
  %v5763 = vadd.f32 0.0, %v5762
  %v5764 = vpop.f32.mrf.mxu0
  %v5765 = vadd.f32 0.0, %v5764
  %5766 = vmatmul.bf16.gmra.mxu0 %v3946
  %v5767 = vpop.f32.mrf.mxu0
  %v5768 = vadd.f32 0.0, %v5767
  %v5769 = vpop.f32.mrf.mxu0
  %v5770 = vadd.f32 0.0, %v5769
  %5771 = vmatmul.bf16.gmra.mxu0 %v3949
  %v5772 = vpop.f32.mrf.mxu0
  %v5773 = vadd.f32 0.0, %v5772
  %v5774 = vpop.f32.mrf.mxu0
  %v5775 = vadd.f32 0.0, %v5774
  %5776 = vmatmul.bf16.gmra.mxu0 %v3952
  %v5777 = vpop.f32.mrf.mxu0
  %v5778 = vadd.f32 0.0, %v5777
  %v5779 = vpop.f32.mrf.mxu0
  %v5780 = vadd.f32 0.0, %v5779
  %5781 = vmatmul.bf16.gmra.mxu0 %v3955
  %v5782 = vpop.f32.mrf.mxu0
  %v5783 = vadd.f32 0.0, %v5782
  %v5784 = vpop.f32.mrf.mxu0
  %v5785 = vadd.f32 0.0, %v5784
  %5786 = vmatmul.bf16.gmra.mxu0 %v3958
  %v5787 = vpop.f32.mrf.mxu0
  %v5788 = vadd.f32 0.0, %v5787
  %v5789 = vpop.f32.mrf.mxu0
  %v5790 = vadd.f32 0.0, %v5789
  %5791 = vmatmul.bf16.gmra.mxu0 %v3961
  %v5792 = vpop.f32.mrf.mxu0
  %v5793 = vadd.f32 0.0, %v5792
  %v5794 = vpop.f32.mrf.mxu0
  %v5795 = vadd.f32 0.0, %v5794
  %5796 = vmatmul.bf16.gmra.mxu0 %v3964
  %v5797 = vpop.f32.mrf.mxu0
  %v5798 = vadd.f32 0.0, %v5797
  %v5799 = vpop.f32.mrf.mxu0
  %v5800 = vadd.f32 0.0, %v5799
  %5801 = vmatmul.bf16.gmra.mxu0 %v3967
  %v5802 = vpop.f32.mrf.mxu0
  %v5803 = vadd.f32 0.0, %v5802
  %v5804 = vpop.f32.mrf.mxu0
  %v5805 = vadd.f32 0.0, %v5804
  %5806 = vmatmul.bf16.gmra.mxu0 %v3970
  %v5807 = vpop.f32.mrf.mxu0
  %v5808 = vadd.f32 0.0, %v5807
  %v5809 = vpop.f32.mrf.mxu0
  %v5810 = vadd.f32 0.0, %v5809
  %5811 = vmatmul.bf16.gmra.mxu0 %v3973
  %v5812 = vpop.f32.mrf.mxu0
  %v5813 = vadd.f32 0.0, %v5812
  %v5814 = vpop.f32.mrf.mxu0
  %v5815 = vadd.f32 0.0, %v5814
  %5816 = vmatmul.bf16.gmra.mxu0 %v3976
  %v5817 = vpop.f32.mrf.mxu0
  %v5818 = vadd.f32 0.0, %v5817
  %v5819 = vpop.f32.mrf.mxu0
  %v5820 = vadd.f32 0.0, %v5819
  %5821 = vmatmul.bf16.gmra.mxu0 %v3979
  %v5822 = vpop.f32.mrf.mxu0
  %v5823 = vadd.f32 0.0, %v5822
  %v5824 = vpop.f32.mrf.mxu0
  %v5825 = vadd.f32 0.0, %v5824
  %5826 = vmatmul.bf16.gmra.mxu0 %v3982
  %v5827 = vpop.f32.mrf.mxu0
  %v5828 = vadd.f32 0.0, %v5827
  %v5829 = vpop.f32.mrf.mxu0
  %v5830 = vadd.f32 0.0, %v5829
  %5831 = vmatmul.bf16.gmra.mxu0 %v3985
  %v5832 = vpop.f32.mrf.mxu0
  %v5833 = vadd.f32 0.0, %v5832
  %v5834 = vpop.f32.mrf.mxu0
  %v5835 = vadd.f32 0.0, %v5834
  %5836 = vmatmul.bf16.gmra.mxu0 %v3988
  %v5837 = vpop.f32.mrf.mxu0
  %v5838 = vadd.f32 0.0, %v5837
  %v5839 = vpop.f32.mrf.mxu0
  %v5840 = vadd.f32 0.0, %v5839
  %5841 = vmatmul.bf16.gmra.mxu0 %v3991
  %v5842 = vpop.f32.mrf.mxu0
  %v5843 = vadd.f32 0.0, %v5842
  %v5844 = vpop.f32.mrf.mxu0
  %v5845 = vadd.f32 0.0, %v5844
  %5846 = vmatmul.bf16.gmra.mxu0 %v3994
  %v5847 = vpop.f32.mrf.mxu0
  %v5848 = vadd.f32 0.0, %v5847
  %v5849 = vpop.f32.mrf.mxu0
  %v5850 = vadd.f32 0.0, %v5849
  %5851 = vmatmul.bf16.gmra.mxu0 %v3997
  %v5852 = vpop.f32.mrf.mxu0
  %v5853 = vadd.f32 0.0, %v5852
  %v5854 = vpop.f32.mrf.mxu0
  %v5855 = vadd.f32 0.0, %v5854
  %5856 = vmatmul.bf16.gmra.mxu0 %v4000
  %v5857 = vpop.f32.mrf.mxu0
  %v5858 = vadd.f32 0.0, %v5857
  %v5859 = vpop.f32.mrf.mxu0
  %v5860 = vadd.f32 0.0, %v5859
  %5861 = vmatmul.bf16.gmra.mxu0 %v4003
  %v5862 = vpop.f32.mrf.mxu0
  %v5863 = vadd.f32 0.0, %v5862
  %v5864 = vpop.f32.mrf.mxu0
  %v5865 = vadd.f32 0.0, %v5864
  %5866 = vmatmul.bf16.gmra.mxu0 %v4006
  %v5867 = vpop.f32.mrf.mxu0
  %v5868 = vadd.f32 0.0, %v5867
  %v5869 = vpop.f32.mrf.mxu0
  %v5870 = vadd.f32 0.0, %v5869
  %5871 = vmatmul.bf16.gmra.mxu0 %v4009
  %v5872 = vpop.f32.mrf.mxu0
  %v5873 = vadd.f32 0.0, %v5872
  %v5874 = vpop.f32.mrf.mxu0
  %v5875 = vadd.f32 0.0, %v5874
  %5876 = vmatmul.bf16.gmra.mxu0 %v4012
  %v5877 = vpop.f32.mrf.mxu0
  %v5878 = vadd.f32 0.0, %v5877
  %v5879 = vpop.f32.mrf.mxu0
  %v5880 = vadd.f32 0.0, %v5879
  %5881 = vmatmul.bf16.gmra.mxu0 %v4015
  %v5882 = vpop.f32.mrf.mxu0
  %v5883 = vadd.f32 0.0, %v5882
  %v5884 = vpop.f32.mrf.mxu0
  %v5885 = vadd.f32 0.0, %v5884
  %5886 = vmatmul.bf16.gmra.mxu0 %v4018
  %v5887 = vpop.f32.mrf.mxu0
  %v5888 = vadd.f32 0.0, %v5887
  %v5889 = vpop.f32.mrf.mxu0
  %v5890 = vadd.f32 0.0, %v5889
  %5891 = vmatmul.bf16.gmra.mxu0 %v4021
  %v5892 = vpop.f32.mrf.mxu0
  %v5893 = vadd.f32 0.0, %v5892
  %v5894 = vpop.f32.mrf.mxu0
  %v5895 = vadd.f32 0.0, %v5894
  %5896 = vmatmul.bf16.gmra.mxu0 %v4024
  %v5897 = vpop.f32.mrf.mxu0
  %v5898 = vadd.f32 0.0, %v5897
  %v5899 = vpop.f32.mrf.mxu0
  %v5900 = vadd.f32 0.0, %v5899
  %5901 = vmatmul.bf16.gmra.mxu0 %v4027
  %v5902 = vpop.f32.mrf.mxu0
  %v5903 = vadd.f32 0.0, %v5902
  %v5904 = vpop.f32.mrf.mxu0
  %v5905 = vadd.f32 0.0, %v5904
  %5906 = vmatmul.bf16.gmra.mxu0 %v4030
  %v5907 = vpop.f32.mrf.mxu0
  %v5908 = vadd.f32 0.0, %v5907
  %v5909 = vpop.f32.mrf.mxu0
  %v5910 = vadd.f32 0.0, %v5909
  %5911 = vmatmul.bf16.gmra.mxu0 %v4033
  %v5912 = vpop.f32.mrf.mxu0
  %v5913 = vadd.f32 0.0, %v5912
  %v5914 = vpop.f32.mrf.mxu0
  %v5915 = vadd.f32 0.0, %v5914
  %5916 = vmatmul.bf16.gmra.mxu0 %v4036
  %v5917 = vpop.f32.mrf.mxu0
  %v5918 = vadd.f32 0.0, %v5917
  %v5919 = vpop.f32.mrf.mxu0
  %v5920 = vadd.f32 0.0, %v5919
  %5921 = vmatmul.bf16.gmra.mxu0 %v4039
  %v5922 = vpop.f32.mrf.mxu0
  %v5923 = vadd.f32 0.0, %v5922
  %v5924 = vpop.f32.mrf.mxu0
  %v5925 = vadd.f32 0.0, %v5924
  %5926 = vmatmul.bf16.gmra.mxu0 %v4042
  %v5927 = vpop.f32.mrf.mxu0
  %v5928 = vadd.f32 0.0, %v5927
  %v5929 = vpop.f32.mrf.mxu0
  %v5930 = vadd.f32 0.0, %v5929
  %5931 = vmatmul.bf16.gmra.mxu0 %v4045
  %v5932 = vpop.f32.mrf.mxu0
  %v5933 = vadd.f32 0.0, %v5932
  %v5934 = vpop.f32.mrf.mxu0
  %v5935 = vadd.f32 0.0, %v5934
  %5936 = vmatmul.bf16.gmra.mxu0 %v4048
  %v5937 = vpop.f32.mrf.mxu0
  %v5938 = vadd.f32 0.0, %v5937
  %v5939 = vpop.f32.mrf.mxu0
  %v5940 = vadd.f32 0.0, %v5939
  %5941 = vmatmul.bf16.gmra.mxu0 %v4051
  %v5942 = vpop.f32.mrf.mxu0
  %v5943 = vadd.f32 0.0, %v5942
  %v5944 = vpop.f32.mrf.mxu0
  %v5945 = vadd.f32 0.0, %v5944
  %5946 = vmatmul.bf16.gmra.mxu0 %v4054
  %v5947 = vpop.f32.mrf.mxu0
  %v5948 = vadd.f32 0.0, %v5947
  %v5949 = vpop.f32.mrf.mxu0
  %v5950 = vadd.f32 0.0, %v5949
  %5951 = vmatmul.bf16.gmra.mxu0 %v4057
  %v5952 = vpop.f32.mrf.mxu0
  %v5953 = vadd.f32 0.0, %v5952
  %v5954 = vpop.f32.mrf.mxu0
  %v5955 = vadd.f32 0.0, %v5954
  %5956 = vmatmul.bf16.gmra.mxu0 %v4060
  %v5957 = vpop.f32.mrf.mxu0
  %v5958 = vadd.f32 0.0, %v5957
  %v5959 = vpop.f32.mrf.mxu0
  %v5960 = vadd.f32 0.0, %v5959
  %5961 = vmatmul.bf16.gmra.mxu0 %v4063
  %v5962 = vpop.f32.mrf.mxu0
  %v5963 = vadd.f32 0.0, %v5962
  %v5964 = vpop.f32.mrf.mxu0
  %v5965 = vadd.f32 0.0, %v5964
  %5966 = vmatmul.bf16.gmra.mxu0 %v4066
  %v5967 = vpop.f32.mrf.mxu0
  %v5968 = vadd.f32 0.0, %v5967
  %v5969 = vpop.f32.mrf.mxu0
  %v5970 = vadd.f32 0.0, %v5969
  %5971 = vmatmul.bf16.gmra.mxu0 %v4069
  %v5972 = vpop.f32.mrf.mxu0
  %v5973 = vadd.f32 0.0, %v5972
  %v5974 = vpop.f32.mrf.mxu0
  %v5975 = vadd.f32 0.0, %v5974
  %5976 = vmatmul.bf16.gmra.mxu0 %v4072
  %v5977 = vpop.f32.mrf.mxu0
  %v5978 = vadd.f32 0.0, %v5977
  %v5979 = vpop.f32.mrf.mxu0
  %v5980 = vadd.f32 0.0, %v5979
  %5981 = vmatmul.bf16.gmra.mxu0 %v4075
  %v5982 = vpop.f32.mrf.mxu0
  %v5983 = vadd.f32 0.0, %v5982
  %v5984 = vpop.f32.mrf.mxu0
  %v5985 = vadd.f32 0.0, %v5984
  %5986 = vmatmul.bf16.gmra.mxu0 %v4078
  %v5987 = vpop.f32.mrf.mxu0
  %v5988 = vadd.f32 0.0, %v5987
  %v5989 = vpop.f32.mrf.mxu0
  %v5990 = vadd.f32 0.0, %v5989
  %5991 = vmatmul.bf16.gmra.mxu0 %v4081
  %v5992 = vpop.f32.mrf.mxu0
  %v5993 = vadd.f32 0.0, %v5992
  %v5994 = vpop.f32.mrf.mxu0
  %v5995 = vadd.f32 0.0, %v5994
  %5996 = vmatmul.bf16.gmra.mxu0 %v4084
  %v5997 = vpop.f32.mrf.mxu0
  %v5998 = vadd.f32 0.0, %v5997
  %v5999 = vpop.f32.mrf.mxu0
  %v6000 = vadd.f32 0.0, %v5999
  %6001 = vmatmul.bf16.gmra.mxu0 %v4087
  %v6002 = vpop.f32.mrf.mxu0
  %v6003 = vadd.f32 0.0, %v6002
  %v6004 = vpop.f32.mrf.mxu0
  %v6005 = vadd.f32 0.0, %v6004
  %6006 = vmatmul.bf16.gmra.mxu0 %v4090
  %v6007 = vpop.f32.mrf.mxu0
  %v6008 = vadd.f32 0.0, %v6007
  %v6009 = vpop.f32.mrf.mxu0
  %v6010 = vadd.f32 0.0, %v6009
  %6011 = vmatmul.bf16.gmra.mxu0 %v4093
  %v6012 = vpop.f32.mrf.mxu0
  %v6013 = vadd.f32 0.0, %v6012
  %v6014 = vpop.f32.mrf.mxu0
  %v6015 = vadd.f32 0.0, %v6014
  %6016 = vmatmul.bf16.gmra.mxu0 %v4096
  %v6017 = vpop.f32.mrf.mxu0
  %v6018 = vadd.f32 0.0, %v6017
  %v6019 = vpop.f32.mrf.mxu0
  %v6020 = vadd.f32 0.0, %v6019
  %6021 = vmatmul.bf16.gmra.mxu0 %v4099
  %v6022 = vpop.f32.mrf.mxu0
  %v6023 = vadd.f32 0.0, %v6022
  %v6024 = vpop.f32.mrf.mxu0
  %v6025 = vadd.f32 0.0, %v6024
  %6026 = vmatmul.bf16.gmra.mxu0 %v4102
  %v6027 = vpop.f32.mrf.mxu0
  %v6028 = vadd.f32 0.0, %v6027
  %v6029 = vpop.f32.mrf.mxu0
  %v6030 = vadd.f32 0.0, %v6029
  %6031 = vmatmul.bf16.gmra.mxu0 %v4105
  %v6032 = vpop.f32.mrf.mxu0
  %v6033 = vadd.f32 0.0, %v6032
  %v6034 = vpop.f32.mrf.mxu0
  %v6035 = vadd.f32 0.0, %v6034
  %6036 = vmatmul.bf16.gmra.mxu0 %v4108
  %v6037 = vpop.f32.mrf.mxu0
  %v6038 = vadd.f32 0.0, %v6037
  %v6039 = vpop.f32.mrf.mxu0
  %v6040 = vadd.f32 0.0, %v6039
  %6041 = vmatmul.bf16.gmra.mxu0 %v4111
  %v6042 = vpop.f32.mrf.mxu0
  %v6043 = vadd.f32 0.0, %v6042
  %v6044 = vpop.f32.mrf.mxu0
  %v6045 = vadd.f32 0.0, %v6044
  %6046 = vmatmul.bf16.gmra.mxu0 %v4114
  %v6047 = vpop.f32.mrf.mxu0
  %v6048 = vadd.f32 0.0, %v6047
  %v6049 = vpop.f32.mrf.mxu0
  %v6050 = vadd.f32 0.0, %v6049
  %6051 = vmatmul.bf16.gmra.mxu0 %v4117
  %v6052 = vpop.f32.mrf.mxu0
  %v6053 = vadd.f32 0.0, %v6052
  %v6054 = vpop.f32.mrf.mxu0
  %v6055 = vadd.f32 0.0, %v6054
  %6056 = vmatmul.bf16.gmra.mxu0 %v4120
  %v6057 = vpop.f32.mrf.mxu0
  %v6058 = vadd.f32 0.0, %v6057
  %v6059 = vpop.f32.mrf.mxu0
  %v6060 = vadd.f32 0.0, %v6059
  %6061 = vmatmul.bf16.gmra.mxu0 %v4123
  %v6062 = vpop.f32.mrf.mxu0
  %v6063 = vadd.f32 0.0, %v6062
  %v6064 = vpop.f32.mrf.mxu0
  %v6065 = vadd.f32 0.0, %v6064
  %6066 = vmatmul.bf16.gmra.mxu0 %v4126
  %v6067 = vpop.f32.mrf.mxu0
  %v6068 = vadd.f32 0.0, %v6067
  %v6069 = vpop.f32.mrf.mxu0
  %v6070 = vadd.f32 0.0, %v6069
  %6071 = vmatmul.bf16.gmra.mxu0 %v4129
  %v6072 = vpop.f32.mrf.mxu0
  %v6073 = vadd.f32 0.0, %v6072
  %v6074 = vpop.f32.mrf.mxu0
  %v6075 = vadd.f32 0.0, %v6074
  %6076 = vmatmul.bf16.gmra.mxu0 %v4132
  %v6077 = vpop.f32.mrf.mxu0
  %v6078 = vadd.f32 0.0, %v6077
  %v6079 = vpop.f32.mrf.mxu0
  %v6080 = vadd.f32 0.0, %v6079
  %6081 = vmatmul.bf16.gmra.mxu0 %v4135
  %v6082 = vpop.f32.mrf.mxu0
  %v6083 = vadd.f32 0.0, %v6082
  %v6084 = vpop.f32.mrf.mxu0
  %v6085 = vadd.f32 0.0, %v6084
  %6086 = vmatmul.bf16.gmra.mxu0 %v4138
  %v6087 = vpop.f32.mrf.mxu0
  %v6088 = vadd.f32 0.0, %v6087
  %v6089 = vpop.f32.mrf.mxu0
  %v6090 = vadd.f32 0.0, %v6089
  %6091 = vmatmul.bf16.gmra.mxu0 %v4141
  %v6092 = vpop.f32.mrf.mxu0
  %v6093 = vadd.f32 0.0, %v6092
  %v6094 = vpop.f32.mrf.mxu0
  %v6095 = vadd.f32 0.0, %v6094
  %6096 = vmatmul.bf16.gmra.mxu0 %v4144
  %v6097 = vpop.f32.mrf.mxu0
  %v6098 = vadd.f32 0.0, %v6097
  %v6099 = vpop.f32.mrf.mxu0
  %v6100 = vadd.f32 0.0, %v6099
  %6101 = vmatmul.bf16.gmra.mxu0 %v4147
  %v6102 = vpop.f32.mrf.mxu0
  %v6103 = vadd.f32 0.0, %v6102
  %v6104 = vpop.f32.mrf.mxu0
  %v6105 = vadd.f32 0.0, %v6104
  %6106 = vmatmul.bf16.gmra.mxu0 %v4150
  %v6107 = vpop.f32.mrf.mxu0
  %v6108 = vadd.f32 0.0, %v6107
  %v6109 = vpop.f32.mrf.mxu0
  %v6110 = vadd.f32 0.0, %v6109
  %6111 = vmatmul.bf16.gmra.mxu0 %v4153
  %v6112 = vpop.f32.mrf.mxu0
  %v6113 = vadd.f32 0.0, %v6112
  %v6114 = vpop.f32.mrf.mxu0
  %v6115 = vadd.f32 0.0, %v6114
  %6116 = vmatmul.bf16.gmra.mxu0 %v4156
  %v6117 = vpop.f32.mrf.mxu0
  %v6118 = vadd.f32 0.0, %v6117
  %v6119 = vpop.f32.mrf.mxu0
  %v6120 = vadd.f32 0.0, %v6119
  %6121 = vmatmul.bf16.gmra.mxu0 %v4159
  %v6122 = vpop.f32.mrf.mxu0
  %v6123 = vadd.f32 0.0, %v6122
  %v6124 = vpop.f32.mrf.mxu0
  %v6125 = vadd.f32 0.0, %v6124
  %6126 = vmatmul.bf16.gmra.mxu0 %v4162
  %v6127 = vpop.f32.mrf.mxu0
  %v6128 = vadd.f32 0.0, %v6127
  %v6129 = vpop.f32.mrf.mxu0
  %v6130 = vadd.f32 0.0, %v6129
  %6131 = vmatmul.bf16.gmra.mxu0 %v4165
  %v6132 = vpop.f32.mrf.mxu0
  %v6133 = vadd.f32 0.0, %v6132
  %v6134 = vpop.f32.mrf.mxu0
  %v6135 = vadd.f32 0.0, %v6134
  %6136 = vmatmul.bf16.gmra.mxu0 %v4168
  %v6137 = vpop.f32.mrf.mxu0
  %v6138 = vadd.f32 0.0, %v6137
  %v6139 = vpop.f32.mrf.mxu0
  %v6140 = vadd.f32 0.0, %v6139
  %6141 = vmatmul.bf16.gmra.mxu0 %v4171
  %v6142 = vpop.f32.mrf.mxu0
  %v6143 = vadd.f32 0.0, %v6142
  %v6144 = vpop.f32.mrf.mxu0
  %v6145 = vadd.f32 0.0, %v6144
  %6146 = vmatmul.bf16.gmra.mxu0 %v4174
  %v6147 = vpop.f32.mrf.mxu0
  %v6148 = vadd.f32 0.0, %v6147
  %v6149 = vpop.f32.mrf.mxu0
  %v6150 = vadd.f32 0.0, %v6149
  %6151 = vmatmul.bf16.gmra.mxu0 %v4177
  %v6152 = vpop.f32.mrf.mxu0
  %v6153 = vadd.f32 0.0, %v6152
  %v6154 = vpop.f32.mrf.mxu0
  %v6155 = vadd.f32 0.0, %v6154
  %6156 = vmatmul.bf16.gmra.mxu0 %v4180
  %v6157 = vpop.f32.mrf.mxu0
  %v6158 = vadd.f32 0.0, %v6157
  %v6159 = vpop.f32.mrf.mxu0
  %v6160 = vadd.f32 0.0, %v6159
  %6161 = vmatmul.bf16.gmra.mxu0 %v4183
  %v6162 = vpop.f32.mrf.mxu0
  %v6163 = vadd.f32 0.0, %v6162
  %v6164 = vpop.f32.mrf.mxu0
  %v6165 = vadd.f32 0.0, %v6164
  %6166 = vmatmul.bf16.gmra.mxu0 %v4186
  %v6167 = vpop.f32.mrf.mxu0
  %v6168 = vadd.f32 0.0, %v6167
  %v6169 = vpop.f32.mrf.mxu0
  %v6170 = vadd.f32 0.0, %v6169
  %6171 = vmatmul.bf16.gmra.mxu0 %v4189
  %v6172 = vpop.f32.mrf.mxu0
  %v6173 = vadd.f32 0.0, %v6172
  %v6174 = vpop.f32.mrf.mxu0
  %v6175 = vadd.f32 0.0, %v6174
  %6176 = vmatmul.bf16.gmra.mxu0 %v4192
  %v6177 = vpop.f32.mrf.mxu0
  %v6178 = vadd.f32 0.0, %v6177
  %v6179 = vpop.f32.mrf.mxu0
  %v6180 = vadd.f32 0.0, %v6179
  %6181 = vmatmul.bf16.gmra.mxu0 %v4195
  %v6182 = vpop.f32.mrf.mxu0
  %v6183 = vadd.f32 0.0, %v6182
  %v6184 = vpop.f32.mrf.mxu0
  %v6185 = vadd.f32 0.0, %v6184
  %6186 = vmatmul.bf16.gmra.mxu0 %v4198
  %v6187 = vpop.f32.mrf.mxu0
  %v6188 = vadd.f32 0.0, %v6187
  %v6189 = vpop.f32.mrf.mxu0
  %v6190 = vadd.f32 0.0, %v6189
  %6191 = vmatmul.bf16.gmra.mxu0 %v4201
  %v6192 = vpop.f32.mrf.mxu0
  %v6193 = vadd.f32 0.0, %v6192
  %v6194 = vpop.f32.mrf.mxu0
  %v6195 = vadd.f32 0.0, %v6194
  %6196 = vmatmul.bf16.gmra.mxu0 %v4204
  %v6197 = vpop.f32.mrf.mxu0
  %v6198 = vadd.f32 0.0, %v6197
  %v6199 = vpop.f32.mrf.mxu0
  %v6200 = vadd.f32 0.0, %v6199
  %6201 = vmatmul.bf16.gmra.mxu0 %v4207
  %v6202 = vpop.f32.mrf.mxu0
  %v6203 = vadd.f32 0.0, %v6202
  %v6204 = vpop.f32.mrf.mxu0
  %v6205 = vadd.f32 0.0, %v6204
  %6206 = vmatmul.bf16.gmra.mxu0 %v4210
  %v6207 = vpop.f32.mrf.mxu0
  %v6208 = vadd.f32 0.0, %v6207
  %v6209 = vpop.f32.mrf.mxu0
  %v6210 = vadd.f32 0.0, %v6209
  %6211 = vmatmul.bf16.gmra.mxu0 %v4213
  %v6212 = vpop.f32.mrf.mxu0
  %v6213 = vadd.f32 0.0, %v6212
  %v6214 = vpop.f32.mrf.mxu0
  %v6215 = vadd.f32 0.0, %v6214
  %6216 = vmatmul.bf16.gmra.mxu0 %v4216
  %v6217 = vpop.f32.mrf.mxu0
  %v6218 = vadd.f32 0.0, %v6217
  %v6219 = vpop.f32.mrf.mxu0
  %v6220 = vadd.f32 0.0, %v6219
  %6221 = vmatmul.bf16.gmra.mxu0 %v4219
  %v6222 = vpop.f32.mrf.mxu0
  %v6223 = vadd.f32 0.0, %v6222
  %v6224 = vpop.f32.mrf.mxu0
  %v6225 = vadd.f32 0.0, %v6224
  %6226 = vmatmul.bf16.gmra.mxu0 %v4222
  %v6227 = vpop.f32.mrf.mxu0
  %v6228 = vadd.f32 0.0, %v6227
  %v6229 = vpop.f32.mrf.mxu0
  %v6230 = vadd.f32 0.0, %v6229
  %6231 = vmatmul.bf16.gmra.mxu0 %v4225
  %v6232 = vpop.f32.mrf.mxu0
  %v6233 = vadd.f32 0.0, %v6232
  %v6234 = vpop.f32.mrf.mxu0
  %v6235 = vadd.f32 0.0, %v6234
  %6236 = vmatmul.bf16.gmra.mxu0 %v4228
  %v6237 = vpop.f32.mrf.mxu0
  %v6238 = vadd.f32 0.0, %v6237
  %v6239 = vpop.f32.mrf.mxu0
  %v6240 = vadd.f32 0.0, %v6239
  %6241 = vmatmul.bf16.gmra.mxu0 %v4231
  %v6242 = vpop.f32.mrf.mxu0
  %v6243 = vadd.f32 0.0, %v6242
  %v6244 = vpop.f32.mrf.mxu0
  %v6245 = vadd.f32 0.0, %v6244
  %6246 = vmatmul.bf16.gmra.mxu0 %v4234
  %v6247 = vpop.f32.mrf.mxu0
  %v6248 = vadd.f32 0.0, %v6247
  %v6249 = vpop.f32.mrf.mxu0
  %v6250 = vadd.f32 0.0, %v6249
  %6251 = vmatmul.bf16.gmra.mxu0 %v4237
  %v6252 = vpop.f32.mrf.mxu0
  %v6253 = vadd.f32 0.0, %v6252
  %v6254 = vpop.f32.mrf.mxu0
  %v6255 = vadd.f32 0.0, %v6254
  %6256 = vmatmul.bf16.gmra.mxu0 %v4240
  %v6257 = vpop.f32.mrf.mxu0
  %v6258 = vadd.f32 0.0, %v6257
  %v6259 = vpop.f32.mrf.mxu0
  %v6260 = vadd.f32 0.0, %v6259
  %6261 = vmatmul.bf16.gmra.mxu0 %v4243
  %v6262 = vpop.f32.mrf.mxu0
  %v6263 = vadd.f32 0.0, %v6262
  %v6264 = vpop.f32.mrf.mxu0
  %v6265 = vadd.f32 0.0, %v6264
  %6266 = vmatmul.bf16.gmra.mxu0 %v4246
  %v6267 = vpop.f32.mrf.mxu0
  %v6268 = vadd.f32 0.0, %v6267
  %v6269 = vpop.f32.mrf.mxu0
  %v6270 = vadd.f32 0.0, %v6269
  %6271 = vmatmul.bf16.gmra.mxu0 %v4249
  %v6272 = vpop.f32.mrf.mxu0
  %v6273 = vadd.f32 0.0, %v6272
  %v6274 = vpop.f32.mrf.mxu0
  %v6275 = vadd.f32 0.0, %v6274
  %6276 = vmatmul.bf16.gmra.mxu0 %v4252
  %v6277 = vpop.f32.mrf.mxu0
  %v6278 = vadd.f32 0.0, %v6277
  %v6279 = vpop.f32.mrf.mxu0
  %v6280 = vadd.f32 0.0, %v6279
  %6281 = vmatmul.bf16.gmra.mxu0 %v4255
  %v6282 = vpop.f32.mrf.mxu0
  %v6283 = vadd.f32 0.0, %v6282
  %v6284 = vpop.f32.mrf.mxu0
  %v6285 = vadd.f32 0.0, %v6284
  %6286 = vmatmul.bf16.gmra.mxu0 %v4258
  %v6287 = vpop.f32.mrf.mxu0
  %v6288 = vadd.f32 0.0, %v6287
  %v6289 = vpop.f32.mrf.mxu0
  %v6290 = vadd.f32 0.0, %v6289
  %6291 = vmatmul.bf16.gmra.mxu0 %v4261
  %v6292 = vpop.f32.mrf.mxu0
  %v6293 = vadd.f32 0.0, %v6292
  %v6294 = vpop.f32.mrf.mxu0
  %v6295 = vadd.f32 0.0, %v6294
  %6296 = vmatmul.bf16.gmra.mxu0 %v4264
  %v6297 = vpop.f32.mrf.mxu0
  %v6298 = vadd.f32 0.0, %v6297
  %v6299 = vpop.f32.mrf.mxu0
  %v6300 = vadd.f32 0.0, %v6299
  %6301 = vmatmul.bf16.gmra.mxu0 %v4267
  %v6302 = vpop.f32.mrf.mxu0
  %v6303 = vadd.f32 0.0, %v6302
  %v6304 = vpop.f32.mrf.mxu0
  %v6305 = vadd.f32 0.0, %v6304
  %6306 = vmatmul.bf16.gmra.mxu0 %v4270
  %v6307 = vpop.f32.mrf.mxu0
  %v6308 = vadd.f32 0.0, %v6307
  %v6309 = vpop.f32.mrf.mxu0
  %v6310 = vadd.f32 0.0, %v6309
  %6311 = vmatmul.bf16.gmra.mxu0 %v4273
  %v6312 = vpop.f32.mrf.mxu0
  %v6313 = vadd.f32 0.0, %v6312
  %v6314 = vpop.f32.mrf.mxu0
  %v6315 = vadd.f32 0.0, %v6314
  %6316 = vmatmul.bf16.gmra.mxu0 %v4276
  %v6317 = vpop.f32.mrf.mxu0
  %v6318 = vadd.f32 0.0, %v6317
  %v6319 = vpop.f32.mrf.mxu0
  %v6320 = vadd.f32 0.0, %v6319
  %6321 = vmatmul.bf16.gmra.mxu0 %v4279
  %v6322 = vpop.f32.mrf.mxu0
  %v6323 = vadd.f32 0.0, %v6322
  %v6324 = vpop.f32.mrf.mxu0
  %v6325 = vadd.f32 0.0, %v6324
  %6326 = vmatmul.bf16.gmra.mxu0 %v4282
  %v6327 = vpop.f32.mrf.mxu0
  %v6328 = vadd.f32 0.0, %v6327
  %v6329 = vpop.f32.mrf.mxu0
  %v6330 = vadd.f32 0.0, %v6329
  %6331 = vmatmul.bf16.gmra.mxu0 %v4285
  %v6332 = vpop.f32.mrf.mxu0
  %v6333 = vadd.f32 0.0, %v6332
  %v6334 = vpop.f32.mrf.mxu0
  %v6335 = vadd.f32 0.0, %v6334
  %6336 = vmatmul.bf16.gmra.mxu0 %v4288
  %v6337 = vpop.f32.mrf.mxu0
  %v6338 = vadd.f32 0.0, %v6337
  %v6339 = vpop.f32.mrf.mxu0
  %v6340 = vadd.f32 0.0, %v6339
  %6341 = vmatmul.bf16.gmra.mxu0 %v4291
  %v6342 = vpop.f32.mrf.mxu0
  %v6343 = vadd.f32 0.0, %v6342
  %v6344 = vpop.f32.mrf.mxu0
  %v6345 = vadd.f32 0.0, %v6344
  %6346 = vmatmul.bf16.gmra.mxu0 %v4294
  %v6347 = vpop.f32.mrf.mxu0
  %v6348 = vadd.f32 0.0, %v6347
  %v6349 = vpop.f32.mrf.mxu0
  %v6350 = vadd.f32 0.0, %v6349
  %6351 = vmatmul.bf16.gmra.mxu0 %v4297
  %v6352 = vpop.f32.mrf.mxu0
  %v6353 = vadd.f32 0.0, %v6352
  %v6354 = vpop.f32.mrf.mxu0
  %v6355 = vadd.f32 0.0, %v6354
  %6356 = vmatmul.bf16.gmra.mxu0 %v4300
  %v6357 = vpop.f32.mrf.mxu0
  %v6358 = vadd.f32 0.0, %v6357
  %v6359 = vpop.f32.mrf.mxu0
  %v6360 = vadd.f32 0.0, %v6359
  %6361 = vmatmul.bf16.gmra.mxu0 %v4303
  %v6362 = vpop.f32.mrf.mxu0
  %v6363 = vadd.f32 0.0, %v6362
  %v6364 = vpop.f32.mrf.mxu0
  %v6365 = vadd.f32 0.0, %v6364
  %6366 = vmatmul.bf16.gmra.mxu0 %v4306
  %v6367 = vpop.f32.mrf.mxu0
  %v6368 = vadd.f32 0.0, %v6367
  %v6369 = vpop.f32.mrf.mxu0
  %v6370 = vadd.f32 0.0, %v6369
  %6371 = vmatmul.bf16.gmra.mxu0 %v4309
  %v6372 = vpop.f32.mrf.mxu0
  %v6373 = vadd.f32 0.0, %v6372
  %v6374 = vpop.f32.mrf.mxu0
  %v6375 = vadd.f32 0.0, %v6374
  %6376 = vmatmul.bf16.gmra.mxu0 %v4312
  %v6377 = vpop.f32.mrf.mxu0
  %v6378 = vadd.f32 0.0, %v6377
  %v6379 = vpop.f32.mrf.mxu0
  %v6380 = vadd.f32 0.0, %v6379
  %6381 = vmatmul.bf16.gmra.mxu0 %v4315
  %v6382 = vpop.f32.mrf.mxu0
  %v6383 = vadd.f32 0.0, %v6382
  %v6384 = vpop.f32.mrf.mxu0
  %v6385 = vadd.f32 0.0, %v6384
  %6386 = vmatmul.bf16.gmra.mxu0 %v4318
  %v6387 = vpop.f32.mrf.mxu0
  %v6388 = vadd.f32 0.0, %v6387
  %v6389 = vpop.f32.mrf.mxu0
  %v6390 = vadd.f32 0.0, %v6389
  %6391 = vmatmul.bf16.gmra.mxu0 %v4321
  %v6392 = vpop.f32.mrf.mxu0
  %v6393 = vadd.f32 0.0, %v6392
  %v6394 = vpop.f32.mrf.mxu0
  %v6395 = vadd.f32 0.0, %v6394
  %6396 = vmatmul.bf16.gmra.mxu0 %v4324
  %v6397 = vpop.f32.mrf.mxu0
  %v6398 = vadd.f32 0.0, %v6397
  %v6399 = vpop.f32.mrf.mxu0
  %v6400 = vadd.f32 0.0, %v6399
  %6401 = vmatmul.bf16.gmra.mxu0 %v4327
  %v6402 = vpop.f32.mrf.mxu0
  %v6403 = vadd.f32 0.0, %v6402
  %v6404 = vpop.f32.mrf.mxu0
  %v6405 = vadd.f32 0.0, %v6404
  %6406 = vmatmul.bf16.gmra.mxu0 %v4330
  %v6407 = vpop.f32.mrf.mxu0
  %v6408 = vadd.f32 0.0, %v6407
  %v6409 = vpop.f32.mrf.mxu0
  %v6410 = vadd.f32 0.0, %v6409
  %6411 = vmatmul.bf16.gmra.mxu0 %v4333
  %v6412 = vpop.f32.mrf.mxu0
  %v6413 = vadd.f32 0.0, %v6412
  %v6414 = vpop.f32.mrf.mxu0
  %v6415 = vadd.f32 0.0, %v6414
  %6416 = vmatmul.bf16.gmra.mxu0 %v4336
  %v6417 = vpop.f32.mrf.mxu0
  %v6418 = vadd.f32 0.0, %v6417
  %v6419 = vpop.f32.mrf.mxu0
  %v6420 = vadd.f32 0.0, %v6419
  %6421 = vmatmul.bf16.gmra.mxu0 %v4339
  %v6422 = vpop.f32.mrf.mxu0
  %v6423 = vadd.f32 0.0, %v6422
  %v6424 = vpop.f32.mrf.mxu0
  %v6425 = vadd.f32 0.0, %v6424
  %6426 = vmatmul.bf16.gmra.mxu0 %v4342
  %v6427 = vpop.f32.mrf.mxu0
  %v6428 = vadd.f32 0.0, %v6427
  %v6429 = vpop.f32.mrf.mxu0
  %v6430 = vadd.f32 0.0, %v6429
  %6431 = vmatmul.bf16.gmra.mxu0 %v4345
  %v6432 = vpop.f32.mrf.mxu0
  %v6433 = vadd.f32 0.0, %v6432
  %v6434 = vpop.f32.mrf.mxu0
  %v6435 = vadd.f32 0.0, %v6434
  %6436 = vmatmul.bf16.gmra.mxu0 %v4348
  %v6437 = vpop.f32.mrf.mxu0
  %v6438 = vadd.f32 0.0, %v6437
  %v6439 = vpop.f32.mrf.mxu0
  %v6440 = vadd.f32 0.0, %v6439
  %6441 = vmatmul.bf16.gmra.mxu0 %v4351
  %v6442 = vpop.f32.mrf.mxu0
  %v6443 = vadd.f32 0.0, %v6442
  %v6444 = vpop.f32.mrf.mxu0
  %v6445 = vadd.f32 0.0, %v6444
  %6446 = vmatmul.bf16.gmra.mxu0 %v4354
  %v6447 = vpop.f32.mrf.mxu0
  %v6448 = vadd.f32 0.0, %v6447
  %v6449 = vpop.f32.mrf.mxu0
  %v6450 = vadd.f32 0.0, %v6449
  %6451 = vmatmul.bf16.gmra.mxu0 %v4357
  %v6452 = vpop.f32.mrf.mxu0
  %v6453 = vadd.f32 0.0, %v6452
  %v6454 = vpop.f32.mrf.mxu0
  %v6455 = vadd.f32 0.0, %v6454
  %6456 = vmatmul.bf16.gmra.mxu0 %v4360
  %v6457 = vpop.f32.mrf.mxu0
  %v6458 = vadd.f32 0.0, %v6457
  %v6459 = vpop.f32.mrf.mxu0
  %v6460 = vadd.f32 0.0, %v6459
  %6461 = vmatmul.bf16.gmra.mxu0 %v4363
  %v6462 = vpop.f32.mrf.mxu0
  %v6463 = vadd.f32 0.0, %v6462
  %v6464 = vpop.f32.mrf.mxu0
  %v6465 = vadd.f32 0.0, %v6464
  %6466 = vmatmul.bf16.gmra.mxu0 %v4366
  %v6467 = vpop.f32.mrf.mxu0
  %v6468 = vadd.f32 0.0, %v6467
  %v6469 = vpop.f32.mrf.mxu0
  %v6470 = vadd.f32 0.0, %v6469
  %6471 = vmatmul.bf16.gmra.mxu0 %v4369
  %v6472 = vpop.f32.mrf.mxu0
  %v6473 = vadd.f32 0.0, %v6472
  %v6474 = vpop.f32.mrf.mxu0
  %v6475 = vadd.f32 0.0, %v6474
  %6476 = vmatmul.bf16.gmra.mxu0 %v4372
  %v6477 = vpop.f32.mrf.mxu0
  %v6478 = vadd.f32 0.0, %v6477
  %v6479 = vpop.f32.mrf.mxu0
  %v6480 = vadd.f32 0.0, %v6479
  %6481 = vmatmul.bf16.gmra.mxu0 %v4375
  %v6482 = vpop.f32.mrf.mxu0
  %v6483 = vadd.f32 0.0, %v6482
  %v6484 = vpop.f32.mrf.mxu0
  %v6485 = vadd.f32 0.0, %v6484
  %6486 = vmatmul.bf16.gmra.mxu0 %v4378
  %v6487 = vpop.f32.mrf.mxu0
  %v6488 = vadd.f32 0.0, %v6487
  %v6489 = vpop.f32.mrf.mxu0
  %v6490 = vadd.f32 0.0, %v6489
  %6491 = vmatmul.bf16.gmra.mxu0 %v4381
  %v6492 = vpop.f32.mrf.mxu0
  %v6493 = vadd.f32 0.0, %v6492
  %v6494 = vpop.f32.mrf.mxu0
  %v6495 = vadd.f32 0.0, %v6494
  %6496 = vmatmul.bf16.gmra.mxu0 %v4384
  %v6497 = vpop.f32.mrf.mxu0
  %v6498 = vadd.f32 0.0, %v6497
  %v6499 = vpop.f32.mrf.mxu0
  %v6500 = vadd.f32 0.0, %v6499
  %6501 = vmatmul.bf16.gmra.mxu0 %v4387
  %v6502 = vpop.f32.mrf.mxu0
  %v6503 = vadd.f32 0.0, %v6502
  %v6504 = vpop.f32.mrf.mxu0
  %v6505 = vadd.f32 0.0, %v6504
  %6506 = vmatmul.bf16.gmra.mxu0 %v4390
  %v6507 = vpop.f32.mrf.mxu0
  %v6508 = vadd.f32 0.0, %v6507
  %v6509 = vpop.f32.mrf.mxu0
  %v6510 = vadd.f32 0.0, %v6509
  %6511 = vmatmul.bf16.gmra.mxu0 %v4393
  %v6512 = vpop.f32.mrf.mxu0
  %v6513 = vadd.f32 0.0, %v6512
  %v6514 = vpop.f32.mrf.mxu0
  %v6515 = vadd.f32 0.0, %v6514
  %6516 = vmatmul.bf16.gmra.mxu0 %v4396
  %v6517 = vpop.f32.mrf.mxu0
  %v6518 = vadd.f32 0.0, %v6517
  %v6519 = vpop.f32.mrf.mxu0
  %v6520 = vadd.f32 0.0, %v6519
  %6521 = vmatmul.bf16.gmra.mxu0 %v4399
  %v6522 = vpop.f32.mrf.mxu0
  %v6523 = vadd.f32 0.0, %v6522
  %v6524 = vpop.f32.mrf.mxu0
  %v6525 = vadd.f32 0.0, %v6524
  %6526 = vmatmul.bf16.gmra.mxu0 %v4402
  %v6527 = vpop.f32.mrf.mxu0
  %v6528 = vadd.f32 0.0, %v6527
  %v6529 = vpop.f32.mrf.mxu0
  %v6530 = vadd.f32 0.0, %v6529
  %6531 = vmatmul.bf16.gmra.mxu0 %v4405
  %v6532 = vpop.f32.mrf.mxu0
  %v6533 = vadd.f32 0.0, %v6532
  %v6534 = vpop.f32.mrf.mxu0
  %v6535 = vadd.f32 0.0, %v6534
  %6536 = vmatmul.bf16.gmra.mxu0 %v4408
  %v6537 = vpop.f32.mrf.mxu0
  %v6538 = vadd.f32 0.0, %v6537
  %v6539 = vpop.f32.mrf.mxu0
  %v6540 = vadd.f32 0.0, %v6539
  %6541 = vmatmul.bf16.gmra.mxu0 %v4411
  %v6542 = vpop.f32.mrf.mxu0
  %v6543 = vadd.f32 0.0, %v6542
  %v6544 = vpop.f32.mrf.mxu0
  %v6545 = vadd.f32 0.0, %v6544
  %6546 = vmatmul.bf16.gmra.mxu0 %v4414
  %v6547 = vpop.f32.mrf.mxu0
  %v6548 = vadd.f32 0.0, %v6547
  %v6549 = vpop.f32.mrf.mxu0
  %v6550 = vadd.f32 0.0, %v6549
  %6551 = vmatmul.bf16.gmra.mxu0 %v4417
  %v6552 = vpop.f32.mrf.mxu0
  %v6553 = vadd.f32 0.0, %v6552
  %v6554 = vpop.f32.mrf.mxu0
  %v6555 = vadd.f32 0.0, %v6554
  %6556 = vmatmul.bf16.gmra.mxu0 %v4420
  %v6557 = vpop.f32.mrf.mxu0
  %v6558 = vadd.f32 0.0, %v6557
  %v6559 = vpop.f32.mrf.mxu0
  %v6560 = vadd.f32 0.0, %v6559
  %6561 = vmatmul.bf16.gmra.mxu0 %v4423
  %v6562 = vpop.f32.mrf.mxu0
  %v6563 = vadd.f32 0.0, %v6562
  %v6564 = vpop.f32.mrf.mxu0
  %v6565 = vadd.f32 0.0, %v6564
  %6566 = vmatmul.bf16.gmra.mxu0 %v4426
  %v6567 = vpop.f32.mrf.mxu0
  %v6568 = vadd.f32 0.0, %v6567
  %v6569 = vpop.f32.mrf.mxu0
  %v6570 = vadd.f32 0.0, %v6569
  %6571 = vmatmul.bf16.gmra.mxu0 %v4429
  %v6572 = vpop.f32.mrf.mxu0
  %v6573 = vadd.f32 0.0, %v6572
  %v6574 = vpop.f32.mrf.mxu0
  %v6575 = vadd.f32 0.0, %v6574
  %6576 = vmatmul.bf16.gmra.mxu0 %v4432
  %v6577 = vpop.f32.mrf.mxu0
  %v6578 = vadd.f32 0.0, %v6577
  %v6579 = vpop.f32.mrf.mxu0
  %v6580 = vadd.f32 0.0, %v6579
  %6581 = vmatmul.bf16.gmra.mxu0 %v4435
  %v6582 = vpop.f32.mrf.mxu0
  %v6583 = vadd.f32 0.0, %v6582
  %v6584 = vpop.f32.mrf.mxu0
  %v6585 = vadd.f32 0.0, %v6584
  %6586 = vmatmul.bf16.gmra.mxu0 %v4438
  %v6587 = vpop.f32.mrf.mxu0
  %v6588 = vadd.f32 0.0, %v6587
  %v6589 = vpop.f32.mrf.mxu0
  %v6590 = vadd.f32 0.0, %v6589
  %6591 = vmatmul.bf16.gmra.mxu0 %v4441
  %v6592 = vpop.f32.mrf.mxu0
  %v6593 = vadd.f32 0.0, %v6592
  %v6594 = vpop.f32.mrf.mxu0
  %v6595 = vadd.f32 0.0, %v6594
  %6596 = vmatmul.bf16.gmra.mxu0 %v4444
  %v6597 = vpop.f32.mrf.mxu0
  %v6598 = vadd.f32 0.0, %v6597
  %v6599 = vpop.f32.mrf.mxu0
  %v6600 = vadd.f32 0.0, %v6599
  %6601 = vmatmul.bf16.gmra.mxu0 %v4447
  %v6602 = vpop.f32.mrf.mxu0
  %v6603 = vadd.f32 0.0, %v6602
  %v6604 = vpop.f32.mrf.mxu0
  %v6605 = vadd.f32 0.0, %v6604
  %6606 = vmatmul.bf16.gmra.mxu0 %v4450
  %v6607 = vpop.f32.mrf.mxu0
  %v6608 = vadd.f32 0.0, %v6607
  %v6609 = vpop.f32.mrf.mxu0
  %v6610 = vadd.f32 0.0, %v6609
  %6611 = vmatmul.bf16.gmra.mxu0 %v4453
  %v6612 = vpop.f32.mrf.mxu0
  %v6613 = vadd.f32 0.0, %v6612
  %v6614 = vpop.f32.mrf.mxu0
  %v6615 = vadd.f32 0.0, %v6614
  %6616 = vmatmul.bf16.gmra.mxu0 %v4456
  %v6617 = vpop.f32.mrf.mxu0
  %v6618 = vadd.f32 0.0, %v6617
  %v6619 = vpop.f32.mrf.mxu0
  %v6620 = vadd.f32 0.0, %v6619
  %6621 = vmatmul.bf16.gmra.mxu0 %v4459
  %v6622 = vpop.f32.mrf.mxu0
  %v6623 = vadd.f32 0.0, %v6622
  %v6624 = vpop.f32.mrf.mxu0
  %v6625 = vadd.f32 0.0, %v6624
  %6626 = vmatmul.bf16.gmra.mxu0 %v4462
  %v6627 = vpop.f32.mrf.mxu0
  %v6628 = vadd.f32 0.0, %v6627
  %v6629 = vpop.f32.mrf.mxu0
  %v6630 = vadd.f32 0.0, %v6629
  %6631 = vmatmul.bf16.gmra.mxu0 %v4465
  %v6632 = vpop.f32.mrf.mxu0
  %v6633 = vadd.f32 0.0, %v6632
  %v6634 = vpop.f32.mrf.mxu0
  %v6635 = vadd.f32 0.0, %v6634
  %6636 = vmatmul.bf16.gmra.mxu0 %v4468
  %v6637 = vpop.f32.mrf.mxu0
  %v6638 = vadd.f32 0.0, %v6637
  %v6639 = vpop.f32.mrf.mxu0
  %v6640 = vadd.f32 0.0, %v6639
  %6641 = vmatmul.bf16.gmra.mxu0 %v4471
  %v6642 = vpop.f32.mrf.mxu0
  %v6643 = vadd.f32 0.0, %v6642
  %v6644 = vpop.f32.mrf.mxu0
  %v6645 = vadd.f32 0.0, %v6644
  %6646 = vmatmul.bf16.gmra.mxu0 %v4474
  %v6647 = vpop.f32.mrf.mxu0
  %v6648 = vadd.f32 0.0, %v6647
  %v6649 = vpop.f32.mrf.mxu0
  %v6650 = vadd.f32 0.0, %v6649
  %6651 = vmatmul.bf16.gmra.mxu0 %v4477
  %v6652 = vpop.f32.mrf.mxu0
  %v6653 = vadd.f32 0.0, %v6652
  %v6654 = vpop.f32.mrf.mxu0
  %v6655 = vadd.f32 0.0, %v6654
  %6656 = vmatmul.bf16.gmra.mxu0 %v4480
  %v6657 = vpop.f32.mrf.mxu0
  %v6658 = vadd.f32 0.0, %v6657
  %v6659 = vpop.f32.mrf.mxu0
  %v6660 = vadd.f32 0.0, %v6659
  %6661 = vmatmul.bf16.gmra.mxu0 %v4483
  %v6662 = vpop.f32.mrf.mxu0
  %v6663 = vadd.f32 0.0, %v6662
  %v6664 = vpop.f32.mrf.mxu0
  %v6665 = vadd.f32 0.0, %v6664
  %6666 = vmatmul.bf16.gmra.mxu0 %v4486
  %v6667 = vpop.f32.mrf.mxu0
  %v6668 = vadd.f32 0.0, %v6667
  %v6669 = vpop.f32.mrf.mxu0
  %v6670 = vadd.f32 0.0, %v6669
  %6671 = vmatmul.bf16.gmra.mxu0 %v4489
  %v6672 = vpop.f32.mrf.mxu0
  %v6673 = vadd.f32 0.0, %v6672
  %v6674 = vpop.f32.mrf.mxu0
  %v6675 = vadd.f32 0.0, %v6674
  %6676 = vmatmul.bf16.gmra.mxu0 %v4492
  %v6677 = vpop.f32.mrf.mxu0
  %v6678 = vadd.f32 0.0, %v6677
  %v6679 = vpop.f32.mrf.mxu0
  %v6680 = vadd.f32 0.0, %v6679
  %6681 = vmatmul.bf16.gmra.mxu0 %v4495
  %v6682 = vpop.f32.mrf.mxu0
  %v6683 = vadd.f32 0.0, %v6682
  %v6684 = vpop.f32.mrf.mxu0
  %v6685 = vadd.f32 0.0, %v6684
  %6686 = vmatmul.bf16.gmra.mxu0 %v4498
  %v6687 = vpop.f32.mrf.mxu0
  %v6688 = vadd.f32 0.0, %v6687
  %v6689 = vpop.f32.mrf.mxu0
  %v6690 = vadd.f32 0.0, %v6689
  %6691 = vmatmul.bf16.gmra.mxu0 %v4501
  %v6692 = vpop.f32.mrf.mxu0
  %v6693 = vadd.f32 0.0, %v6692
  %v6694 = vpop.f32.mrf.mxu0
  %v6695 = vadd.f32 0.0, %v6694
  %6696 = vmatmul.bf16.gmra.mxu0 %v4504
  %v6697 = vpop.f32.mrf.mxu0
  %v6698 = vadd.f32 0.0, %v6697
  %v6699 = vpop.f32.mrf.mxu0
  %v6700 = vadd.f32 0.0, %v6699
  %6701 = vmatmul.bf16.gmra.mxu0 %v4507
  %v6702 = vpop.f32.mrf.mxu0
  %v6703 = vadd.f32 0.0, %v6702
  %v6704 = vpop.f32.mrf.mxu0
  %v6705 = vadd.f32 0.0, %v6704
  %6706 = vmatmul.bf16.gmra.mxu0 %v4510
  %v6707 = vpop.f32.mrf.mxu0
  %v6708 = vadd.f32 0.0, %v6707
  %v6709 = vpop.f32.mrf.mxu0
  %v6710 = vadd.f32 0.0, %v6709
  %6711 = vmatmul.bf16.gmra.mxu0 %v4513
  %v6712 = vpop.f32.mrf.mxu0
  %v6713 = vadd.f32 0.0, %v6712
  %v6714 = vpop.f32.mrf.mxu0
  %v6715 = vadd.f32 0.0, %v6714
  %6716 = vmatmul.bf16.gmra.mxu0 %v4516
  %v6717 = vpop.f32.mrf.mxu0
  %v6718 = vadd.f32 0.0, %v6717
  %v6719 = vpop.f32.mrf.mxu0
  %v6720 = vadd.f32 0.0, %v6719
  %6721 = vmatmul.bf16.gmra.mxu0 %v4519
  %v6722 = vpop.f32.mrf.mxu0
  %v6723 = vadd.f32 0.0, %v6722
  %v6724 = vpop.f32.mrf.mxu0
  %v6725 = vadd.f32 0.0, %v6724
  %6726 = vmatmul.bf16.gmra.mxu0 %v4522
  %v6727 = vpop.f32.mrf.mxu0
  %v6728 = vadd.f32 0.0, %v6727
  %v6729 = vpop.f32.mrf.mxu0
  %v6730 = vadd.f32 0.0, %v6729
  %6731 = vmatmul.bf16.gmra.mxu0 %v4525
  %v6732 = vpop.f32.mrf.mxu0
  %v6733 = vadd.f32 0.0, %v6732
  %v6734 = vpop.f32.mrf.mxu0
  %v6735 = vadd.f32 0.0, %v6734
  %6736 = vmatmul.bf16.gmra.mxu0 %v4528
  %v6737 = vpop.f32.mrf.mxu0
  %v6738 = vadd.f32 0.0, %v6737
  %v6739 = vpop.f32.mrf.mxu0
  %v6740 = vadd.f32 0.0, %v6739
  %6741 = vmatmul.bf16.gmra.mxu0 %v4531
  %v6742 = vpop.f32.mrf.mxu0
  %v6743 = vadd.f32 0.0, %v6742
  %v6744 = vpop.f32.mrf.mxu0
  %v6745 = vadd.f32 0.0, %v6744
  %6746 = vmatmul.bf16.gmra.mxu0 %v4534
  %v6747 = vpop.f32.mrf.mxu0
  %v6748 = vadd.f32 0.0, %v6747
  %v6749 = vpop.f32.mrf.mxu0
  %v6750 = vadd.f32 0.0, %v6749
  %6751 = vmatmul.bf16.gmra.mxu0 %v4537
  %v6752 = vpop.f32.mrf.mxu0
  %v6753 = vadd.f32 0.0, %v6752
  %v6754 = vpop.f32.mrf.mxu0
  %v6755 = vadd.f32 0.0, %v6754
  %6756 = vmatmul.bf16.gmra.mxu0 %v4540
  %v6757 = vpop.f32.mrf.mxu0
  %v6758 = vadd.f32 0.0, %v6757
  %v6759 = vpop.f32.mrf.mxu0
  %v6760 = vadd.f32 0.0, %v6759
  %6761 = vmatmul.bf16.gmra.mxu0 %v4543
  %v6762 = vpop.f32.mrf.mxu0
  %v6763 = vadd.f32 0.0, %v6762
  %v6764 = vpop.f32.mrf.mxu0
  %v6765 = vadd.f32 0.0, %v6764
  %6766 = vmatmul.bf16.gmra.mxu0 %v4546
  %v6767 = vpop.f32.mrf.mxu0
  %v6768 = vadd.f32 0.0, %v6767
  %v6769 = vpop.f32.mrf.mxu0
  %v6770 = vadd.f32 0.0, %v6769
  %6771 = vmatmul.bf16.gmra.mxu0 %v4549
  %v6772 = vpop.f32.mrf.mxu0
  %v6773 = vadd.f32 0.0, %v6772
  %v6774 = vpop.f32.mrf.mxu0
  %v6775 = vadd.f32 0.0, %v6774
  %6776 = vmatmul.bf16.gmra.mxu0 %v4552
  %v6777 = vpop.f32.mrf.mxu0
  %v6778 = vadd.f32 0.0, %v6777
  %v6779 = vpop.f32.mrf.mxu0
  %v6780 = vadd.f32 0.0, %v6779
  %6781 = vmatmul.bf16.gmra.mxu0 %v4555
  %v6782 = vpop.f32.mrf.mxu0
  %v6783 = vadd.f32 0.0, %v6782
  %v6784 = vpop.f32.mrf.mxu0
  %v6785 = vadd.f32 0.0, %v6784
  %6786 = vmatmul.bf16.gmra.mxu0 %v4558
  %v6787 = vpop.f32.mrf.mxu0
  %v6788 = vadd.f32 0.0, %v6787
  %v6789 = vpop.f32.mrf.mxu0
  %v6790 = vadd.f32 0.0, %v6789
  %6791 = vmatmul.bf16.gmra.mxu0 %v4561
  %v6792 = vpop.f32.mrf.mxu0
  %v6793 = vadd.f32 0.0, %v6792
  %v6794 = vpop.f32.mrf.mxu0
  %v6795 = vadd.f32 0.0, %v6794
  %6796 = vmatmul.bf16.gmra.mxu0 %v4564
  %v6797 = vpop.f32.mrf.mxu0
  %v6798 = vadd.f32 0.0, %v6797
  %v6799 = vpop.f32.mrf.mxu0
  %v6800 = vadd.f32 0.0, %v6799
  %6801 = vmatmul.bf16.gmra.mxu0 %v4567
  %v6802 = vpop.f32.mrf.mxu0
  %v6803 = vadd.f32 0.0, %v6802
  %v6804 = vpop.f32.mrf.mxu0
  %v6805 = vadd.f32 0.0, %v6804
  %6806 = vmatmul.bf16.gmra.mxu0 %v4570
  %v6807 = vpop.f32.mrf.mxu0
  %v6808 = vadd.f32 0.0, %v6807
  %v6809 = vpop.f32.mrf.mxu0
  %v6810 = vadd.f32 0.0, %v6809
  %6811 = vmatmul.bf16.gmra.mxu0 %v4573
  %v6812 = vpop.f32.mrf.mxu0
  %v6813 = vadd.f32 0.0, %v6812
  %v6814 = vpop.f32.mrf.mxu0
  %v6815 = vadd.f32 0.0, %v6814
  %6816 = vmatmul.bf16.gmra.mxu0 %v4576
  %v6817 = vpop.f32.mrf.mxu0
  %v6818 = vadd.f32 0.0, %v6817
  %v6819 = vpop.f32.mrf.mxu0
  %v6820 = vadd.f32 0.0, %v6819
  %6821 = vmatmul.bf16.gmra.mxu0 %v4579
  %v6822 = vpop.f32.mrf.mxu0
  %v6823 = vadd.f32 0.0, %v6822
  %v6824 = vpop.f32.mrf.mxu0
  %v6825 = vadd.f32 0.0, %v6824
  %6826 = vmatmul.bf16.gmra.mxu0 %v4582
  %v6827 = vpop.f32.mrf.mxu0
  %v6828 = vadd.f32 0.0, %v6827
  %v6829 = vpop.f32.mrf.mxu0
  %v6830 = vadd.f32 0.0, %v6829
  %6831 = vmatmul.bf16.gmra.mxu0 %v4585
  %v6832 = vpop.f32.mrf.mxu0
  %v6833 = vadd.f32 0.0, %v6832
  %v6834 = vpop.f32.mrf.mxu0
  %v6835 = vadd.f32 0.0, %v6834
  %6836 = vmatmul.bf16.gmra.mxu0 %v4588
  %v6837 = vpop.f32.mrf.mxu0
  %v6838 = vadd.f32 0.0, %v6837
  %v6839 = vpop.f32.mrf.mxu0
  %v6840 = vadd.f32 0.0, %v6839
  %6841 = vmatmul.bf16.gmra.mxu0 %v4591
  %v6842 = vpop.f32.mrf.mxu0
  %v6843 = vadd.f32 0.0, %v6842
  %v6844 = vpop.f32.mrf.mxu0
  %v6845 = vadd.f32 0.0, %v6844
  %6846 = vmatmul.bf16.gmra.mxu0 %v4594
  %v6847 = vpop.f32.mrf.mxu0
  %v6848 = vadd.f32 0.0, %v6847
  %v6849 = vpop.f32.mrf.mxu0
  %v6850 = vadd.f32 0.0, %v6849
  %6851 = vmatmul.bf16.gmra.mxu0 %v4597
  %v6852 = vpop.f32.mrf.mxu0
  %v6853 = vadd.f32 0.0, %v6852
  %v6854 = vpop.f32.mrf.mxu0
  %v6855 = vadd.f32 0.0, %v6854
  %6856 = vmatmul.bf16.gmra.mxu0 %v4600
  %v6857 = vpop.f32.mrf.mxu0
  %v6858 = vadd.f32 0.0, %v6857
  %v6859 = vpop.f32.mrf.mxu0
  %v6860 = vadd.f32 0.0, %v6859
  %6861 = vmatmul.bf16.gmra.mxu0 %v4603
  %v6862 = vpop.f32.mrf.mxu0
  %v6863 = vadd.f32 0.0, %v6862
  %v6864 = vpop.f32.mrf.mxu0
  %v6865 = vadd.f32 0.0, %v6864
  %6866 = vmatmul.bf16.gmra.mxu0 %v4606
  %v6867 = vpop.f32.mrf.mxu0
  %v6868 = vadd.f32 0.0, %v6867
  %v6869 = vpop.f32.mrf.mxu0
  %v6870 = vadd.f32 0.0, %v6869
  %6871 = vmatmul.bf16.gmra.mxu0 %v4609
  %v6872 = vpop.f32.mrf.mxu0
  %v6873 = vadd.f32 0.0, %v6872
  %v6874 = vpop.f32.mrf.mxu0
  %v6875 = vadd.f32 0.0, %v6874
  %6876 = vmatmul.bf16.gmra.mxu0 %v4612
  %v6877 = vpop.f32.mrf.mxu0
  %v6878 = vadd.f32 0.0, %v6877
  %v6879 = vpop.f32.mrf.mxu0
  %v6880 = vadd.f32 0.0, %v6879
  %6881 = vmatmul.bf16.gmra.mxu0 %v4615
  %v6882 = vpop.f32.mrf.mxu0
  %v6883 = vadd.f32 0.0, %v6882
  %v6884 = vpop.f32.mrf.mxu0
  %v6885 = vadd.f32 0.0, %v6884
  %6886 = vmatmul.bf16.gmra.mxu0 %v4618
  %v6887 = vpop.f32.mrf.mxu0
  %v6888 = vadd.f32 0.0, %v6887
  %v6889 = vpop.f32.mrf.mxu0
  %v6890 = vadd.f32 0.0, %v6889
  %6891 = vmatmul.bf16.gmra.mxu0 %v4621
  %v6892 = vpop.f32.mrf.mxu0
  %v6893 = vadd.f32 0.0, %v6892
  %v6894 = vpop.f32.mrf.mxu0
  %v6895 = vadd.f32 0.0, %v6894
  %6896 = vmatmul.bf16.gmra.mxu0 %v4624
  %v6897 = vpop.f32.mrf.mxu0
  %v6898 = vadd.f32 0.0, %v6897
  %v6899 = vpop.f32.mrf.mxu0
  %v6900 = vadd.f32 0.0, %v6899
  %6901 = vmatmul.bf16.gmra.mxu0 %v4627
  %v6902 = vpop.f32.mrf.mxu0
  %v6903 = vadd.f32 0.0, %v6902
  %v6904 = vpop.f32.mrf.mxu0
  %v6905 = vadd.f32 0.0, %v6904
  %6906 = vmatmul.bf16.gmra.mxu0 %v4630
  %v6907 = vpop.f32.mrf.mxu0
  %v6908 = vadd.f32 0.0, %v6907
  %v6909 = vpop.f32.mrf.mxu0
  %v6910 = vadd.f32 0.0, %v6909
  %6911 = vmatmul.bf16.gmra.mxu0 %v4633
  %v6912 = vpop.f32.mrf.mxu0
  %v6913 = vadd.f32 0.0, %v6912
  %v6914 = vpop.f32.mrf.mxu0
  %v6915 = vadd.f32 0.0, %v6914
  %6916 = vmatmul.bf16.gmra.mxu0 %v4636
  %v6917 = vpop.f32.mrf.mxu0
  %v6918 = vadd.f32 0.0, %v6917
  %v6919 = vpop.f32.mrf.mxu0
  %v6920 = vadd.f32 0.0, %v6919
  %6921 = vmatmul.bf16.gmra.mxu0 %v4639
  %v6922 = vpop.f32.mrf.mxu0
  %v6923 = vadd.f32 0.0, %v6922
  %v6924 = vpop.f32.mrf.mxu0
  %v6925 = vadd.f32 0.0, %v6924
  %6926 = vmatmul.bf16.gmra.mxu0 %v4642
  %v6927 = vpop.f32.mrf.mxu0
  %v6928 = vadd.f32 0.0, %v6927
  %v6929 = vpop.f32.mrf.mxu0
  %v6930 = vadd.f32 0.0, %v6929
  %6931 = vmatmul.bf16.gmra.mxu0 %v4645
  %v6932 = vpop.f32.mrf.mxu0
  %v6933 = vadd.f32 0.0, %v6932
  %v6934 = vpop.f32.mrf.mxu0
  %v6935 = vadd.f32 0.0, %v6934
  %6936 = vmatmul.bf16.gmra.mxu0 %v4648
  %v6937 = vpop.f32.mrf.mxu0
  %v6938 = vadd.f32 0.0, %v6937
  %v6939 = vpop.f32.mrf.mxu0
  %v6940 = vadd.f32 0.0, %v6939
  %6941 = vmatmul.bf16.gmra.mxu0 %v4651
  %v6942 = vpop.f32.mrf.mxu0
  %v6943 = vadd.f32 0.0, %v6942
  %v6944 = vpop.f32.mrf.mxu0
  %v6945 = vadd.f32 0.0, %v6944
  %6946 = vmatmul.bf16.gmra.mxu0 %v4654
  %v6947 = vpop.f32.mrf.mxu0
  %v6948 = vadd.f32 0.0, %v6947
  %v6949 = vpop.f32.mrf.mxu0
  %v6950 = vadd.f32 0.0, %v6949
  %6951 = vmatmul.bf16.gmra.mxu0 %v4657
  %v6952 = vpop.f32.mrf.mxu0
  %v6953 = vadd.f32 0.0, %v6952
  %v6954 = vpop.f32.mrf.mxu0
  %v6955 = vadd.f32 0.0, %v6954
  %6956 = vmatmul.bf16.gmra.mxu0 %v4660
  %v6957 = vpop.f32.mrf.mxu0
  %v6958 = vadd.f32 0.0, %v6957
  %v6959 = vpop.f32.mrf.mxu0
  %v6960 = vadd.f32 0.0, %v6959
  %6961 = vmatmul.bf16.gmra.mxu0 %v4663
  %v6962 = vpop.f32.mrf.mxu0
  %v6963 = vadd.f32 0.0, %v6962
  %v6964 = vpop.f32.mrf.mxu0
  %v6965 = vadd.f32 0.0, %v6964
  %6966 = vmatmul.bf16.gmra.mxu0 %v4666
  %v6967 = vpop.f32.mrf.mxu0
  %v6968 = vadd.f32 0.0, %v6967
  %v6969 = vpop.f32.mrf.mxu0
  %v6970 = vadd.f32 0.0, %v6969
  %6971 = vmatmul.bf16.gmra.mxu0 %v4669
  %v6972 = vpop.f32.mrf.mxu0
  %v6973 = vadd.f32 0.0, %v6972
  %v6974 = vpop.f32.mrf.mxu0
  %v6975 = vadd.f32 0.0, %v6974
  %6976 = vmatmul.bf16.gmra.mxu0 %v4672
  %v6977 = vpop.f32.mrf.mxu0
  %v6978 = vadd.f32 0.0, %v6977
  %v6979 = vpop.f32.mrf.mxu0
  %v6980 = vadd.f32 0.0, %v6979
  %6981 = vmatmul.bf16.gmra.mxu0 %v4675
  %v6982 = vpop.f32.mrf.mxu0
  %v6983 = vadd.f32 0.0, %v6982
  %v6984 = vpop.f32.mrf.mxu0
  %v6985 = vadd.f32 0.0, %v6984
  %6986 = vmatmul.bf16.gmra.mxu0 %v4678
  %v6987 = vpop.f32.mrf.mxu0
  %v6988 = vadd.f32 0.0, %v6987
  %v6989 = vpop.f32.mrf.mxu0
  %v6990 = vadd.f32 0.0, %v6989
  %6991 = vmatmul.bf16.gmra.mxu0 %v4681
  %v6992 = vpop.f32.mrf.mxu0
  %v6993 = vadd.f32 0.0, %v6992
  %v6994 = vpop.f32.mrf.mxu0
  %v6995 = vadd.f32 0.0, %v6994
  %6996 = vmatmul.bf16.gmra.mxu0 %v4684
  %v6997 = vpop.f32.mrf.mxu0
  %v6998 = vadd.f32 0.0, %v6997
  %v6999 = vpop.f32.mrf.mxu0
  %v7000 = vadd.f32 0.0, %v6999
  %7001 = vmatmul.bf16.gmra.mxu0 %v4687
  %v7002 = vpop.f32.mrf.mxu0
  %v7003 = vadd.f32 0.0, %v7002
  %v7004 = vpop.f32.mrf.mxu0
  %v7005 = vadd.f32 0.0, %v7004
  %7006 = vmatmul.bf16.gmra.mxu0 %v4690
  %v7007 = vpop.f32.mrf.mxu0
  %v7008 = vadd.f32 0.0, %v7007
  %v7009 = vpop.f32.mrf.mxu0
  %v7010 = vadd.f32 0.0, %v7009
  %7011 = vmatmul.bf16.gmra.mxu0 %v4693
  %v7012 = vpop.f32.mrf.mxu0
  %v7013 = vadd.f32 0.0, %v7012
  %v7014 = vpop.f32.mrf.mxu0
  %v7015 = vadd.f32 0.0, %v7014
  %7016 = vmatmul.bf16.gmra.mxu0 %v4696
  %v7017 = vpop.f32.mrf.mxu0
  %v7018 = vadd.f32 0.0, %v7017
  %v7019 = vpop.f32.mrf.mxu0
  %v7020 = vadd.f32 0.0, %v7019
  %7021 = vmatmul.bf16.gmra.mxu0 %v4699
  %v7022 = vpop.f32.mrf.mxu0
  %v7023 = vadd.f32 0.0, %v7022
  %v7024 = vpop.f32.mrf.mxu0
  %v7025 = vadd.f32 0.0, %v7024
  %7026 = vmatmul.bf16.gmra.mxu0 %v4702
  %v7027 = vpop.f32.mrf.mxu0
  %v7028 = vadd.f32 0.0, %v7027
  %v7029 = vpop.f32.mrf.mxu0
  %v7030 = vadd.f32 0.0, %v7029
  %7031 = vmatmul.bf16.gmra.mxu0 %v4705
  %v7032 = vpop.f32.mrf.mxu0
  %v7033 = vadd.f32 0.0, %v7032
  %v7034 = vpop.f32.mrf.mxu0
  %v7035 = vadd.f32 0.0, %v7034
  %7036 = vmatmul.bf16.gmra.mxu0 %v4708
  %v7037 = vpop.f32.mrf.mxu0
  %v7038 = vadd.f32 0.0, %v7037
  %v7039 = vpop.f32.mrf.mxu0
  %v7040 = vadd.f32 0.0, %v7039
  %7041 = vmatmul.bf16.gmra.mxu0 %v4711
  %v7042 = vpop.f32.mrf.mxu0
  %v7043 = vadd.f32 0.0, %v7042
  %v7044 = vpop.f32.mrf.mxu0
  %v7045 = vadd.f32 0.0, %v7044
  %7046 = vmatmul.bf16.gmra.mxu0 %v4714
  %v7047 = vpop.f32.mrf.mxu0
  %v7048 = vadd.f32 0.0, %v7047
  %v7049 = vpop.f32.mrf.mxu0
  %v7050 = vadd.f32 0.0, %v7049
  %7051 = vmatmul.bf16.gmra.mxu0 %v4717
  %v7052 = vpop.f32.mrf.mxu0
  %v7053 = vadd.f32 0.0, %v7052
  %v7054 = vpop.f32.mrf.mxu0
  %v7055 = vadd.f32 0.0, %v7054
  %7056 = vmatmul.bf16.gmra.mxu0 %v4720
  %v7057 = vpop.f32.mrf.mxu0
  %v7058 = vadd.f32 0.0, %v7057
  %v7059 = vpop.f32.mrf.mxu0
  %v7060 = vadd.f32 0.0, %v7059
  %7061 = vmatmul.bf16.gmra.mxu0 %v4723
  %v7062 = vpop.f32.mrf.mxu0
  %v7063 = vadd.f32 0.0, %v7062
  %v7064 = vpop.f32.mrf.mxu0
  %v7065 = vadd.f32 0.0, %v7064
  %7066 = vmatmul.bf16.gmra.mxu0 %v4726
  %v7067 = vpop.f32.mrf.mxu0
  %v7068 = vadd.f32 0.0, %v7067
  %v7069 = vpop.f32.mrf.mxu0
  %v7070 = vadd.f32 0.0, %v7069
  %7071 = vmatmul.bf16.gmra.mxu0 %v4729
  %v7072 = vpop.f32.mrf.mxu0
  %v7073 = vadd.f32 0.0, %v7072
  %v7074 = vpop.f32.mrf.mxu0
  %v7075 = vadd.f32 0.0, %v7074
  %7076 = vmatmul.bf16.gmra.mxu0 %v4732
  %v7077 = vpop.f32.mrf.mxu0
  %v7078 = vadd.f32 0.0, %v7077
  %v7079 = vpop.f32.mrf.mxu0
  %v7080 = vadd.f32 0.0, %v7079
  %7081 = vmatmul.bf16.gmra.mxu0 %v4735
  %v7082 = vpop.f32.mrf.mxu0
  %v7083 = vadd.f32 0.0, %v7082
  %v7084 = vpop.f32.mrf.mxu0
  %v7085 = vadd.f32 0.0, %v7084
  %7086 = vmatmul.bf16.gmra.mxu0 %v4738
  %v7087 = vpop.f32.mrf.mxu0
  %v7088 = vadd.f32 0.0, %v7087
  %v7089 = vpop.f32.mrf.mxu0
  %v7090 = vadd.f32 0.0, %v7089
  %7091 = vmatmul.bf16.gmra.mxu0 %v4741
  %v7092 = vpop.f32.mrf.mxu0
  %v7093 = vadd.f32 0.0, %v7092
  %v7094 = vpop.f32.mrf.mxu0
  %v7095 = vadd.f32 0.0, %v7094
  %7096 = vmatmul.bf16.gmra.mxu0 %v4744
  %v7097 = vpop.f32.mrf.mxu0
  %v7098 = vadd.f32 0.0, %v7097
  %v7099 = vpop.f32.mrf.mxu0
  %v7100 = vadd.f32 0.0, %v7099
  %7101 = vmatmul.bf16.gmra.mxu0 %v4747
  %v7102 = vpop.f32.mrf.mxu0
  %v7103 = vadd.f32 0.0, %v7102
  %v7104 = vpop.f32.mrf.mxu0
  %v7105 = vadd.f32 0.0, %v7104
  %7106 = vmatmul.bf16.gmra.mxu0 %v4750
  %v7107 = vpop.f32.mrf.mxu0
  %v7108 = vadd.f32 0.0, %v7107
  %v7109 = vpop.f32.mrf.mxu0
  %v7110 = vadd.f32 0.0, %v7109
  %7111 = vmatmul.bf16.gmra.mxu0 %v4753
  %v7112 = vpop.f32.mrf.mxu0
  %v7113 = vadd.f32 0.0, %v7112
  %v7114 = vpop.f32.mrf.mxu0
  %v7115 = vadd.f32 0.0, %v7114
  %7116 = vmatmul.bf16.gmra.mxu0 %v4756
  %v7117 = vpop.f32.mrf.mxu0
  %v7118 = vadd.f32 0.0, %v7117
  %v7119 = vpop.f32.mrf.mxu0
  %v7120 = vadd.f32 0.0, %v7119
  %7121 = vmatmul.bf16.gmra.mxu0 %v4759
  %v7122 = vpop.f32.mrf.mxu0
  %v7123 = vadd.f32 0.0, %v7122
  %v7124 = vpop.f32.mrf.mxu0
  %v7125 = vadd.f32 0.0, %v7124
  %7126 = vmatmul.bf16.gmra.mxu0 %v4762
  %v7127 = vpop.f32.mrf.mxu0
  %v7128 = vadd.f32 0.0, %v7127
  %v7129 = vpop.f32.mrf.mxu0
  %v7130 = vadd.f32 0.0, %v7129
  %7131 = vmatmul.bf16.gmra.mxu0 %v4765
  %v7132 = vpop.f32.mrf.mxu0
  %v7133 = vadd.f32 0.0, %v7132
  %v7134 = vpop.f32.mrf.mxu0
  %v7135 = vadd.f32 0.0, %v7134
  %7136 = vmatmul.bf16.gmra.mxu0 %v4768
  %v7137 = vpop.f32.mrf.mxu0
  %v7138 = vadd.f32 0.0, %v7137
  %v7139 = vpop.f32.mrf.mxu0
  %v7140 = vadd.f32 0.0, %v7139
  %7141 = vmatmul.bf16.gmra.mxu0 %v4771
  %v7142 = vpop.f32.mrf.mxu0
  %v7143 = vadd.f32 0.0, %v7142
  %v7144 = vpop.f32.mrf.mxu0
  %v7145 = vadd.f32 0.0, %v7144
  %7146 = vmatmul.bf16.gmra.mxu0 %v4774
  %v7147 = vpop.f32.mrf.mxu0
  %v7148 = vadd.f32 0.0, %v7147
  %v7149 = vpop.f32.mrf.mxu0
  %v7150 = vadd.f32 0.0, %v7149
  %7151 = vmatmul.bf16.gmra.mxu0 %v4777
  %v7152 = vpop.f32.mrf.mxu0
  %v7153 = vadd.f32 0.0, %v7152
  %v7154 = vpop.f32.mrf.mxu0
  %v7155 = vadd.f32 0.0, %v7154
  %7156 = vmatmul.bf16.gmra.mxu0 %v4780
  %v7157 = vpop.f32.mrf.mxu0
  %v7158 = vadd.f32 0.0, %v7157
  %v7159 = vpop.f32.mrf.mxu0
  %v7160 = vadd.f32 0.0, %v7159
  %7161 = vmatmul.bf16.gmra.mxu0 %v4783
  %v7162 = vpop.f32.mrf.mxu0
  %v7163 = vadd.f32 0.0, %v7162
  %v7164 = vpop.f32.mrf.mxu0
  %v7165 = vadd.f32 0.0, %v7164
  %7166 = vmatmul.bf16.gmra.mxu0 %v4786
  %v7167 = vpop.f32.mrf.mxu0
  %v7168 = vadd.f32 0.0, %v7167
  %v7169 = vpop.f32.mrf.mxu0
  %v7170 = vadd.f32 0.0, %v7169
  %7171 = vmatmul.bf16.gmra.mxu0 %v4789
  %v7172 = vpop.f32.mrf.mxu0
  %v7173 = vadd.f32 0.0, %v7172
  %v7174 = vpop.f32.mrf.mxu0
  %v7175 = vadd.f32 0.0, %v7174
  %7176 = vmatmul.bf16.gmra.mxu0 %v4792
  %v7177 = vpop.f32.mrf.mxu0
  %v7178 = vadd.f32 0.0, %v7177
  %v7179 = vpop.f32.mrf.mxu0
  %v7180 = vadd.f32 0.0, %v7179
  %7181 = vmatmul.bf16.gmra.mxu0 %v4795
  %v7182 = vpop.f32.mrf.mxu0
  %v7183 = vadd.f32 0.0, %v7182
  %v7184 = vpop.f32.mrf.mxu0
  %v7185 = vadd.f32 0.0, %v7184
  %7186 = vmatmul.bf16.gmra.mxu0 %v4798
  %v7187 = vpop.f32.mrf.mxu0
  %v7188 = vadd.f32 0.0, %v7187
  %v7189 = vpop.f32.mrf.mxu0
  %v7190 = vadd.f32 0.0, %v7189
  %7191 = vmatmul.bf16.gmra.mxu0 %v4801
  %v7192 = vpop.f32.mrf.mxu0
  %v7193 = vadd.f32 0.0, %v7192
  %v7194 = vpop.f32.mrf.mxu0
  %v7195 = vadd.f32 0.0, %v7194
  %7196 = vmatmul.bf16.gmra.mxu0 %v4804
  %v7197 = vpop.f32.mrf.mxu0
  %v7198 = vadd.f32 0.0, %v7197
  %v7199 = vpop.f32.mrf.mxu0
  %v7200 = vadd.f32 0.0, %v7199
  %7201 = vmatmul.bf16.gmra.mxu0 %v4807
  %v7202 = vpop.f32.mrf.mxu0
  %v7203 = vadd.f32 0.0, %v7202
  %v7204 = vpop.f32.mrf.mxu0
  %v7205 = vadd.f32 0.0, %v7204
  %7206 = vmatmul.bf16.gmra.mxu0 %v4810
  %v7207 = vpop.f32.mrf.mxu0
  %v7208 = vadd.f32 0.0, %v7207
  %v7209 = vpop.f32.mrf.mxu0
  %v7210 = vadd.f32 0.0, %v7209
  %7211 = vmatmul.bf16.gmra.mxu0 %v4813
  %v7212 = vpop.f32.mrf.mxu0
  %v7213 = vadd.f32 0.0, %v7212
  %v7214 = vpop.f32.mrf.mxu0
  %v7215 = vadd.f32 0.0, %v7214
  %7216 = vmatmul.bf16.gmra.mxu0 %v4816
  %v7217 = vpop.f32.mrf.mxu0
  %v7218 = vadd.f32 0.0, %v7217
  %v7219 = vpop.f32.mrf.mxu0
  %v7220 = vadd.f32 0.0, %v7219
  %7221 = vmatmul.bf16.gmra.mxu0 %v4819
  %v7222 = vpop.f32.mrf.mxu0
  %v7223 = vadd.f32 0.0, %v7222
  %v7224 = vpop.f32.mrf.mxu0
  %v7225 = vadd.f32 0.0, %v7224
  %7226 = vmatmul.bf16.gmra.mxu0 %v4822
  %v7227 = vpop.f32.mrf.mxu0
  %v7228 = vadd.f32 0.0, %v7227
  %v7229 = vpop.f32.mrf.mxu0
  %v7230 = vadd.f32 0.0, %v7229
  %7231 = vmatmul.bf16.gmra.mxu0 %v4825
  %v7232 = vpop.f32.mrf.mxu0
  %v7233 = vadd.f32 0.0, %v7232
  %v7234 = vpop.f32.mrf.mxu0
  %v7235 = vadd.f32 0.0, %v7234
  %7236 = vmatmul.bf16.gmra.mxu0 %v4828
  %v7237 = vpop.f32.mrf.mxu0
  %v7238 = vadd.f32 0.0, %v7237
  %v7239 = vpop.f32.mrf.mxu0
  %v7240 = vadd.f32 0.0, %v7239
  %7241 = vmatmul.bf16.gmra.mxu0 %v4831
  %v7242 = vpop.f32.mrf.mxu0
  %v7243 = vadd.f32 0.0, %v7242
  %v7244 = vpop.f32.mrf.mxu0
  %v7245 = vadd.f32 0.0, %v7244
  %7246 = vmatmul.bf16.gmra.mxu0 %v4834
  %v7247 = vpop.f32.mrf.mxu0
  %v7248 = vadd.f32 0.0, %v7247
  %v7249 = vpop.f32.mrf.mxu0
  %v7250 = vadd.f32 0.0, %v7249
  %7251 = vmatmul.bf16.gmra.mxu0 %v4837
  %v7252 = vpop.f32.mrf.mxu0
  %v7253 = vadd.f32 0.0, %v7252
  %v7254 = vpop.f32.mrf.mxu0
  %v7255 = vadd.f32 0.0, %v7254
  %7256 = vmatmul.bf16.gmra.mxu0 %v4840
  %v7257 = vpop.f32.mrf.mxu0
  %v7258 = vadd.f32 0.0, %v7257
  %v7259 = vpop.f32.mrf.mxu0
  %v7260 = vadd.f32 0.0, %v7259
  %7261 = vmatmul.bf16.gmra.mxu0 %v4843
  %v7262 = vpop.f32.mrf.mxu0
  %v7263 = vadd.f32 0.0, %v7262
  %v7264 = vpop.f32.mrf.mxu0
  %v7265 = vadd.f32 0.0, %v7264
  %7266 = vmatmul.bf16.gmra.mxu0 %v4846
  %v7267 = vpop.f32.mrf.mxu0
  %v7268 = vadd.f32 0.0, %v7267
  %v7269 = vpop.f32.mrf.mxu0
  %v7270 = vadd.f32 0.0, %v7269
  %7271 = vmatmul.bf16.gmra.mxu0 %v4849
  %v7272 = vpop.f32.mrf.mxu0
  %v7273 = vadd.f32 0.0, %v7272
  %v7274 = vpop.f32.mrf.mxu0
  %v7275 = vadd.f32 0.0, %v7274
  %7276 = vdwg.mxu0
  %v7277 = vmax.f32 %v4868, %v5470
  %v7278 = vmax.f32 %v4870, %v5473
  %v7279 = vmax.f32 %v4873, %v5475
  %v7280 = vmax.f32 %v4875, %v5478
  %v7281 = vmax.f32 %v4878, %v5480
  %v7282 = vmax.f32 %v4880, %v5483
  %v7283 = vmax.f32 %v4883, %v5485
  %v7284 = vmax.f32 %v4885, %v5488
  %v7285 = vmax.f32 %v4888, %v5490
  %v7286 = vmax.f32 %v4890, %v5493
  %v7287 = vmax.f32 %v4893, %v5495
  %v7288 = vmax.f32 %v4895, %v5498
  %v7289 = vmax.f32 %v4898, %v5500
  %v7290 = vmax.f32 %v4900, %v5503
  %v7291 = vmax.f32 %v4903, %v5505
  %v7292 = vmax.f32 %v4905, %v5508
  %v7293 = vmax.f32 %v4908, %v5510
  %v7294 = vmax.f32 %v4910, %v5513
  %v7295 = vmax.f32 %v4913, %v5515
  %v7296 = vmax.f32 %v4915, %v5518
  %v7297 = vmax.f32 %v4918, %v5520
  %v7298 = vmax.f32 %v4920, %v5523
  %v7299 = vmax.f32 %v4923, %v5525
  %v7300 = vmax.f32 %v4925, %v5528
  %v7301 = vmax.f32 %v4928, %v5530
  %v7302 = vmax.f32 %v4930, %v5533
  %v7303 = vmax.f32 %v4933, %v5535
  %v7304 = vmax.f32 %v4935, %v5538
  %v7305 = vmax.f32 %v4938, %v5540
  %v7306 = vmax.f32 %v4940, %v5543
  %v7307 = vmax.f32 %v4943, %v5545
  %v7308 = vmax.f32 %v4945, %v5548
  %v7309 = vmax.f32 %v4948, %v5550
  %v7310 = vmax.f32 %v4950, %v5553
  %v7311 = vmax.f32 %v4953, %v5555
  %v7312 = vmax.f32 %v4955, %v5558
  %v7313 = vmax.f32 %v4958, %v5560
  %v7314 = vmax.f32 %v4960, %v5563
  %v7315 = vmax.f32 %v4963, %v5565
  %v7316 = vmax.f32 %v4965, %v5568
  %v7317 = vmax.f32 %v4968, %v5570
  %v7318 = vmax.f32 %v4970, %v5573
  %v7319 = vmax.f32 %v4973, %v5575
  %v7320 = vmax.f32 %v4975, %v5578
  %v7321 = vmax.f32 %v4978, %v5580
  %v7322 = vmax.f32 %v4980, %v5583
  %v7323 = vmax.f32 %v4983, %v5585
  %v7324 = vmax.f32 %v4985, %v5588
  %v7325 = vmax.f32 %v4988, %v5590
  %v7326 = vmax.f32 %v4990, %v5593
  %v7327 = vmax.f32 %v4993, %v5595
  %v7328 = vmax.f32 %v4995, %v5598
  %v7329 = vmax.f32 %v4998, %v5600
  %v7330 = vmax.f32 %v5000, %v5603
  %v7331 = vmax.f32 %v5003, %v5605
  %v7332 = vmax.f32 %v5005, %v5608
  %v7333 = vmax.f32 %v5008, %v5610
  %v7334 = vmax.f32 %v5010, %v5613
  %v7335 = vmax.f32 %v5013, %v5615
  %v7336 = vmax.f32 %v5015, %v5618
  %v7337 = vmax.f32 %v5018, %v5620
  %v7338 = vmax.f32 %v5020, %v5623
  %v7339 = vmax.f32 %v5023, %v5625
  %v7340 = vmax.f32 %v5025, %v5628
  %v7341 = vmax.f32 %v5028, %v5630
  %v7342 = vmax.f32 %v5030, %v5633
  %v7343 = vmax.f32 %v5033, %v5635
  %v7344 = vmax.f32 %v5035, %v5638
  %v7345 = vmax.f32 %v5038, %v5640
  %v7346 = vmax.f32 %v5040, %v5643
  %v7347 = vmax.f32 %v5043, %v5645
  %v7348 = vmax.f32 %v5045, %v5648
  %v7349 = vmax.f32 %v5048, %v5650
  %v7350 = vmax.f32 %v5050, %v5653
  %v7351 = vmax.f32 %v5053, %v5655
  %v7352 = vmax.f32 %v5055, %v5658
  %v7353 = vmax.f32 %v5058, %v5660
  %v7354 = vmax.f32 %v5060, %v5663
  %v7355 = vmax.f32 %v5063, %v5665
  %v7356 = vmax.f32 %v5065, %v5668
  %v7357 = vmax.f32 %v5068, %v5670
  %v7358 = vmax.f32 %v5070, %v5673
  %v7359 = vmax.f32 %v5073, %v5675
  %v7360 = vmax.f32 %v5075, %v5678
  %v7361 = vmax.f32 %v5078, %v5680
  %v7362 = vmax.f32 %v5080, %v5683
  %v7363 = vmax.f32 %v5083, %v5685
  %v7364 = vmax.f32 %v5085, %v5688
  %v7365 = vmax.f32 %v5088, %v5690
  %v7366 = vmax.f32 %v5090, %v5693
  %v7367 = vmax.f32 %v5093, %v5695
  %v7368 = vmax.f32 %v5095, %v5698
  %v7369 = vmax.f32 %v5098, %v5700
  %v7370 = vmax.f32 %v5100, %v5703
  %v7371 = vmax.f32 %v5103, %v5705
  %v7372 = vmax.f32 %v5105, %v5708
  %v7373 = vmax.f32 %v5108, %v5710
  %v7374 = vmax.f32 %v5110, %v5713
  %v7375 = vmax.f32 %v5113, %v5715
  %v7376 = vmax.f32 %v5115, %v5718
  %v7377 = vmax.f32 %v5118, %v5720
  %v7378 = vmax.f32 %v5120, %v5723
  %v7379 = vmax.f32 %v5123, %v5725
  %v7380 = vmax.f32 %v5125, %v5728
  %v7381 = vmax.f32 %v5128, %v5730
  %v7382 = vmax.f32 %v5130, %v5733
  %v7383 = vmax.f32 %v5133, %v5735
  %v7384 = vmax.f32 %v5135, %v5738
  %v7385 = vmax.f32 %v5138, %v5740
  %v7386 = vmax.f32 %v5140, %v5743
  %v7387 = vmax.f32 %v5143, %v5745
  %v7388 = vmax.f32 %v5145, %v5748
  %v7389 = vmax.f32 %v5148, %v5750
  %v7390 = vmax.f32 %v5150, %v5753
  %v7391 = vmax.f32 %v5153, %v5755
  %v7392 = vmax.f32 %v5155, %v5758
  %v7393 = vmax.f32 %v5158, %v5760
  %v7394 = vmax.f32 %v5160, %v5763
  %v7395 = vmax.f32 %v5163, %v5765
  %v7396 = vmax.f32 %v5165, %v5768
  %v7397 = vmax.f32 %v5168, %v5770
  %v7398 = vmax.f32 %v5170, %v5773
  %v7399 = vmax.f32 %v5173, %v5775
  %v7400 = vmax.f32 %v5175, %v5778
  %v7401 = vmax.f32 %v5178, %v5780
  %v7402 = vmax.f32 %v5180, %v5783
  %v7403 = vmax.f32 %v5183, %v5785
  %v7404 = vmax.f32 %v5185, %v5788
  %v7405 = vmax.f32 %v5188, %v5790
  %v7406 = vmax.f32 %v5190, %v5793
  %v7407 = vmax.f32 %v5193, %v5795
  %v7408 = vmax.f32 %v5195, %v5798
  %v7409 = vmax.f32 %v5198, %v5800
  %v7410 = vmax.f32 %v5200, %v5803
  %v7411 = vmax.f32 %v5203, %v5805
  %v7412 = vmax.f32 %v5205, %v5808
  %v7413 = vmax.f32 %v5208, %v5810
  %v7414 = vmax.f32 %v5210, %v5813
  %v7415 = vmax.f32 %v5213, %v5815
  %v7416 = vmax.f32 %v5215, %v5818
  %v7417 = vmax.f32 %v5218, %v5820
  %v7418 = vmax.f32 %v5220, %v5823
  %v7419 = vmax.f32 %v5223, %v5825
  %v7420 = vmax.f32 %v5225, %v5828
  %v7421 = vmax.f32 %v5228, %v5830
  %v7422 = vmax.f32 %v5230, %v5833
  %v7423 = vmax.f32 %v5233, %v5835
  %v7424 = vmax.f32 %v5235, %v5838
  %v7425 = vmax.f32 %v5238, %v5840
  %v7426 = vmax.f32 %v5240, %v5843
  %v7427 = vmax.f32 %v5243, %v5845
  %v7428 = vmax.f32 %v5245, %v5848
  %v7429 = vmax.f32 %v5248, %v5850
  %v7430 = vmax.f32 %v5250, %v5853
  %v7431 = vmax.f32 %v5253, %v5855
  %v7432 = vmax.f32 %v5255, %v5858
  %v7433 = vmax.f32 %v5258, %v5860
  %v7434 = vmax.f32 %v5260, %v5863
  %v7435 = vmax.f32 %v5263, %v5865
  %v7436 = vmax.f32 %v5265, %v5868
  %v7437 = vmax.f32 %v5268, %v5870
  %v7438 = vmax.f32 %v5270, %v5873
  %v7439 = vmax.f32 %v5273, %v5875
  %v7440 = vmax.f32 %v5275, %v5878
  %v7441 = vmax.f32 %v5278, %v5880
  %v7442 = vmax.f32 %v5280, %v5883
  %v7443 = vmax.f32 %v5283, %v5885
  %v7444 = vmax.f32 %v5285, %v5888
  %v7445 = vmax.f32 %v5288, %v5890
  %v7446 = vmax.f32 %v5290, %v5893
  %v7447 = vmax.f32 %v5293, %v5895
  %v7448 = vmax.f32 %v5295, %v5898
  %v7449 = vmax.f32 %v5298, %v5900
  %v7450 = vmax.f32 %v5300, %v5903
  %v7451 = vmax.f32 %v5303, %v5905
  %v7452 = vmax.f32 %v5305, %v5908
  %v7453 = vmax.f32 %v5308, %v5910
  %v7454 = vmax.f32 %v5310, %v5913
  %v7455 = vmax.f32 %v5313, %v5915
  %v7456 = vmax.f32 %v5315, %v5918
  %v7457 = vmax.f32 %v5318, %v5920
  %v7458 = vmax.f32 %v5320, %v5923
  %v7459 = vmax.f32 %v5323, %v5925
  %v7460 = vmax.f32 %v5325, %v5928
  %v7461 = vmax.f32 %v5328, %v5930
  %v7462 = vmax.f32 %v5330, %v5933
  %v7463 = vmax.f32 %v5333, %v5935
  %v7464 = vmax.f32 %v5335, %v5938
  %v7465 = vmax.f32 %v5338, %v5940
  %v7466 = vmax.f32 %v5340, %v5943
  %v7467 = vmax.f32 %v5343, %v5945
  %v7468 = vmax.f32 %v5345, %v5948
  %v7469 = vmax.f32 %v5348, %v5950
  %v7470 = vmax.f32 %v5350, %v5953
  %v7471 = vmax.f32 %v5353, %v5955
  %v7472 = vmax.f32 %v5355, %v5958
  %v7473 = vmax.f32 %v5358, %v5960
  %v7474 = vmax.f32 %v5360, %v5963
  %v7475 = vmax.f32 %v5363, %v5965
  %v7476 = vmax.f32 %v5365, %v5968
  %v7477 = vmax.f32 %v5368, %v5970
  %v7478 = vmax.f32 %v5370, %v5973
  %v7479 = vmax.f32 %v5373, %v5975
  %v7480 = vmax.f32 %v5375, %v5978
  %v7481 = vmax.f32 %v5378, %v5980
  %v7482 = vmax.f32 %v5380, %v5983
  %v7483 = vmax.f32 %v5383, %v5985
  %v7484 = vmax.f32 %v5385, %v5988
  %v7485 = vmax.f32 %v5388, %v5990
  %v7486 = vmax.f32 %v5390, %v5993
  %v7487 = vmax.f32 %v5393, %v5995
  %v7488 = vmax.f32 %v5395, %v5998
  %v7489 = vmax.f32 %v5398, %v6000
  %v7490 = vmax.f32 %v5400, %v6003
  %v7491 = vmax.f32 %v5403, %v6005
  %v7492 = vmax.f32 %v5405, %v6008
  %v7493 = vmax.f32 %v5408, %v6010
  %v7494 = vmax.f32 %v5410, %v6013
  %v7495 = vmax.f32 %v5413, %v6015
  %v7496 = vmax.f32 %v5415, %v6018
  %v7497 = vmax.f32 %v5418, %v6020
  %v7498 = vmax.f32 %v5420, %v6023
  %v7499 = vmax.f32 %v5423, %v6025
  %v7500 = vmax.f32 %v5425, %v6028
  %v7501 = vmax.f32 %v5428, %v6030
  %v7502 = vmax.f32 %v5430, %v6033
  %v7503 = vmax.f32 %v5433, %v6035
  %v7504 = vmax.f32 %v5435, %v6038
  %v7505 = vmax.f32 %v5438, %v6040
  %v7506 = vmax.f32 %v5440, %v6043
  %v7507 = vmax.f32 %v5443, %v6045
  %v7508 = vmax.f32 %v5445, %v6048
  %v7509 = vmax.f32 %v5448, %v6050
  %v7510 = vmax.f32 %v5450, %v6053
  %v7511 = vmax.f32 %v5453, %v6055
  %v7512 = vmax.f32 %v5455, %v6058
  %v7513 = vmax.f32 %v5458, %v6060
  %v7514 = vmax.f32 %v5460, %v6063
  %v7515 = vmax.f32 %v5463, %v6065
  %v7516 = vmax.f32 %v5465, %v6068
  %v7517 = vmax.f32 %v5468, %v6070
  %v7518 = vmax.f32 %v6073, %v6675
  %v7519 = vmax.f32 %v6075, %v6678
  %v7520 = vmax.f32 %v6078, %v6680
  %v7521 = vmax.f32 %v6080, %v6683
  %v7522 = vmax.f32 %v6083, %v6685
  %v7523 = vmax.f32 %v6085, %v6688
  %v7524 = vmax.f32 %v6088, %v6690
  %v7525 = vmax.f32 %v6090, %v6693
  %v7526 = vmax.f32 %v6093, %v6695
  %v7527 = vmax.f32 %v6095, %v6698
  %v7528 = vmax.f32 %v6098, %v6700
  %v7529 = vmax.f32 %v6100, %v6703
  %v7530 = vmax.f32 %v6103, %v6705
  %v7531 = vmax.f32 %v6105, %v6708
  %v7532 = vmax.f32 %v6108, %v6710
  %v7533 = vmax.f32 %v6110, %v6713
  %v7534 = vmax.f32 %v6113, %v6715
  %v7535 = vmax.f32 %v6115, %v6718
  %v7536 = vmax.f32 %v6118, %v6720
  %v7537 = vmax.f32 %v6120, %v6723
  %v7538 = vmax.f32 %v6123, %v6725
  %v7539 = vmax.f32 %v6125, %v6728
  %v7540 = vmax.f32 %v6128, %v6730
  %v7541 = vmax.f32 %v6130, %v6733
  %v7542 = vmax.f32 %v6133, %v6735
  %v7543 = vmax.f32 %v6135, %v6738
  %v7544 = vmax.f32 %v6138, %v6740
  %v7545 = vmax.f32 %v6140, %v6743
  %v7546 = vmax.f32 %v6143, %v6745
  %v7547 = vmax.f32 %v6145, %v6748
  %v7548 = vmax.f32 %v6148, %v6750
  %v7549 = vmax.f32 %v6150, %v6753
  %v7550 = vmax.f32 %v6153, %v6755
  %v7551 = vmax.f32 %v6155, %v6758
  %v7552 = vmax.f32 %v6158, %v6760
  %v7553 = vmax.f32 %v6160, %v6763
  %v7554 = vmax.f32 %v6163, %v6765
  %v7555 = vmax.f32 %v6165, %v6768
  %v7556 = vmax.f32 %v6168, %v6770
  %v7557 = vmax.f32 %v6170, %v6773
  %v7558 = vmax.f32 %v6173, %v6775
  %v7559 = vmax.f32 %v6175, %v6778
  %v7560 = vmax.f32 %v6178, %v6780
  %v7561 = vmax.f32 %v6180, %v6783
  %v7562 = vmax.f32 %v6183, %v6785
  %v7563 = vmax.f32 %v6185, %v6788
  %v7564 = vmax.f32 %v6188, %v6790
  %v7565 = vmax.f32 %v6190, %v6793
  %v7566 = vmax.f32 %v6193, %v6795
  %v7567 = vmax.f32 %v6195, %v6798
  %v7568 = vmax.f32 %v6198, %v6800
  %v7569 = vmax.f32 %v6200, %v6803
  %v7570 = vmax.f32 %v6203, %v6805
  %v7571 = vmax.f32 %v6205, %v6808
  %v7572 = vmax.f32 %v6208, %v6810
  %v7573 = vmax.f32 %v6210, %v6813
  %v7574 = vmax.f32 %v6213, %v6815
  %v7575 = vmax.f32 %v6215, %v6818
  %v7576 = vmax.f32 %v6218, %v6820
  %v7577 = vmax.f32 %v6220, %v6823
  %v7578 = vmax.f32 %v6223, %v6825
  %v7579 = vmax.f32 %v6225, %v6828
  %v7580 = vmax.f32 %v6228, %v6830
  %v7581 = vmax.f32 %v6230, %v6833
  %v7582 = vmax.f32 %v6233, %v6835
  %v7583 = vmax.f32 %v6235, %v6838
  %v7584 = vmax.f32 %v6238, %v6840
  %v7585 = vmax.f32 %v6240, %v6843
  %v7586 = vmax.f32 %v6243, %v6845
  %v7587 = vmax.f32 %v6245, %v6848
  %v7588 = vmax.f32 %v6248, %v6850
  %v7589 = vmax.f32 %v6250, %v6853
  %v7590 = vmax.f32 %v6253, %v6855
  %v7591 = vmax.f32 %v6255, %v6858
  %v7592 = vmax.f32 %v6258, %v6860
  %v7593 = vmax.f32 %v6260, %v6863
  %v7594 = vmax.f32 %v6263, %v6865
  %v7595 = vmax.f32 %v6265, %v6868
  %v7596 = vmax.f32 %v6268, %v6870
  %v7597 = vmax.f32 %v6270, %v6873
  %v7598 = vmax.f32 %v6273, %v6875
  %v7599 = vmax.f32 %v6275, %v6878
  %v7600 = vmax.f32 %v6278, %v6880
  %v7601 = vmax.f32 %v6280, %v6883
  %v7602 = vmax.f32 %v6283, %v6885
  %v7603 = vmax.f32 %v6285, %v6888
  %v7604 = vmax.f32 %v6288, %v6890
  %v7605 = vmax.f32 %v6290, %v6893
  %v7606 = vmax.f32 %v6293, %v6895
  %v7607 = vmax.f32 %v6295, %v6898
  %v7608 = vmax.f32 %v6298, %v6900
  %v7609 = vmax.f32 %v6300, %v6903
  %v7610 = vmax.f32 %v6303, %v6905
  %v7611 = vmax.f32 %v6305, %v6908
  %v7612 = vmax.f32 %v6308, %v6910
  %v7613 = vmax.f32 %v6310, %v6913
  %v7614 = vmax.f32 %v6313, %v6915
  %v7615 = vmax.f32 %v6315, %v6918
  %v7616 = vmax.f32 %v6318, %v6920
  %v7617 = vmax.f32 %v6320, %v6923
  %v7618 = vmax.f32 %v6323, %v6925
  %v7619 = vmax.f32 %v6325, %v6928
  %v7620 = vmax.f32 %v6328, %v6930
  %v7621 = vmax.f32 %v6330, %v6933
  %v7622 = vmax.f32 %v6333, %v6935
  %v7623 = vmax.f32 %v6335, %v6938
  %v7624 = vmax.f32 %v6338, %v6940
  %v7625 = vmax.f32 %v6340, %v6943
  %v7626 = vmax.f32 %v6343, %v6945
  %v7627 = vmax.f32 %v6345, %v6948
  %v7628 = vmax.f32 %v6348, %v6950
  %v7629 = vmax.f32 %v6350, %v6953
  %v7630 = vmax.f32 %v6353, %v6955
  %v7631 = vmax.f32 %v6355, %v6958
  %v7632 = vmax.f32 %v6358, %v6960
  %v7633 = vmax.f32 %v6360, %v6963
  %v7634 = vmax.f32 %v6363, %v6965
  %v7635 = vmax.f32 %v6365, %v6968
  %v7636 = vmax.f32 %v6368, %v6970
  %v7637 = vmax.f32 %v6370, %v6973
  %v7638 = vmax.f32 %v6373, %v6975
  %v7639 = vmax.f32 %v6375, %v6978
  %v7640 = vmax.f32 %v6378, %v6980
  %v7641 = vmax.f32 %v6380, %v6983
  %v7642 = vmax.f32 %v6383, %v6985
  %v7643 = vmax.f32 %v6385, %v6988
  %v7644 = vmax.f32 %v6388, %v6990
  %v7645 = vmax.f32 %v6390, %v6993
  %v7646 = vmax.f32 %v6393, %v6995
  %v7647 = vmax.f32 %v6395, %v6998
  %v7648 = vmax.f32 %v6398, %v7000
  %v7649 = vmax.f32 %v6400, %v7003
  %v7650 = vmax.f32 %v6403, %v7005
  %v7651 = vmax.f32 %v6405, %v7008
  %v7652 = vmax.f32 %v6408, %v7010
  %v7653 = vmax.f32 %v6410, %v7013
  %v7654 = vmax.f32 %v6413, %v7015
  %v7655 = vmax.f32 %v6415, %v7018
  %v7656 = vmax.f32 %v6418, %v7020
  %v7657 = vmax.f32 %v6420, %v7023
  %v7658 = vmax.f32 %v6423, %v7025
  %v7659 = vmax.f32 %v6425, %v7028
  %v7660 = vmax.f32 %v6428, %v7030
  %v7661 = vmax.f32 %v6430, %v7033
  %v7662 = vmax.f32 %v6433, %v7035
  %v7663 = vmax.f32 %v6435, %v7038
  %v7664 = vmax.f32 %v6438, %v7040
  %v7665 = vmax.f32 %v6440, %v7043
  %v7666 = vmax.f32 %v6443, %v7045
  %v7667 = vmax.f32 %v6445, %v7048
  %v7668 = vmax.f32 %v6448, %v7050
  %v7669 = vmax.f32 %v6450, %v7053
  %v7670 = vmax.f32 %v6453, %v7055
  %v7671 = vmax.f32 %v6455, %v7058
  %v7672 = vmax.f32 %v6458, %v7060
  %v7673 = vmax.f32 %v6460, %v7063
  %v7674 = vmax.f32 %v6463, %v7065
  %v7675 = vmax.f32 %v6465, %v7068
  %v7676 = vmax.f32 %v6468, %v7070
  %v7677 = vmax.f32 %v6470, %v7073
  %v7678 = vmax.f32 %v6473, %v7075
  %v7679 = vmax.f32 %v6475, %v7078
  %v7680 = vmax.f32 %v6478, %v7080
  %v7681 = vmax.f32 %v6480, %v7083
  %v7682 = vmax.f32 %v6483, %v7085
  %v7683 = vmax.f32 %v6485, %v7088
  %v7684 = vmax.f32 %v6488, %v7090
  %v7685 = vmax.f32 %v6490, %v7093
  %v7686 = vmax.f32 %v6493, %v7095
  %v7687 = vmax.f32 %v6495, %v7098
  %v7688 = vmax.f32 %v6498, %v7100
  %v7689 = vmax.f32 %v6500, %v7103
  %v7690 = vmax.f32 %v6503, %v7105
  %v7691 = vmax.f32 %v6505, %v7108
  %v7692 = vmax.f32 %v6508, %v7110
  %v7693 = vmax.f32 %v6510, %v7113
  %v7694 = vmax.f32 %v6513, %v7115
  %v7695 = vmax.f32 %v6515, %v7118
  %v7696 = vmax.f32 %v6518, %v7120
  %v7697 = vmax.f32 %v6520, %v7123
  %v7698 = vmax.f32 %v6523, %v7125
  %v7699 = vmax.f32 %v6525, %v7128
  %v7700 = vmax.f32 %v6528, %v7130
  %v7701 = vmax.f32 %v6530, %v7133
  %v7702 = vmax.f32 %v6533, %v7135
  %v7703 = vmax.f32 %v6535, %v7138
  %v7704 = vmax.f32 %v6538, %v7140
  %v7705 = vmax.f32 %v6540, %v7143
  %v7706 = vmax.f32 %v6543, %v7145
  %v7707 = vmax.f32 %v6545, %v7148
  %v7708 = vmax.f32 %v6548, %v7150
  %v7709 = vmax.f32 %v6550, %v7153
  %v7710 = vmax.f32 %v6553, %v7155
  %v7711 = vmax.f32 %v6555, %v7158
  %v7712 = vmax.f32 %v6558, %v7160
  %v7713 = vmax.f32 %v6560, %v7163
  %v7714 = vmax.f32 %v6563, %v7165
  %v7715 = vmax.f32 %v6565, %v7168
  %v7716 = vmax.f32 %v6568, %v7170
  %v7717 = vmax.f32 %v6570, %v7173
  %v7718 = vmax.f32 %v6573, %v7175
  %v7719 = vmax.f32 %v6575, %v7178
  %v7720 = vmax.f32 %v6578, %v7180
  %v7721 = vmax.f32 %v6580, %v7183
  %v7722 = vmax.f32 %v6583, %v7185
  %v7723 = vmax.f32 %v6585, %v7188
  %v7724 = vmax.f32 %v6588, %v7190
  %v7725 = vmax.f32 %v6590, %v7193
  %v7726 = vmax.f32 %v6593, %v7195
  %v7727 = vmax.f32 %v6595, %v7198
  %v7728 = vmax.f32 %v6598, %v7200
  %v7729 = vmax.f32 %v6600, %v7203
  %v7730 = vmax.f32 %v6603, %v7205
  %v7731 = vmax.f32 %v6605, %v7208
  %v7732 = vmax.f32 %v6608, %v7210
  %v7733 = vmax.f32 %v6610, %v7213
  %v7734 = vmax.f32 %v6613, %v7215
  %v7735 = vmax.f32 %v6615, %v7218
  %v7736 = vmax.f32 %v6618, %v7220
  %v7737 = vmax.f32 %v6620, %v7223
  %v7738 = vmax.f32 %v6623, %v7225
  %v7739 = vmax.f32 %v6625, %v7228
  %v7740 = vmax.f32 %v6628, %v7230
  %v7741 = vmax.f32 %v6630, %v7233
  %v7742 = vmax.f32 %v6633, %v7235
  %v7743 = vmax.f32 %v6635, %v7238
  %v7744 = vmax.f32 %v6638, %v7240
  %v7745 = vmax.f32 %v6640, %v7243
  %v7746 = vmax.f32 %v6643, %v7245
  %v7747 = vmax.f32 %v6645, %v7248
  %v7748 = vmax.f32 %v6648, %v7250
  %v7749 = vmax.f32 %v6650, %v7253
  %v7750 = vmax.f32 %v6653, %v7255
  %v7751 = vmax.f32 %v6655, %v7258
  %v7752 = vmax.f32 %v6658, %v7260
  %v7753 = vmax.f32 %v6660, %v7263
  %v7754 = vmax.f32 %v6663, %v7265
  %v7755 = vmax.f32 %v6665, %v7268
  %v7756 = vmax.f32 %v6668, %v7270
  %v7757 = vmax.f32 %v6670, %v7273
  %v7758 = vmax.f32 %v6673, %v7275
  %v7759 = vmax.f32 %v7277, %v7518
  %v7760 = vmax.f32 %v7278, %v7519
  %v7761 = vmax.f32 %v7279, %v7520
  %v7762 = vmax.f32 %v7280, %v7521
  %v7763 = vmax.f32 %v7281, %v7522
  %v7764 = vmax.f32 %v7282, %v7523
  %v7765 = vmax.f32 %v7283, %v7524
  %v7766 = vmax.f32 %v7284, %v7525
  %v7767 = vmax.f32 %v7285, %v7526
  %v7768 = vmax.f32 %v7286, %v7527
  %v7769 = vmax.f32 %v7287, %v7528
  %v7770 = vmax.f32 %v7288, %v7529
  %v7771 = vmax.f32 %v7289, %v7530
  %v7772 = vmax.f32 %v7290, %v7531
  %v7773 = vmax.f32 %v7291, %v7532
  %v7774 = vmax.f32 %v7292, %v7533
  %v7775 = vmax.f32 %v7293, %v7534
  %v7776 = vmax.f32 %v7294, %v7535
  %v7777 = vmax.f32 %v7295, %v7536
  %v7778 = vmax.f32 %v7296, %v7537
  %v7779 = vmax.f32 %v7297, %v7538
  %v7780 = vmax.f32 %v7298, %v7539
  %v7781 = vmax.f32 %v7299, %v7540
  %v7782 = vmax.f32 %v7300, %v7541
  %v7783 = vmax.f32 %v7301, %v7542
  %v7784 = vmax.f32 %v7302, %v7543
  %v7785 = vmax.f32 %v7303, %v7544
  %v7786 = vmax.f32 %v7304, %v7545
  %v7787 = vmax.f32 %v7305, %v7546
  %v7788 = vmax.f32 %v7306, %v7547
  %v7789 = vmax.f32 %v7307, %v7548
  %v7790 = vmax.f32 %v7308, %v7549
  %v7791 = vmax.f32 %v7309, %v7550
  %v7792 = vmax.f32 %v7310, %v7551
  %v7793 = vmax.f32 %v7311, %v7552
  %v7794 = vmax.f32 %v7312, %v7553
  %v7795 = vmax.f32 %v7313, %v7554
  %v7796 = vmax.f32 %v7314, %v7555
  %v7797 = vmax.f32 %v7315, %v7556
  %v7798 = vmax.f32 %v7316, %v7557
  %v7799 = vmax.f32 %v7317, %v7558
  %v7800 = vmax.f32 %v7318, %v7559
  %v7801 = vmax.f32 %v7319, %v7560
  %v7802 = vmax.f32 %v7320, %v7561
  %v7803 = vmax.f32 %v7321, %v7562
  %v7804 = vmax.f32 %v7322, %v7563
  %v7805 = vmax.f32 %v7323, %v7564
  %v7806 = vmax.f32 %v7324, %v7565
  %v7807 = vmax.f32 %v7325, %v7566
  %v7808 = vmax.f32 %v7326, %v7567
  %v7809 = vmax.f32 %v7327, %v7568
  %v7810 = vmax.f32 %v7328, %v7569
  %v7811 = vmax.f32 %v7329, %v7570
  %v7812 = vmax.f32 %v7330, %v7571
  %v7813 = vmax.f32 %v7331, %v7572
  %v7814 = vmax.f32 %v7332, %v7573
  %v7815 = vmax.f32 %v7333, %v7574
  %v7816 = vmax.f32 %v7334, %v7575
  %v7817 = vmax.f32 %v7335, %v7576
  %v7818 = vmax.f32 %v7336, %v7577
  %v7819 = vmax.f32 %v7337, %v7578
  %v7820 = vmax.f32 %v7338, %v7579
  %v7821 = vmax.f32 %v7339, %v7580
  %v7822 = vmax.f32 %v7340, %v7581
  %v7823 = vmax.f32 %v7341, %v7582
  %v7824 = vmax.f32 %v7342, %v7583
  %v7825 = vmax.f32 %v7343, %v7584
  %v7826 = vmax.f32 %v7344, %v7585
  %v7827 = vmax.f32 %v7345, %v7586
  %v7828 = vmax.f32 %v7346, %v7587
  %v7829 = vmax.f32 %v7347, %v7588
  %v7830 = vmax.f32 %v7348, %v7589
  %v7831 = vmax.f32 %v7349, %v7590
  %v7832 = vmax.f32 %v7350, %v7591
  %v7833 = vmax.f32 %v7351, %v7592
  %v7834 = vmax.f32 %v7352, %v7593
  %v7835 = vmax.f32 %v7353, %v7594
  %v7836 = vmax.f32 %v7354, %v7595
  %v7837 = vmax.f32 %v7355, %v7596
  %v7838 = vmax.f32 %v7356, %v7597
  %v7839 = vmax.f32 %v7357, %v7598
  %v7840 = vmax.f32 %v7358, %v7599
  %v7841 = vmax.f32 %v7359, %v7600
  %v7842 = vmax.f32 %v7360, %v7601
  %v7843 = vmax.f32 %v7361, %v7602
  %v7844 = vmax.f32 %v7362, %v7603
  %v7845 = vmax.f32 %v7363, %v7604
  %v7846 = vmax.f32 %v7364, %v7605
  %v7847 = vmax.f32 %v7365, %v7606
  %v7848 = vmax.f32 %v7366, %v7607
  %v7849 = vmax.f32 %v7367, %v7608
  %v7850 = vmax.f32 %v7368, %v7609
  %v7851 = vmax.f32 %v7369, %v7610
  %v7852 = vmax.f32 %v7370, %v7611
  %v7853 = vmax.f32 %v7371, %v7612
  %v7854 = vmax.f32 %v7372, %v7613
  %v7855 = vmax.f32 %v7373, %v7614
  %v7856 = vmax.f32 %v7374, %v7615
  %v7857 = vmax.f32 %v7375, %v7616
  %v7858 = vmax.f32 %v7376, %v7617
  %v7859 = vmax.f32 %v7377, %v7618
  %v7860 = vmax.f32 %v7378, %v7619
  %v7861 = vmax.f32 %v7379, %v7620
  %v7862 = vmax.f32 %v7380, %v7621
  %v7863 = vmax.f32 %v7381, %v7622
  %v7864 = vmax.f32 %v7382, %v7623
  %v7865 = vmax.f32 %v7383, %v7624
  %v7866 = vmax.f32 %v7384, %v7625
  %v7867 = vmax.f32 %v7385, %v7626
  %v7868 = vmax.f32 %v7386, %v7627
  %v7869 = vmax.f32 %v7387, %v7628
  %v7870 = vmax.f32 %v7388, %v7629
  %v7871 = vmax.f32 %v7389, %v7630
  %v7872 = vmax.f32 %v7390, %v7631
  %v7873 = vmax.f32 %v7391, %v7632
  %v7874 = vmax.f32 %v7392, %v7633
  %v7875 = vmax.f32 %v7393, %v7634
  %v7876 = vmax.f32 %v7394, %v7635
  %v7877 = vmax.f32 %v7395, %v7636
  %v7878 = vmax.f32 %v7396, %v7637
  %v7879 = vmax.f32 %v7397, %v7638
  %v7880 = vmax.f32 %v7398, %v7639
  %v7881 = vmax.f32 %v7399, %v7640
  %v7882 = vmax.f32 %v7400, %v7641
  %v7883 = vmax.f32 %v7401, %v7642
  %v7884 = vmax.f32 %v7402, %v7643
  %v7885 = vmax.f32 %v7403, %v7644
  %v7886 = vmax.f32 %v7404, %v7645
  %v7887 = vmax.f32 %v7405, %v7646
  %v7888 = vmax.f32 %v7406, %v7647
  %v7889 = vmax.f32 %v7407, %v7648
  %v7890 = vmax.f32 %v7408, %v7649
  %v7891 = vmax.f32 %v7409, %v7650
  %v7892 = vmax.f32 %v7410, %v7651
  %v7893 = vmax.f32 %v7411, %v7652
  %v7894 = vmax.f32 %v7412, %v7653
  %v7895 = vmax.f32 %v7413, %v7654
  %v7896 = vmax.f32 %v7414, %v7655
  %v7897 = vmax.f32 %v7415, %v7656
  %v7898 = vmax.f32 %v7416, %v7657
  %v7899 = vmax.f32 %v7417, %v7658
  %v7900 = vmax.f32 %v7418, %v7659
  %v7901 = vmax.f32 %v7419, %v7660
  %v7902 = vmax.f32 %v7420, %v7661
  %v7903 = vmax.f32 %v7421, %v7662
  %v7904 = vmax.f32 %v7422, %v7663
  %v7905 = vmax.f32 %v7423, %v7664
  %v7906 = vmax.f32 %v7424, %v7665
  %v7907 = vmax.f32 %v7425, %v7666
  %v7908 = vmax.f32 %v7426, %v7667
  %v7909 = vmax.f32 %v7427, %v7668
  %v7910 = vmax.f32 %v7428, %v7669
  %v7911 = vmax.f32 %v7429, %v7670
  %v7912 = vmax.f32 %v7430, %v7671
  %v7913 = vmax.f32 %v7431, %v7672
  %v7914 = vmax.f32 %v7432, %v7673
  %v7915 = vmax.f32 %v7433, %v7674
  %v7916 = vmax.f32 %v7434, %v7675
  %v7917 = vmax.f32 %v7435, %v7676
  %v7918 = vmax.f32 %v7436, %v7677
  %v7919 = vmax.f32 %v7437, %v7678
  %v7920 = vmax.f32 %v7438, %v7679
  %v7921 = vmax.f32 %v7439, %v7680
  %v7922 = vmax.f32 %v7440, %v7681
  %v7923 = vmax.f32 %v7441, %v7682
  %v7924 = vmax.f32 %v7442, %v7683
  %v7925 = vmax.f32 %v7443, %v7684
  %v7926 = vmax.f32 %v7444, %v7685
  %v7927 = vmax.f32 %v7445, %v7686
  %v7928 = vmax.f32 %v7446, %v7687
  %v7929 = vmax.f32 %v7447, %v7688
  %v7930 = vmax.f32 %v7448, %v7689
  %v7931 = vmax.f32 %v7449, %v7690
  %v7932 = vmax.f32 %v7450, %v7691
  %v7933 = vmax.f32 %v7451, %v7692
  %v7934 = vmax.f32 %v7452, %v7693
  %v7935 = vmax.f32 %v7453, %v7694
  %v7936 = vmax.f32 %v7454, %v7695
  %v7937 = vmax.f32 %v7455, %v7696
  %v7938 = vmax.f32 %v7456, %v7697
  %v7939 = vmax.f32 %v7457, %v7698
  %v7940 = vmax.f32 %v7458, %v7699
  %v7941 = vmax.f32 %v7459, %v7700
  %v7942 = vmax.f32 %v7460, %v7701
  %v7943 = vmax.f32 %v7461, %v7702
  %v7944 = vmax.f32 %v7462, %v7703
  %v7945 = vmax.f32 %v7463, %v7704
  %v7946 = vmax.f32 %v7464, %v7705
  %v7947 = vmax.f32 %v7465, %v7706
  %v7948 = vmax.f32 %v7466, %v7707
  %v7949 = vmax.f32 %v7467, %v7708
  %v7950 = vmax.f32 %v7468, %v7709
  %v7951 = vmax.f32 %v7469, %v7710
  %v7952 = vmax.f32 %v7470, %v7711
  %v7953 = vmax.f32 %v7471, %v7712
  %v7954 = vmax.f32 %v7472, %v7713
  %v7955 = vmax.f32 %v7473, %v7714
  %v7956 = vmax.f32 %v7474, %v7715
  %v7957 = vmax.f32 %v7475, %v7716
  %v7958 = vmax.f32 %v7476, %v7717
  %v7959 = vmax.f32 %v7477, %v7718
  %v7960 = vmax.f32 %v7478, %v7719
  %v7961 = vmax.f32 %v7479, %v7720
  %v7962 = vmax.f32 %v7480, %v7721
  %v7963 = vmax.f32 %v7481, %v7722
  %v7964 = vmax.f32 %v7482, %v7723
  %v7965 = vmax.f32 %v7483, %v7724
  %v7966 = vmax.f32 %v7484, %v7725
  %v7967 = vmax.f32 %v7485, %v7726
  %v7968 = vmax.f32 %v7486, %v7727
  %v7969 = vmax.f32 %v7487, %v7728
  %v7970 = vmax.f32 %v7488, %v7729
  %v7971 = vmax.f32 %v7489, %v7730
  %v7972 = vmax.f32 %v7490, %v7731
  %v7973 = vmax.f32 %v7491, %v7732
  %v7974 = vmax.f32 %v7492, %v7733
  %v7975 = vmax.f32 %v7493, %v7734
  %v7976 = vmax.f32 %v7494, %v7735
  %v7977 = vmax.f32 %v7495, %v7736
  %v7978 = vmax.f32 %v7496, %v7737
  %v7979 = vmax.f32 %v7497, %v7738
  %v7980 = vmax.f32 %v7498, %v7739
  %v7981 = vmax.f32 %v7499, %v7740
  %v7982 = vmax.f32 %v7500, %v7741
  %v7983 = vmax.f32 %v7501, %v7742
  %v7984 = vmax.f32 %v7502, %v7743
  %v7985 = vmax.f32 %v7503, %v7744
  %v7986 = vmax.f32 %v7504, %v7745
  %v7987 = vmax.f32 %v7505, %v7746
  %v7988 = vmax.f32 %v7506, %v7747
  %v7989 = vmax.f32 %v7507, %v7748
  %v7990 = vmax.f32 %v7508, %v7749
  %v7991 = vmax.f32 %v7509, %v7750
  %v7992 = vmax.f32 %v7510, %v7751
  %v7993 = vmax.f32 %v7511, %v7752
  %v7994 = vmax.f32 %v7512, %v7753
  %v7995 = vmax.f32 %v7513, %v7754
  %v7996 = vmax.f32 %v7514, %v7755
  %v7997 = vmax.f32 %v7515, %v7756
  %v7998 = vmax.f32 %v7516, %v7757
  %v7999 = vmax.f32 %v7517, %v7758
  %v8000 = vld [vmem:[%s2] sm:$0x1]
  %v8002 = vperm.slane %v8000, 0
  %v8004 = vadd.f32 %v7759, %v8002
  %v8005 = vadd.f32 %v7760, %v8002
  %v8006 = vadd.f32 %v7761, %v8002
  %v8007 = vadd.f32 %v7762, %v8002
  %v8008 = vadd.f32 %v7763, %v8002
  %v8009 = vadd.f32 %v7764, %v8002
  %v8010 = vadd.f32 %v7765, %v8002
  %v8011 = vadd.f32 %v7766, %v8002
  %v8012 = vadd.f32 %v7767, %v8002
  %v8013 = vadd.f32 %v7768, %v8002
  %v8014 = vadd.f32 %v7769, %v8002
  %v8015 = vadd.f32 %v7770, %v8002
  %v8016 = vadd.f32 %v7771, %v8002
  %v8017 = vadd.f32 %v7772, %v8002
  %v8018 = vadd.f32 %v7773, %v8002
  %v8019 = vadd.f32 %v7774, %v8002
  %v8020 = vadd.f32 %v7775, %v8002
  %v8021 = vadd.f32 %v7776, %v8002
  %v8022 = vadd.f32 %v7777, %v8002
  %v8023 = vadd.f32 %v7778, %v8002
  %v8024 = vadd.f32 %v7779, %v8002
  %v8025 = vadd.f32 %v7780, %v8002
  %v8026 = vadd.f32 %v7781, %v8002
  %v8027 = vadd.f32 %v7782, %v8002
  %v8028 = vadd.f32 %v7783, %v8002
  %v8029 = vadd.f32 %v7784, %v8002
  %v8030 = vadd.f32 %v7785, %v8002
  %v8031 = vadd.f32 %v7786, %v8002
  %v8032 = vadd.f32 %v7787, %v8002
  %v8033 = vadd.f32 %v7788, %v8002
  %v8034 = vadd.f32 %v7789, %v8002
  %v8035 = vadd.f32 %v7790, %v8002
  %v8036 = vadd.f32 %v7791, %v8002
  %v8037 = vadd.f32 %v7792, %v8002
  %v8038 = vadd.f32 %v7793, %v8002
  %v8039 = vadd.f32 %v7794, %v8002
  %v8040 = vadd.f32 %v7795, %v8002
  %v8041 = vadd.f32 %v7796, %v8002
  %v8042 = vadd.f32 %v7797, %v8002
  %v8043 = vadd.f32 %v7798, %v8002
  %v8044 = vadd.f32 %v7799, %v8002
  %v8045 = vadd.f32 %v7800, %v8002
  %v8046 = vadd.f32 %v7801, %v8002
  %v8047 = vadd.f32 %v7802, %v8002
  %v8048 = vadd.f32 %v7803, %v8002
  %v8049 = vadd.f32 %v7804, %v8002
  %v8050 = vadd.f32 %v7805, %v8002
  %v8051 = vadd.f32 %v7806, %v8002
  %v8052 = vadd.f32 %v7807, %v8002
  %v8053 = vadd.f32 %v7808, %v8002
  %v8054 = vadd.f32 %v7809, %v8002
  %v8055 = vadd.f32 %v7810, %v8002
  %v8056 = vadd.f32 %v7811, %v8002
  %v8057 = vadd.f32 %v7812, %v8002
  %v8058 = vadd.f32 %v7813, %v8002
  %v8059 = vadd.f32 %v7814, %v8002
  %v8060 = vadd.f32 %v7815, %v8002
  %v8061 = vadd.f32 %v7816, %v8002
  %v8062 = vadd.f32 %v7817, %v8002
  %v8063 = vadd.f32 %v7818, %v8002
  %v8064 = vadd.f32 %v7819, %v8002
  %v8065 = vadd.f32 %v7820, %v8002
  %v8066 = vadd.f32 %v7821, %v8002
  %v8067 = vadd.f32 %v7822, %v8002
  %v8068 = vadd.f32 %v7823, %v8002
  %v8069 = vadd.f32 %v7824, %v8002
  %v8070 = vadd.f32 %v7825, %v8002
  %v8071 = vadd.f32 %v7826, %v8002
  %v8072 = vadd.f32 %v7827, %v8002
  %v8073 = vadd.f32 %v7828, %v8002
  %v8074 = vadd.f32 %v7829, %v8002
  %v8075 = vadd.f32 %v7830, %v8002
  %v8076 = vadd.f32 %v7831, %v8002
  %v8077 = vadd.f32 %v7832, %v8002
  %v8078 = vadd.f32 %v7833, %v8002
  %v8079 = vadd.f32 %v7834, %v8002
  %v8080 = vadd.f32 %v7835, %v8002
  %v8081 = vadd.f32 %v7836, %v8002
  %v8082 = vadd.f32 %v7837, %v8002
  %v8083 = vadd.f32 %v7838, %v8002
  %v8084 = vadd.f32 %v7839, %v8002
  %v8085 = vadd.f32 %v7840, %v8002
  %v8086 = vadd.f32 %v7841, %v8002
  %v8087 = vadd.f32 %v7842, %v8002
  %v8088 = vadd.f32 %v7843, %v8002
  %v8089 = vadd.f32 %v7844, %v8002
  %v8090 = vadd.f32 %v7845, %v8002
  %v8091 = vadd.f32 %v7846, %v8002
  %v8092 = vadd.f32 %v7847, %v8002
  %v8093 = vadd.f32 %v7848, %v8002
  %v8094 = vadd.f32 %v7849, %v8002
  %v8095 = vadd.f32 %v7850, %v8002
  %v8096 = vadd.f32 %v7851, %v8002
  %v8097 = vadd.f32 %v7852, %v8002
  %v8098 = vadd.f32 %v7853, %v8002
  %v8099 = vadd.f32 %v7854, %v8002
  %v8100 = vadd.f32 %v7855, %v8002
  %v8101 = vadd.f32 %v7856, %v8002
  %v8102 = vadd.f32 %v7857, %v8002
  %v8103 = vadd.f32 %v7858, %v8002
  %v8104 = vadd.f32 %v7859, %v8002
  %v8105 = vadd.f32 %v7860, %v8002
  %v8106 = vadd.f32 %v7861, %v8002
  %v8107 = vadd.f32 %v7862, %v8002
  %v8108 = vadd.f32 %v7863, %v8002
  %v8109 = vadd.f32 %v7864, %v8002
  %v8110 = vadd.f32 %v7865, %v8002
  %v8111 = vadd.f32 %v7866, %v8002
  %v8112 = vadd.f32 %v7867, %v8002
  %v8113 = vadd.f32 %v7868, %v8002
  %v8114 = vadd.f32 %v7869, %v8002
  %v8115 = vadd.f32 %v7870, %v8002
  %v8116 = vadd.f32 %v7871, %v8002
  %v8117 = vadd.f32 %v7872, %v8002
  %v8118 = vadd.f32 %v7873, %v8002
  %v8119 = vadd.f32 %v7874, %v8002
  %v8120 = vadd.f32 %v7875, %v8002
  %v8121 = vadd.f32 %v7876, %v8002
  %v8122 = vadd.f32 %v7877, %v8002
  %v8123 = vadd.f32 %v7878, %v8002
  %v8124 = vadd.f32 %v7879, %v8002
  %v8125 = vadd.f32 %v7880, %v8002
  %v8126 = vadd.f32 %v7881, %v8002
  %v8127 = vadd.f32 %v7882, %v8002
  %v8128 = vadd.f32 %v7883, %v8002
  %v8129 = vadd.f32 %v7884, %v8002
  %v8130 = vadd.f32 %v7885, %v8002
  %v8131 = vadd.f32 %v7886, %v8002
  %v8132 = vadd.f32 %v7887, %v8002
  %v8133 = vadd.f32 %v7888, %v8002
  %v8134 = vadd.f32 %v7889, %v8002
  %v8135 = vadd.f32 %v7890, %v8002
  %v8136 = vadd.f32 %v7891, %v8002
  %v8137 = vadd.f32 %v7892, %v8002
  %v8138 = vadd.f32 %v7893, %v8002
  %v8139 = vadd.f32 %v7894, %v8002
  %v8140 = vadd.f32 %v7895, %v8002
  %v8141 = vadd.f32 %v7896, %v8002
  %v8142 = vadd.f32 %v7897, %v8002
  %v8143 = vadd.f32 %v7898, %v8002
  %v8144 = vadd.f32 %v7899, %v8002
  %v8145 = vadd.f32 %v7900, %v8002
  %v8146 = vadd.f32 %v7901, %v8002
  %v8147 = vadd.f32 %v7902, %v8002
  %v8148 = vadd.f32 %v7903, %v8002
  %v8149 = vadd.f32 %v7904, %v8002
  %v8150 = vadd.f32 %v7905, %v8002
  %v8151 = vadd.f32 %v7906, %v8002
  %v8152 = vadd.f32 %v7907, %v8002
  %v8153 = vadd.f32 %v7908, %v8002
  %v8154 = vadd.f32 %v7909, %v8002
  %v8155 = vadd.f32 %v7910, %v8002
  %v8156 = vadd.f32 %v7911, %v8002
  %v8157 = vadd.f32 %v7912, %v8002
  %v8158 = vadd.f32 %v7913, %v8002
  %v8159 = vadd.f32 %v7914, %v8002
  %v8160 = vadd.f32 %v7915, %v8002
  %v8161 = vadd.f32 %v7916, %v8002
  %v8162 = vadd.f32 %v7917, %v8002
  %v8163 = vadd.f32 %v7918, %v8002
  %v8164 = vadd.f32 %v7919, %v8002
  %v8165 = vadd.f32 %v7920, %v8002
  %v8166 = vadd.f32 %v7921, %v8002
  %v8167 = vadd.f32 %v7922, %v8002
  %v8168 = vadd.f32 %v7923, %v8002
  %v8169 = vadd.f32 %v7924, %v8002
  %v8170 = vadd.f32 %v7925, %v8002
  %v8171 = vadd.f32 %v7926, %v8002
  %v8172 = vadd.f32 %v7927, %v8002
  %v8173 = vadd.f32 %v7928, %v8002
  %v8174 = vadd.f32 %v7929, %v8002
  %v8175 = vadd.f32 %v7930, %v8002
  %v8176 = vadd.f32 %v7931, %v8002
  %v8177 = vadd.f32 %v7932, %v8002
  %v8178 = vadd.f32 %v7933, %v8002
  %v8179 = vadd.f32 %v7934, %v8002
  %v8180 = vadd.f32 %v7935, %v8002
  %v8181 = vadd.f32 %v7936, %v8002
  %v8182 = vadd.f32 %v7937, %v8002
  %v8183 = vadd.f32 %v7938, %v8002
  %v8184 = vadd.f32 %v7939, %v8002
  %v8185 = vadd.f32 %v7940, %v8002
  %v8186 = vadd.f32 %v7941, %v8002
  %v8187 = vadd.f32 %v7942, %v8002
  %v8188 = vadd.f32 %v7943, %v8002
  %v8189 = vadd.f32 %v7944, %v8002
  %v8190 = vadd.f32 %v7945, %v8002
  %v8191 = vadd.f32 %v7946, %v8002
  %v8192 = vadd.f32 %v7947, %v8002
  %v8193 = vadd.f32 %v7948, %v8002
  %v8194 = vadd.f32 %v7949, %v8002
  %v8195 = vadd.f32 %v7950, %v8002
  %v8196 = vadd.f32 %v7951, %v8002
  %v8197 = vadd.f32 %v7952, %v8002
  %v8198 = vadd.f32 %v7953, %v8002
  %v8199 = vadd.f32 %v7954, %v8002
  %v8200 = vadd.f32 %v7955, %v8002
  %v8201 = vadd.f32 %v7956, %v8002
  %v8202 = vadd.f32 %v7957, %v8002
  %v8203 = vadd.f32 %v7958, %v8002
  %v8204 = vadd.f32 %v7959, %v8002
  %v8205 = vadd.f32 %v7960, %v8002
  %v8206 = vadd.f32 %v7961, %v8002
  %v8207 = vadd.f32 %v7962, %v8002
  %v8208 = vadd.f32 %v7963, %v8002
  %v8209 = vadd.f32 %v7964, %v8002
  %v8210 = vadd.f32 %v7965, %v8002
  %v8211 = vadd.f32 %v7966, %v8002
  %v8212 = vadd.f32 %v7967, %v8002
  %v8213 = vadd.f32 %v7968, %v8002
  %v8214 = vadd.f32 %v7969, %v8002
  %v8215 = vadd.f32 %v7970, %v8002
  %v8216 = vadd.f32 %v7971, %v8002
  %v8217 = vadd.f32 %v7972, %v8002
  %v8218 = vadd.f32 %v7973, %v8002
  %v8219 = vadd.f32 %v7974, %v8002
  %v8220 = vadd.f32 %v7975, %v8002
  %v8221 = vadd.f32 %v7976, %v8002
  %v8222 = vadd.f32 %v7977, %v8002
  %v8223 = vadd.f32 %v7978, %v8002
  %v8224 = vadd.f32 %v7979, %v8002
  %v8225 = vadd.f32 %v7980, %v8002
  %v8226 = vadd.f32 %v7981, %v8002
  %v8227 = vadd.f32 %v7982, %v8002
  %v8228 = vadd.f32 %v7983, %v8002
  %v8229 = vadd.f32 %v7984, %v8002
  %v8230 = vadd.f32 %v7985, %v8002
  %v8231 = vadd.f32 %v7986, %v8002
  %v8232 = vadd.f32 %v7987, %v8002
  %v8233 = vadd.f32 %v7988, %v8002
  %v8234 = vadd.f32 %v7989, %v8002
  %v8235 = vadd.f32 %v7990, %v8002
  %v8236 = vadd.f32 %v7991, %v8002
  %v8237 = vadd.f32 %v7992, %v8002
  %v8238 = vadd.f32 %v7993, %v8002
  %v8239 = vadd.f32 %v7994, %v8002
  %v8240 = vadd.f32 %v7995, %v8002
  %v8241 = vadd.f32 %v7996, %v8002
  %v8242 = vadd.f32 %v7997, %v8002
  %v8243 = vadd.f32 %v7998, %v8002
  %v8244 = vadd.f32 %v7999, %v8002
  %v8245 = vmax.f32 %v8004, 0.0
  %v8246 = vmax.f32 %v8005, 0.0
  %v8247 = vmax.f32 %v8006, 0.0
  %v8248 = vmax.f32 %v8007, 0.0
  %v8249 = vmax.f32 %v8008, 0.0
  %v8250 = vmax.f32 %v8009, 0.0
  %v8251 = vmax.f32 %v8010, 0.0
  %v8252 = vmax.f32 %v8011, 0.0
  %v8253 = vmax.f32 %v8012, 0.0
  %v8254 = vmax.f32 %v8013, 0.0
  %v8255 = vmax.f32 %v8014, 0.0
  %v8256 = vmax.f32 %v8015, 0.0
  %v8257 = vmax.f32 %v8016, 0.0
  %v8258 = vmax.f32 %v8017, 0.0
  %v8259 = vmax.f32 %v8018, 0.0
  %v8260 = vmax.f32 %v8019, 0.0
  %v8261 = vmax.f32 %v8020, 0.0
  %v8262 = vmax.f32 %v8021, 0.0
  %v8263 = vmax.f32 %v8022, 0.0
  %v8264 = vmax.f32 %v8023, 0.0
  %v8265 = vmax.f32 %v8024, 0.0
  %v8266 = vmax.f32 %v8025, 0.0
  %v8267 = vmax.f32 %v8026, 0.0
  %v8268 = vmax.f32 %v8027, 0.0
  %v8269 = vmax.f32 %v8028, 0.0
  %v8270 = vmax.f32 %v8029, 0.0
  %v8271 = vmax.f32 %v8030, 0.0
  %v8272 = vmax.f32 %v8031, 0.0
  %v8273 = vmax.f32 %v8032, 0.0
  %v8274 = vmax.f32 %v8033, 0.0
  %v8275 = vmax.f32 %v8034, 0.0
  %v8276 = vmax.f32 %v8035, 0.0
  %v8277 = vmax.f32 %v8036, 0.0
  %v8278 = vmax.f32 %v8037, 0.0
  %v8279 = vmax.f32 %v8038, 0.0
  %v8280 = vmax.f32 %v8039, 0.0
  %v8281 = vmax.f32 %v8040, 0.0
  %v8282 = vmax.f32 %v8041, 0.0
  %v8283 = vmax.f32 %v8042, 0.0
  %v8284 = vmax.f32 %v8043, 0.0
  %v8285 = vmax.f32 %v8044, 0.0
  %v8286 = vmax.f32 %v8045, 0.0
  %v8287 = vmax.f32 %v8046, 0.0
  %v8288 = vmax.f32 %v8047, 0.0
  %v8289 = vmax.f32 %v8048, 0.0
  %v8290 = vmax.f32 %v8049, 0.0
  %v8291 = vmax.f32 %v8050, 0.0
  %v8292 = vmax.f32 %v8051, 0.0
  %v8293 = vmax.f32 %v8052, 0.0
  %v8294 = vmax.f32 %v8053, 0.0
  %v8295 = vmax.f32 %v8054, 0.0
  %v8296 = vmax.f32 %v8055, 0.0
  %v8297 = vmax.f32 %v8056, 0.0
  %v8298 = vmax.f32 %v8057, 0.0
  %v8299 = vmax.f32 %v8058, 0.0
  %v8300 = vmax.f32 %v8059, 0.0
  %v8301 = vmax.f32 %v8060, 0.0
  %v8302 = vmax.f32 %v8061, 0.0
  %v8303 = vmax.f32 %v8062, 0.0
  %v8304 = vmax.f32 %v8063, 0.0
  %v8305 = vmax.f32 %v8064, 0.0
  %v8306 = vmax.f32 %v8065, 0.0
  %v8307 = vmax.f32 %v8066, 0.0
  %v8308 = vmax.f32 %v8067, 0.0
  %v8309 = vmax.f32 %v8068, 0.0
  %v8310 = vmax.f32 %v8069, 0.0
  %v8311 = vmax.f32 %v8070, 0.0
  %v8312 = vmax.f32 %v8071, 0.0
  %v8313 = vmax.f32 %v8072, 0.0
  %v8314 = vmax.f32 %v8073, 0.0
  %v8315 = vmax.f32 %v8074, 0.0
  %v8316 = vmax.f32 %v8075, 0.0
  %v8317 = vmax.f32 %v8076, 0.0
  %v8318 = vmax.f32 %v8077, 0.0
  %v8319 = vmax.f32 %v8078, 0.0
  %v8320 = vmax.f32 %v8079, 0.0
  %v8321 = vmax.f32 %v8080, 0.0
  %v8322 = vmax.f32 %v8081, 0.0
  %v8323 = vmax.f32 %v8082, 0.0
  %v8324 = vmax.f32 %v8083, 0.0
  %v8325 = vmax.f32 %v8084, 0.0
  %v8326 = vmax.f32 %v8085, 0.0
  %v8327 = vmax.f32 %v8086, 0.0
  %v8328 = vmax.f32 %v8087, 0.0
  %v8329 = vmax.f32 %v8088, 0.0
  %v8330 = vmax.f32 %v8089, 0.0
  %v8331 = vmax.f32 %v8090, 0.0
  %v8332 = vmax.f32 %v8091, 0.0
  %v8333 = vmax.f32 %v8092, 0.0
  %v8334 = vmax.f32 %v8093, 0.0
  %v8335 = vmax.f32 %v8094, 0.0
  %v8336 = vmax.f32 %v8095, 0.0
  %v8337 = vmax.f32 %v8096, 0.0
  %v8338 = vmax.f32 %v8097, 0.0
  %v8339 = vmax.f32 %v8098, 0.0
  %v8340 = vmax.f32 %v8099, 0.0
  %v8341 = vmax.f32 %v8100, 0.0
  %v8342 = vmax.f32 %v8101, 0.0
  %v8343 = vmax.f32 %v8102, 0.0
  %v8344 = vmax.f32 %v8103, 0.0
  %v8345 = vmax.f32 %v8104, 0.0
  %v8346 = vmax.f32 %v8105, 0.0
  %v8347 = vmax.f32 %v8106, 0.0
  %v8348 = vmax.f32 %v8107, 0.0
  %v8349 = vmax.f32 %v8108, 0.0
  %v8350 = vmax.f32 %v8109, 0.0
  %v8351 = vmax.f32 %v8110, 0.0
  %v8352 = vmax.f32 %v8111, 0.0
  %v8353 = vmax.f32 %v8112, 0.0
  %v8354 = vmax.f32 %v8113, 0.0
  %v8355 = vmax.f32 %v8114, 0.0
  %v8356 = vmax.f32 %v8115, 0.0
  %v8357 = vmax.f32 %v8116, 0.0
  %v8358 = vmax.f32 %v8117, 0.0
  %v8359 = vmax.f32 %v8118, 0.0
  %v8360 = vmax.f32 %v8119, 0.0
  %v8361 = vmax.f32 %v8120, 0.0
  %v8362 = vmax.f32 %v8121, 0.0
  %v8363 = vmax.f32 %v8122, 0.0
  %v8364 = vmax.f32 %v8123, 0.0
  %v8365 = vmax.f32 %v8124, 0.0
  %v8366 = vmax.f32 %v8125, 0.0
  %v8367 = vmax.f32 %v8126, 0.0
  %v8368 = vmax.f32 %v8127, 0.0
  %v8369 = vmax.f32 %v8128, 0.0
  %v8370 = vmax.f32 %v8129, 0.0
  %v8371 = vmax.f32 %v8130, 0.0
  %v8372 = vmax.f32 %v8131, 0.0
  %v8373 = vmax.f32 %v8132, 0.0
  %v8374 = vmax.f32 %v8133, 0.0
  %v8375 = vmax.f32 %v8134, 0.0
  %v8376 = vmax.f32 %v8135, 0.0
  %v8377 = vmax.f32 %v8136, 0.0
  %v8378 = vmax.f32 %v8137, 0.0
  %v8379 = vmax.f32 %v8138, 0.0
  %v8380 = vmax.f32 %v8139, 0.0
  %v8381 = vmax.f32 %v8140, 0.0
  %v8382 = vmax.f32 %v8141, 0.0
  %v8383 = vmax.f32 %v8142, 0.0
  %v8384 = vmax.f32 %v8143, 0.0
  %v8385 = vmax.f32 %v8144, 0.0
  %v8386 = vmax.f32 %v8145, 0.0
  %v8387 = vmax.f32 %v8146, 0.0
  %v8388 = vmax.f32 %v8147, 0.0
  %v8389 = vmax.f32 %v8148, 0.0
  %v8390 = vmax.f32 %v8149, 0.0
  %v8391 = vmax.f32 %v8150, 0.0
  %v8392 = vmax.f32 %v8151, 0.0
  %v8393 = vmax.f32 %v8152, 0.0
  %v8394 = vmax.f32 %v8153, 0.0
  %v8395 = vmax.f32 %v8154, 0.0
  %v8396 = vmax.f32 %v8155, 0.0
  %v8397 = vmax.f32 %v8156, 0.0
  %v8398 = vmax.f32 %v8157, 0.0
  %v8399 = vmax.f32 %v8158, 0.0
  %v8400 = vmax.f32 %v8159, 0.0
  %v8401 = vmax.f32 %v8160, 0.0
  %v8402 = vmax.f32 %v8161, 0.0
  %v8403 = vmax.f32 %v8162, 0.0
  %v8404 = vmax.f32 %v8163, 0.0
  %v8405 = vmax.f32 %v8164, 0.0
  %v8406 = vmax.f32 %v8165, 0.0
  %v8407 = vmax.f32 %v8166, 0.0
  %v8408 = vmax.f32 %v8167, 0.0
  %v8409 = vmax.f32 %v8168, 0.0
  %v8410 = vmax.f32 %v8169, 0.0
  %v8411 = vmax.f32 %v8170, 0.0
  %v8412 = vmax.f32 %v8171, 0.0
  %v8413 = vmax.f32 %v8172, 0.0
  %v8414 = vmax.f32 %v8173, 0.0
  %v8415 = vmax.f32 %v8174, 0.0
  %v8416 = vmax.f32 %v8175, 0.0
  %v8417 = vmax.f32 %v8176, 0.0
  %v8418 = vmax.f32 %v8177, 0.0
  %v8419 = vmax.f32 %v8178, 0.0
  %v8420 = vmax.f32 %v8179, 0.0
  %v8421 = vmax.f32 %v8180, 0.0
  %v8422 = vmax.f32 %v8181, 0.0
  %v8423 = vmax.f32 %v8182, 0.0
  %v8424 = vmax.f32 %v8183, 0.0
  %v8425 = vmax.f32 %v8184, 0.0
  %v8426 = vmax.f32 %v8185, 0.0
  %v8427 = vmax.f32 %v8186, 0.0
  %v8428 = vmax.f32 %v8187, 0.0
  %v8429 = vmax.f32 %v8188, 0.0
  %v8430 = vmax.f32 %v8189, 0.0
  %v8431 = vmax.f32 %v8190, 0.0
  %v8432 = vmax.f32 %v8191, 0.0
  %v8433 = vmax.f32 %v8192, 0.0
  %v8434 = vmax.f32 %v8193, 0.0
  %v8435 = vmax.f32 %v8194, 0.0
  %v8436 = vmax.f32 %v8195, 0.0
  %v8437 = vmax.f32 %v8196, 0.0
  %v8438 = vmax.f32 %v8197, 0.0
  %v8439 = vmax.f32 %v8198, 0.0
  %v8440 = vmax.f32 %v8199, 0.0
  %v8441 = vmax.f32 %v8200, 0.0
  %v8442 = vmax.f32 %v8201, 0.0
  %v8443 = vmax.f32 %v8202, 0.0
  %v8444 = vmax.f32 %v8203, 0.0
  %v8445 = vmax.f32 %v8204, 0.0
  %v8446 = vmax.f32 %v8205, 0.0
  %v8447 = vmax.f32 %v8206, 0.0
  %v8448 = vmax.f32 %v8207, 0.0
  %v8449 = vmax.f32 %v8208, 0.0
  %v8450 = vmax.f32 %v8209, 0.0
  %v8451 = vmax.f32 %v8210, 0.0
  %v8452 = vmax.f32 %v8211, 0.0
  %v8453 = vmax.f32 %v8212, 0.0
  %v8454 = vmax.f32 %v8213, 0.0
  %v8455 = vmax.f32 %v8214, 0.0
  %v8456 = vmax.f32 %v8215, 0.0
  %v8457 = vmax.f32 %v8216, 0.0
  %v8458 = vmax.f32 %v8217, 0.0
  %v8459 = vmax.f32 %v8218, 0.0
  %v8460 = vmax.f32 %v8219, 0.0
  %v8461 = vmax.f32 %v8220, 0.0
  %v8462 = vmax.f32 %v8221, 0.0
  %v8463 = vmax.f32 %v8222, 0.0
  %v8464 = vmax.f32 %v8223, 0.0
  %v8465 = vmax.f32 %v8224, 0.0
  %v8466 = vmax.f32 %v8225, 0.0
  %v8467 = vmax.f32 %v8226, 0.0
  %v8468 = vmax.f32 %v8227, 0.0
  %v8469 = vmax.f32 %v8228, 0.0
  %v8470 = vmax.f32 %v8229, 0.0
  %v8471 = vmax.f32 %v8230, 0.0
  %v8472 = vmax.f32 %v8231, 0.0
  %v8473 = vmax.f32 %v8232, 0.0
  %v8474 = vmax.f32 %v8233, 0.0
  %v8475 = vmax.f32 %v8234, 0.0
  %v8476 = vmax.f32 %v8235, 0.0
  %v8477 = vmax.f32 %v8236, 0.0
  %v8478 = vmax.f32 %v8237, 0.0
  %v8479 = vmax.f32 %v8238, 0.0
  %v8480 = vmax.f32 %v8239, 0.0
  %v8481 = vmax.f32 %v8240, 0.0
  %v8482 = vmax.f32 %v8241, 0.0
  %v8483 = vmax.f32 %v8242, 0.0
  %v8484 = vmax.f32 %v8243, 0.0
  %v8485 = vmax.f32 %v8244, 0.0
  %v8486 = vpack.c.bf16 %v8245, %v8245
  %v8487 = vpack.c.bf16 %v8246, %v8246
  %v8488 = vpack.c.bf16 %v8247, %v8247
  %v8489 = vpack.c.bf16 %v8248, %v8248
  %v8490 = vpack.c.bf16 %v8249, %v8249
  %v8491 = vpack.c.bf16 %v8250, %v8250
  %v8492 = vpack.c.bf16 %v8251, %v8251
  %v8493 = vpack.c.bf16 %v8252, %v8252
  %v8494 = vpack.c.bf16 %v8253, %v8253
  %v8495 = vpack.c.bf16 %v8254, %v8254
  %v8496 = vpack.c.bf16 %v8255, %v8255
  %v8497 = vpack.c.bf16 %v8256, %v8256
  %v8498 = vpack.c.bf16 %v8257, %v8257
  %v8499 = vpack.c.bf16 %v8258, %v8258
  %v8500 = vpack.c.bf16 %v8259, %v8259
  %v8501 = vpack.c.bf16 %v8260, %v8260
  %v8502 = vpack.c.bf16 %v8261, %v8261
  %v8503 = vpack.c.bf16 %v8262, %v8262
  %v8504 = vpack.c.bf16 %v8263, %v8263
  %v8505 = vpack.c.bf16 %v8264, %v8264
  %v8506 = vpack.c.bf16 %v8265, %v8265
  %v8507 = vpack.c.bf16 %v8266, %v8266
  %v8508 = vpack.c.bf16 %v8267, %v8267
  %v8509 = vpack.c.bf16 %v8268, %v8268
  %v8510 = vpack.c.bf16 %v8269, %v8269
  %v8511 = vpack.c.bf16 %v8270, %v8270
  %v8512 = vpack.c.bf16 %v8271, %v8271
  %v8513 = vpack.c.bf16 %v8272, %v8272
  %v8514 = vpack.c.bf16 %v8273, %v8273
  %v8515 = vpack.c.bf16 %v8274, %v8274
  %v8516 = vpack.c.bf16 %v8275, %v8275
  %v8517 = vpack.c.bf16 %v8276, %v8276
  %v8518 = vpack.c.bf16 %v8277, %v8277
  %v8519 = vpack.c.bf16 %v8278, %v8278
  %v8520 = vpack.c.bf16 %v8279, %v8279
  %v8521 = vpack.c.bf16 %v8280, %v8280
  %v8522 = vpack.c.bf16 %v8281, %v8281
  %v8523 = vpack.c.bf16 %v8282, %v8282
  %v8524 = vpack.c.bf16 %v8283, %v8283
  %v8525 = vpack.c.bf16 %v8284, %v8284
  %v8526 = vpack.c.bf16 %v8285, %v8285
  %v8527 = vpack.c.bf16 %v8286, %v8286
  %v8528 = vpack.c.bf16 %v8287, %v8287
  %v8529 = vpack.c.bf16 %v8288, %v8288
  %v8530 = vpack.c.bf16 %v8289, %v8289
  %v8531 = vpack.c.bf16 %v8290, %v8290
  %v8532 = vpack.c.bf16 %v8291, %v8291
  %v8533 = vpack.c.bf16 %v8292, %v8292
  %v8534 = vpack.c.bf16 %v8293, %v8293
  %v8535 = vpack.c.bf16 %v8294, %v8294
  %v8536 = vpack.c.bf16 %v8295, %v8295
  %v8537 = vpack.c.bf16 %v8296, %v8296
  %v8538 = vpack.c.bf16 %v8297, %v8297
  %v8539 = vpack.c.bf16 %v8298, %v8298
  %v8540 = vpack.c.bf16 %v8299, %v8299
  %v8541 = vpack.c.bf16 %v8300, %v8300
  %v8542 = vpack.c.bf16 %v8301, %v8301
  %v8543 = vpack.c.bf16 %v8302, %v8302
  %v8544 = vpack.c.bf16 %v8303, %v8303
  %v8545 = vpack.c.bf16 %v8304, %v8304
  %v8546 = vpack.c.bf16 %v8305, %v8305
  %v8547 = vpack.c.bf16 %v8306, %v8306
  %v8548 = vpack.c.bf16 %v8307, %v8307
  %v8549 = vpack.c.bf16 %v8308, %v8308
  %v8550 = vpack.c.bf16 %v8309, %v8309
  %v8551 = vpack.c.bf16 %v8310, %v8310
  %v8552 = vpack.c.bf16 %v8311, %v8311
  %v8553 = vpack.c.bf16 %v8312, %v8312
  %v8554 = vpack.c.bf16 %v8313, %v8313
  %v8555 = vpack.c.bf16 %v8314, %v8314
  %v8556 = vpack.c.bf16 %v8315, %v8315
  %v8557 = vpack.c.bf16 %v8316, %v8316
  %v8558 = vpack.c.bf16 %v8317, %v8317
  %v8559 = vpack.c.bf16 %v8318, %v8318
  %v8560 = vpack.c.bf16 %v8319, %v8319
  %v8561 = vpack.c.bf16 %v8320, %v8320
  %v8562 = vpack.c.bf16 %v8321, %v8321
  %v8563 = vpack.c.bf16 %v8322, %v8322
  %v8564 = vpack.c.bf16 %v8323, %v8323
  %v8565 = vpack.c.bf16 %v8324, %v8324
  %v8566 = vpack.c.bf16 %v8325, %v8325
  %v8567 = vpack.c.bf16 %v8326, %v8326
  %v8568 = vpack.c.bf16 %v8327, %v8327
  %v8569 = vpack.c.bf16 %v8328, %v8328
  %v8570 = vpack.c.bf16 %v8329, %v8329
  %v8571 = vpack.c.bf16 %v8330, %v8330
  %v8572 = vpack.c.bf16 %v8331, %v8331
  %v8573 = vpack.c.bf16 %v8332, %v8332
  %v8574 = vpack.c.bf16 %v8333, %v8333
  %v8575 = vpack.c.bf16 %v8334, %v8334
  %v8576 = vpack.c.bf16 %v8335, %v8335
  %v8577 = vpack.c.bf16 %v8336, %v8336
  %v8578 = vpack.c.bf16 %v8337, %v8337
  %v8579 = vpack.c.bf16 %v8338, %v8338
  %v8580 = vpack.c.bf16 %v8339, %v8339
  %v8581 = vpack.c.bf16 %v8340, %v8340
  %v8582 = vpack.c.bf16 %v8341, %v8341
  %v8583 = vpack.c.bf16 %v8342, %v8342
  %v8584 = vpack.c.bf16 %v8343, %v8343
  %v8585 = vpack.c.bf16 %v8344, %v8344
  %v8586 = vpack.c.bf16 %v8345, %v8345
  %v8587 = vpack.c.bf16 %v8346, %v8346
  %v8588 = vpack.c.bf16 %v8347, %v8347
  %v8589 = vpack.c.bf16 %v8348, %v8348
  %v8590 = vpack.c.bf16 %v8349, %v8349
  %v8591 = vpack.c.bf16 %v8350, %v8350
  %v8592 = vpack.c.bf16 %v8351, %v8351
  %v8593 = vpack.c.bf16 %v8352, %v8352
  %v8594 = vpack.c.bf16 %v8353, %v8353
  %v8595 = vpack.c.bf16 %v8354, %v8354
  %v8596 = vpack.c.bf16 %v8355, %v8355
  %v8597 = vpack.c.bf16 %v8356, %v8356
  %v8598 = vpack.c.bf16 %v8357, %v8357
  %v8599 = vpack.c.bf16 %v8358, %v8358
  %v8600 = vpack.c.bf16 %v8359, %v8359
  %v8601 = vpack.c.bf16 %v8360, %v8360
  %v8602 = vpack.c.bf16 %v8361, %v8361
  %v8603 = vpack.c.bf16 %v8362, %v8362
  %v8604 = vpack.c.bf16 %v8363, %v8363
  %v8605 = vpack.c.bf16 %v8364, %v8364
  %v8606 = vpack.c.bf16 %v8365, %v8365
  %v8607 = vpack.c.bf16 %v8366, %v8366
  %v8608 = vpack.c.bf16 %v8367, %v8367
  %v8609 = vpack.c.bf16 %v8368, %v8368
  %v8610 = vpack.c.bf16 %v8369, %v8369
  %v8611 = vpack.c.bf16 %v8370, %v8370
  %v8612 = vpack.c.bf16 %v8371, %v8371
  %v8613 = vpack.c.bf16 %v8372, %v8372
  %v8614 = vpack.c.bf16 %v8373, %v8373
  %v8615 = vpack.c.bf16 %v8374, %v8374
  %v8616 = vpack.c.bf16 %v8375, %v8375
  %v8617 = vpack.c.bf16 %v8376, %v8376
  %v8618 = vpack.c.bf16 %v8377, %v8377
  %v8619 = vpack.c.bf16 %v8378, %v8378
  %v8620 = vpack.c.bf16 %v8379, %v8379
  %v8621 = vpack.c.bf16 %v8380, %v8380
  %v8622 = vpack.c.bf16 %v8381, %v8381
  %v8623 = vpack.c.bf16 %v8382, %v8382
  %v8624 = vpack.c.bf16 %v8383, %v8383
  %v8625 = vpack.c.bf16 %v8384, %v8384
  %v8626 = vpack.c.bf16 %v8385, %v8385
  %v8627 = vpack.c.bf16 %v8386, %v8386
  %v8628 = vpack.c.bf16 %v8387, %v8387
  %v8629 = vpack.c.bf16 %v8388, %v8388
  %v8630 = vpack.c.bf16 %v8389, %v8389
  %v8631 = vpack.c.bf16 %v8390, %v8390
  %v8632 = vpack.c.bf16 %v8391, %v8391
  %v8633 = vpack.c.bf16 %v8392, %v8392
  %v8634 = vpack.c.bf16 %v8393, %v8393
  %v8635 = vpack.c.bf16 %v8394, %v8394
  %v8636 = vpack.c.bf16 %v8395, %v8395
  %v8637 = vpack.c.bf16 %v8396, %v8396
  %v8638 = vpack.c.bf16 %v8397, %v8397
  %v8639 = vpack.c.bf16 %v8398, %v8398
  %v8640 = vpack.c.bf16 %v8399, %v8399
  %v8641 = vpack.c.bf16 %v8400, %v8400
  %v8642 = vpack.c.bf16 %v8401, %v8401
  %v8643 = vpack.c.bf16 %v8402, %v8402
  %v8644 = vpack.c.bf16 %v8403, %v8403
  %v8645 = vpack.c.bf16 %v8404, %v8404
  %v8646 = vpack.c.bf16 %v8405, %v8405
  %v8647 = vpack.c.bf16 %v8406, %v8406
  %v8648 = vpack.c.bf16 %v8407, %v8407
  %v8649 = vpack.c.bf16 %v8408, %v8408
  %v8650 = vpack.c.bf16 %v8409, %v8409
  %v8651 = vpack.c.bf16 %v8410, %v8410
  %v8652 = vpack.c.bf16 %v8411, %v8411
  %v8653 = vpack.c.bf16 %v8412, %v8412
  %v8654 = vpack.c.bf16 %v8413, %v8413
  %v8655 = vpack.c.bf16 %v8414, %v8414
  %v8656 = vpack.c.bf16 %v8415, %v8415
  %v8657 = vpack.c.bf16 %v8416, %v8416
  %v8658 = vpack.c.bf16 %v8417, %v8417
  %v8659 = vpack.c.bf16 %v8418, %v8418
  %v8660 = vpack.c.bf16 %v8419, %v8419
  %v8661 = vpack.c.bf16 %v8420, %v8420
  %v8662 = vpack.c.bf16 %v8421, %v8421
  %v8663 = vpack.c.bf16 %v8422, %v8422
  %v8664 = vpack.c.bf16 %v8423, %v8423
  %v8665 = vpack.c.bf16 %v8424, %v8424
  %v8666 = vpack.c.bf16 %v8425, %v8425
  %v8667 = vpack.c.bf16 %v8426, %v8426
  %v8668 = vpack.c.bf16 %v8427, %v8427
  %v8669 = vpack.c.bf16 %v8428, %v8428
  %v8670 = vpack.c.bf16 %v8429, %v8429
  %v8671 = vpack.c.bf16 %v8430, %v8430
  %v8672 = vpack.c.bf16 %v8431, %v8431
  %v8673 = vpack.c.bf16 %v8432, %v8432
  %v8674 = vpack.c.bf16 %v8433, %v8433
  %v8675 = vpack.c.bf16 %v8434, %v8434
  %v8676 = vpack.c.bf16 %v8435, %v8435
  %v8677 = vpack.c.bf16 %v8436, %v8436
  %v8678 = vpack.c.bf16 %v8437, %v8437
  %v8679 = vpack.c.bf16 %v8438, %v8438
  %v8680 = vpack.c.bf16 %v8439, %v8439
  %v8681 = vpack.c.bf16 %v8440, %v8440
  %v8682 = vpack.c.bf16 %v8441, %v8441
  %v8683 = vpack.c.bf16 %v8442, %v8442
  %v8684 = vpack.c.bf16 %v8443, %v8443
  %v8685 = vpack.c.bf16 %v8444, %v8444
  %v8686 = vpack.c.bf16 %v8445, %v8445
  %v8687 = vpack.c.bf16 %v8446, %v8446
  %v8688 = vpack.c.bf16 %v8447, %v8447
  %v8689 = vpack.c.bf16 %v8448, %v8448
  %v8690 = vpack.c.bf16 %v8449, %v8449
  %v8691 = vpack.c.bf16 %v8450, %v8450
  %v8692 = vpack.c.bf16 %v8451, %v8451
  %v8693 = vpack.c.bf16 %v8452, %v8452
  %v8694 = vpack.c.bf16 %v8453, %v8453
  %v8695 = vpack.c.bf16 %v8454, %v8454
  %v8696 = vpack.c.bf16 %v8455, %v8455
  %v8697 = vpack.c.bf16 %v8456, %v8456
  %v8698 = vpack.c.bf16 %v8457, %v8457
  %v8699 = vpack.c.bf16 %v8458, %v8458
  %v8700 = vpack.c.bf16 %v8459, %v8459
  %v8701 = vpack.c.bf16 %v8460, %v8460
  %v8702 = vpack.c.bf16 %v8461, %v8461
  %v8703 = vpack.c.bf16 %v8462, %v8462
  %v8704 = vpack.c.bf16 %v8463, %v8463
  %v8705 = vpack.c.bf16 %v8464, %v8464
  %v8706 = vpack.c.bf16 %v8465, %v8465
  %v8707 = vpack.c.bf16 %v8466, %v8466
  %v8708 = vpack.c.bf16 %v8467, %v8467
  %v8709 = vpack.c.bf16 %v8468, %v8468
  %v8710 = vpack.c.bf16 %v8469, %v8469
  %v8711 = vpack.c.bf16 %v8470, %v8470
  %v8712 = vpack.c.bf16 %v8471, %v8471
  %v8713 = vpack.c.bf16 %v8472, %v8472
  %v8714 = vpack.c.bf16 %v8473, %v8473
  %v8715 = vpack.c.bf16 %v8474, %v8474
  %v8716 = vpack.c.bf16 %v8475, %v8475
  %v8717 = vpack.c.bf16 %v8476, %v8476
  %v8718 = vpack.c.bf16 %v8477, %v8477
  %v8719 = vpack.c.bf16 %v8478, %v8478
  %v8720 = vpack.c.bf16 %v8479, %v8479
  %v8721 = vpack.c.bf16 %v8480, %v8480
  %v8722 = vpack.c.bf16 %v8481, %v8481
  %v8723 = vpack.c.bf16 %v8482, %v8482
  %v8724 = vpack.c.bf16 %v8483, %v8483
  %v8725 = vpack.c.bf16 %v8484, %v8484
  %v8726 = vpack.c.bf16 %v8485, %v8485
  %vm8727 = vcmask 257024
  %8728 = vst.msk [vmem:[%s3] sm:$0xf] %vm8727, %v8486
  %8729 = vst.msk [vmem:[%s3 + $0x4] sm:$0xf] %vm8727, %v8487
  %8730 = vst.msk [vmem:[%s3 + $0x8] sm:$0xf] %vm8727, %v8488
  %8731 = vst.msk [vmem:[%s3 + $0xc] sm:$0xf] %vm8727, %v8489
  %8732 = vst.msk [vmem:[%s3 + $0x10] sm:$0xf] %vm8727, %v8490
  %8733 = vst.msk [vmem:[%s3 + $0x14] sm:$0xf] %vm8727, %v8491
  %8734 = vst.msk [vmem:[%s3 + $0x18] sm:$0xf] %vm8727, %v8492
  %8735 = vst.msk [vmem:[%s3 + $0x1c] sm:$0xf] %vm8727, %v8493
  %8736 = vst.msk [vmem:[%s3 + $0x20] sm:$0xf] %vm8727, %v8494
  %8737 = vst.msk [vmem:[%s3 + $0x24] sm:$0xf] %vm8727, %v8495
  %8738 = vst.msk [vmem:[%s3 + $0x28] sm:$0xf] %vm8727, %v8496
  %8739 = vst.msk [vmem:[%s3 + $0x2c] sm:$0xf] %vm8727, %v8497
  %8740 = vst.msk [vmem:[%s3 + $0x30] sm:$0xf] %vm8727, %v8498
  %8741 = vst.msk [vmem:[%s3 + $0x34] sm:$0xf] %vm8727, %v8499
  %8742 = vst.msk [vmem:[%s3 + $0x38] sm:$0xf] %vm8727, %v8500
  %8743 = vst.msk [vmem:[%s3 + $0x3c] sm:$0xf] %vm8727, %v8501
  %8744 = vst.msk [vmem:[%s3 + $0x40] sm:$0xf] %vm8727, %v8502
  %8745 = vst.msk [vmem:[%s3 + $0x44] sm:$0xf] %vm8727, %v8503
  %8746 = vst.msk [vmem:[%s3 + $0x48] sm:$0xf] %vm8727, %v8504
  %8747 = vst.msk [vmem:[%s3 + $0x4c] sm:$0xf] %vm8727, %v8505
  %8748 = vst.msk [vmem:[%s3 + $0x50] sm:$0xf] %vm8727, %v8506
  %8749 = vst.msk [vmem:[%s3 + $0x54] sm:$0xf] %vm8727, %v8507
  %8750 = vst.msk [vmem:[%s3 + $0x58] sm:$0xf] %vm8727, %v8508
  %8751 = vst.msk [vmem:[%s3 + $0x5c] sm:$0xf] %vm8727, %v8509
  %8752 = vst.msk [vmem:[%s3 + $0x60] sm:$0xf] %vm8727, %v8510
  %8753 = vst.msk [vmem:[%s3 + $0x64] sm:$0xf] %vm8727, %v8511
  %8754 = vst.msk [vmem:[%s3 + $0x68] sm:$0xf] %vm8727, %v8512
  %8755 = vst.msk [vmem:[%s3 + $0x6c] sm:$0xf] %vm8727, %v8513
  %8756 = vst.msk [vmem:[%s3 + $0x70] sm:$0xf] %vm8727, %v8514
  %8757 = vst.msk [vmem:[%s3 + $0x74] sm:$0xf] %vm8727, %v8515
  %8758 = vst.msk [vmem:[%s3 + $0x78] sm:$0xf] %vm8727, %v8516
  %8759 = vst.msk [vmem:[%s3 + $0x7c] sm:$0xf] %vm8727, %v8517
  %8760 = vst.msk [vmem:[%s3 + $0x80] sm:$0xf] %vm8727, %v8518
  %8761 = vst.msk [vmem:[%s3 + $0x84] sm:$0xf] %vm8727, %v8519
  %8762 = vst.msk [vmem:[%s3 + $0x88] sm:$0xf] %vm8727, %v8520
  %8763 = vst.msk [vmem:[%s3 + $0x8c] sm:$0xf] %vm8727, %v8521
  %8764 = vst.msk [vmem:[%s3 + $0x90] sm:$0xf] %vm8727, %v8522
  %8765 = vst.msk [vmem:[%s3 + $0x94] sm:$0xf] %vm8727, %v8523
  %8766 = vst.msk [vmem:[%s3 + $0x98] sm:$0xf] %vm8727, %v8524
  %8767 = vst.msk [vmem:[%s3 + $0x9c] sm:$0xf] %vm8727, %v8525
  %8768 = vst.msk [vmem:[%s3 + $0xa0] sm:$0xf] %vm8727, %v8526
  %8769 = vst.msk [vmem:[%s3 + $0xa4] sm:$0xf] %vm8727, %v8527
  %8770 = vst.msk [vmem:[%s3 + $0xa8] sm:$0xf] %vm8727, %v8528
  %8771 = vst.msk [vmem:[%s3 + $0xac] sm:$0xf] %vm8727, %v8529
  %8772 = vst.msk [vmem:[%s3 + $0xb0] sm:$0xf] %vm8727, %v8530
  %8773 = vst.msk [vmem:[%s3 + $0xb4] sm:$0xf] %vm8727, %v8531
  %8774 = vst.msk [vmem:[%s3 + $0xb8] sm:$0xf] %vm8727, %v8532
  %8775 = vst.msk [vmem:[%s3 + $0xbc] sm:$0xf] %vm8727, %v8533
  %8776 = vst.msk [vmem:[%s3 + $0xc0] sm:$0xf] %vm8727, %v8534
  %8777 = vst.msk [vmem:[%s3 + $0xc4] sm:$0xf] %vm8727, %v8535
  %8778 = vst.msk [vmem:[%s3 + $0xc8] sm:$0xf] %vm8727, %v8536
  %8779 = vst.msk [vmem:[%s3 + $0xcc] sm:$0xf] %vm8727, %v8537
  %8780 = vst.msk [vmem:[%s3 + $0xd0] sm:$0xf] %vm8727, %v8538
  %8781 = vst.msk [vmem:[%s3 + $0xd4] sm:$0xf] %vm8727, %v8539
  %8782 = vst.msk [vmem:[%s3 + $0xd8] sm:$0xf] %vm8727, %v8540
  %8783 = vst.msk [vmem:[%s3 + $0xdc] sm:$0xf] %vm8727, %v8541
  %8784 = vst.msk [vmem:[%s3 + $0xe0] sm:$0xf] %vm8727, %v8542
  %8785 = vst.msk [vmem:[%s3 + $0xe4] sm:$0xf] %vm8727, %v8543
  %8786 = vst.msk [vmem:[%s3 + $0xe8] sm:$0xf] %vm8727, %v8544
  %8787 = vst.msk [vmem:[%s3 + $0xec] sm:$0xf] %vm8727, %v8545
  %8788 = vst.msk [vmem:[%s3 + $0xf0] sm:$0xf] %vm8727, %v8546
  %8789 = vst.msk [vmem:[%s3 + $0xf4] sm:$0xf] %vm8727, %v8547
  %8790 = vst.msk [vmem:[%s3 + $0xf8] sm:$0xf] %vm8727, %v8548
  %8791 = vst.msk [vmem:[%s3 + $0xfc] sm:$0xf] %vm8727, %v8549
  %8792 = vst.msk [vmem:[%s3 + $0x100] sm:$0xf] %vm8727, %v8550
  %8793 = vst.msk [vmem:[%s3 + $0x104] sm:$0xf] %vm8727, %v8551
  %8794 = vst.msk [vmem:[%s3 + $0x108] sm:$0xf] %vm8727, %v8552
  %8795 = vst.msk [vmem:[%s3 + $0x10c] sm:$0xf] %vm8727, %v8553
  %8796 = vst.msk [vmem:[%s3 + $0x110] sm:$0xf] %vm8727, %v8554
  %8797 = vst.msk [vmem:[%s3 + $0x114] sm:$0xf] %vm8727, %v8555
  %8798 = vst.msk [vmem:[%s3 + $0x118] sm:$0xf] %vm8727, %v8556
  %8799 = vst.msk [vmem:[%s3 + $0x11c] sm:$0xf] %vm8727, %v8557
  %8800 = vst.msk [vmem:[%s3 + $0x120] sm:$0xf] %vm8727, %v8558
  %8801 = vst.msk [vmem:[%s3 + $0x124] sm:$0xf] %vm8727, %v8559
  %8802 = vst.msk [vmem:[%s3 + $0x128] sm:$0xf] %vm8727, %v8560
  %8803 = vst.msk [vmem:[%s3 + $0x12c] sm:$0xf] %vm8727, %v8561
  %8804 = vst.msk [vmem:[%s3 + $0x130] sm:$0xf] %vm8727, %v8562
  %8805 = vst.msk [vmem:[%s3 + $0x134] sm:$0xf] %vm8727, %v8563
  %8806 = vst.msk [vmem:[%s3 + $0x138] sm:$0xf] %vm8727, %v8564
  %8807 = vst.msk [vmem:[%s3 + $0x13c] sm:$0xf] %vm8727, %v8565
  %8808 = vst.msk [vmem:[%s3 + $0x140] sm:$0xf] %vm8727, %v8566
  %8809 = vst.msk [vmem:[%s3 + $0x144] sm:$0xf] %vm8727, %v8567
  %8810 = vst.msk [vmem:[%s3 + $0x148] sm:$0xf] %vm8727, %v8568
  %8811 = vst.msk [vmem:[%s3 + $0x14c] sm:$0xf] %vm8727, %v8569
  %8812 = vst.msk [vmem:[%s3 + $0x150] sm:$0xf] %vm8727, %v8570
  %8813 = vst.msk [vmem:[%s3 + $0x154] sm:$0xf] %vm8727, %v8571
  %8814 = vst.msk [vmem:[%s3 + $0x158] sm:$0xf] %vm8727, %v8572
  %8815 = vst.msk [vmem:[%s3 + $0x15c] sm:$0xf] %vm8727, %v8573
  %8816 = vst.msk [vmem:[%s3 + $0x160] sm:$0xf] %vm8727, %v8574
  %8817 = vst.msk [vmem:[%s3 + $0x164] sm:$0xf] %vm8727, %v8575
  %8818 = vst.msk [vmem:[%s3 + $0x168] sm:$0xf] %vm8727, %v8576
  %8819 = vst.msk [vmem:[%s3 + $0x16c] sm:$0xf] %vm8727, %v8577
  %8820 = vst.msk [vmem:[%s3 + $0x170] sm:$0xf] %vm8727, %v8578
  %8821 = vst.msk [vmem:[%s3 + $0x174] sm:$0xf] %vm8727, %v8579
  %8822 = vst.msk [vmem:[%s3 + $0x178] sm:$0xf] %vm8727, %v8580
  %8823 = vst.msk [vmem:[%s3 + $0x17c] sm:$0xf] %vm8727, %v8581
  %8824 = vst.msk [vmem:[%s3 + $0x180] sm:$0xf] %vm8727, %v8582
  %8825 = vst.msk [vmem:[%s3 + $0x184] sm:$0xf] %vm8727, %v8583
  %8826 = vst.msk [vmem:[%s3 + $0x188] sm:$0xf] %vm8727, %v8584
  %8827 = vst.msk [vmem:[%s3 + $0x18c] sm:$0xf] %vm8727, %v8585
  %8828 = vst.msk [vmem:[%s3 + $0x190] sm:$0xf] %vm8727, %v8586
  %8829 = vst.msk [vmem:[%s3 + $0x194] sm:$0xf] %vm8727, %v8587
  %8830 = vst.msk [vmem:[%s3 + $0x198] sm:$0xf] %vm8727, %v8588
  %8831 = vst.msk [vmem:[%s3 + $0x19c] sm:$0xf] %vm8727, %v8589
  %8832 = vst.msk [vmem:[%s3 + $0x1a0] sm:$0xf] %vm8727, %v8590
  %8833 = vst.msk [vmem:[%s3 + $0x1a4] sm:$0xf] %vm8727, %v8591
  %8834 = vst.msk [vmem:[%s3 + $0x1a8] sm:$0xf] %vm8727, %v8592
  %8835 = vst.msk [vmem:[%s3 + $0x1ac] sm:$0xf] %vm8727, %v8593
  %8836 = vst.msk [vmem:[%s3 + $0x1b0] sm:$0xf] %vm8727, %v8594
  %8837 = vst.msk [vmem:[%s3 + $0x1b4] sm:$0xf] %vm8727, %v8595
  %8838 = vst.msk [vmem:[%s3 + $0x1b8] sm:$0xf] %vm8727, %v8596
  %8839 = vst.msk [vmem:[%s3 + $0x1bc] sm:$0xf] %vm8727, %v8597
  %8840 = vst.msk [vmem:[%s3 + $0x1c0] sm:$0xf] %vm8727, %v8598
  %8841 = vst.msk [vmem:[%s3 + $0x1c4] sm:$0xf] %vm8727, %v8599
  %8842 = vst.msk [vmem:[%s3 + $0x1c8] sm:$0xf] %vm8727, %v8600
  %8843 = vst.msk [vmem:[%s3 + $0x1cc] sm:$0xf] %vm8727, %v8601
  %8844 = vst.msk [vmem:[%s3 + $0x1d0] sm:$0xf] %vm8727, %v8602
  %8845 = vst.msk [vmem:[%s3 + $0x1d4] sm:$0xf] %vm8727, %v8603
  %8846 = vst.msk [vmem:[%s3 + $0x1d8] sm:$0xf] %vm8727, %v8604
  %8847 = vst.msk [vmem:[%s3 + $0x1dc] sm:$0xf] %vm8727, %v8605
  %8848 = vst.msk [vmem:[%s3 + $0x1e0] sm:$0xf] %vm8727, %v8606
  %8849 = vst.msk [vmem:[%s3 + $0x1e4] sm:$0xf] %vm8727, %v8607
  %8850 = vst.msk [vmem:[%s3 + $0x1e8] sm:$0xf] %vm8727, %v8608
  %8851 = vst.msk [vmem:[%s3 + $0x1ec] sm:$0xf] %vm8727, %v8609
  %8852 = vst.msk [vmem:[%s3 + $0x1f0] sm:$0xf] %vm8727, %v8610
  %8853 = vst.msk [vmem:[%s3 + $0x1f4] sm:$0xf] %vm8727, %v8611
  %8854 = vst.msk [vmem:[%s3 + $0x1f8] sm:$0xf] %vm8727, %v8612
  %8855 = vst.msk [vmem:[%s3 + $0x1fc] sm:$0xf] %vm8727, %v8613
  %8856 = vst.msk [vmem:[%s3 + $0x200] sm:$0xf] %vm8727, %v8614
  %8857 = vst.msk [vmem:[%s3 + $0x204] sm:$0xf] %vm8727, %v8615
  %8858 = vst.msk [vmem:[%s3 + $0x208] sm:$0xf] %vm8727, %v8616
  %8859 = vst.msk [vmem:[%s3 + $0x20c] sm:$0xf] %vm8727, %v8617
  %8860 = vst.msk [vmem:[%s3 + $0x210] sm:$0xf] %vm8727, %v8618
  %8861 = vst.msk [vmem:[%s3 + $0x214] sm:$0xf] %vm8727, %v8619
  %8862 = vst.msk [vmem:[%s3 + $0x218] sm:$0xf] %vm8727, %v8620
  %8863 = vst.msk [vmem:[%s3 + $0x21c] sm:$0xf] %vm8727, %v8621
  %8864 = vst.msk [vmem:[%s3 + $0x220] sm:$0xf] %vm8727, %v8622
  %8865 = vst.msk [vmem:[%s3 + $0x224] sm:$0xf] %vm8727, %v8623
  %8866 = vst.msk [vmem:[%s3 + $0x228] sm:$0xf] %vm8727, %v8624
  %8867 = vst.msk [vmem:[%s3 + $0x22c] sm:$0xf] %vm8727, %v8625
  %8868 = vst.msk [vmem:[%s3 + $0x230] sm:$0xf] %vm8727, %v8626
  %8869 = vst.msk [vmem:[%s3 + $0x234] sm:$0xf] %vm8727, %v8627
  %8870 = vst.msk [vmem:[%s3 + $0x238] sm:$0xf] %vm8727, %v8628
  %8871 = vst.msk [vmem:[%s3 + $0x23c] sm:$0xf] %vm8727, %v8629
  %8872 = vst.msk [vmem:[%s3 + $0x240] sm:$0xf] %vm8727, %v8630
  %8873 = vst.msk [vmem:[%s3 + $0x244] sm:$0xf] %vm8727, %v8631
  %8874 = vst.msk [vmem:[%s3 + $0x248] sm:$0xf] %vm8727, %v8632
  %8875 = vst.msk [vmem:[%s3 + $0x24c] sm:$0xf] %vm8727, %v8633
  %8876 = vst.msk [vmem:[%s3 + $0x250] sm:$0xf] %vm8727, %v8634
  %8877 = vst.msk [vmem:[%s3 + $0x254] sm:$0xf] %vm8727, %v8635
  %8878 = vst.msk [vmem:[%s3 + $0x258] sm:$0xf] %vm8727, %v8636
  %8879 = vst.msk [vmem:[%s3 + $0x25c] sm:$0xf] %vm8727, %v8637
  %8880 = vst.msk [vmem:[%s3 + $0x260] sm:$0xf] %vm8727, %v8638
  %8881 = vst.msk [vmem:[%s3 + $0x264] sm:$0xf] %vm8727, %v8639
  %8882 = vst.msk [vmem:[%s3 + $0x268] sm:$0xf] %vm8727, %v8640
  %8883 = vst.msk [vmem:[%s3 + $0x26c] sm:$0xf] %vm8727, %v8641
  %8884 = vst.msk [vmem:[%s3 + $0x270] sm:$0xf] %vm8727, %v8642
  %8885 = vst.msk [vmem:[%s3 + $0x274] sm:$0xf] %vm8727, %v8643
  %8886 = vst.msk [vmem:[%s3 + $0x278] sm:$0xf] %vm8727, %v8644
  %8887 = vst.msk [vmem:[%s3 + $0x27c] sm:$0xf] %vm8727, %v8645
  %8888 = vst.msk [vmem:[%s3 + $0x280] sm:$0xf] %vm8727, %v8646
  %8889 = vst.msk [vmem:[%s3 + $0x284] sm:$0xf] %vm8727, %v8647
  %8890 = vst.msk [vmem:[%s3 + $0x288] sm:$0xf] %vm8727, %v8648
  %8891 = vst.msk [vmem:[%s3 + $0x28c] sm:$0xf] %vm8727, %v8649
  %8892 = vst.msk [vmem:[%s3 + $0x290] sm:$0xf] %vm8727, %v8650
  %8893 = vst.msk [vmem:[%s3 + $0x294] sm:$0xf] %vm8727, %v8651
  %8894 = vst.msk [vmem:[%s3 + $0x298] sm:$0xf] %vm8727, %v8652
  %8895 = vst.msk [vmem:[%s3 + $0x29c] sm:$0xf] %vm8727, %v8653
  %8896 = vst.msk [vmem:[%s3 + $0x2a0] sm:$0xf] %vm8727, %v8654
  %8897 = vst.msk [vmem:[%s3 + $0x2a4] sm:$0xf] %vm8727, %v8655
  %8898 = vst.msk [vmem:[%s3 + $0x2a8] sm:$0xf] %vm8727, %v8656
  %8899 = vst.msk [vmem:[%s3 + $0x2ac] sm:$0xf] %vm8727, %v8657
  %8900 = vst.msk [vmem:[%s3 + $0x2b0] sm:$0xf] %vm8727, %v8658
  %8901 = vst.msk [vmem:[%s3 + $0x2b4] sm:$0xf] %vm8727, %v8659
  %8902 = vst.msk [vmem:[%s3 + $0x2b8] sm:$0xf] %vm8727, %v8660
  %8903 = vst.msk [vmem:[%s3 + $0x2bc] sm:$0xf] %vm8727, %v8661
  %8904 = vst.msk [vmem:[%s3 + $0x2c0] sm:$0xf] %vm8727, %v8662
  %8905 = vst.msk [vmem:[%s3 + $0x2c4] sm:$0xf] %vm8727, %v8663
  %8906 = vst.msk [vmem:[%s3 + $0x2c8] sm:$0xf] %vm8727, %v8664
  %8907 = vst.msk [vmem:[%s3 + $0x2cc] sm:$0xf] %vm8727, %v8665
  %8908 = vst.msk [vmem:[%s3 + $0x2d0] sm:$0xf] %vm8727, %v8666
  %8909 = vst.msk [vmem:[%s3 + $0x2d4] sm:$0xf] %vm8727, %v8667
  %8910 = vst.msk [vmem:[%s3 + $0x2d8] sm:$0xf] %vm8727, %v8668
  %8911 = vst.msk [vmem:[%s3 + $0x2dc] sm:$0xf] %vm8727, %v8669
  %8912 = vst.msk [vmem:[%s3 + $0x2e0] sm:$0xf] %vm8727, %v8670
  %8913 = vst.msk [vmem:[%s3 + $0x2e4] sm:$0xf] %vm8727, %v8671
  %8914 = vst.msk [vmem:[%s3 + $0x2e8] sm:$0xf] %vm8727, %v8672
  %8915 = vst.msk [vmem:[%s3 + $0x2ec] sm:$0xf] %vm8727, %v8673
  %8916 = vst.msk [vmem:[%s3 + $0x2f0] sm:$0xf] %vm8727, %v8674
  %8917 = vst.msk [vmem:[%s3 + $0x2f4] sm:$0xf] %vm8727, %v8675
  %8918 = vst.msk [vmem:[%s3 + $0x2f8] sm:$0xf] %vm8727, %v8676
  %8919 = vst.msk [vmem:[%s3 + $0x2fc] sm:$0xf] %vm8727, %v8677
  %8920 = vst.msk [vmem:[%s3 + $0x300] sm:$0xf] %vm8727, %v8678
  %8921 = vst.msk [vmem:[%s3 + $0x304] sm:$0xf] %vm8727, %v8679
  %8922 = vst.msk [vmem:[%s3 + $0x308] sm:$0xf] %vm8727, %v8680
  %8923 = vst.msk [vmem:[%s3 + $0x30c] sm:$0xf] %vm8727, %v8681
  %8924 = vst.msk [vmem:[%s3 + $0x310] sm:$0xf] %vm8727, %v8682
  %8925 = vst.msk [vmem:[%s3 + $0x314] sm:$0xf] %vm8727, %v8683
  %8926 = vst.msk [vmem:[%s3 + $0x318] sm:$0xf] %vm8727, %v8684
  %8927 = vst.msk [vmem:[%s3 + $0x31c] sm:$0xf] %vm8727, %v8685
  %8928 = vst.msk [vmem:[%s3 + $0x320] sm:$0xf] %vm8727, %v8686
  %8929 = vst.msk [vmem:[%s3 + $0x324] sm:$0xf] %vm8727, %v8687
  %8930 = vst.msk [vmem:[%s3 + $0x328] sm:$0xf] %vm8727, %v8688
  %8931 = vst.msk [vmem:[%s3 + $0x32c] sm:$0xf] %vm8727, %v8689
  %8932 = vst.msk [vmem:[%s3 + $0x330] sm:$0xf] %vm8727, %v8690
  %8933 = vst.msk [vmem:[%s3 + $0x334] sm:$0xf] %vm8727, %v8691
  %8934 = vst.msk [vmem:[%s3 + $0x338] sm:$0xf] %vm8727, %v8692
  %8935 = vst.msk [vmem:[%s3 + $0x33c] sm:$0xf] %vm8727, %v8693
  %8936 = vst.msk [vmem:[%s3 + $0x340] sm:$0xf] %vm8727, %v8694
  %8937 = vst.msk [vmem:[%s3 + $0x344] sm:$0xf] %vm8727, %v8695
  %8938 = vst.msk [vmem:[%s3 + $0x348] sm:$0xf] %vm8727, %v8696
  %8939 = vst.msk [vmem:[%s3 + $0x34c] sm:$0xf] %vm8727, %v8697
  %8940 = vst.msk [vmem:[%s3 + $0x350] sm:$0xf] %vm8727, %v8698
  %8941 = vst.msk [vmem:[%s3 + $0x354] sm:$0xf] %vm8727, %v8699
  %8942 = vst.msk [vmem:[%s3 + $0x358] sm:$0xf] %vm8727, %v8700
  %8943 = vst.msk [vmem:[%s3 + $0x35c] sm:$0xf] %vm8727, %v8701
  %8944 = vst.msk [vmem:[%s3 + $0x360] sm:$0xf] %vm8727, %v8702
  %8945 = vst.msk [vmem:[%s3 + $0x364] sm:$0xf] %vm8727, %v8703
  %8946 = vst.msk [vmem:[%s3 + $0x368] sm:$0xf] %vm8727, %v8704
  %8947 = vst.msk [vmem:[%s3 + $0x36c] sm:$0xf] %vm8727, %v8705
  %8948 = vst.msk [vmem:[%s3 + $0x370] sm:$0xf] %vm8727, %v8706
  %8949 = vst.msk [vmem:[%s3 + $0x374] sm:$0xf] %vm8727, %v8707
  %8950 = vst.msk [vmem:[%s3 + $0x378] sm:$0xf] %vm8727, %v8708
  %8951 = vst.msk [vmem:[%s3 + $0x37c] sm:$0xf] %vm8727, %v8709
  %8952 = vst.msk [vmem:[%s3 + $0x380] sm:$0xf] %vm8727, %v8710
  %8953 = vst.msk [vmem:[%s3 + $0x384] sm:$0xf] %vm8727, %v8711
  %8954 = vst.msk [vmem:[%s3 + $0x388] sm:$0xf] %vm8727, %v8712
  %8955 = vst.msk [vmem:[%s3 + $0x38c] sm:$0xf] %vm8727, %v8713
  %8956 = vst.msk [vmem:[%s3 + $0x390] sm:$0xf] %vm8727, %v8714
  %8957 = vst.msk [vmem:[%s3 + $0x394] sm:$0xf] %vm8727, %v8715
  %8958 = vst.msk [vmem:[%s3 + $0x398] sm:$0xf] %vm8727, %v8716
  %8959 = vst.msk [vmem:[%s3 + $0x39c] sm:$0xf] %vm8727, %v8717
  %8960 = vst.msk [vmem:[%s3 + $0x3a0] sm:$0xf] %vm8727, %v8718
  %8961 = vst.msk [vmem:[%s3 + $0x3a4] sm:$0xf] %vm8727, %v8719
  %8962 = vst.msk [vmem:[%s3 + $0x3a8] sm:$0xf] %vm8727, %v8720
  %8963 = vst.msk [vmem:[%s3 + $0x3ac] sm:$0xf] %vm8727, %v8721
  %8964 = vst.msk [vmem:[%s3 + $0x3b0] sm:$0xf] %vm8727, %v8722
  %8965 = vst.msk [vmem:[%s3 + $0x3b4] sm:$0xf] %vm8727, %v8723
  %8966 = vst.msk [vmem:[%s3 + $0x3b8] sm:$0xf] %vm8727, %v8724
  %8967 = vst.msk [vmem:[%s3 + $0x3bc] sm:$0xf] %vm8727, %v8725
  %8968 = vst.msk [vmem:[%s3 + $0x3c0] sm:$0xf] %vm8727, %v8726
  // Predicated region
  $region14: #{convnet4_forward.4} parent=0 // pred_check
    _
  $region15: #{convnet4_forward.4} parent=0 // pred_check_branch
    %8970 = sbr.rel (0) target = $region17
  $region16: #{convnet4_forward.4} parent=0 // pred_region
    _
  $region17: #{convnet4_forward.4} parent=0 // pred_fallthru
    _
  // Predicated region
  $region18: #{convnet4_forward.4} parent=0 // pred_check
    _
  $region19: #{convnet4_forward.4} parent=0 // pred_check_branch
    %8972 = sbr.rel (0) target = $region21
  $region20: #{convnet4_forward.4} parent=0 // pred_region
    _
  $region21: #{convnet4_forward.4} parent=0 // pred_fallthru
    _

// kernel: convnet4_forward.5
$region0: #{convnet4_forward.5}
  #allocation0 [shape = 'u32[]', space=smem, size = 0x4, offset = 0x4, fixed_abs, tag = 'smem constant byte address 0x4 - core index']
  #allocation1 [shape = 'u32[72,128]{1,0:T(1,128)}', space=vmem, size = 0x9000, scoped, tag = 'internal scratch']
  %s0 = inlined_call_operand.vmem [shape: bf16[1568,288], index: 0, kind: input, shape index: {}]
  %s1 = inlined_call_operand.vmem [shape: bf16[288,32], index: 1, kind: input, shape index: {}]
  %s2 = inlined_call_operand.vmem [shape: f32[1,32], index: 2, kind: input, shape index: {}]
  %s3 = inlined_call_operand.vmem [shape: bf16[392,32], index: 3, kind: output, shape index: {}]
  %s4 = sld [smem:[#allocation0]]
  $region22: #{convnet4_forward.5} parent=0
    _
  %s6 = ssub.s32 1, %s4
  %s7 = scalar_select 0, %s6, %s4
  // Predicated region
  $region2: #{convnet4_forward.5} parent=0 // pred_check
    _
  $region3: #{convnet4_forward.5} parent=0 // pred_check_branch
    %9 = sbr.rel (0) target = $region5
  $region4: #{convnet4_forward.5} parent=0 // pred_region
    _
  $region5: #{convnet4_forward.5} parent=0 // pred_fallthru
    _
  // Predicated region
  $region6: #{convnet4_forward.5} parent=0 // pred_check
    _
  $region7: #{convnet4_forward.5} parent=0 // pred_check_branch
    %11 = sbr.rel (0) target = $region9
  $region8: #{convnet4_forward.5} parent=0 // pred_region
    _
  $region9: #{convnet4_forward.5} parent=0 // pred_fallthru
    _
  // Predicated region
  $region10: #{convnet4_forward.5} parent=0 // pred_check
    _
  $region11: #{convnet4_forward.5} parent=0 // pred_check_branch
    %13 = sbr.rel (0) target = $region13
  $region12: #{convnet4_forward.5} parent=0 // pred_region
    _
  $region13: #{convnet4_forward.5} parent=0 // pred_fallthru
    _
  %v15 = vld [vmem:[%s0] sm:$0xff]
  %v16 = vld [vmem:[%s0 + $0x8] sm:$0xf]
  %v17 = vld [vmem:[%s0 + $0xc] sm:$0xff]
  %v18 = vld [vmem:[%s0 + $0x14] sm:$0xf]
  %v19 = vld [vmem:[%s0 + $0x18] sm:$0xff]
  %v20 = vld [vmem:[%s0 + $0x20] sm:$0xf]
  %v21 = vld [vmem:[%s0 + $0x24] sm:$0xff]
  %v22 = vld [vmem:[%s0 + $0x2c] sm:$0xf]
  %v23 = vld [vmem:[%s0 + $0x30] sm:$0xff]
  %v24 = vld [vmem:[%s0 + $0x38] sm:$0xf]
  %v25 = vld [vmem:[%s0 + $0x3c] sm:$0xff]
  %v26 = vld [vmem:[%s0 + $0x44] sm:$0xf]
  %v27 = vld [vmem:[%s0 + $0x48] sm:$0xff]
  %v28 = vld [vmem:[%s0 + $0x50] sm:$0xf]
  %v29 = vld [vmem:[%s0 + $0x54] sm:$0xff]
  %v30 = vld [vmem:[%s0 + $0x5c] sm:$0xf]
  %v31 = vld [vmem:[%s0 + $0x60] sm:$0xff]
  %v32 = vld [vmem:[%s0 + $0x68] sm:$0xf]
  %v33 = vld [vmem:[%s0 + $0x6c] sm:$0xff]
  %v34 = vld [vmem:[%s0 + $0x74] sm:$0xf]
  %v35 = vld [vmem:[%s0 + $0x78] sm:$0xff]
  %v36 = vld [vmem:[%s0 + $0x80] sm:$0xf]
  %v37 = vld [vmem:[%s0 + $0x84] sm:$0xff]
  %v38 = vld [vmem:[%s0 + $0x8c] sm:$0xf]
  %v39 = vld [vmem:[%s0 + $0x90] sm:$0xff]
  %v40 = vld [vmem:[%s0 + $0x98] sm:$0xf]
  %v41 = vld [vmem:[%s0 + $0x9c] sm:$0xff]
  %v42 = vld [vmem:[%s0 + $0xa4] sm:$0xf]
  %v43 = vld [vmem:[%s0 + $0xa8] sm:$0xff]
  %v44 = vld [vmem:[%s0 + $0xb0] sm:$0xf]
  %v45 = vld [vmem:[%s0 + $0xb4] sm:$0xff]
  %v46 = vld [vmem:[%s0 + $0xbc] sm:$0xf]
  %v47 = vld [vmem:[%s0 + $0xc0] sm:$0xff]
  %v48 = vld [vmem:[%s0 + $0xc8] sm:$0xf]
  %v49 = vld [vmem:[%s0 + $0xcc] sm:$0xff]
  %v50 = vld [vmem:[%s0 + $0xd4] sm:$0xf]
  %v51 = vld [vmem:[%s0 + $0xd8] sm:$0xff]
  %v52 = vld [vmem:[%s0 + $0xe0] sm:$0xf]
  %v53 = vld [vmem:[%s0 + $0xe4] sm:$0xff]
  %v54 = vld [vmem:[%s0 + $0xec] sm:$0xf]
  %v55 = vld [vmem:[%s0 + $0xf0] sm:$0xff]
  %v56 = vld [vmem:[%s0 + $0xf8] sm:$0xf]
  %v57 = vld [vmem:[%s0 + $0xfc] sm:$0xff]
  %v58 = vld [vmem:[%s0 + $0x104] sm:$0xf]
  %v59 = vld [vmem:[%s0 + $0x108] sm:$0xff]
  %v60 = vld [vmem:[%s0 + $0x110] sm:$0xf]
  %v61 = vld [vmem:[%s0 + $0x114] sm:$0xff]
  %v62 = vld [vmem:[%s0 + $0x11c] sm:$0xf]
  %v63 = vld [vmem:[%s0 + $0x120] sm:$0xff]
  %v64 = vld [vmem:[%s0 + $0x128] sm:$0xf]
  %v65 = vld [vmem:[%s0 + $0x12c] sm:$0xff]
  %v66 = vld [vmem:[%s0 + $0x134] sm:$0xf]
  %v67 = vld [vmem:[%s0 + $0x138] sm:$0xff]
  %v68 = vld [vmem:[%s0 + $0x140] sm:$0xf]
  %v69 = vld [vmem:[%s0 + $0x144] sm:$0xff]
  %v70 = vld [vmem:[%s0 + $0x14c] sm:$0xf]
  %v71 = vld [vmem:[%s0 + $0x150] sm:$0xff]
  %v72 = vld [vmem:[%s0 + $0x158] sm:$0xf]
  %v73 = vld [vmem:[%s0 + $0x15c] sm:$0xff]
  %v74 = vld [vmem:[%s0 + $0x164] sm:$0xf]
  %v75 = vld [vmem:[%s0 + $0x168] sm:$0xff]
  %v76 = vld [vmem:[%s0 + $0x170] sm:$0xf]
  %v77 = vld [vmem:[%s0 + $0x174] sm:$0xff]
  %v78 = vld [vmem:[%s0 + $0x17c] sm:$0xf]
  %v79 = vld [vmem:[%s0 + $0x180] sm:$0xff]
  %v80 = vld [vmem:[%s0 + $0x188] sm:$0xf]
  %v81 = vld [vmem:[%s0 + $0x18c] sm:$0xff]
  %v82 = vld [vmem:[%s0 + $0x194] sm:$0xf]
  %v83 = vld [vmem:[%s0 + $0x198] sm:$0xff]
  %v84 = vld [vmem:[%s0 + $0x1a0] sm:$0xf]
  %v85 = vld [vmem:[%s0 + $0x1a4] sm:$0xff]
  %v86 = vld [vmem:[%s0 + $0x1ac] sm:$0xf]
  %v87 = vld [vmem:[%s0 + $0x1b0] sm:$0xff]
  %v88 = vld [vmem:[%s0 + $0x1b8] sm:$0xf]
  %v89 = vld [vmem:[%s0 + $0x1bc] sm:$0xff]
  %v90 = vld [vmem:[%s0 + $0x1c4] sm:$0xf]
  %v91 = vld [vmem:[%s0 + $0x1c8] sm:$0xff]
  %v92 = vld [vmem:[%s0 + $0x1d0] sm:$0xf]
  %v93 = vld [vmem:[%s0 + $0x1d4] sm:$0xff]
  %v94 = vld [vmem:[%s0 + $0x1dc] sm:$0xf]
  %v95 = vld [vmem:[%s0 + $0x1e0] sm:$0xff]
  %v96 = vld [vmem:[%s0 + $0x1e8] sm:$0xf]
  %v97 = vld [vmem:[%s0 + $0x1ec] sm:$0xff]
  %v98 = vld [vmem:[%s0 + $0x1f4] sm:$0xf]
  %v99 = vld [vmem:[%s0 + $0x1f8] sm:$0xff]
  %v100 = vld [vmem:[%s0 + $0x200] sm:$0xf]
  %v101 = vld [vmem:[%s0 + $0x204] sm:$0xff]
  %v102 = vld [vmem:[%s0 + $0x20c] sm:$0xf]
  %v103 = vld [vmem:[%s0 + $0x210] sm:$0xff]
  %v104 = vld [vmem:[%s0 + $0x218] sm:$0xf]
  %v105 = vld [vmem:[%s0 + $0x21c] sm:$0xff]
  %v106 = vld [vmem:[%s0 + $0x224] sm:$0xf]
  %v107 = vld [vmem:[%s0 + $0x228] sm:$0xff]
  %v108 = vld [vmem:[%s0 + $0x230] sm:$0xf]
  %v109 = vld [vmem:[%s0 + $0x234] sm:$0xff]
  %v110 = vld [vmem:[%s0 + $0x23c] sm:$0xf]
  %v111 = vld [vmem:[%s0 + $0x240] sm:$0xff]
  %v112 = vld [vmem:[%s0 + $0x248] sm:$0xf]
  %v113 = vld [vmem:[%s0 + $0x24c] sm:$0xff]
  %v114 = vld [vmem:[%s0 + $0x254] sm:$0xf]
  %v115 = vld [vmem:[%s0 + $0x258] sm:$0xff]
  %v116 = vld [vmem:[%s0 + $0x260] sm:$0xf]
  %v117 = vld [vmem:[%s0 + $0x264] sm:$0xff]
  %v118 = vld [vmem:[%s0 + $0x26c] sm:$0xf]
  %v119 = vld [vmem:[%s0 + $0x270] sm:$0xff]
  %v120 = vld [vmem:[%s0 + $0x278] sm:$0xf]
  %v121 = vld [vmem:[%s0 + $0x27c] sm:$0xff]
  %v122 = vld [vmem:[%s0 + $0x284] sm:$0xf]
  %v123 = vld [vmem:[%s0 + $0x288] sm:$0xff]
  %v124 = vld [vmem:[%s0 + $0x290] sm:$0xf]
  %v125 = vld [vmem:[%s0 + $0x294] sm:$0xff]
  %v126 = vld [vmem:[%s0 + $0x29c] sm:$0xf]
  %v127 = vld [vmem:[%s0 + $0x2a0] sm:$0xff]
  %v128 = vld [vmem:[%s0 + $0x2a8] sm:$0xf]
  %v129 = vld [vmem:[%s0 + $0x2ac] sm:$0xff]
  %v130 = vld [vmem:[%s0 + $0x2b4] sm:$0xf]
  %v131 = vld [vmem:[%s0 + $0x2b8] sm:$0xff]
  %v132 = vld [vmem:[%s0 + $0x2c0] sm:$0xf]
  %v133 = vld [vmem:[%s0 + $0x2c4] sm:$0xff]
  %v134 = vld [vmem:[%s0 + $0x2cc] sm:$0xf]
  %v135 = vld [vmem:[%s0 + $0x2d0] sm:$0xff]
  %v136 = vld [vmem:[%s0 + $0x2d8] sm:$0xf]
  %v137 = vld [vmem:[%s0 + $0x2dc] sm:$0xff]
  %v138 = vld [vmem:[%s0 + $0x2e4] sm:$0xf]
  %v139 = vld [vmem:[%s0 + $0x2e8] sm:$0xff]
  %v140 = vld [vmem:[%s0 + $0x2f0] sm:$0xf]
  %v141 = vld [vmem:[%s0 + $0x2f4] sm:$0xff]
  %v142 = vld [vmem:[%s0 + $0x2fc] sm:$0xf]
  %v143 = vld [vmem:[%s0 + $0x300] sm:$0xff]
  %v144 = vld [vmem:[%s0 + $0x308] sm:$0xf]
  %v145 = vld [vmem:[%s0 + $0x30c] sm:$0xff]
  %v146 = vld [vmem:[%s0 + $0x314] sm:$0xf]
  %v147 = vld [vmem:[%s0 + $0x318] sm:$0xff]
  %v148 = vld [vmem:[%s0 + $0x320] sm:$0xf]
  %v149 = vld [vmem:[%s0 + $0x324] sm:$0xff]
  %v150 = vld [vmem:[%s0 + $0x32c] sm:$0xf]
  %v151 = vld [vmem:[%s0 + $0x330] sm:$0xff]
  %v152 = vld [vmem:[%s0 + $0x338] sm:$0xf]
  %v153 = vld [vmem:[%s0 + $0x33c] sm:$0xff]
  %v154 = vld [vmem:[%s0 + $0x344] sm:$0xf]
  %v155 = vld [vmem:[%s0 + $0x348] sm:$0xff]
  %v156 = vld [vmem:[%s0 + $0x350] sm:$0xf]
  %v157 = vld [vmem:[%s0 + $0x354] sm:$0xff]
  %v158 = vld [vmem:[%s0 + $0x35c] sm:$0xf]
  %v159 = vld [vmem:[%s0 + $0x360] sm:$0xff]
  %v160 = vld [vmem:[%s0 + $0x368] sm:$0xf]
  %v161 = vld [vmem:[%s0 + $0x36c] sm:$0xff]
  %v162 = vld [vmem:[%s0 + $0x374] sm:$0xf]
  %v163 = vld [vmem:[%s0 + $0x378] sm:$0xff]
  %v164 = vld [vmem:[%s0 + $0x380] sm:$0xf]
  %v165 = vld [vmem:[%s0 + $0x384] sm:$0xff]
  %v166 = vld [vmem:[%s0 + $0x38c] sm:$0xf]
  %v167 = vld [vmem:[%s0 + $0x390] sm:$0xff]
  %v168 = vld [vmem:[%s0 + $0x398] sm:$0xf]
  %v169 = vld [vmem:[%s0 + $0x39c] sm:$0xff]
  %v170 = vld [vmem:[%s0 + $0x3a4] sm:$0xf]
  %v171 = vld [vmem:[%s0 + $0x3a8] sm:$0xff]
  %v172 = vld [vmem:[%s0 + $0x3b0] sm:$0xf]
  %v173 = vld [vmem:[%s0 + $0x3b4] sm:$0xff]
  %v174 = vld [vmem:[%s0 + $0x3bc] sm:$0xf]
  %v175 = vld [vmem:[%s0 + $0x3c0] sm:$0xff]
  %v176 = vld [vmem:[%s0 + $0x3c8] sm:$0xf]
  %v177 = vld [vmem:[%s0 + $0x3cc] sm:$0xff]
  %v178 = vld [vmem:[%s0 + $0x3d4] sm:$0xf]
  %v179 = vld [vmem:[%s0 + $0x3d8] sm:$0xff]
  %v180 = vld [vmem:[%s0 + $0x3e0] sm:$0xf]
  %v181 = vld [vmem:[%s0 + $0x3e4] sm:$0xff]
  %v182 = vld [vmem:[%s0 + $0x3ec] sm:$0xf]
  %v183 = vld [vmem:[%s0 + $0x3f0] sm:$0xff]
  %v184 = vld [vmem:[%s0 + $0x3f8] sm:$0xf]
  %v185 = vld [vmem:[%s0 + $0x3fc] sm:$0xff]
  %v186 = vld [vmem:[%s0 + $0x404] sm:$0xf]
  %v187 = vld [vmem:[%s0 + $0x408] sm:$0xff]
  %v188 = vld [vmem:[%s0 + $0x410] sm:$0xf]
  %v189 = vld [vmem:[%s0 + $0x414] sm:$0xff]
  %v190 = vld [vmem:[%s0 + $0x41c] sm:$0xf]
  %v191 = vld [vmem:[%s0 + $0x420] sm:$0xff]
  %v192 = vld [vmem:[%s0 + $0x428] sm:$0xf]
  %v193 = vld [vmem:[%s0 + $0x42c] sm:$0xff]
  %v194 = vld [vmem:[%s0 + $0x434] sm:$0xf]
  %v195 = vld [vmem:[%s0 + $0x438] sm:$0xff]
  %v196 = vld [vmem:[%s0 + $0x440] sm:$0xf]
  %v197 = vld [vmem:[%s0 + $0x444] sm:$0xff]
  %v198 = vld [vmem:[%s0 + $0x44c] sm:$0xf]
  %v199 = vld [vmem:[%s0 + $0x450] sm:$0xff]
  %v200 = vld [vmem:[%s0 + $0x458] sm:$0xf]
  %v201 = vld [vmem:[%s0 + $0x45c] sm:$0xff]
  %v202 = vld [vmem:[%s0 + $0x464] sm:$0xf]
  %v203 = vld [vmem:[%s0 + $0x468] sm:$0xff]
  %v204 = vld [vmem:[%s0 + $0x470] sm:$0xf]
  %v205 = vld [vmem:[%s0 + $0x474] sm:$0xff]
  %v206 = vld [vmem:[%s0 + $0x47c] sm:$0xf]
  %v207 = vld [vmem:[%s0 + $0x480] sm:$0xff]
  %v208 = vld [vmem:[%s0 + $0x488] sm:$0xf]
  %v209 = vld [vmem:[%s0 + $0x48c] sm:$0xff]
  %v210 = vld [vmem:[%s0 + $0x494] sm:$0xf]
  %v211 = vld [vmem:[%s0 + $0x498] sm:$0xff]
  %v212 = vld [vmem:[%s0 + $0x4a0] sm:$0xf]
  %v213 = vld [vmem:[%s0 + $0x4a4] sm:$0xff]
  %v214 = vld [vmem:[%s0 + $0x4ac] sm:$0xf]
  %v215 = vld [vmem:[%s0 + $0x4b0] sm:$0xff]
  %v216 = vld [vmem:[%s0 + $0x4b8] sm:$0xf]
  %v217 = vld [vmem:[%s0 + $0x4bc] sm:$0xff]
  %v218 = vld [vmem:[%s0 + $0x4c4] sm:$0xf]
  %v219 = vld [vmem:[%s0 + $0x4c8] sm:$0xff]
  %v220 = vld [vmem:[%s0 + $0x4d0] sm:$0xf]
  %v221 = vld [vmem:[%s0 + $0x4d4] sm:$0xff]
  %v222 = vld [vmem:[%s0 + $0x4dc] sm:$0xf]
  %v223 = vld [vmem:[%s0 + $0x4e0] sm:$0xff]
  %v224 = vld [vmem:[%s0 + $0x4e8] sm:$0xf]
  %v225 = vld [vmem:[%s0 + $0x4ec] sm:$0xff]
  %v226 = vld [vmem:[%s0 + $0x4f4] sm:$0xf]
  %v227 = vld [vmem:[%s0 + $0x4f8] sm:$0xff]
  %v228 = vld [vmem:[%s0 + $0x500] sm:$0xf]
  %v229 = vld [vmem:[%s0 + $0x504] sm:$0xff]
  %v230 = vld [vmem:[%s0 + $0x50c] sm:$0xf]
  %v231 = vld [vmem:[%s0 + $0x510] sm:$0xff]
  %v232 = vld [vmem:[%s0 + $0x518] sm:$0xf]
  %v233 = vld [vmem:[%s0 + $0x51c] sm:$0xff]
  %v234 = vld [vmem:[%s0 + $0x524] sm:$0xf]
  %v235 = vld [vmem:[%s0 + $0x528] sm:$0xff]
  %v236 = vld [vmem:[%s0 + $0x530] sm:$0xf]
  %v237 = vld [vmem:[%s0 + $0x534] sm:$0xff]
  %v238 = vld [vmem:[%s0 + $0x53c] sm:$0xf]
  %v239 = vld [vmem:[%s0 + $0x540] sm:$0xff]
  %v240 = vld [vmem:[%s0 + $0x548] sm:$0xf]
  %v241 = vld [vmem:[%s0 + $0x54c] sm:$0xff]
  %v242 = vld [vmem:[%s0 + $0x554] sm:$0xf]
  %v243 = vld [vmem:[%s0 + $0x558] sm:$0xff]
  %v244 = vld [vmem:[%s0 + $0x560] sm:$0xf]
  %v245 = vld [vmem:[%s0 + $0x564] sm:$0xff]
  %v246 = vld [vmem:[%s0 + $0x56c] sm:$0xf]
  %v247 = vld [vmem:[%s0 + $0x570] sm:$0xff]
  %v248 = vld [vmem:[%s0 + $0x578] sm:$0xf]
  %v249 = vld [vmem:[%s0 + $0x57c] sm:$0xff]
  %v250 = vld [vmem:[%s0 + $0x584] sm:$0xf]
  %v251 = vld [vmem:[%s0 + $0x588] sm:$0xff]
  %v252 = vld [vmem:[%s0 + $0x590] sm:$0xf]
  %v253 = vld [vmem:[%s0 + $0x594] sm:$0xff]
  %v254 = vld [vmem:[%s0 + $0x59c] sm:$0xf]
  %v255 = vld [vmem:[%s0 + $0x5a0] sm:$0xff]
  %v256 = vld [vmem:[%s0 + $0x5a8] sm:$0xf]
  %v257 = vld [vmem:[%s0 + $0x5ac] sm:$0xff]
  %v258 = vld [vmem:[%s0 + $0x5b4] sm:$0xf]
  %v259 = vld [vmem:[%s0 + $0x5b8] sm:$0xff]
  %v260 = vld [vmem:[%s0 + $0x5c0] sm:$0xf]
  %v261 = vld [vmem:[%s0 + $0x5c4] sm:$0xff]
  %v262 = vld [vmem:[%s0 + $0x5cc] sm:$0xf]
  %v263 = vld [vmem:[%s0 + $0x5d0] sm:$0xff]
  %v264 = vld [vmem:[%s0 + $0x5d8] sm:$0xf]
  %v265 = vld [vmem:[%s0 + $0x5dc] sm:$0xff]
  %v266 = vld [vmem:[%s0 + $0x5e4] sm:$0xf]
  %v267 = vld [vmem:[%s0 + $0x5e8] sm:$0xff]
  %v268 = vld [vmem:[%s0 + $0x5f0] sm:$0xf]
  %v269 = vld [vmem:[%s0 + $0x5f4] sm:$0xff]
  %v270 = vld [vmem:[%s0 + $0x5fc] sm:$0xf]
  %v271 = vld [vmem:[%s0 + $0x600] sm:$0xff]
  %v272 = vld [vmem:[%s0 + $0x608] sm:$0xf]
  %v273 = vld [vmem:[%s0 + $0x60c] sm:$0xff]
  %v274 = vld [vmem:[%s0 + $0x614] sm:$0xf]
  %v275 = vld [vmem:[%s0 + $0x618] sm:$0xff]
  %v276 = vld [vmem:[%s0 + $0x620] sm:$0xf]
  %v277 = vld [vmem:[%s0 + $0x624] sm:$0xff]
  %v278 = vld [vmem:[%s0 + $0x62c] sm:$0xf]
  %v279 = vld [vmem:[%s0 + $0x630] sm:$0xff]
  %v280 = vld [vmem:[%s0 + $0x638] sm:$0xf]
  %v281 = vld [vmem:[%s0 + $0x63c] sm:$0xff]
  %v282 = vld [vmem:[%s0 + $0x644] sm:$0xf]
  %v283 = vld [vmem:[%s0 + $0x648] sm:$0xff]
  %v284 = vld [vmem:[%s0 + $0x650] sm:$0xf]
  %v285 = vld [vmem:[%s0 + $0x654] sm:$0xff]
  %v286 = vld [vmem:[%s0 + $0x65c] sm:$0xf]
  %v287 = vld [vmem:[%s0 + $0x660] sm:$0xff]
  %v288 = vld [vmem:[%s0 + $0x668] sm:$0xf]
  %v289 = vld [vmem:[%s0 + $0x66c] sm:$0xff]
  %v290 = vld [vmem:[%s0 + $0x674] sm:$0xf]
  %v291 = vld [vmem:[%s0 + $0x678] sm:$0xff]
  %v292 = vld [vmem:[%s0 + $0x680] sm:$0xf]
  %v293 = vld [vmem:[%s0 + $0x684] sm:$0xff]
  %v294 = vld [vmem:[%s0 + $0x68c] sm:$0xf]
  %v295 = vld [vmem:[%s0 + $0x690] sm:$0xff]
  %v296 = vld [vmem:[%s0 + $0x698] sm:$0xf]
  %v297 = vld [vmem:[%s0 + $0x69c] sm:$0xff]
  %v298 = vld [vmem:[%s0 + $0x6a4] sm:$0xf]
  %v299 = vld [vmem:[%s0 + $0x6a8] sm:$0xff]
  %v300 = vld [vmem:[%s0 + $0x6b0] sm:$0xf]
  %v301 = vld [vmem:[%s0 + $0x6b4] sm:$0xff]
  %v302 = vld [vmem:[%s0 + $0x6bc] sm:$0xf]
  %v303 = vld [vmem:[%s0 + $0x6c0] sm:$0xff]
  %v304 = vld [vmem:[%s0 + $0x6c8] sm:$0xf]
  %v305 = vld [vmem:[%s0 + $0x6cc] sm:$0xff]
  %v306 = vld [vmem:[%s0 + $0x6d4] sm:$0xf]
  %v307 = vld [vmem:[%s0 + $0x6d8] sm:$0xff]
  %v308 = vld [vmem:[%s0 + $0x6e0] sm:$0xf]
  %v309 = vld [vmem:[%s0 + $0x6e4] sm:$0xff]
  %v310 = vld [vmem:[%s0 + $0x6ec] sm:$0xf]
  %v311 = vld [vmem:[%s0 + $0x6f0] sm:$0xff]
  %v312 = vld [vmem:[%s0 + $0x6f8] sm:$0xf]
  %v313 = vld [vmem:[%s0 + $0x6fc] sm:$0xff]
  %v314 = vld [vmem:[%s0 + $0x704] sm:$0xf]
  %v315 = vld [vmem:[%s0 + $0x708] sm:$0xff]
  %v316 = vld [vmem:[%s0 + $0x710] sm:$0xf]
  %v317 = vld [vmem:[%s0 + $0x714] sm:$0xff]
  %v318 = vld [vmem:[%s0 + $0x71c] sm:$0xf]
  %v319 = vld [vmem:[%s0 + $0x720] sm:$0xff]
  %v320 = vld [vmem:[%s0 + $0x728] sm:$0xf]
  %v321 = vld [vmem:[%s0 + $0x72c] sm:$0xff]
  %v322 = vld [vmem:[%s0 + $0x734] sm:$0xf]
  %v323 = vld [vmem:[%s0 + $0x738] sm:$0xff]
  %v324 = vld [vmem:[%s0 + $0x740] sm:$0xf]
  %v325 = vld [vmem:[%s0 + $0x744] sm:$0xff]
  %v326 = vld [vmem:[%s0 + $0x74c] sm:$0xf]
  %v327 = vld [vmem:[%s0 + $0x750] sm:$0xff]
  %v328 = vld [vmem:[%s0 + $0x758] sm:$0xf]
  %v329 = vld [vmem:[%s0 + $0x75c] sm:$0xff]
  %v330 = vld [vmem:[%s0 + $0x764] sm:$0xf]
  %v331 = vld [vmem:[%s0 + $0x768] sm:$0xff]
  %v332 = vld [vmem:[%s0 + $0x770] sm:$0xf]
  %v333 = vld [vmem:[%s0 + $0x774] sm:$0xff]
  %v334 = vld [vmem:[%s0 + $0x77c] sm:$0xf]
  %v335 = vld [vmem:[%s0 + $0x780] sm:$0xff]
  %v336 = vld [vmem:[%s0 + $0x788] sm:$0xf]
  %v337 = vld [vmem:[%s0 + $0x78c] sm:$0xff]
  %v338 = vld [vmem:[%s0 + $0x794] sm:$0xf]
  %v339 = vld [vmem:[%s0 + $0x798] sm:$0xff]
  %v340 = vld [vmem:[%s0 + $0x7a0] sm:$0xf]
  %v341 = vld [vmem:[%s0 + $0x7a4] sm:$0xff]
  %v342 = vld [vmem:[%s0 + $0x7ac] sm:$0xf]
  %v343 = vld [vmem:[%s0 + $0x7b0] sm:$0xff]
  %v344 = vld [vmem:[%s0 + $0x7b8] sm:$0xf]
  %v345 = vld [vmem:[%s0 + $0x7bc] sm:$0xff]
  %v346 = vld [vmem:[%s0 + $0x7c4] sm:$0xf]
  %v347 = vld [vmem:[%s0 + $0x7c8] sm:$0xff]
  %v348 = vld [vmem:[%s0 + $0x7d0] sm:$0xf]
  %v349 = vld [vmem:[%s0 + $0x7d4] sm:$0xff]
  %v350 = vld [vmem:[%s0 + $0x7dc] sm:$0xf]
  %v351 = vld [vmem:[%s0 + $0x7e0] sm:$0xff]
  %v352 = vld [vmem:[%s0 + $0x7e8] sm:$0xf]
  %v353 = vld [vmem:[%s0 + $0x7ec] sm:$0xff]
  %v354 = vld [vmem:[%s0 + $0x7f4] sm:$0xf]
  %v355 = vld [vmem:[%s0 + $0x7f8] sm:$0xff]
  %v356 = vld [vmem:[%s0 + $0x800] sm:$0xf]
  %v357 = vld [vmem:[%s0 + $0x804] sm:$0xff]
  %v358 = vld [vmem:[%s0 + $0x80c] sm:$0xf]
  %v359 = vld [vmem:[%s0 + $0x810] sm:$0xff]
  %v360 = vld [vmem:[%s0 + $0x818] sm:$0xf]
  %v361 = vld [vmem:[%s0 + $0x81c] sm:$0xff]
  %v362 = vld [vmem:[%s0 + $0x824] sm:$0xf]
  %v363 = vld [vmem:[%s0 + $0x828] sm:$0xff]
  %v364 = vld [vmem:[%s0 + $0x830] sm:$0xf]
  %v365 = vld [vmem:[%s0 + $0x834] sm:$0xff]
  %v366 = vld [vmem:[%s0 + $0x83c] sm:$0xf]
  %v367 = vld [vmem:[%s0 + $0x840] sm:$0xff]
  %v368 = vld [vmem:[%s0 + $0x848] sm:$0xf]
  %v369 = vld [vmem:[%s0 + $0x84c] sm:$0xff]
  %v370 = vld [vmem:[%s0 + $0x854] sm:$0xf]
  %v371 = vld [vmem:[%s0 + $0x858] sm:$0xff]
  %v372 = vld [vmem:[%s0 + $0x860] sm:$0xf]
  %v373 = vld [vmem:[%s0 + $0x864] sm:$0xff]
  %v374 = vld [vmem:[%s0 + $0x86c] sm:$0xf]
  %v375 = vld [vmem:[%s0 + $0x870] sm:$0xff]
  %v376 = vld [vmem:[%s0 + $0x878] sm:$0xf]
  %v377 = vld [vmem:[%s0 + $0x87c] sm:$0xff]
  %v378 = vld [vmem:[%s0 + $0x884] sm:$0xf]
  %v379 = vld [vmem:[%s0 + $0x888] sm:$0xff]
  %v380 = vld [vmem:[%s0 + $0x890] sm:$0xf]
  %v381 = vld [vmem:[%s0 + $0x894] sm:$0xff]
  %v382 = vld [vmem:[%s0 + $0x89c] sm:$0xf]
  %v383 = vld [vmem:[%s0 + $0x8a0] sm:$0xff]
  %v384 = vld [vmem:[%s0 + $0x8a8] sm:$0xf]
  %v385 = vld [vmem:[%s0 + $0x8ac] sm:$0xff]
  %v386 = vld [vmem:[%s0 + $0x8b4] sm:$0xf]
  %v387 = vld [vmem:[%s0 + $0x8b8] sm:$0xff]
  %v388 = vld [vmem:[%s0 + $0x8c0] sm:$0xf]
  %v389 = vld [vmem:[%s0 + $0x8c4] sm:$0xff]
  %v390 = vld [vmem:[%s0 + $0x8cc] sm:$0xf]
  %v391 = vld [vmem:[%s0 + $0x8d0] sm:$0xff]
  %v392 = vld [vmem:[%s0 + $0x8d8] sm:$0xf]
  %v393 = vld [vmem:[%s0 + $0x8dc] sm:$0xff]
  %v394 = vld [vmem:[%s0 + $0x8e4] sm:$0xf]
  %v395 = vld [vmem:[%s0 + $0x8e8] sm:$0xff]
  %v396 = vld [vmem:[%s0 + $0x8f0] sm:$0xf]
  %v397 = vld [vmem:[%s0 + $0x8f4] sm:$0xff]
  %v398 = vld [vmem:[%s0 + $0x8fc] sm:$0xf]
  %v399 = vld [vmem:[%s0 + $0x900] sm:$0xff]
  %v400 = vld [vmem:[%s0 + $0x908] sm:$0xf]
  %v401 = vld [vmem:[%s0 + $0x90c] sm:$0xff]
  %v402 = vld [vmem:[%s0 + $0x914] sm:$0xf]
  %v403 = vld [vmem:[%s0 + $0x918] sm:$0xff]
  %v404 = vld [vmem:[%s0 + $0x920] sm:$0xf]
  %v405 = vld [vmem:[%s0 + $0x924] sm:$0xff]
  %v406 = vld [vmem:[%s0 + $0x92c] sm:$0xf]
  %v407 = vld [vmem:[%s1] sm:$0xf]
  %v408 = vld [vmem:[%s1 + $0x4] sm:$0xf]
  %v409 = vld [vmem:[%s1 + $0x8] sm:$0xf]
  %v410 = vld [vmem:[%s1 + $0xc] sm:$0xf]
  %v411 = vld [vmem:[%s1 + $0x10] sm:$0xf]
  %v412 = vld [vmem:[%s1 + $0x14] sm:$0xf]
  %v413 = vld [vmem:[%s1 + $0x18] sm:$0xf]
  %v414 = vld [vmem:[%s1 + $0x1c] sm:$0xf]
  %v415 = vld [vmem:[%s1 + $0x20] sm:$0xf]
  %v416 = vld [vmem:[%s1 + $0x24] sm:$0xf]
  %v417 = vld [vmem:[%s1 + $0x28] sm:$0xf]
  %v418 = vld [vmem:[%s1 + $0x2c] sm:$0xf]
  %v419 = vld [vmem:[%s1 + $0x30] sm:$0xf]
  %v420 = vld [vmem:[%s1 + $0x34] sm:$0xf]
  %v421 = vld [vmem:[%s1 + $0x38] sm:$0xf]
  %v422 = vld [vmem:[%s1 + $0x3c] sm:$0xf]
  %v423 = vld [vmem:[%s1 + $0x40] sm:$0xf]
  %v424 = vld [vmem:[%s1 + $0x44] sm:$0xf]
  %v425 = vld [vmem:[%s1 + $0x48] sm:$0xf]
  %v426 = vld [vmem:[%s1 + $0x4c] sm:$0xf]
  %v427 = vld [vmem:[%s1 + $0x50] sm:$0xf]
  %v428 = vld [vmem:[%s1 + $0x54] sm:$0xf]
  %v429 = vld [vmem:[%s1 + $0x58] sm:$0xf]
  %v430 = vld [vmem:[%s1 + $0x5c] sm:$0xf]
  %v431 = vld [vmem:[%s1 + $0x60] sm:$0xf]
  %v432 = vld [vmem:[%s1 + $0x64] sm:$0xf]
  %v433 = vld [vmem:[%s1 + $0x68] sm:$0xf]
  %v434 = vld [vmem:[%s1 + $0x6c] sm:$0xf]
  %v435 = vld [vmem:[%s1 + $0x70] sm:$0xf]
  %v436 = vld [vmem:[%s1 + $0x74] sm:$0xf]
  %v437 = vld [vmem:[%s1 + $0x78] sm:$0xf]
  %v438 = vld [vmem:[%s1 + $0x7c] sm:$0xf]
  %v439 = vld [vmem:[%s1 + $0x80] sm:$0xf]
  %v440 = vld [vmem:[%s1 + $0x84] sm:$0xf]
  %v441 = vld [vmem:[%s1 + $0x88] sm:$0xf]
  %v442 = vld [vmem:[%s1 + $0x8c] sm:$0xf]
  %v835 = vunpack.c.l.b16 %v15
  %v836 = vunpack.c.h.b16 %v15
  %v837 = vunpack.c.l.b16 %v16
  %v838 = vunpack.c.l.b16 %v17
  %v839 = vunpack.c.h.b16 %v17
  %v840 = vunpack.c.l.b16 %v18
  %v841 = vunpack.c.l.b16 %v19
  %v842 = vunpack.c.h.b16 %v19
  %v843 = vunpack.c.l.b16 %v20
  %v844 = vunpack.c.l.b16 %v21
  %v845 = vunpack.c.h.b16 %v21
  %v846 = vunpack.c.l.b16 %v22
  %v847 = vunpack.c.l.b16 %v23
  %v848 = vunpack.c.h.b16 %v23
  %v849 = vunpack.c.l.b16 %v24
  %v850 = vunpack.c.l.b16 %v25
  %v851 = vunpack.c.h.b16 %v25
  %v852 = vunpack.c.l.b16 %v26
  %v853 = vunpack.c.l.b16 %v27
  %v854 = vunpack.c.h.b16 %v27
  %v855 = vunpack.c.l.b16 %v28
  %v856 = vunpack.c.l.b16 %v29
  %v857 = vunpack.c.h.b16 %v29
  %v858 = vunpack.c.l.b16 %v30
  %v859 = vunpack.c.l.b16 %v31
  %v860 = vunpack.c.h.b16 %v31
  %v861 = vunpack.c.l.b16 %v32
  %v862 = vunpack.c.l.b16 %v33
  %v863 = vunpack.c.h.b16 %v33
  %v864 = vunpack.c.l.b16 %v34
  %v865 = vunpack.c.l.b16 %v35
  %v866 = vunpack.c.h.b16 %v35
  %v867 = vunpack.c.l.b16 %v36
  %v868 = vunpack.c.l.b16 %v37
  %v869 = vunpack.c.h.b16 %v37
  %v870 = vunpack.c.l.b16 %v38
  %v871 = vunpack.c.l.b16 %v39
  %v872 = vunpack.c.h.b16 %v39
  %v873 = vunpack.c.l.b16 %v40
  %v874 = vunpack.c.l.b16 %v41
  %v875 = vunpack.c.h.b16 %v41
  %v876 = vunpack.c.l.b16 %v42
  %v877 = vunpack.c.l.b16 %v43
  %v878 = vunpack.c.h.b16 %v43
  %v879 = vunpack.c.l.b16 %v44
  %v880 = vunpack.c.l.b16 %v45
  %v881 = vunpack.c.h.b16 %v45
  %v882 = vunpack.c.l.b16 %v46
  %v883 = vunpack.c.l.b16 %v47
  %v884 = vunpack.c.h.b16 %v47
  %v885 = vunpack.c.l.b16 %v48
  %v886 = vunpack.c.l.b16 %v49
  %v887 = vunpack.c.h.b16 %v49
  %v888 = vunpack.c.l.b16 %v50
  %v889 = vunpack.c.l.b16 %v51
  %v890 = vunpack.c.h.b16 %v51
  %v891 = vunpack.c.l.b16 %v52
  %v892 = vunpack.c.l.b16 %v53
  %v893 = vunpack.c.h.b16 %v53
  %v894 = vunpack.c.l.b16 %v54
  %v895 = vunpack.c.l.b16 %v55
  %v896 = vunpack.c.h.b16 %v55
  %v897 = vunpack.c.l.b16 %v56
  %v898 = vunpack.c.l.b16 %v57
  %v899 = vunpack.c.h.b16 %v57
  %v900 = vunpack.c.l.b16 %v58
  %v901 = vunpack.c.l.b16 %v59
  %v902 = vunpack.c.h.b16 %v59
  %v903 = vunpack.c.l.b16 %v60
  %v904 = vunpack.c.l.b16 %v61
  %v905 = vunpack.c.h.b16 %v61
  %v906 = vunpack.c.l.b16 %v62
  %v907 = vunpack.c.l.b16 %v63
  %v908 = vunpack.c.h.b16 %v63
  %v909 = vunpack.c.l.b16 %v64
  %v910 = vunpack.c.l.b16 %v65
  %v911 = vunpack.c.h.b16 %v65
  %v912 = vunpack.c.l.b16 %v66
  %v913 = vunpack.c.l.b16 %v67
  %v914 = vunpack.c.h.b16 %v67
  %v915 = vunpack.c.l.b16 %v68
  %v916 = vunpack.c.l.b16 %v69
  %v917 = vunpack.c.h.b16 %v69
  %v918 = vunpack.c.l.b16 %v70
  %v919 = vunpack.c.l.b16 %v71
  %v920 = vunpack.c.h.b16 %v71
  %v921 = vunpack.c.l.b16 %v72
  %v922 = vunpack.c.l.b16 %v73
  %v923 = vunpack.c.h.b16 %v73
  %v924 = vunpack.c.l.b16 %v74
  %v925 = vunpack.c.l.b16 %v75
  %v926 = vunpack.c.h.b16 %v75
  %v927 = vunpack.c.l.b16 %v76
  %v928 = vunpack.c.l.b16 %v77
  %v929 = vunpack.c.h.b16 %v77
  %v930 = vunpack.c.l.b16 %v78
  %v931 = vunpack.c.l.b16 %v79
  %v932 = vunpack.c.h.b16 %v79
  %v933 = vunpack.c.l.b16 %v80
  %v934 = vunpack.c.l.b16 %v81
  %v935 = vunpack.c.h.b16 %v81
  %v936 = vunpack.c.l.b16 %v82
  %v937 = vunpack.c.l.b16 %v83
  %v938 = vunpack.c.h.b16 %v83
  %v939 = vunpack.c.l.b16 %v84
  %v940 = vunpack.c.l.b16 %v85
  %v941 = vunpack.c.h.b16 %v85
  %v942 = vunpack.c.l.b16 %v86
  %v943 = vunpack.c.l.b16 %v87
  %v944 = vunpack.c.h.b16 %v87
  %v945 = vunpack.c.l.b16 %v88
  %v946 = vunpack.c.l.b16 %v89
  %v947 = vunpack.c.h.b16 %v89
  %v948 = vunpack.c.l.b16 %v90
  %v949 = vunpack.c.l.b16 %v91
  %v950 = vunpack.c.h.b16 %v91
  %v951 = vunpack.c.l.b16 %v92
  %v952 = vunpack.c.l.b16 %v93
  %v953 = vunpack.c.h.b16 %v93
  %v954 = vunpack.c.l.b16 %v94
  %v955 = vunpack.c.l.b16 %v95
  %v956 = vunpack.c.h.b16 %v95
  %v957 = vunpack.c.l.b16 %v96
  %v958 = vunpack.c.l.b16 %v97
  %v959 = vunpack.c.h.b16 %v97
  %v960 = vunpack.c.l.b16 %v98
  %v961 = vunpack.c.l.b16 %v99
  %v962 = vunpack.c.h.b16 %v99
  %v963 = vunpack.c.l.b16 %v100
  %v964 = vunpack.c.l.b16 %v101
  %v965 = vunpack.c.h.b16 %v101
  %v966 = vunpack.c.l.b16 %v102
  %v967 = vunpack.c.l.b16 %v103
  %v968 = vunpack.c.h.b16 %v103
  %v969 = vunpack.c.l.b16 %v104
  %v970 = vunpack.c.l.b16 %v105
  %v971 = vunpack.c.h.b16 %v105
  %v972 = vunpack.c.l.b16 %v106
  %v973 = vunpack.c.l.b16 %v107
  %v974 = vunpack.c.h.b16 %v107
  %v975 = vunpack.c.l.b16 %v108
  %v976 = vunpack.c.l.b16 %v109
  %v977 = vunpack.c.h.b16 %v109
  %v978 = vunpack.c.l.b16 %v110
  %v979 = vunpack.c.l.b16 %v111
  %v980 = vunpack.c.h.b16 %v111
  %v981 = vunpack.c.l.b16 %v112
  %v982 = vunpack.c.l.b16 %v113
  %v983 = vunpack.c.h.b16 %v113
  %v984 = vunpack.c.l.b16 %v114
  %v985 = vunpack.c.l.b16 %v115
  %v986 = vunpack.c.h.b16 %v115
  %v987 = vunpack.c.l.b16 %v116
  %v988 = vunpack.c.l.b16 %v117
  %v989 = vunpack.c.h.b16 %v117
  %v990 = vunpack.c.l.b16 %v118
  %v991 = vunpack.c.l.b16 %v119
  %v992 = vunpack.c.h.b16 %v119
  %v993 = vunpack.c.l.b16 %v120
  %v994 = vunpack.c.l.b16 %v121
  %v995 = vunpack.c.h.b16 %v121
  %v996 = vunpack.c.l.b16 %v122
  %v997 = vunpack.c.l.b16 %v123
  %v998 = vunpack.c.h.b16 %v123
  %v999 = vunpack.c.l.b16 %v124
  %v1000 = vunpack.c.l.b16 %v125
  %v1001 = vunpack.c.h.b16 %v125
  %v1002 = vunpack.c.l.b16 %v126
  %v1003 = vunpack.c.l.b16 %v127
  %v1004 = vunpack.c.h.b16 %v127
  %v1005 = vunpack.c.l.b16 %v128
  %v1006 = vunpack.c.l.b16 %v129
  %v1007 = vunpack.c.h.b16 %v129
  %v1008 = vunpack.c.l.b16 %v130
  %v1009 = vunpack.c.l.b16 %v131
  %v1010 = vunpack.c.h.b16 %v131
  %v1011 = vunpack.c.l.b16 %v132
  %v1012 = vunpack.c.l.b16 %v133
  %v1013 = vunpack.c.h.b16 %v133
  %v1014 = vunpack.c.l.b16 %v134
  %v1015 = vunpack.c.l.b16 %v135
  %v1016 = vunpack.c.h.b16 %v135
  %v1017 = vunpack.c.l.b16 %v136
  %v1018 = vunpack.c.l.b16 %v137
  %v1019 = vunpack.c.h.b16 %v137
  %v1020 = vunpack.c.l.b16 %v138
  %v1021 = vunpack.c.l.b16 %v139
  %v1022 = vunpack.c.h.b16 %v139
  %v1023 = vunpack.c.l.b16 %v140
  %v1024 = vunpack.c.l.b16 %v141
  %v1025 = vunpack.c.h.b16 %v141
  %v1026 = vunpack.c.l.b16 %v142
  %v1027 = vunpack.c.l.b16 %v143
  %v1028 = vunpack.c.h.b16 %v143
  %v1029 = vunpack.c.l.b16 %v144
  %v1030 = vunpack.c.l.b16 %v145
  %v1031 = vunpack.c.h.b16 %v145
  %v1032 = vunpack.c.l.b16 %v146
  %v1033 = vunpack.c.l.b16 %v147
  %v1034 = vunpack.c.h.b16 %v147
  %v1035 = vunpack.c.l.b16 %v148
  %v1036 = vunpack.c.l.b16 %v149
  %v1037 = vunpack.c.h.b16 %v149
  %v1038 = vunpack.c.l.b16 %v150
  %v1039 = vunpack.c.l.b16 %v151
  %v1040 = vunpack.c.h.b16 %v151
  %v1041 = vunpack.c.l.b16 %v152
  %v1042 = vunpack.c.l.b16 %v153
  %v1043 = vunpack.c.h.b16 %v153
  %v1044 = vunpack.c.l.b16 %v154
  %v1045 = vunpack.c.l.b16 %v155
  %v1046 = vunpack.c.h.b16 %v155
  %v1047 = vunpack.c.l.b16 %v156
  %v1048 = vunpack.c.l.b16 %v157
  %v1049 = vunpack.c.h.b16 %v157
  %v1050 = vunpack.c.l.b16 %v158
  %v1051 = vunpack.c.l.b16 %v159
  %v1052 = vunpack.c.h.b16 %v159
  %v1053 = vunpack.c.l.b16 %v160
  %v1054 = vunpack.c.l.b16 %v161
  %v1055 = vunpack.c.h.b16 %v161
  %v1056 = vunpack.c.l.b16 %v162
  %v1057 = vunpack.c.l.b16 %v163
  %v1058 = vunpack.c.h.b16 %v163
  %v1059 = vunpack.c.l.b16 %v164
  %v1060 = vunpack.c.l.b16 %v165
  %v1061 = vunpack.c.h.b16 %v165
  %v1062 = vunpack.c.l.b16 %v166
  %v1063 = vunpack.c.l.b16 %v167
  %v1064 = vunpack.c.h.b16 %v167
  %v1065 = vunpack.c.l.b16 %v168
  %v1066 = vunpack.c.l.b16 %v169
  %v1067 = vunpack.c.h.b16 %v169
  %v1068 = vunpack.c.l.b16 %v170
  %v1069 = vunpack.c.l.b16 %v171
  %v1070 = vunpack.c.h.b16 %v171
  %v1071 = vunpack.c.l.b16 %v172
  %v1072 = vunpack.c.l.b16 %v173
  %v1073 = vunpack.c.h.b16 %v173
  %v1074 = vunpack.c.l.b16 %v174
  %v1075 = vunpack.c.l.b16 %v175
  %v1076 = vunpack.c.h.b16 %v175
  %v1077 = vunpack.c.l.b16 %v176
  %v1078 = vunpack.c.l.b16 %v177
  %v1079 = vunpack.c.h.b16 %v177
  %v1080 = vunpack.c.l.b16 %v178
  %v1081 = vunpack.c.l.b16 %v179
  %v1082 = vunpack.c.h.b16 %v179
  %v1083 = vunpack.c.l.b16 %v180
  %v1084 = vunpack.c.l.b16 %v181
  %v1085 = vunpack.c.h.b16 %v181
  %v1086 = vunpack.c.l.b16 %v182
  %v1087 = vunpack.c.l.b16 %v183
  %v1088 = vunpack.c.h.b16 %v183
  %v1089 = vunpack.c.l.b16 %v184
  %v1090 = vunpack.c.l.b16 %v185
  %v1091 = vunpack.c.h.b16 %v185
  %v1092 = vunpack.c.l.b16 %v186
  %v1093 = vunpack.c.l.b16 %v187
  %v1094 = vunpack.c.h.b16 %v187
  %v1095 = vunpack.c.l.b16 %v188
  %v1096 = vunpack.c.l.b16 %v189
  %v1097 = vunpack.c.h.b16 %v189
  %v1098 = vunpack.c.l.b16 %v190
  %v1099 = vunpack.c.l.b16 %v191
  %v1100 = vunpack.c.h.b16 %v191
  %v1101 = vunpack.c.l.b16 %v192
  %v1102 = vunpack.c.l.b16 %v193
  %v1103 = vunpack.c.h.b16 %v193
  %v1104 = vunpack.c.l.b16 %v194
  %v1105 = vunpack.c.l.b16 %v195
  %v1106 = vunpack.c.h.b16 %v195
  %v1107 = vunpack.c.l.b16 %v196
  %v1108 = vunpack.c.l.b16 %v197
  %v1109 = vunpack.c.h.b16 %v197
  %v1110 = vunpack.c.l.b16 %v198
  %v1111 = vunpack.c.l.b16 %v199
  %v1112 = vunpack.c.h.b16 %v199
  %v1113 = vunpack.c.l.b16 %v200
  %v1114 = vunpack.c.l.b16 %v201
  %v1115 = vunpack.c.h.b16 %v201
  %v1116 = vunpack.c.l.b16 %v202
  %v1117 = vunpack.c.l.b16 %v203
  %v1118 = vunpack.c.h.b16 %v203
  %v1119 = vunpack.c.l.b16 %v204
  %v1120 = vunpack.c.l.b16 %v205
  %v1121 = vunpack.c.h.b16 %v205
  %v1122 = vunpack.c.l.b16 %v206
  %v1123 = vunpack.c.l.b16 %v207
  %v1124 = vunpack.c.h.b16 %v207
  %v1125 = vunpack.c.l.b16 %v208
  %v1126 = vunpack.c.l.b16 %v209
  %v1127 = vunpack.c.h.b16 %v209
  %v1128 = vunpack.c.l.b16 %v210
  %v1129 = vunpack.c.l.b16 %v211
  %v1130 = vunpack.c.h.b16 %v211
  %v1131 = vunpack.c.l.b16 %v212
  %v1132 = vunpack.c.l.b16 %v213
  %v1133 = vunpack.c.h.b16 %v213
  %v1134 = vunpack.c.l.b16 %v214
  %v1135 = vunpack.c.l.b16 %v215
  %v1136 = vunpack.c.h.b16 %v215
  %v1137 = vunpack.c.l.b16 %v216
  %v1138 = vunpack.c.l.b16 %v217
  %v1139 = vunpack.c.h.b16 %v217
  %v1140 = vunpack.c.l.b16 %v218
  %v1141 = vunpack.c.l.b16 %v219
  %v1142 = vunpack.c.h.b16 %v219
  %v1143 = vunpack.c.l.b16 %v220
  %v1144 = vunpack.c.l.b16 %v221
  %v1145 = vunpack.c.h.b16 %v221
  %v1146 = vunpack.c.l.b16 %v222
  %v1147 = vunpack.c.l.b16 %v223
  %v1148 = vunpack.c.h.b16 %v223
  %v1149 = vunpack.c.l.b16 %v224
  %v1150 = vunpack.c.l.b16 %v225
  %v1151 = vunpack.c.h.b16 %v225
  %v1152 = vunpack.c.l.b16 %v226
  %v1153 = vunpack.c.l.b16 %v227
  %v1154 = vunpack.c.h.b16 %v227
  %v1155 = vunpack.c.l.b16 %v228
  %v1156 = vunpack.c.l.b16 %v229
  %v1157 = vunpack.c.h.b16 %v229
  %v1158 = vunpack.c.l.b16 %v230
  %v1159 = vunpack.c.l.b16 %v231
  %v1160 = vunpack.c.h.b16 %v231
  %v1161 = vunpack.c.l.b16 %v232
  %v1162 = vunpack.c.l.b16 %v233
  %v1163 = vunpack.c.h.b16 %v233
  %v1164 = vunpack.c.l.b16 %v234
  %v1165 = vunpack.c.l.b16 %v235
  %v1166 = vunpack.c.h.b16 %v235
  %v1167 = vunpack.c.l.b16 %v236
  %v1168 = vunpack.c.l.b16 %v237
  %v1169 = vunpack.c.h.b16 %v237
  %v1170 = vunpack.c.l.b16 %v238
  %v1171 = vunpack.c.l.b16 %v239
  %v1172 = vunpack.c.h.b16 %v239
  %v1173 = vunpack.c.l.b16 %v240
  %v1174 = vunpack.c.l.b16 %v241
  %v1175 = vunpack.c.h.b16 %v241
  %v1176 = vunpack.c.l.b16 %v242
  %v1177 = vunpack.c.l.b16 %v243
  %v1178 = vunpack.c.h.b16 %v243
  %v1179 = vunpack.c.l.b16 %v244
  %v1180 = vunpack.c.l.b16 %v245
  %v1181 = vunpack.c.h.b16 %v245
  %v1182 = vunpack.c.l.b16 %v246
  %v1183 = vunpack.c.l.b16 %v247
  %v1184 = vunpack.c.h.b16 %v247
  %v1185 = vunpack.c.l.b16 %v248
  %v1186 = vunpack.c.l.b16 %v249
  %v1187 = vunpack.c.h.b16 %v249
  %v1188 = vunpack.c.l.b16 %v250
  %v1189 = vunpack.c.l.b16 %v251
  %v1190 = vunpack.c.h.b16 %v251
  %v1191 = vunpack.c.l.b16 %v252
  %v1192 = vunpack.c.l.b16 %v253
  %v1193 = vunpack.c.h.b16 %v253
  %v1194 = vunpack.c.l.b16 %v254
  %v1195 = vunpack.c.l.b16 %v255
  %v1196 = vunpack.c.h.b16 %v255
  %v1197 = vunpack.c.l.b16 %v256
  %v1198 = vunpack.c.l.b16 %v257
  %v1199 = vunpack.c.h.b16 %v257
  %v1200 = vunpack.c.l.b16 %v258
  %v1201 = vunpack.c.l.b16 %v259
  %v1202 = vunpack.c.h.b16 %v259
  %v1203 = vunpack.c.l.b16 %v260
  %v1204 = vunpack.c.l.b16 %v261
  %v1205 = vunpack.c.h.b16 %v261
  %v1206 = vunpack.c.l.b16 %v262
  %v1207 = vunpack.c.l.b16 %v263
  %v1208 = vunpack.c.h.b16 %v263
  %v1209 = vunpack.c.l.b16 %v264
  %v1210 = vunpack.c.l.b16 %v265
  %v1211 = vunpack.c.h.b16 %v265
  %v1212 = vunpack.c.l.b16 %v266
  %v1213 = vunpack.c.l.b16 %v267
  %v1214 = vunpack.c.h.b16 %v267
  %v1215 = vunpack.c.l.b16 %v268
  %v1216 = vunpack.c.l.b16 %v269
  %v1217 = vunpack.c.h.b16 %v269
  %v1218 = vunpack.c.l.b16 %v270
  %v1219 = vunpack.c.l.b16 %v271
  %v1220 = vunpack.c.h.b16 %v271
  %v1221 = vunpack.c.l.b16 %v272
  %v1222 = vunpack.c.l.b16 %v273
  %v1223 = vunpack.c.h.b16 %v273
  %v1224 = vunpack.c.l.b16 %v274
  %v1225 = vunpack.c.l.b16 %v275
  %v1226 = vunpack.c.h.b16 %v275
  %v1227 = vunpack.c.l.b16 %v276
  %v1228 = vunpack.c.l.b16 %v277
  %v1229 = vunpack.c.h.b16 %v277
  %v1230 = vunpack.c.l.b16 %v278
  %v1231 = vunpack.c.l.b16 %v279
  %v1232 = vunpack.c.h.b16 %v279
  %v1233 = vunpack.c.l.b16 %v280
  %v1234 = vunpack.c.l.b16 %v281
  %v1235 = vunpack.c.h.b16 %v281
  %v1236 = vunpack.c.l.b16 %v282
  %v1237 = vunpack.c.l.b16 %v283
  %v1238 = vunpack.c.h.b16 %v283
  %v1239 = vunpack.c.l.b16 %v284
  %v1240 = vunpack.c.l.b16 %v285
  %v1241 = vunpack.c.h.b16 %v285
  %v1242 = vunpack.c.l.b16 %v286
  %v1243 = vunpack.c.l.b16 %v287
  %v1244 = vunpack.c.h.b16 %v287
  %v1245 = vunpack.c.l.b16 %v288
  %v1246 = vunpack.c.l.b16 %v289
  %v1247 = vunpack.c.h.b16 %v289
  %v1248 = vunpack.c.l.b16 %v290
  %v1249 = vunpack.c.l.b16 %v291
  %v1250 = vunpack.c.h.b16 %v291
  %v1251 = vunpack.c.l.b16 %v292
  %v1252 = vunpack.c.l.b16 %v293
  %v1253 = vunpack.c.h.b16 %v293
  %v1254 = vunpack.c.l.b16 %v294
  %v1255 = vunpack.c.l.b16 %v295
  %v1256 = vunpack.c.h.b16 %v295
  %v1257 = vunpack.c.l.b16 %v296
  %v1258 = vunpack.c.l.b16 %v297
  %v1259 = vunpack.c.h.b16 %v297
  %v1260 = vunpack.c.l.b16 %v298
  %v1261 = vunpack.c.l.b16 %v299
  %v1262 = vunpack.c.h.b16 %v299
  %v1263 = vunpack.c.l.b16 %v300
  %v1264 = vunpack.c.l.b16 %v301
  %v1265 = vunpack.c.h.b16 %v301
  %v1266 = vunpack.c.l.b16 %v302
  %v1267 = vunpack.c.l.b16 %v303
  %v1268 = vunpack.c.h.b16 %v303
  %v1269 = vunpack.c.l.b16 %v304
  %v1270 = vunpack.c.l.b16 %v305
  %v1271 = vunpack.c.h.b16 %v305
  %v1272 = vunpack.c.l.b16 %v306
  %v1273 = vunpack.c.l.b16 %v307
  %v1274 = vunpack.c.h.b16 %v307
  %v1275 = vunpack.c.l.b16 %v308
  %v1276 = vunpack.c.l.b16 %v309
  %v1277 = vunpack.c.h.b16 %v309
  %v1278 = vunpack.c.l.b16 %v310
  %v1279 = vunpack.c.l.b16 %v311
  %v1280 = vunpack.c.h.b16 %v311
  %v1281 = vunpack.c.l.b16 %v312
  %v1282 = vunpack.c.l.b16 %v313
  %v1283 = vunpack.c.h.b16 %v313
  %v1284 = vunpack.c.l.b16 %v314
  %v1285 = vunpack.c.l.b16 %v315
  %v1286 = vunpack.c.h.b16 %v315
  %v1287 = vunpack.c.l.b16 %v316
  %v1288 = vunpack.c.l.b16 %v317
  %v1289 = vunpack.c.h.b16 %v317
  %v1290 = vunpack.c.l.b16 %v318
  %v1291 = vunpack.c.l.b16 %v319
  %v1292 = vunpack.c.h.b16 %v319
  %v1293 = vunpack.c.l.b16 %v320
  %v1294 = vunpack.c.l.b16 %v321
  %v1295 = vunpack.c.h.b16 %v321
  %v1296 = vunpack.c.l.b16 %v322
  %v1297 = vunpack.c.l.b16 %v323
  %v1298 = vunpack.c.h.b16 %v323
  %v1299 = vunpack.c.l.b16 %v324
  %v1300 = vunpack.c.l.b16 %v325
  %v1301 = vunpack.c.h.b16 %v325
  %v1302 = vunpack.c.l.b16 %v326
  %v1303 = vunpack.c.l.b16 %v327
  %v1304 = vunpack.c.h.b16 %v327
  %v1305 = vunpack.c.l.b16 %v328
  %v1306 = vunpack.c.l.b16 %v329
  %v1307 = vunpack.c.h.b16 %v329
  %v1308 = vunpack.c.l.b16 %v330
  %v1309 = vunpack.c.l.b16 %v331
  %v1310 = vunpack.c.h.b16 %v331
  %v1311 = vunpack.c.l.b16 %v332
  %v1312 = vunpack.c.l.b16 %v333
  %v1313 = vunpack.c.h.b16 %v333
  %v1314 = vunpack.c.l.b16 %v334
  %v1315 = vunpack.c.l.b16 %v335
  %v1316 = vunpack.c.h.b16 %v335
  %v1317 = vunpack.c.l.b16 %v336
  %v1318 = vunpack.c.l.b16 %v337
  %v1319 = vunpack.c.h.b16 %v337
  %v1320 = vunpack.c.l.b16 %v338
  %v1321 = vunpack.c.l.b16 %v339
  %v1322 = vunpack.c.h.b16 %v339
  %v1323 = vunpack.c.l.b16 %v340
  %v1324 = vunpack.c.l.b16 %v341
  %v1325 = vunpack.c.h.b16 %v341
  %v1326 = vunpack.c.l.b16 %v342
  %v1327 = vunpack.c.l.b16 %v343
  %v1328 = vunpack.c.h.b16 %v343
  %v1329 = vunpack.c.l.b16 %v344
  %v1330 = vunpack.c.l.b16 %v345
  %v1331 = vunpack.c.h.b16 %v345
  %v1332 = vunpack.c.l.b16 %v346
  %v1333 = vunpack.c.l.b16 %v347
  %v1334 = vunpack.c.h.b16 %v347
  %v1335 = vunpack.c.l.b16 %v348
  %v1336 = vunpack.c.l.b16 %v349
  %v1337 = vunpack.c.h.b16 %v349
  %v1338 = vunpack.c.l.b16 %v350
  %v1339 = vunpack.c.l.b16 %v351
  %v1340 = vunpack.c.h.b16 %v351
  %v1341 = vunpack.c.l.b16 %v352
  %v1342 = vunpack.c.l.b16 %v353
  %v1343 = vunpack.c.h.b16 %v353
  %v1344 = vunpack.c.l.b16 %v354
  %v1345 = vunpack.c.l.b16 %v355
  %v1346 = vunpack.c.h.b16 %v355
  %v1347 = vunpack.c.l.b16 %v356
  %v1348 = vunpack.c.l.b16 %v357
  %v1349 = vunpack.c.h.b16 %v357
  %v1350 = vunpack.c.l.b16 %v358
  %v1351 = vunpack.c.l.b16 %v359
  %v1352 = vunpack.c.h.b16 %v359
  %v1353 = vunpack.c.l.b16 %v360
  %v1354 = vunpack.c.l.b16 %v361
  %v1355 = vunpack.c.h.b16 %v361
  %v1356 = vunpack.c.l.b16 %v362
  %v1357 = vunpack.c.l.b16 %v363
  %v1358 = vunpack.c.h.b16 %v363
  %v1359 = vunpack.c.l.b16 %v364
  %v1360 = vunpack.c.l.b16 %v365
  %v1361 = vunpack.c.h.b16 %v365
  %v1362 = vunpack.c.l.b16 %v366
  %v1363 = vunpack.c.l.b16 %v367
  %v1364 = vunpack.c.h.b16 %v367
  %v1365 = vunpack.c.l.b16 %v368
  %v1366 = vunpack.c.l.b16 %v369
  %v1367 = vunpack.c.h.b16 %v369
  %v1368 = vunpack.c.l.b16 %v370
  %v1369 = vunpack.c.l.b16 %v371
  %v1370 = vunpack.c.h.b16 %v371
  %v1371 = vunpack.c.l.b16 %v372
  %v1372 = vunpack.c.l.b16 %v373
  %v1373 = vunpack.c.h.b16 %v373
  %v1374 = vunpack.c.l.b16 %v374
  %v1375 = vunpack.c.l.b16 %v375
  %v1376 = vunpack.c.h.b16 %v375
  %v1377 = vunpack.c.l.b16 %v376
  %v1378 = vunpack.c.l.b16 %v377
  %v1379 = vunpack.c.h.b16 %v377
  %v1380 = vunpack.c.l.b16 %v378
  %v1381 = vunpack.c.l.b16 %v379
  %v1382 = vunpack.c.h.b16 %v379
  %v1383 = vunpack.c.l.b16 %v380
  %v1384 = vunpack.c.l.b16 %v381
  %v1385 = vunpack.c.h.b16 %v381
  %v1386 = vunpack.c.l.b16 %v382
  %v1387 = vunpack.c.l.b16 %v383
  %v1388 = vunpack.c.h.b16 %v383
  %v1389 = vunpack.c.l.b16 %v384
  %v1390 = vunpack.c.l.b16 %v385
  %v1391 = vunpack.c.h.b16 %v385
  %v1392 = vunpack.c.l.b16 %v386
  %v1393 = vunpack.c.l.b16 %v387
  %v1394 = vunpack.c.h.b16 %v387
  %v1395 = vunpack.c.l.b16 %v388
  %v1396 = vunpack.c.l.b16 %v389
  %v1397 = vunpack.c.h.b16 %v389
  %v1398 = vunpack.c.l.b16 %v390
  %v1399 = vunpack.c.l.b16 %v391
  %v1400 = vunpack.c.h.b16 %v391
  %v1401 = vunpack.c.l.b16 %v392
  %v1402 = vunpack.c.l.b16 %v393
  %v1403 = vunpack.c.h.b16 %v393
  %v1404 = vunpack.c.l.b16 %v394
  %v1405 = vunpack.c.l.b16 %v395
  %v1406 = vunpack.c.h.b16 %v395
  %v1407 = vunpack.c.l.b16 %v396
  %v1408 = vunpack.c.l.b16 %v397
  %v1409 = vunpack.c.h.b16 %v397
  %v1410 = vunpack.c.l.b16 %v398
  %v1411 = vunpack.c.l.b16 %v399
  %v1412 = vunpack.c.h.b16 %v399
  %v1413 = vunpack.c.l.b16 %v400
  %v1414 = vunpack.c.l.b16 %v401
  %v1415 = vunpack.c.h.b16 %v401
  %v1416 = vunpack.c.l.b16 %v402
  %v1417 = vunpack.c.l.b16 %v403
  %v1418 = vunpack.c.h.b16 %v403
  %v1419 = vunpack.c.l.b16 %v404
  %v1420 = vunpack.c.l.b16 %v405
  %v1421 = vunpack.c.h.b16 %v405
  %v1422 = vunpack.c.l.b16 %v406
  %v1423 = vpack.c.b16 %v838, %v835
  %v1424 = vpack.c.b16 %v839, %v836
  %v1425 = vpack.c.b16 %v840, %v837
  %v1426 = vpack.c.b16 %v844, %v841
  %v1427 = vpack.c.b16 %v845, %v842
  %v1428 = vpack.c.b16 %v846, %v843
  %v1429 = vpack.c.b16 %v850, %v847
  %v1430 = vpack.c.b16 %v851, %v848
  %v1431 = vpack.c.b16 %v852, %v849
  %v1432 = vpack.c.b16 %v856, %v853
  %v1433 = vpack.c.b16 %v857, %v854
  %v1434 = vpack.c.b16 %v858, %v855
  %v1435 = vpack.c.b16 %v862, %v859
  %v1436 = vpack.c.b16 %v863, %v860
  %v1437 = vpack.c.b16 %v864, %v861
  %v1438 = vpack.c.b16 %v868, %v865
  %v1439 = vpack.c.b16 %v869, %v866
  %v1440 = vpack.c.b16 %v870, %v867
  %v1441 = vpack.c.b16 %v874, %v871
  %v1442 = vpack.c.b16 %v875, %v872
  %v1443 = vpack.c.b16 %v876, %v873
  %v1444 = vpack.c.b16 %v880, %v877
  %v1445 = vpack.c.b16 %v881, %v878
  %v1446 = vpack.c.b16 %v882, %v879
  %v1447 = vpack.c.b16 %v886, %v883
  %v1448 = vpack.c.b16 %v887, %v884
  %v1449 = vpack.c.b16 %v888, %v885
  %v1450 = vpack.c.b16 %v892, %v889
  %v1451 = vpack.c.b16 %v893, %v890
  %v1452 = vpack.c.b16 %v894, %v891
  %v1453 = vpack.c.b16 %v898, %v895
  %v1454 = vpack.c.b16 %v899, %v896
  %v1455 = vpack.c.b16 %v900, %v897
  %v1456 = vpack.c.b16 %v904, %v901
  %v1457 = vpack.c.b16 %v905, %v902
  %v1458 = vpack.c.b16 %v906, %v903
  %v1459 = vpack.c.b16 %v910, %v907
  %v1460 = vpack.c.b16 %v911, %v908
  %v1461 = vpack.c.b16 %v912, %v909
  %v1462 = vpack.c.b16 %v916, %v913
  %v1463 = vpack.c.b16 %v917, %v914
  %v1464 = vpack.c.b16 %v918, %v915
  %v1465 = vpack.c.b16 %v922, %v919
  %v1466 = vpack.c.b16 %v923, %v920
  %v1467 = vpack.c.b16 %v924, %v921
  %v1468 = vpack.c.b16 %v928, %v925
  %v1469 = vpack.c.b16 %v929, %v926
  %v1470 = vpack.c.b16 %v930, %v927
  %v1471 = vpack.c.b16 %v934, %v931
  %v1472 = vpack.c.b16 %v935, %v932
  %v1473 = vpack.c.b16 %v936, %v933
  %v1474 = vpack.c.b16 %v940, %v937
  %v1475 = vpack.c.b16 %v941, %v938
  %v1476 = vpack.c.b16 %v942, %v939
  %v1477 = vpack.c.b16 %v946, %v943
  %v1478 = vpack.c.b16 %v947, %v944
  %v1479 = vpack.c.b16 %v948, %v945
  %v1480 = vpack.c.b16 %v952, %v949
  %v1481 = vpack.c.b16 %v953, %v950
  %v1482 = vpack.c.b16 %v954, %v951
  %v1483 = vpack.c.b16 %v958, %v955
  %v1484 = vpack.c.b16 %v959, %v956
  %v1485 = vpack.c.b16 %v960, %v957
  %v1486 = vpack.c.b16 %v964, %v961
  %v1487 = vpack.c.b16 %v965, %v962
  %v1488 = vpack.c.b16 %v966, %v963
  %v1489 = vpack.c.b16 %v970, %v967
  %v1490 = vpack.c.b16 %v971, %v968
  %v1491 = vpack.c.b16 %v972, %v969
  %v1492 = vpack.c.b16 %v976, %v973
  %v1493 = vpack.c.b16 %v977, %v974
  %v1494 = vpack.c.b16 %v978, %v975
  %v1495 = vpack.c.b16 %v982, %v979
  %v1496 = vpack.c.b16 %v983, %v980
  %v1497 = vpack.c.b16 %v984, %v981
  %v1498 = vpack.c.b16 %v988, %v985
  %v1499 = vpack.c.b16 %v989, %v986
  %v1500 = vpack.c.b16 %v990, %v987
  %v1501 = vpack.c.b16 %v994, %v991
  %v1502 = vpack.c.b16 %v995, %v992
  %v1503 = vpack.c.b16 %v996, %v993
  %v1504 = vpack.c.b16 %v1000, %v997
  %v1505 = vpack.c.b16 %v1001, %v998
  %v1506 = vpack.c.b16 %v1002, %v999
  %v1507 = vpack.c.b16 %v1006, %v1003
  %v1508 = vpack.c.b16 %v1007, %v1004
  %v1509 = vpack.c.b16 %v1008, %v1005
  %v1510 = vpack.c.b16 %v1012, %v1009
  %v1511 = vpack.c.b16 %v1013, %v1010
  %v1512 = vpack.c.b16 %v1014, %v1011
  %v1513 = vpack.c.b16 %v1018, %v1015
  %v1514 = vpack.c.b16 %v1019, %v1016
  %v1515 = vpack.c.b16 %v1020, %v1017
  %v1516 = vpack.c.b16 %v1024, %v1021
  %v1517 = vpack.c.b16 %v1025, %v1022
  %v1518 = vpack.c.b16 %v1026, %v1023
  %v1519 = vpack.c.b16 %v1030, %v1027
  %v1520 = vpack.c.b16 %v1031, %v1028
  %v1521 = vpack.c.b16 %v1032, %v1029
  %v1522 = vpack.c.b16 %v1036, %v1033
  %v1523 = vpack.c.b16 %v1037, %v1034
  %v1524 = vpack.c.b16 %v1038, %v1035
  %v1525 = vpack.c.b16 %v1042, %v1039
  %v1526 = vpack.c.b16 %v1043, %v1040
  %v1527 = vpack.c.b16 %v1044, %v1041
  %v1528 = vpack.c.b16 %v1048, %v1045
  %v1529 = vpack.c.b16 %v1049, %v1046
  %v1530 = vpack.c.b16 %v1050, %v1047
  %v1531 = vpack.c.b16 %v1054, %v1051
  %v1532 = vpack.c.b16 %v1055, %v1052
  %v1533 = vpack.c.b16 %v1056, %v1053
  %v1534 = vpack.c.b16 %v1060, %v1057
  %v1535 = vpack.c.b16 %v1061, %v1058
  %v1536 = vpack.c.b16 %v1062, %v1059
  %v1537 = vpack.c.b16 %v1066, %v1063
  %v1538 = vpack.c.b16 %v1067, %v1064
  %v1539 = vpack.c.b16 %v1068, %v1065
  %v1540 = vpack.c.b16 %v1072, %v1069
  %v1541 = vpack.c.b16 %v1073, %v1070
  %v1542 = vpack.c.b16 %v1074, %v1071
  %v1543 = vpack.c.b16 %v1078, %v1075
  %v1544 = vpack.c.b16 %v1079, %v1076
  %v1545 = vpack.c.b16 %v1080, %v1077
  %v1546 = vpack.c.b16 %v1084, %v1081
  %v1547 = vpack.c.b16 %v1085, %v1082
  %v1548 = vpack.c.b16 %v1086, %v1083
  %v1549 = vpack.c.b16 %v1090, %v1087
  %v1550 = vpack.c.b16 %v1091, %v1088
  %v1551 = vpack.c.b16 %v1092, %v1089
  %v1552 = vpack.c.b16 %v1096, %v1093
  %v1553 = vpack.c.b16 %v1097, %v1094
  %v1554 = vpack.c.b16 %v1098, %v1095
  %v1555 = vpack.c.b16 %v1102, %v1099
  %v1556 = vpack.c.b16 %v1103, %v1100
  %v1557 = vpack.c.b16 %v1104, %v1101
  %v1558 = vpack.c.b16 %v1108, %v1105
  %v1559 = vpack.c.b16 %v1109, %v1106
  %v1560 = vpack.c.b16 %v1110, %v1107
  %v1561 = vpack.c.b16 %v1114, %v1111
  %v1562 = vpack.c.b16 %v1115, %v1112
  %v1563 = vpack.c.b16 %v1116, %v1113
  %v1564 = vpack.c.b16 %v1120, %v1117
  %v1565 = vpack.c.b16 %v1121, %v1118
  %v1566 = vpack.c.b16 %v1122, %v1119
  %v1567 = vpack.c.b16 %v1126, %v1123
  %v1568 = vpack.c.b16 %v1127, %v1124
  %v1569 = vpack.c.b16 %v1128, %v1125
  %v1570 = vpack.c.b16 %v1132, %v1129
  %v1571 = vpack.c.b16 %v1133, %v1130
  %v1572 = vpack.c.b16 %v1134, %v1131
  %v1573 = vpack.c.b16 %v1138, %v1135
  %v1574 = vpack.c.b16 %v1139, %v1136
  %v1575 = vpack.c.b16 %v1140, %v1137
  %v1576 = vpack.c.b16 %v1144, %v1141
  %v1577 = vpack.c.b16 %v1145, %v1142
  %v1578 = vpack.c.b16 %v1146, %v1143
  %v1579 = vpack.c.b16 %v1150, %v1147
  %v1580 = vpack.c.b16 %v1151, %v1148
  %v1581 = vpack.c.b16 %v1152, %v1149
  %v1582 = vpack.c.b16 %v1156, %v1153
  %v1583 = vpack.c.b16 %v1157, %v1154
  %v1584 = vpack.c.b16 %v1158, %v1155
  %v1585 = vpack.c.b16 %v1162, %v1159
  %v1586 = vpack.c.b16 %v1163, %v1160
  %v1587 = vpack.c.b16 %v1164, %v1161
  %v1588 = vpack.c.b16 %v1168, %v1165
  %v1589 = vpack.c.b16 %v1169, %v1166
  %v1590 = vpack.c.b16 %v1170, %v1167
  %v1591 = vpack.c.b16 %v1174, %v1171
  %v1592 = vpack.c.b16 %v1175, %v1172
  %v1593 = vpack.c.b16 %v1176, %v1173
  %v1594 = vpack.c.b16 %v1180, %v1177
  %v1595 = vpack.c.b16 %v1181, %v1178
  %v1596 = vpack.c.b16 %v1182, %v1179
  %v1597 = vpack.c.b16 %v1186, %v1183
  %v1598 = vpack.c.b16 %v1187, %v1184
  %v1599 = vpack.c.b16 %v1188, %v1185
  %v1600 = vpack.c.b16 %v1192, %v1189
  %v1601 = vpack.c.b16 %v1193, %v1190
  %v1602 = vpack.c.b16 %v1194, %v1191
  %v1603 = vpack.c.b16 %v1198, %v1195
  %v1604 = vpack.c.b16 %v1199, %v1196
  %v1605 = vpack.c.b16 %v1200, %v1197
  %v1606 = vpack.c.b16 %v1204, %v1201
  %v1607 = vpack.c.b16 %v1205, %v1202
  %v1608 = vpack.c.b16 %v1206, %v1203
  %v1609 = vpack.c.b16 %v1210, %v1207
  %v1610 = vpack.c.b16 %v1211, %v1208
  %v1611 = vpack.c.b16 %v1212, %v1209
  %v1612 = vpack.c.b16 %v1216, %v1213
  %v1613 = vpack.c.b16 %v1217, %v1214
  %v1614 = vpack.c.b16 %v1218, %v1215
  %v1615 = vpack.c.b16 %v1222, %v1219
  %v1616 = vpack.c.b16 %v1223, %v1220
  %v1617 = vpack.c.b16 %v1224, %v1221
  %v1618 = vpack.c.b16 %v1228, %v1225
  %v1619 = vpack.c.b16 %v1229, %v1226
  %v1620 = vpack.c.b16 %v1230, %v1227
  %v1621 = vpack.c.b16 %v1234, %v1231
  %v1622 = vpack.c.b16 %v1235, %v1232
  %v1623 = vpack.c.b16 %v1236, %v1233
  %v1624 = vpack.c.b16 %v1240, %v1237
  %v1625 = vpack.c.b16 %v1241, %v1238
  %v1626 = vpack.c.b16 %v1242, %v1239
  %v1627 = vpack.c.b16 %v1246, %v1243
  %v1628 = vpack.c.b16 %v1247, %v1244
  %v1629 = vpack.c.b16 %v1248, %v1245
  %v1630 = vpack.c.b16 %v1252, %v1249
  %v1631 = vpack.c.b16 %v1253, %v1250
  %v1632 = vpack.c.b16 %v1254, %v1251
  %v1633 = vpack.c.b16 %v1258, %v1255
  %v1634 = vpack.c.b16 %v1259, %v1256
  %v1635 = vpack.c.b16 %v1260, %v1257
  %v1636 = vpack.c.b16 %v1264, %v1261
  %v1637 = vpack.c.b16 %v1265, %v1262
  %v1638 = vpack.c.b16 %v1266, %v1263
  %v1639 = vpack.c.b16 %v1270, %v1267
  %v1640 = vpack.c.b16 %v1271, %v1268
  %v1641 = vpack.c.b16 %v1272, %v1269
  %v1642 = vpack.c.b16 %v1276, %v1273
  %v1643 = vpack.c.b16 %v1277, %v1274
  %v1644 = vpack.c.b16 %v1278, %v1275
  %v1645 = vpack.c.b16 %v1282, %v1279
  %v1646 = vpack.c.b16 %v1283, %v1280
  %v1647 = vpack.c.b16 %v1284, %v1281
  %v1648 = vpack.c.b16 %v1288, %v1285
  %v1649 = vpack.c.b16 %v1289, %v1286
  %v1650 = vpack.c.b16 %v1290, %v1287
  %v1651 = vpack.c.b16 %v1294, %v1291
  %v1652 = vpack.c.b16 %v1295, %v1292
  %v1653 = vpack.c.b16 %v1296, %v1293
  %v1654 = vpack.c.b16 %v1300, %v1297
  %v1655 = vpack.c.b16 %v1301, %v1298
  %v1656 = vpack.c.b16 %v1302, %v1299
  %v1657 = vpack.c.b16 %v1306, %v1303
  %v1658 = vpack.c.b16 %v1307, %v1304
  %v1659 = vpack.c.b16 %v1308, %v1305
  %v1660 = vpack.c.b16 %v1312, %v1309
  %v1661 = vpack.c.b16 %v1313, %v1310
  %v1662 = vpack.c.b16 %v1314, %v1311
  %v1663 = vpack.c.b16 %v1318, %v1315
  %v1664 = vpack.c.b16 %v1319, %v1316
  %v1665 = vpack.c.b16 %v1320, %v1317
  %v1666 = vpack.c.b16 %v1324, %v1321
  %v1667 = vpack.c.b16 %v1325, %v1322
  %v1668 = vpack.c.b16 %v1326, %v1323
  %v1669 = vpack.c.b16 %v1330, %v1327
  %v1670 = vpack.c.b16 %v1331, %v1328
  %v1671 = vpack.c.b16 %v1332, %v1329
  %v1672 = vpack.c.b16 %v1336, %v1333
  %v1673 = vpack.c.b16 %v1337, %v1334
  %v1674 = vpack.c.b16 %v1338, %v1335
  %v1675 = vpack.c.b16 %v1342, %v1339
  %v1676 = vpack.c.b16 %v1343, %v1340
  %v1677 = vpack.c.b16 %v1344, %v1341
  %v1678 = vpack.c.b16 %v1348, %v1345
  %v1679 = vpack.c.b16 %v1349, %v1346
  %v1680 = vpack.c.b16 %v1350, %v1347
  %v1681 = vpack.c.b16 %v1354, %v1351
  %v1682 = vpack.c.b16 %v1355, %v1352
  %v1683 = vpack.c.b16 %v1356, %v1353
  %v1684 = vpack.c.b16 %v1360, %v1357
  %v1685 = vpack.c.b16 %v1361, %v1358
  %v1686 = vpack.c.b16 %v1362, %v1359
  %v1687 = vpack.c.b16 %v1366, %v1363
  %v1688 = vpack.c.b16 %v1367, %v1364
  %v1689 = vpack.c.b16 %v1368, %v1365
  %v1690 = vpack.c.b16 %v1372, %v1369
  %v1691 = vpack.c.b16 %v1373, %v1370
  %v1692 = vpack.c.b16 %v1374, %v1371
  %v1693 = vpack.c.b16 %v1378, %v1375
  %v1694 = vpack.c.b16 %v1379, %v1376
  %v1695 = vpack.c.b16 %v1380, %v1377
  %v1696 = vpack.c.b16 %v1384, %v1381
  %v1697 = vpack.c.b16 %v1385, %v1382
  %v1698 = vpack.c.b16 %v1386, %v1383
  %v1699 = vpack.c.b16 %v1390, %v1387
  %v1700 = vpack.c.b16 %v1391, %v1388
  %v1701 = vpack.c.b16 %v1392, %v1389
  %v1702 = vpack.c.b16 %v1396, %v1393
  %v1703 = vpack.c.b16 %v1397, %v1394
  %v1704 = vpack.c.b16 %v1398, %v1395
  %v1705 = vpack.c.b16 %v1402, %v1399
  %v1706 = vpack.c.b16 %v1403, %v1400
  %v1707 = vpack.c.b16 %v1404, %v1401
  %v1708 = vpack.c.b16 %v1408, %v1405
  %v1709 = vpack.c.b16 %v1409, %v1406
  %v1710 = vpack.c.b16 %v1410, %v1407
  %v1711 = vpack.c.b16 %v1414, %v1411
  %v1712 = vpack.c.b16 %v1415, %v1412
  %v1713 = vpack.c.b16 %v1416, %v1413
  %v1714 = vpack.c.b16 %v1420, %v1417
  %v1715 = vpack.c.b16 %v1421, %v1418
  %v1716 = vpack.c.b16 %v1422, %v1419
  %v1949 = vunpack.c.l.b16 %v407
  %v1950 = vunpack.c.l.b16 %v408
  %v1951 = vunpack.c.l.b16 %v409
  %v1952 = vunpack.c.l.b16 %v410
  %v1953 = vunpack.c.l.b16 %v411
  %v1954 = vunpack.c.l.b16 %v412
  %v1955 = vunpack.c.l.b16 %v413
  %v1956 = vunpack.c.l.b16 %v414
  %v1957 = vunpack.c.l.b16 %v415
  %v1958 = vunpack.c.l.b16 %v416
  %v1959 = vunpack.c.l.b16 %v417
  %v1960 = vunpack.c.l.b16 %v418
  %v1961 = vunpack.c.l.b16 %v419
  %v1962 = vunpack.c.l.b16 %v420
  %v1963 = vunpack.c.l.b16 %v421
  %v1964 = vunpack.c.l.b16 %v422
  %v1965 = vunpack.c.l.b16 %v423
  %v1966 = vunpack.c.l.b16 %v424
  %v1967 = vunpack.c.l.b16 %v425
  %v1968 = vunpack.c.l.b16 %v426
  %v1969 = vunpack.c.l.b16 %v427
  %v1970 = vunpack.c.l.b16 %v428
  %v1971 = vunpack.c.l.b16 %v429
  %v1972 = vunpack.c.l.b16 %v430
  %v1973 = vunpack.c.l.b16 %v431
  %v1974 = vunpack.c.l.b16 %v432
  %v1975 = vunpack.c.l.b16 %v433
  %v1976 = vunpack.c.l.b16 %v434
  %v1977 = vunpack.c.l.b16 %v435
  %v1978 = vunpack.c.l.b16 %v436
  %v1979 = vunpack.c.l.b16 %v437
  %v1980 = vunpack.c.l.b16 %v438
  %v1981 = vunpack.c.l.b16 %v439
  %v1982 = vunpack.c.l.b16 %v440
  %v1983 = vunpack.c.l.b16 %v441
  %v1984 = vunpack.c.l.b16 %v442
  %v1985 = vpack.c.b16 %v1950, %v1949
  %v1986 = vpack.c.b16 %v1952, %v1951
  %v1987 = vpack.c.b16 %v1954, %v1953
  %v1988 = vpack.c.b16 %v1956, %v1955
  %v1989 = vpack.c.b16 %v1958, %v1957
  %v1990 = vpack.c.b16 %v1960, %v1959
  %v1991 = vpack.c.b16 %v1962, %v1961
  %v1992 = vpack.c.b16 %v1964, %v1963
  %v1993 = vpack.c.b16 %v1966, %v1965
  %v1994 = vpack.c.b16 %v1968, %v1967
  %v1995 = vpack.c.b16 %v1970, %v1969
  %v1996 = vpack.c.b16 %v1972, %v1971
  %v1997 = vpack.c.b16 %v1974, %v1973
  %v1998 = vpack.c.b16 %v1976, %v1975
  %v1999 = vpack.c.b16 %v1978, %v1977
  %v2000 = vpack.c.b16 %v1980, %v1979
  %v2001 = vpack.c.b16 %v1982, %v1981
  %v2002 = vpack.c.b16 %v1984, %v1983
  %vm2021 = vcmask 261120
  %v2023 = vsel %vm2021, %v1425, 0
  %v2026 = vsel %vm2021, %v1428, 0
  %v2029 = vsel %vm2021, %v1431, 0
  %v2032 = vsel %vm2021, %v1434, 0
  %v2035 = vsel %vm2021, %v1437, 0
  %v2038 = vsel %vm2021, %v1440, 0
  %v2041 = vsel %vm2021, %v1443, 0
  %v2044 = vsel %vm2021, %v1446, 0
  %v2047 = vsel %vm2021, %v1449, 0
  %v2050 = vsel %vm2021, %v1452, 0
  %v2053 = vsel %vm2021, %v1455, 0
  %v2056 = vsel %vm2021, %v1458, 0
  %v2059 = vsel %vm2021, %v1461, 0
  %v2062 = vsel %vm2021, %v1464, 0
  %v2065 = vsel %vm2021, %v1467, 0
  %v2068 = vsel %vm2021, %v1470, 0
  %v2071 = vsel %vm2021, %v1473, 0
  %v2074 = vsel %vm2021, %v1476, 0
  %v2077 = vsel %vm2021, %v1479, 0
  %v2080 = vsel %vm2021, %v1482, 0
  %v2083 = vsel %vm2021, %v1485, 0
  %v2086 = vsel %vm2021, %v1488, 0
  %v2089 = vsel %vm2021, %v1491, 0
  %v2092 = vsel %vm2021, %v1494, 0
  %v2095 = vsel %vm2021, %v1497, 0
  %v2098 = vsel %vm2021, %v1500, 0
  %v2101 = vsel %vm2021, %v1503, 0
  %v2104 = vsel %vm2021, %v1506, 0
  %v2107 = vsel %vm2021, %v1509, 0
  %v2110 = vsel %vm2021, %v1512, 0
  %v2113 = vsel %vm2021, %v1515, 0
  %v2116 = vsel %vm2021, %v1518, 0
  %v2119 = vsel %vm2021, %v1521, 0
  %v2122 = vsel %vm2021, %v1524, 0
  %v2125 = vsel %vm2021, %v1527, 0
  %v2128 = vsel %vm2021, %v1530, 0
  %v2131 = vsel %vm2021, %v1533, 0
  %v2134 = vsel %vm2021, %v1536, 0
  %v2137 = vsel %vm2021, %v1539, 0
  %v2140 = vsel %vm2021, %v1542, 0
  %v2143 = vsel %vm2021, %v1545, 0
  %v2146 = vsel %vm2021, %v1548, 0
  %v2149 = vsel %vm2021, %v1551, 0
  %v2152 = vsel %vm2021, %v1554, 0
  %v2155 = vsel %vm2021, %v1557, 0
  %v2158 = vsel %vm2021, %v1560, 0
  %v2161 = vsel %vm2021, %v1563, 0
  %v2164 = vsel %vm2021, %v1566, 0
  %v2167 = vsel %vm2021, %v1569, 0
  %v2170 = vsel %vm2021, %v1572, 0
  %v2173 = vsel %vm2021, %v1575, 0
  %v2176 = vsel %vm2021, %v1578, 0
  %v2179 = vsel %vm2021, %v1581, 0
  %v2182 = vsel %vm2021, %v1584, 0
  %v2185 = vsel %vm2021, %v1587, 0
  %v2188 = vsel %vm2021, %v1590, 0
  %v2191 = vsel %vm2021, %v1593, 0
  %v2194 = vsel %vm2021, %v1596, 0
  %v2197 = vsel %vm2021, %v1599, 0
  %v2200 = vsel %vm2021, %v1602, 0
  %v2203 = vsel %vm2021, %v1605, 0
  %v2206 = vsel %vm2021, %v1608, 0
  %v2209 = vsel %vm2021, %v1611, 0
  %v2212 = vsel %vm2021, %v1614, 0
  %v2215 = vsel %vm2021, %v1617, 0
  %v2218 = vsel %vm2021, %v1620, 0
  %v2221 = vsel %vm2021, %v1623, 0
  %v2224 = vsel %vm2021, %v1626, 0
  %v2227 = vsel %vm2021, %v1629, 0
  %v2230 = vsel %vm2021, %v1632, 0
  %v2233 = vsel %vm2021, %v1635, 0
  %v2236 = vsel %vm2021, %v1638, 0
  %v2239 = vsel %vm2021, %v1641, 0
  %v2242 = vsel %vm2021, %v1644, 0
  %v2245 = vsel %vm2021, %v1647, 0
  %v2248 = vsel %vm2021, %v1650, 0
  %v2251 = vsel %vm2021, %v1653, 0
  %v2254 = vsel %vm2021, %v1656, 0
  %v2257 = vsel %vm2021, %v1659, 0
  %v2260 = vsel %vm2021, %v1662, 0
  %v2263 = vsel %vm2021, %v1665, 0
  %v2266 = vsel %vm2021, %v1668, 0
  %v2269 = vsel %vm2021, %v1671, 0
  %v2272 = vsel %vm2021, %v1674, 0
  %v2275 = vsel %vm2021, %v1677, 0
  %v2278 = vsel %vm2021, %v1680, 0
  %v2281 = vsel %vm2021, %v1683, 0
  %v2284 = vsel %vm2021, %v1686, 0
  %v2287 = vsel %vm2021, %v1689, 0
  %v2290 = vsel %vm2021, %v1692, 0
  %v2293 = vsel %vm2021, %v1695, 0
  %v2296 = vsel %vm2021, %v1698, 0
  %v2299 = vsel %vm2021, %v1701, 0
  %v2302 = vsel %vm2021, %v1704, 0
  %v2305 = vsel %vm2021, %v1707, 0
  %v2308 = vsel %vm2021, %v1710, 0
  %v2311 = vsel %vm2021, %v1713, 0
  %v2314 = vsel %vm2021, %v1716, 0
  %2316 = vmatpush.bf16.msra.mxu0 %v1992
  %2317 = vmatpush.bf16.msra.mxu0 %v1991
  %2318 = vmatpush.bf16.msra.mxu0 %v1990
  %2319 = vmatpush.bf16.msra.mxu0 %v1989
  %2320 = vmatpush.bf16.msra.mxu0 %v1988
  %2321 = vmatpush.bf16.msra.mxu0 %v1987
  %2322 = vmatpush.bf16.msra.mxu0 %v1986
  %2323 = vmatpush.bf16.msra.mxu0 %v1985
  %2324 = vmatmul.bf16.gmra.mxu0 %v1423
  %v2325 = vpop.f32.mrf.mxu0
  %v2326 = vadd.f32 0.0, %v2325
  %v2327 = vpop.f32.mrf.mxu0
  %v2328 = vadd.f32 0.0, %v2327
  %2329 = vmatmul.bf16.gmra.mxu0 %v1426
  %v2330 = vpop.f32.mrf.mxu0
  %v2331 = vadd.f32 0.0, %v2330
  %v2332 = vpop.f32.mrf.mxu0
  %v2333 = vadd.f32 0.0, %v2332
  %2334 = vmatmul.bf16.gmra.mxu0 %v1429
  %v2335 = vpop.f32.mrf.mxu0
  %v2336 = vadd.f32 0.0, %v2335
  %v2337 = vpop.f32.mrf.mxu0
  %v2338 = vadd.f32 0.0, %v2337
  %2339 = vmatmul.bf16.gmra.mxu0 %v1432
  %v2340 = vpop.f32.mrf.mxu0
  %v2341 = vadd.f32 0.0, %v2340
  %v2342 = vpop.f32.mrf.mxu0
  %v2343 = vadd.f32 0.0, %v2342
  %2344 = vmatmul.bf16.gmra.mxu0 %v1435
  %v2345 = vpop.f32.mrf.mxu0
  %v2346 = vadd.f32 0.0, %v2345
  %v2347 = vpop.f32.mrf.mxu0
  %v2348 = vadd.f32 0.0, %v2347
  %2349 = vmatmul.bf16.gmra.mxu0 %v1438
  %v2350 = vpop.f32.mrf.mxu0
  %v2351 = vadd.f32 0.0, %v2350
  %v2352 = vpop.f32.mrf.mxu0
  %v2353 = vadd.f32 0.0, %v2352
  %2354 = vmatmul.bf16.gmra.mxu0 %v1441
  %v2355 = vpop.f32.mrf.mxu0
  %v2356 = vadd.f32 0.0, %v2355
  %v2357 = vpop.f32.mrf.mxu0
  %v2358 = vadd.f32 0.0, %v2357
  %2359 = vmatmul.bf16.gmra.mxu0 %v1444
  %v2360 = vpop.f32.mrf.mxu0
  %v2361 = vadd.f32 0.0, %v2360
  %v2362 = vpop.f32.mrf.mxu0
  %v2363 = vadd.f32 0.0, %v2362
  %2364 = vmatmul.bf16.gmra.mxu0 %v1447
  %v2365 = vpop.f32.mrf.mxu0
  %v2366 = vadd.f32 0.0, %v2365
  %v2367 = vpop.f32.mrf.mxu0
  %v2368 = vadd.f32 0.0, %v2367
  %2369 = vmatmul.bf16.gmra.mxu0 %v1450
  %v2370 = vpop.f32.mrf.mxu0
  %v2371 = vadd.f32 0.0, %v2370
  %v2372 = vpop.f32.mrf.mxu0
  %v2373 = vadd.f32 0.0, %v2372
  %2374 = vmatmul.bf16.gmra.mxu0 %v1453
  %v2375 = vpop.f32.mrf.mxu0
  %v2376 = vadd.f32 0.0, %v2375
  %v2377 = vpop.f32.mrf.mxu0
  %v2378 = vadd.f32 0.0, %v2377
  %2379 = vmatmul.bf16.gmra.mxu0 %v1456
  %v2380 = vpop.f32.mrf.mxu0
  %v2381 = vadd.f32 0.0, %v2380
  %v2382 = vpop.f32.mrf.mxu0
  %v2383 = vadd.f32 0.0, %v2382
  %2384 = vmatmul.bf16.gmra.mxu0 %v1459
  %v2385 = vpop.f32.mrf.mxu0
  %v2386 = vadd.f32 0.0, %v2385
  %v2387 = vpop.f32.mrf.mxu0
  %v2388 = vadd.f32 0.0, %v2387
  %2389 = vmatmul.bf16.gmra.mxu0 %v1462
  %v2390 = vpop.f32.mrf.mxu0
  %v2391 = vadd.f32 0.0, %v2390
  %v2392 = vpop.f32.mrf.mxu0
  %v2393 = vadd.f32 0.0, %v2392
  %2394 = vmatmul.bf16.gmra.mxu0 %v1465
  %v2395 = vpop.f32.mrf.mxu0
  %v2396 = vadd.f32 0.0, %v2395
  %v2397 = vpop.f32.mrf.mxu0
  %v2398 = vadd.f32 0.0, %v2397
  %2399 = vmatmul.bf16.gmra.mxu0 %v1468
  %v2400 = vpop.f32.mrf.mxu0
  %v2401 = vadd.f32 0.0, %v2400
  %v2402 = vpop.f32.mrf.mxu0
  %v2403 = vadd.f32 0.0, %v2402
  %2404 = vmatmul.bf16.gmra.mxu0 %v1471
  %v2405 = vpop.f32.mrf.mxu0
  %v2406 = vadd.f32 0.0, %v2405
  %v2407 = vpop.f32.mrf.mxu0
  %v2408 = vadd.f32 0.0, %v2407
  %2409 = vmatmul.bf16.gmra.mxu0 %v1474
  %v2410 = vpop.f32.mrf.mxu0
  %v2411 = vadd.f32 0.0, %v2410
  %v2412 = vpop.f32.mrf.mxu0
  %v2413 = vadd.f32 0.0, %v2412
  %2414 = vmatmul.bf16.gmra.mxu0 %v1477
  %v2415 = vpop.f32.mrf.mxu0
  %v2416 = vadd.f32 0.0, %v2415
  %v2417 = vpop.f32.mrf.mxu0
  %v2418 = vadd.f32 0.0, %v2417
  %2419 = vmatmul.bf16.gmra.mxu0 %v1480
  %v2420 = vpop.f32.mrf.mxu0
  %v2421 = vadd.f32 0.0, %v2420
  %v2422 = vpop.f32.mrf.mxu0
  %v2423 = vadd.f32 0.0, %v2422
  %2424 = vmatmul.bf16.gmra.mxu0 %v1483
  %v2425 = vpop.f32.mrf.mxu0
  %v2426 = vadd.f32 0.0, %v2425
  %v2427 = vpop.f32.mrf.mxu0
  %v2428 = vadd.f32 0.0, %v2427
  %2429 = vmatmul.bf16.gmra.mxu0 %v1486
  %v2430 = vpop.f32.mrf.mxu0
  %v2431 = vadd.f32 0.0, %v2430
  %v2432 = vpop.f32.mrf.mxu0
  %v2433 = vadd.f32 0.0, %v2432
  %2434 = vmatmul.bf16.gmra.mxu0 %v1489
  %v2435 = vpop.f32.mrf.mxu0
  %v2436 = vadd.f32 0.0, %v2435
  %v2437 = vpop.f32.mrf.mxu0
  %v2438 = vadd.f32 0.0, %v2437
  %2439 = vmatmul.bf16.gmra.mxu0 %v1492
  %v2440 = vpop.f32.mrf.mxu0
  %v2441 = vadd.f32 0.0, %v2440
  %v2442 = vpop.f32.mrf.mxu0
  %v2443 = vadd.f32 0.0, %v2442
  %2444 = vmatmul.bf16.gmra.mxu0 %v1495
  %v2445 = vpop.f32.mrf.mxu0
  %v2446 = vadd.f32 0.0, %v2445
  %v2447 = vpop.f32.mrf.mxu0
  %v2448 = vadd.f32 0.0, %v2447
  %2449 = vmatmul.bf16.gmra.mxu0 %v1498
  %v2450 = vpop.f32.mrf.mxu0
  %v2451 = vadd.f32 0.0, %v2450
  %v2452 = vpop.f32.mrf.mxu0
  %v2453 = vadd.f32 0.0, %v2452
  %2454 = vmatmul.bf16.gmra.mxu0 %v1501
  %v2455 = vpop.f32.mrf.mxu0
  %v2456 = vadd.f32 0.0, %v2455
  %v2457 = vpop.f32.mrf.mxu0
  %v2458 = vadd.f32 0.0, %v2457
  %2459 = vmatmul.bf16.gmra.mxu0 %v1504
  %v2460 = vpop.f32.mrf.mxu0
  %v2461 = vadd.f32 0.0, %v2460
  %v2462 = vpop.f32.mrf.mxu0
  %v2463 = vadd.f32 0.0, %v2462
  %2464 = vmatmul.bf16.gmra.mxu0 %v1507
  %v2465 = vpop.f32.mrf.mxu0
  %v2466 = vadd.f32 0.0, %v2465
  %v2467 = vpop.f32.mrf.mxu0
  %v2468 = vadd.f32 0.0, %v2467
  %2469 = vmatmul.bf16.gmra.mxu0 %v1510
  %v2470 = vpop.f32.mrf.mxu0
  %v2471 = vadd.f32 0.0, %v2470
  %v2472 = vpop.f32.mrf.mxu0
  %v2473 = vadd.f32 0.0, %v2472
  %2474 = vmatmul.bf16.gmra.mxu0 %v1513
  %v2475 = vpop.f32.mrf.mxu0
  %v2476 = vadd.f32 0.0, %v2475
  %v2477 = vpop.f32.mrf.mxu0
  %v2478 = vadd.f32 0.0, %v2477
  %2479 = vmatmul.bf16.gmra.mxu0 %v1516
  %v2480 = vpop.f32.mrf.mxu0
  %v2481 = vadd.f32 0.0, %v2480
  %v2482 = vpop.f32.mrf.mxu0
  %v2483 = vadd.f32 0.0, %v2482
  %2484 = vmatmul.bf16.gmra.mxu0 %v1519
  %v2485 = vpop.f32.mrf.mxu0
  %v2486 = vadd.f32 0.0, %v2485
  %v2487 = vpop.f32.mrf.mxu0
  %v2488 = vadd.f32 0.0, %v2487
  %2489 = vmatmul.bf16.gmra.mxu0 %v1522
  %v2490 = vpop.f32.mrf.mxu0
  %v2491 = vadd.f32 0.0, %v2490
  %v2492 = vpop.f32.mrf.mxu0
  %v2493 = vadd.f32 0.0, %v2492
  %2494 = vmatmul.bf16.gmra.mxu0 %v1525
  %v2495 = vpop.f32.mrf.mxu0
  %v2496 = vadd.f32 0.0, %v2495
  %v2497 = vpop.f32.mrf.mxu0
  %v2498 = vadd.f32 0.0, %v2497
  %2499 = vmatmul.bf16.gmra.mxu0 %v1528
  %v2500 = vpop.f32.mrf.mxu0
  %v2501 = vadd.f32 0.0, %v2500
  %v2502 = vpop.f32.mrf.mxu0
  %v2503 = vadd.f32 0.0, %v2502
  %2504 = vmatmul.bf16.gmra.mxu0 %v1531
  %v2505 = vpop.f32.mrf.mxu0
  %v2506 = vadd.f32 0.0, %v2505
  %v2507 = vpop.f32.mrf.mxu0
  %v2508 = vadd.f32 0.0, %v2507
  %2509 = vmatmul.bf16.gmra.mxu0 %v1534
  %v2510 = vpop.f32.mrf.mxu0
  %v2511 = vadd.f32 0.0, %v2510
  %v2512 = vpop.f32.mrf.mxu0
  %v2513 = vadd.f32 0.0, %v2512
  %2514 = vmatmul.bf16.gmra.mxu0 %v1537
  %v2515 = vpop.f32.mrf.mxu0
  %v2516 = vadd.f32 0.0, %v2515
  %v2517 = vpop.f32.mrf.mxu0
  %v2518 = vadd.f32 0.0, %v2517
  %2519 = vmatmul.bf16.gmra.mxu0 %v1540
  %v2520 = vpop.f32.mrf.mxu0
  %v2521 = vadd.f32 0.0, %v2520
  %v2522 = vpop.f32.mrf.mxu0
  %v2523 = vadd.f32 0.0, %v2522
  %2524 = vmatmul.bf16.gmra.mxu0 %v1543
  %v2525 = vpop.f32.mrf.mxu0
  %v2526 = vadd.f32 0.0, %v2525
  %v2527 = vpop.f32.mrf.mxu0
  %v2528 = vadd.f32 0.0, %v2527
  %2529 = vmatmul.bf16.gmra.mxu0 %v1546
  %v2530 = vpop.f32.mrf.mxu0
  %v2531 = vadd.f32 0.0, %v2530
  %v2532 = vpop.f32.mrf.mxu0
  %v2533 = vadd.f32 0.0, %v2532
  %2534 = vmatmul.bf16.gmra.mxu0 %v1549
  %v2535 = vpop.f32.mrf.mxu0
  %v2536 = vadd.f32 0.0, %v2535
  %v2537 = vpop.f32.mrf.mxu0
  %v2538 = vadd.f32 0.0, %v2537
  %2539 = vmatmul.bf16.gmra.mxu0 %v1552
  %v2540 = vpop.f32.mrf.mxu0
  %v2541 = vadd.f32 0.0, %v2540
  %v2542 = vpop.f32.mrf.mxu0
  %v2543 = vadd.f32 0.0, %v2542
  %2544 = vmatmul.bf16.gmra.mxu0 %v1555
  %v2545 = vpop.f32.mrf.mxu0
  %v2546 = vadd.f32 0.0, %v2545
  %v2547 = vpop.f32.mrf.mxu0
  %v2548 = vadd.f32 0.0, %v2547
  %2549 = vmatmul.bf16.gmra.mxu0 %v1558
  %v2550 = vpop.f32.mrf.mxu0
  %v2551 = vadd.f32 0.0, %v2550
  %v2552 = vpop.f32.mrf.mxu0
  %v2553 = vadd.f32 0.0, %v2552
  %2554 = vmatmul.bf16.gmra.mxu0 %v1561
  %v2555 = vpop.f32.mrf.mxu0
  %v2556 = vadd.f32 0.0, %v2555
  %v2557 = vpop.f32.mrf.mxu0
  %v2558 = vadd.f32 0.0, %v2557
  %2559 = vmatmul.bf16.gmra.mxu0 %v1564
  %v2560 = vpop.f32.mrf.mxu0
  %v2561 = vadd.f32 0.0, %v2560
  %v2562 = vpop.f32.mrf.mxu0
  %v2563 = vadd.f32 0.0, %v2562
  %2564 = vmatmul.bf16.gmra.mxu0 %v1567
  %v2565 = vpop.f32.mrf.mxu0
  %v2566 = vadd.f32 0.0, %v2565
  %v2567 = vpop.f32.mrf.mxu0
  %v2568 = vadd.f32 0.0, %v2567
  %2569 = vmatmul.bf16.gmra.mxu0 %v1570
  %v2570 = vpop.f32.mrf.mxu0
  %v2571 = vadd.f32 0.0, %v2570
  %v2572 = vpop.f32.mrf.mxu0
  %v2573 = vadd.f32 0.0, %v2572
  %2574 = vmatmul.bf16.gmra.mxu0 %v1573
  %v2575 = vpop.f32.mrf.mxu0
  %v2576 = vadd.f32 0.0, %v2575
  %v2577 = vpop.f32.mrf.mxu0
  %v2578 = vadd.f32 0.0, %v2577
  %2579 = vmatmul.bf16.gmra.mxu0 %v1576
  %v2580 = vpop.f32.mrf.mxu0
  %v2581 = vadd.f32 0.0, %v2580
  %v2582 = vpop.f32.mrf.mxu0
  %v2583 = vadd.f32 0.0, %v2582
  %2584 = vmatmul.bf16.gmra.mxu0 %v1579
  %v2585 = vpop.f32.mrf.mxu0
  %v2586 = vadd.f32 0.0, %v2585
  %v2587 = vpop.f32.mrf.mxu0
  %v2588 = vadd.f32 0.0, %v2587
  %2589 = vmatmul.bf16.gmra.mxu0 %v1582
  %v2590 = vpop.f32.mrf.mxu0
  %v2591 = vadd.f32 0.0, %v2590
  %v2592 = vpop.f32.mrf.mxu0
  %v2593 = vadd.f32 0.0, %v2592
  %2594 = vmatmul.bf16.gmra.mxu0 %v1585
  %v2595 = vpop.f32.mrf.mxu0
  %v2596 = vadd.f32 0.0, %v2595
  %v2597 = vpop.f32.mrf.mxu0
  %v2598 = vadd.f32 0.0, %v2597
  %2599 = vmatmul.bf16.gmra.mxu0 %v1588
  %v2600 = vpop.f32.mrf.mxu0
  %v2601 = vadd.f32 0.0, %v2600
  %v2602 = vpop.f32.mrf.mxu0
  %v2603 = vadd.f32 0.0, %v2602
  %2604 = vmatmul.bf16.gmra.mxu0 %v1591
  %v2605 = vpop.f32.mrf.mxu0
  %v2606 = vadd.f32 0.0, %v2605
  %v2607 = vpop.f32.mrf.mxu0
  %v2608 = vadd.f32 0.0, %v2607
  %2609 = vmatmul.bf16.gmra.mxu0 %v1594
  %v2610 = vpop.f32.mrf.mxu0
  %v2611 = vadd.f32 0.0, %v2610
  %v2612 = vpop.f32.mrf.mxu0
  %v2613 = vadd.f32 0.0, %v2612
  %2614 = vmatmul.bf16.gmra.mxu0 %v1597
  %v2615 = vpop.f32.mrf.mxu0
  %v2616 = vadd.f32 0.0, %v2615
  %v2617 = vpop.f32.mrf.mxu0
  %v2618 = vadd.f32 0.0, %v2617
  %2619 = vmatmul.bf16.gmra.mxu0 %v1600
  %v2620 = vpop.f32.mrf.mxu0
  %v2621 = vadd.f32 0.0, %v2620
  %v2622 = vpop.f32.mrf.mxu0
  %v2623 = vadd.f32 0.0, %v2622
  %2624 = vmatmul.bf16.gmra.mxu0 %v1603
  %v2625 = vpop.f32.mrf.mxu0
  %v2626 = vadd.f32 0.0, %v2625
  %v2627 = vpop.f32.mrf.mxu0
  %v2628 = vadd.f32 0.0, %v2627
  %2629 = vmatmul.bf16.gmra.mxu0 %v1606
  %v2630 = vpop.f32.mrf.mxu0
  %v2631 = vadd.f32 0.0, %v2630
  %v2632 = vpop.f32.mrf.mxu0
  %v2633 = vadd.f32 0.0, %v2632
  %2634 = vmatmul.bf16.gmra.mxu0 %v1609
  %v2635 = vpop.f32.mrf.mxu0
  %v2636 = vadd.f32 0.0, %v2635
  %v2637 = vpop.f32.mrf.mxu0
  %v2638 = vadd.f32 0.0, %v2637
  %2639 = vmatmul.bf16.gmra.mxu0 %v1612
  %v2640 = vpop.f32.mrf.mxu0
  %v2641 = vadd.f32 0.0, %v2640
  %v2642 = vpop.f32.mrf.mxu0
  %v2643 = vadd.f32 0.0, %v2642
  %2644 = vmatmul.bf16.gmra.mxu0 %v1615
  %v2645 = vpop.f32.mrf.mxu0
  %v2646 = vadd.f32 0.0, %v2645
  %v2647 = vpop.f32.mrf.mxu0
  %v2648 = vadd.f32 0.0, %v2647
  %2649 = vmatmul.bf16.gmra.mxu0 %v1618
  %v2650 = vpop.f32.mrf.mxu0
  %v2651 = vadd.f32 0.0, %v2650
  %v2652 = vpop.f32.mrf.mxu0
  %v2653 = vadd.f32 0.0, %v2652
  %2654 = vmatmul.bf16.gmra.mxu0 %v1621
  %v2655 = vpop.f32.mrf.mxu0
  %v2656 = vadd.f32 0.0, %v2655
  %v2657 = vpop.f32.mrf.mxu0
  %v2658 = vadd.f32 0.0, %v2657
  %2659 = vmatmul.bf16.gmra.mxu0 %v1624
  %v2660 = vpop.f32.mrf.mxu0
  %v2661 = vadd.f32 0.0, %v2660
  %v2662 = vpop.f32.mrf.mxu0
  %v2663 = vadd.f32 0.0, %v2662
  %2664 = vmatmul.bf16.gmra.mxu0 %v1627
  %v2665 = vpop.f32.mrf.mxu0
  %v2666 = vadd.f32 0.0, %v2665
  %v2667 = vpop.f32.mrf.mxu0
  %v2668 = vadd.f32 0.0, %v2667
  %2669 = vmatmul.bf16.gmra.mxu0 %v1630
  %v2670 = vpop.f32.mrf.mxu0
  %v2671 = vadd.f32 0.0, %v2670
  %v2672 = vpop.f32.mrf.mxu0
  %v2673 = vadd.f32 0.0, %v2672
  %2674 = vmatmul.bf16.gmra.mxu0 %v1633
  %v2675 = vpop.f32.mrf.mxu0
  %v2676 = vadd.f32 0.0, %v2675
  %v2677 = vpop.f32.mrf.mxu0
  %v2678 = vadd.f32 0.0, %v2677
  %2679 = vmatmul.bf16.gmra.mxu0 %v1636
  %v2680 = vpop.f32.mrf.mxu0
  %v2681 = vadd.f32 0.0, %v2680
  %v2682 = vpop.f32.mrf.mxu0
  %v2683 = vadd.f32 0.0, %v2682
  %2684 = vmatmul.bf16.gmra.mxu0 %v1639
  %v2685 = vpop.f32.mrf.mxu0
  %v2686 = vadd.f32 0.0, %v2685
  %v2687 = vpop.f32.mrf.mxu0
  %v2688 = vadd.f32 0.0, %v2687
  %2689 = vmatmul.bf16.gmra.mxu0 %v1642
  %v2690 = vpop.f32.mrf.mxu0
  %v2691 = vadd.f32 0.0, %v2690
  %v2692 = vpop.f32.mrf.mxu0
  %v2693 = vadd.f32 0.0, %v2692
  %2694 = vmatmul.bf16.gmra.mxu0 %v1645
  %v2695 = vpop.f32.mrf.mxu0
  %v2696 = vadd.f32 0.0, %v2695
  %v2697 = vpop.f32.mrf.mxu0
  %v2698 = vadd.f32 0.0, %v2697
  %2699 = vmatmul.bf16.gmra.mxu0 %v1648
  %v2700 = vpop.f32.mrf.mxu0
  %v2701 = vadd.f32 0.0, %v2700
  %v2702 = vpop.f32.mrf.mxu0
  %v2703 = vadd.f32 0.0, %v2702
  %2704 = vmatmul.bf16.gmra.mxu0 %v1651
  %v2705 = vpop.f32.mrf.mxu0
  %v2706 = vadd.f32 0.0, %v2705
  %v2707 = vpop.f32.mrf.mxu0
  %v2708 = vadd.f32 0.0, %v2707
  %2709 = vmatmul.bf16.gmra.mxu0 %v1654
  %v2710 = vpop.f32.mrf.mxu0
  %v2711 = vadd.f32 0.0, %v2710
  %v2712 = vpop.f32.mrf.mxu0
  %v2713 = vadd.f32 0.0, %v2712
  %2714 = vmatmul.bf16.gmra.mxu0 %v1657
  %v2715 = vpop.f32.mrf.mxu0
  %v2716 = vadd.f32 0.0, %v2715
  %v2717 = vpop.f32.mrf.mxu0
  %v2718 = vadd.f32 0.0, %v2717
  %2719 = vmatmul.bf16.gmra.mxu0 %v1660
  %v2720 = vpop.f32.mrf.mxu0
  %v2721 = vadd.f32 0.0, %v2720
  %v2722 = vpop.f32.mrf.mxu0
  %v2723 = vadd.f32 0.0, %v2722
  %2724 = vmatmul.bf16.gmra.mxu0 %v1663
  %v2725 = vpop.f32.mrf.mxu0
  %v2726 = vadd.f32 0.0, %v2725
  %v2727 = vpop.f32.mrf.mxu0
  %v2728 = vadd.f32 0.0, %v2727
  %2729 = vmatmul.bf16.gmra.mxu0 %v1666
  %v2730 = vpop.f32.mrf.mxu0
  %v2731 = vadd.f32 0.0, %v2730
  %v2732 = vpop.f32.mrf.mxu0
  %v2733 = vadd.f32 0.0, %v2732
  %2734 = vmatmul.bf16.gmra.mxu0 %v1669
  %v2735 = vpop.f32.mrf.mxu0
  %v2736 = vadd.f32 0.0, %v2735
  %v2737 = vpop.f32.mrf.mxu0
  %v2738 = vadd.f32 0.0, %v2737
  %2739 = vmatmul.bf16.gmra.mxu0 %v1672
  %v2740 = vpop.f32.mrf.mxu0
  %v2741 = vadd.f32 0.0, %v2740
  %v2742 = vpop.f32.mrf.mxu0
  %v2743 = vadd.f32 0.0, %v2742
  %2744 = vmatmul.bf16.gmra.mxu0 %v1675
  %v2745 = vpop.f32.mrf.mxu0
  %v2746 = vadd.f32 0.0, %v2745
  %v2747 = vpop.f32.mrf.mxu0
  %v2748 = vadd.f32 0.0, %v2747
  %2749 = vmatmul.bf16.gmra.mxu0 %v1678
  %v2750 = vpop.f32.mrf.mxu0
  %v2751 = vadd.f32 0.0, %v2750
  %v2752 = vpop.f32.mrf.mxu0
  %v2753 = vadd.f32 0.0, %v2752
  %2754 = vmatmul.bf16.gmra.mxu0 %v1681
  %v2755 = vpop.f32.mrf.mxu0
  %v2756 = vadd.f32 0.0, %v2755
  %v2757 = vpop.f32.mrf.mxu0
  %v2758 = vadd.f32 0.0, %v2757
  %2759 = vmatmul.bf16.gmra.mxu0 %v1684
  %v2760 = vpop.f32.mrf.mxu0
  %v2761 = vadd.f32 0.0, %v2760
  %v2762 = vpop.f32.mrf.mxu0
  %v2763 = vadd.f32 0.0, %v2762
  %2764 = vmatmul.bf16.gmra.mxu0 %v1687
  %v2765 = vpop.f32.mrf.mxu0
  %v2766 = vadd.f32 0.0, %v2765
  %v2767 = vpop.f32.mrf.mxu0
  %v2768 = vadd.f32 0.0, %v2767
  %2769 = vmatmul.bf16.gmra.mxu0 %v1690
  %v2770 = vpop.f32.mrf.mxu0
  %v2771 = vadd.f32 0.0, %v2770
  %v2772 = vpop.f32.mrf.mxu0
  %v2773 = vadd.f32 0.0, %v2772
  %2774 = vmatmul.bf16.gmra.mxu0 %v1693
  %v2775 = vpop.f32.mrf.mxu0
  %v2776 = vadd.f32 0.0, %v2775
  %v2777 = vpop.f32.mrf.mxu0
  %v2778 = vadd.f32 0.0, %v2777
  %2779 = vmatmul.bf16.gmra.mxu0 %v1696
  %v2780 = vpop.f32.mrf.mxu0
  %v2781 = vadd.f32 0.0, %v2780
  %v2782 = vpop.f32.mrf.mxu0
  %v2783 = vadd.f32 0.0, %v2782
  %2784 = vmatmul.bf16.gmra.mxu0 %v1699
  %v2785 = vpop.f32.mrf.mxu0
  %v2786 = vadd.f32 0.0, %v2785
  %v2787 = vpop.f32.mrf.mxu0
  %v2788 = vadd.f32 0.0, %v2787
  %2789 = vmatmul.bf16.gmra.mxu0 %v1702
  %v2790 = vpop.f32.mrf.mxu0
  %v2791 = vadd.f32 0.0, %v2790
  %v2792 = vpop.f32.mrf.mxu0
  %v2793 = vadd.f32 0.0, %v2792
  %2794 = vmatmul.bf16.gmra.mxu0 %v1705
  %v2795 = vpop.f32.mrf.mxu0
  %v2796 = vadd.f32 0.0, %v2795
  %v2797 = vpop.f32.mrf.mxu0
  %v2798 = vadd.f32 0.0, %v2797
  %2799 = vmatmul.bf16.gmra.mxu0 %v1708
  %v2800 = vpop.f32.mrf.mxu0
  %v2801 = vadd.f32 0.0, %v2800
  %v2802 = vpop.f32.mrf.mxu0
  %v2803 = vadd.f32 0.0, %v2802
  %2804 = vmatmul.bf16.gmra.mxu0 %v1711
  %v2805 = vpop.f32.mrf.mxu0
  %v2806 = vadd.f32 0.0, %v2805
  %v2807 = vpop.f32.mrf.mxu0
  %v2808 = vadd.f32 0.0, %v2807
  %2809 = vmatmul.bf16.gmra.mxu0 %v1714
  %v2810 = vpop.f32.mrf.mxu0
  %v2811 = vadd.f32 0.0, %v2810
  %v2812 = vpop.f32.mrf.mxu0
  %v2813 = vadd.f32 0.0, %v2812
  %2814 = vdwg.mxu0
  %2815 = vmatpush.bf16.msra.mxu0 %v2000
  %2816 = vmatpush.bf16.msra.mxu0 %v1999
  %2817 = vmatpush.bf16.msra.mxu0 %v1998
  %2818 = vmatpush.bf16.msra.mxu0 %v1997
  %2819 = vmatpush.bf16.msra.mxu0 %v1996
  %2820 = vmatpush.bf16.msra.mxu0 %v1995
  %2821 = vmatpush.bf16.msra.mxu0 %v1994
  %2822 = vmatpush.bf16.msra.mxu0 %v1993
  %2823 = vmatmul.bf16.gmra.mxu0 %v1424
  %v2824 = vpop.f32.mrf.mxu0
  %v2825 = vadd.f32 %v2326, %v2824
  %v2826 = vpop.f32.mrf.mxu0
  %v2827 = vadd.f32 %v2328, %v2826
  %2828 = vmatmul.bf16.gmra.mxu0 %v1427
  %v2829 = vpop.f32.mrf.mxu0
  %v2830 = vadd.f32 %v2331, %v2829
  %v2831 = vpop.f32.mrf.mxu0
  %v2832 = vadd.f32 %v2333, %v2831
  %2833 = vmatmul.bf16.gmra.mxu0 %v1430
  %v2834 = vpop.f32.mrf.mxu0
  %v2835 = vadd.f32 %v2336, %v2834
  %v2836 = vpop.f32.mrf.mxu0
  %v2837 = vadd.f32 %v2338, %v2836
  %2838 = vmatmul.bf16.gmra.mxu0 %v1433
  %v2839 = vpop.f32.mrf.mxu0
  %v2840 = vadd.f32 %v2341, %v2839
  %v2841 = vpop.f32.mrf.mxu0
  %v2842 = vadd.f32 %v2343, %v2841
  %2843 = vmatmul.bf16.gmra.mxu0 %v1436
  %v2844 = vpop.f32.mrf.mxu0
  %v2845 = vadd.f32 %v2346, %v2844
  %v2846 = vpop.f32.mrf.mxu0
  %v2847 = vadd.f32 %v2348, %v2846
  %2848 = vmatmul.bf16.gmra.mxu0 %v1439
  %v2849 = vpop.f32.mrf.mxu0
  %v2850 = vadd.f32 %v2351, %v2849
  %v2851 = vpop.f32.mrf.mxu0
  %v2852 = vadd.f32 %v2353, %v2851
  %2853 = vmatmul.bf16.gmra.mxu0 %v1442
  %v2854 = vpop.f32.mrf.mxu0
  %v2855 = vadd.f32 %v2356, %v2854
  %v2856 = vpop.f32.mrf.mxu0
  %v2857 = vadd.f32 %v2358, %v2856
  %2858 = vmatmul.bf16.gmra.mxu0 %v1445
  %v2859 = vpop.f32.mrf.mxu0
  %v2860 = vadd.f32 %v2361, %v2859
  %v2861 = vpop.f32.mrf.mxu0
  %v2862 = vadd.f32 %v2363, %v2861
  %2863 = vmatmul.bf16.gmra.mxu0 %v1448
  %v2864 = vpop.f32.mrf.mxu0
  %v2865 = vadd.f32 %v2366, %v2864
  %v2866 = vpop.f32.mrf.mxu0
  %v2867 = vadd.f32 %v2368, %v2866
  %2868 = vmatmul.bf16.gmra.mxu0 %v1451
  %v2869 = vpop.f32.mrf.mxu0
  %v2870 = vadd.f32 %v2371, %v2869
  %v2871 = vpop.f32.mrf.mxu0
  %v2872 = vadd.f32 %v2373, %v2871
  %2873 = vmatmul.bf16.gmra.mxu0 %v1454
  %v2874 = vpop.f32.mrf.mxu0
  %v2875 = vadd.f32 %v2376, %v2874
  %v2876 = vpop.f32.mrf.mxu0
  %v2877 = vadd.f32 %v2378, %v2876
  %2878 = vmatmul.bf16.gmra.mxu0 %v1457
  %v2879 = vpop.f32.mrf.mxu0
  %v2880 = vadd.f32 %v2381, %v2879
  %v2881 = vpop.f32.mrf.mxu0
  %v2882 = vadd.f32 %v2383, %v2881
  %2883 = vmatmul.bf16.gmra.mxu0 %v1460
  %v2884 = vpop.f32.mrf.mxu0
  %v2885 = vadd.f32 %v2386, %v2884
  %v2886 = vpop.f32.mrf.mxu0
  %v2887 = vadd.f32 %v2388, %v2886
  %2888 = vmatmul.bf16.gmra.mxu0 %v1463
  %v2889 = vpop.f32.mrf.mxu0
  %v2890 = vadd.f32 %v2391, %v2889
  %v2891 = vpop.f32.mrf.mxu0
  %v2892 = vadd.f32 %v2393, %v2891
  %2893 = vmatmul.bf16.gmra.mxu0 %v1466
  %v2894 = vpop.f32.mrf.mxu0
  %v2895 = vadd.f32 %v2396, %v2894
  %v2896 = vpop.f32.mrf.mxu0
  %v2897 = vadd.f32 %v2398, %v2896
  %2898 = vmatmul.bf16.gmra.mxu0 %v1469
  %v2899 = vpop.f32.mrf.mxu0
  %v2900 = vadd.f32 %v2401, %v2899
  %v2901 = vpop.f32.mrf.mxu0
  %v2902 = vadd.f32 %v2403, %v2901
  %2903 = vmatmul.bf16.gmra.mxu0 %v1472
  %v2904 = vpop.f32.mrf.mxu0
  %v2905 = vadd.f32 %v2406, %v2904
  %v2906 = vpop.f32.mrf.mxu0
  %v2907 = vadd.f32 %v2408, %v2906
  %2908 = vmatmul.bf16.gmra.mxu0 %v1475
  %v2909 = vpop.f32.mrf.mxu0
  %v2910 = vadd.f32 %v2411, %v2909
  %v2911 = vpop.f32.mrf.mxu0
  %v2912 = vadd.f32 %v2413, %v2911
  %2913 = vmatmul.bf16.gmra.mxu0 %v1478
  %v2914 = vpop.f32.mrf.mxu0
  %v2915 = vadd.f32 %v2416, %v2914
  %v2916 = vpop.f32.mrf.mxu0
  %v2917 = vadd.f32 %v2418, %v2916
  %2918 = vmatmul.bf16.gmra.mxu0 %v1481
  %v2919 = vpop.f32.mrf.mxu0
  %v2920 = vadd.f32 %v2421, %v2919
  %v2921 = vpop.f32.mrf.mxu0
  %v2922 = vadd.f32 %v2423, %v2921
  %2923 = vmatmul.bf16.gmra.mxu0 %v1484
  %v2924 = vpop.f32.mrf.mxu0
  %v2925 = vadd.f32 %v2426, %v2924
  %v2926 = vpop.f32.mrf.mxu0
  %v2927 = vadd.f32 %v2428, %v2926
  %2928 = vmatmul.bf16.gmra.mxu0 %v1487
  %v2929 = vpop.f32.mrf.mxu0
  %v2930 = vadd.f32 %v2431, %v2929
  %v2931 = vpop.f32.mrf.mxu0
  %v2932 = vadd.f32 %v2433, %v2931
  %2933 = vmatmul.bf16.gmra.mxu0 %v1490
  %v2934 = vpop.f32.mrf.mxu0
  %v2935 = vadd.f32 %v2436, %v2934
  %v2936 = vpop.f32.mrf.mxu0
  %v2937 = vadd.f32 %v2438, %v2936
  %2938 = vmatmul.bf16.gmra.mxu0 %v1493
  %v2939 = vpop.f32.mrf.mxu0
  %v2940 = vadd.f32 %v2441, %v2939
  %v2941 = vpop.f32.mrf.mxu0
  %v2942 = vadd.f32 %v2443, %v2941
  %2943 = vmatmul.bf16.gmra.mxu0 %v1496
  %v2944 = vpop.f32.mrf.mxu0
  %v2945 = vadd.f32 %v2446, %v2944
  %v2946 = vpop.f32.mrf.mxu0
  %v2947 = vadd.f32 %v2448, %v2946
  %2948 = vmatmul.bf16.gmra.mxu0 %v1499
  %v2949 = vpop.f32.mrf.mxu0
  %v2950 = vadd.f32 %v2451, %v2949
  %v2951 = vpop.f32.mrf.mxu0
  %v2952 = vadd.f32 %v2453, %v2951
  %2953 = vmatmul.bf16.gmra.mxu0 %v1502
  %v2954 = vpop.f32.mrf.mxu0
  %v2955 = vadd.f32 %v2456, %v2954
  %v2956 = vpop.f32.mrf.mxu0
  %v2957 = vadd.f32 %v2458, %v2956
  %2958 = vmatmul.bf16.gmra.mxu0 %v1505
  %v2959 = vpop.f32.mrf.mxu0
  %v2960 = vadd.f32 %v2461, %v2959
  %v2961 = vpop.f32.mrf.mxu0
  %v2962 = vadd.f32 %v2463, %v2961
  %2963 = vmatmul.bf16.gmra.mxu0 %v1508
  %v2964 = vpop.f32.mrf.mxu0
  %v2965 = vadd.f32 %v2466, %v2964
  %v2966 = vpop.f32.mrf.mxu0
  %v2967 = vadd.f32 %v2468, %v2966
  %2968 = vmatmul.bf16.gmra.mxu0 %v1511
  %v2969 = vpop.f32.mrf.mxu0
  %v2970 = vadd.f32 %v2471, %v2969
  %v2971 = vpop.f32.mrf.mxu0
  %v2972 = vadd.f32 %v2473, %v2971
  %2973 = vmatmul.bf16.gmra.mxu0 %v1514
  %v2974 = vpop.f32.mrf.mxu0
  %v2975 = vadd.f32 %v2476, %v2974
  %v2976 = vpop.f32.mrf.mxu0
  %v2977 = vadd.f32 %v2478, %v2976
  %2978 = vmatmul.bf16.gmra.mxu0 %v1517
  %v2979 = vpop.f32.mrf.mxu0
  %v2980 = vadd.f32 %v2481, %v2979
  %v2981 = vpop.f32.mrf.mxu0
  %v2982 = vadd.f32 %v2483, %v2981
  %2983 = vmatmul.bf16.gmra.mxu0 %v1520
  %v2984 = vpop.f32.mrf.mxu0
  %v2985 = vadd.f32 %v2486, %v2984
  %v2986 = vpop.f32.mrf.mxu0
  %v2987 = vadd.f32 %v2488, %v2986
  %2988 = vmatmul.bf16.gmra.mxu0 %v1523
  %v2989 = vpop.f32.mrf.mxu0
  %v2990 = vadd.f32 %v2491, %v2989
  %v2991 = vpop.f32.mrf.mxu0
  %v2992 = vadd.f32 %v2493, %v2991
  %2993 = vmatmul.bf16.gmra.mxu0 %v1526
  %v2994 = vpop.f32.mrf.mxu0
  %v2995 = vadd.f32 %v2496, %v2994
  %v2996 = vpop.f32.mrf.mxu0
  %v2997 = vadd.f32 %v2498, %v2996
  %2998 = vmatmul.bf16.gmra.mxu0 %v1529
  %v2999 = vpop.f32.mrf.mxu0
  %v3000 = vadd.f32 %v2501, %v2999
  %v3001 = vpop.f32.mrf.mxu0
  %v3002 = vadd.f32 %v2503, %v3001
  %3003 = vmatmul.bf16.gmra.mxu0 %v1532
  %v3004 = vpop.f32.mrf.mxu0
  %v3005 = vadd.f32 %v2506, %v3004
  %v3006 = vpop.f32.mrf.mxu0
  %v3007 = vadd.f32 %v2508, %v3006
  %3008 = vmatmul.bf16.gmra.mxu0 %v1535
  %v3009 = vpop.f32.mrf.mxu0
  %v3010 = vadd.f32 %v2511, %v3009
  %v3011 = vpop.f32.mrf.mxu0
  %v3012 = vadd.f32 %v2513, %v3011
  %3013 = vmatmul.bf16.gmra.mxu0 %v1538
  %v3014 = vpop.f32.mrf.mxu0
  %v3015 = vadd.f32 %v2516, %v3014
  %v3016 = vpop.f32.mrf.mxu0
  %v3017 = vadd.f32 %v2518, %v3016
  %3018 = vmatmul.bf16.gmra.mxu0 %v1541
  %v3019 = vpop.f32.mrf.mxu0
  %v3020 = vadd.f32 %v2521, %v3019
  %v3021 = vpop.f32.mrf.mxu0
  %v3022 = vadd.f32 %v2523, %v3021
  %3023 = vmatmul.bf16.gmra.mxu0 %v1544
  %v3024 = vpop.f32.mrf.mxu0
  %v3025 = vadd.f32 %v2526, %v3024
  %v3026 = vpop.f32.mrf.mxu0
  %v3027 = vadd.f32 %v2528, %v3026
  %3028 = vmatmul.bf16.gmra.mxu0 %v1547
  %v3029 = vpop.f32.mrf.mxu0
  %v3030 = vadd.f32 %v2531, %v3029
  %v3031 = vpop.f32.mrf.mxu0
  %v3032 = vadd.f32 %v2533, %v3031
  %3033 = vmatmul.bf16.gmra.mxu0 %v1550
  %v3034 = vpop.f32.mrf.mxu0
  %v3035 = vadd.f32 %v2536, %v3034
  %v3036 = vpop.f32.mrf.mxu0
  %v3037 = vadd.f32 %v2538, %v3036
  %3038 = vmatmul.bf16.gmra.mxu0 %v1553
  %v3039 = vpop.f32.mrf.mxu0
  %v3040 = vadd.f32 %v2541, %v3039
  %v3041 = vpop.f32.mrf.mxu0
  %v3042 = vadd.f32 %v2543, %v3041
  %3043 = vmatmul.bf16.gmra.mxu0 %v1556
  %v3044 = vpop.f32.mrf.mxu0
  %v3045 = vadd.f32 %v2546, %v3044
  %v3046 = vpop.f32.mrf.mxu0
  %v3047 = vadd.f32 %v2548, %v3046
  %3048 = vmatmul.bf16.gmra.mxu0 %v1559
  %v3049 = vpop.f32.mrf.mxu0
  %v3050 = vadd.f32 %v2551, %v3049
  %v3051 = vpop.f32.mrf.mxu0
  %v3052 = vadd.f32 %v2553, %v3051
  %3053 = vmatmul.bf16.gmra.mxu0 %v1562
  %v3054 = vpop.f32.mrf.mxu0
  %v3055 = vadd.f32 %v2556, %v3054
  %v3056 = vpop.f32.mrf.mxu0
  %v3057 = vadd.f32 %v2558, %v3056
  %3058 = vmatmul.bf16.gmra.mxu0 %v1565
  %v3059 = vpop.f32.mrf.mxu0
  %v3060 = vadd.f32 %v2561, %v3059
  %v3061 = vpop.f32.mrf.mxu0
  %v3062 = vadd.f32 %v2563, %v3061
  %3063 = vmatmul.bf16.gmra.mxu0 %v1568
  %v3064 = vpop.f32.mrf.mxu0
  %v3065 = vadd.f32 %v2566, %v3064
  %v3066 = vpop.f32.mrf.mxu0
  %v3067 = vadd.f32 %v2568, %v3066
  %3068 = vmatmul.bf16.gmra.mxu0 %v1571
  %v3069 = vpop.f32.mrf.mxu0
  %v3070 = vadd.f32 %v2571, %v3069
  %v3071 = vpop.f32.mrf.mxu0
  %v3072 = vadd.f32 %v2573, %v3071
  %3073 = vmatmul.bf16.gmra.mxu0 %v1574
  %v3074 = vpop.f32.mrf.mxu0
  %v3075 = vadd.f32 %v2576, %v3074
  %v3076 = vpop.f32.mrf.mxu0
  %v3077 = vadd.f32 %v2578, %v3076
  %3078 = vmatmul.bf16.gmra.mxu0 %v1577
  %v3079 = vpop.f32.mrf.mxu0
  %v3080 = vadd.f32 %v2581, %v3079
  %v3081 = vpop.f32.mrf.mxu0
  %v3082 = vadd.f32 %v2583, %v3081
  %3083 = vmatmul.bf16.gmra.mxu0 %v1580
  %v3084 = vpop.f32.mrf.mxu0
  %v3085 = vadd.f32 %v2586, %v3084
  %v3086 = vpop.f32.mrf.mxu0
  %v3087 = vadd.f32 %v2588, %v3086
  %3088 = vmatmul.bf16.gmra.mxu0 %v1583
  %v3089 = vpop.f32.mrf.mxu0
  %v3090 = vadd.f32 %v2591, %v3089
  %v3091 = vpop.f32.mrf.mxu0
  %v3092 = vadd.f32 %v2593, %v3091
  %3093 = vmatmul.bf16.gmra.mxu0 %v1586
  %v3094 = vpop.f32.mrf.mxu0
  %v3095 = vadd.f32 %v2596, %v3094
  %v3096 = vpop.f32.mrf.mxu0
  %v3097 = vadd.f32 %v2598, %v3096
  %3098 = vmatmul.bf16.gmra.mxu0 %v1589
  %v3099 = vpop.f32.mrf.mxu0
  %v3100 = vadd.f32 %v2601, %v3099
  %v3101 = vpop.f32.mrf.mxu0
  %v3102 = vadd.f32 %v2603, %v3101
  %3103 = vmatmul.bf16.gmra.mxu0 %v1592
  %v3104 = vpop.f32.mrf.mxu0
  %v3105 = vadd.f32 %v2606, %v3104
  %v3106 = vpop.f32.mrf.mxu0
  %v3107 = vadd.f32 %v2608, %v3106
  %3108 = vmatmul.bf16.gmra.mxu0 %v1595
  %v3109 = vpop.f32.mrf.mxu0
  %v3110 = vadd.f32 %v2611, %v3109
  %v3111 = vpop.f32.mrf.mxu0
  %v3112 = vadd.f32 %v2613, %v3111
  %3113 = vmatmul.bf16.gmra.mxu0 %v1598
  %v3114 = vpop.f32.mrf.mxu0
  %v3115 = vadd.f32 %v2616, %v3114
  %v3116 = vpop.f32.mrf.mxu0
  %v3117 = vadd.f32 %v2618, %v3116
  %3118 = vmatmul.bf16.gmra.mxu0 %v1601
  %v3119 = vpop.f32.mrf.mxu0
  %v3120 = vadd.f32 %v2621, %v3119
  %v3121 = vpop.f32.mrf.mxu0
  %v3122 = vadd.f32 %v2623, %v3121
  %3123 = vmatmul.bf16.gmra.mxu0 %v1604
  %v3124 = vpop.f32.mrf.mxu0
  %v3125 = vadd.f32 %v2626, %v3124
  %v3126 = vpop.f32.mrf.mxu0
  %v3127 = vadd.f32 %v2628, %v3126
  %3128 = vmatmul.bf16.gmra.mxu0 %v1607
  %v3129 = vpop.f32.mrf.mxu0
  %v3130 = vadd.f32 %v2631, %v3129
  %v3131 = vpop.f32.mrf.mxu0
  %v3132 = vadd.f32 %v2633, %v3131
  %3133 = vmatmul.bf16.gmra.mxu0 %v1610
  %v3134 = vpop.f32.mrf.mxu0
  %v3135 = vadd.f32 %v2636, %v3134
  %v3136 = vpop.f32.mrf.mxu0
  %v3137 = vadd.f32 %v2638, %v3136
  %3138 = vmatmul.bf16.gmra.mxu0 %v1613
  %v3139 = vpop.f32.mrf.mxu0
  %v3140 = vadd.f32 %v2641, %v3139
  %v3141 = vpop.f32.mrf.mxu0
  %v3142 = vadd.f32 %v2643, %v3141
  %3143 = vmatmul.bf16.gmra.mxu0 %v1616
  %v3144 = vpop.f32.mrf.mxu0
  %v3145 = vadd.f32 %v2646, %v3144
  %v3146 = vpop.f32.mrf.mxu0
  %v3147 = vadd.f32 %v2648, %v3146
  %3148 = vmatmul.bf16.gmra.mxu0 %v1619
  %v3149 = vpop.f32.mrf.mxu0
  %v3150 = vadd.f32 %v2651, %v3149
  %v3151 = vpop.f32.mrf.mxu0
  %v3152 = vadd.f32 %v2653, %v3151
  %3153 = vmatmul.bf16.gmra.mxu0 %v1622
  %v3154 = vpop.f32.mrf.mxu0
  %v3155 = vadd.f32 %v2656, %v3154
  %v3156 = vpop.f32.mrf.mxu0
  %v3157 = vadd.f32 %v2658, %v3156
  %3158 = vmatmul.bf16.gmra.mxu0 %v1625
  %v3159 = vpop.f32.mrf.mxu0
  %v3160 = vadd.f32 %v2661, %v3159
  %v3161 = vpop.f32.mrf.mxu0
  %v3162 = vadd.f32 %v2663, %v3161
  %3163 = vmatmul.bf16.gmra.mxu0 %v1628
  %v3164 = vpop.f32.mrf.mxu0
  %v3165 = vadd.f32 %v2666, %v3164
  %v3166 = vpop.f32.mrf.mxu0
  %v3167 = vadd.f32 %v2668, %v3166
  %3168 = vmatmul.bf16.gmra.mxu0 %v1631
  %v3169 = vpop.f32.mrf.mxu0
  %v3170 = vadd.f32 %v2671, %v3169
  %v3171 = vpop.f32.mrf.mxu0
  %v3172 = vadd.f32 %v2673, %v3171
  %3173 = vmatmul.bf16.gmra.mxu0 %v1634
  %v3174 = vpop.f32.mrf.mxu0
  %v3175 = vadd.f32 %v2676, %v3174
  %v3176 = vpop.f32.mrf.mxu0
  %v3177 = vadd.f32 %v2678, %v3176
  %3178 = vmatmul.bf16.gmra.mxu0 %v1637
  %v3179 = vpop.f32.mrf.mxu0
  %v3180 = vadd.f32 %v2681, %v3179
  %v3181 = vpop.f32.mrf.mxu0
  %v3182 = vadd.f32 %v2683, %v3181
  %3183 = vmatmul.bf16.gmra.mxu0 %v1640
  %v3184 = vpop.f32.mrf.mxu0
  %v3185 = vadd.f32 %v2686, %v3184
  %v3186 = vpop.f32.mrf.mxu0
  %v3187 = vadd.f32 %v2688, %v3186
  %3188 = vmatmul.bf16.gmra.mxu0 %v1643
  %v3189 = vpop.f32.mrf.mxu0
  %v3190 = vadd.f32 %v2691, %v3189
  %v3191 = vpop.f32.mrf.mxu0
  %v3192 = vadd.f32 %v2693, %v3191
  %3193 = vmatmul.bf16.gmra.mxu0 %v1646
  %v3194 = vpop.f32.mrf.mxu0
  %v3195 = vadd.f32 %v2696, %v3194
  %v3196 = vpop.f32.mrf.mxu0
  %v3197 = vadd.f32 %v2698, %v3196
  %3198 = vmatmul.bf16.gmra.mxu0 %v1649
  %v3199 = vpop.f32.mrf.mxu0
  %v3200 = vadd.f32 %v2701, %v3199
  %v3201 = vpop.f32.mrf.mxu0
  %v3202 = vadd.f32 %v2703, %v3201
  %3203 = vmatmul.bf16.gmra.mxu0 %v1652
  %v3204 = vpop.f32.mrf.mxu0
  %v3205 = vadd.f32 %v2706, %v3204
  %v3206 = vpop.f32.mrf.mxu0
  %v3207 = vadd.f32 %v2708, %v3206
  %3208 = vmatmul.bf16.gmra.mxu0 %v1655
  %v3209 = vpop.f32.mrf.mxu0
  %v3210 = vadd.f32 %v2711, %v3209
  %v3211 = vpop.f32.mrf.mxu0
  %v3212 = vadd.f32 %v2713, %v3211
  %3213 = vmatmul.bf16.gmra.mxu0 %v1658
  %v3214 = vpop.f32.mrf.mxu0
  %v3215 = vadd.f32 %v2716, %v3214
  %v3216 = vpop.f32.mrf.mxu0
  %v3217 = vadd.f32 %v2718, %v3216
  %3218 = vmatmul.bf16.gmra.mxu0 %v1661
  %v3219 = vpop.f32.mrf.mxu0
  %v3220 = vadd.f32 %v2721, %v3219
  %v3221 = vpop.f32.mrf.mxu0
  %v3222 = vadd.f32 %v2723, %v3221
  %3223 = vmatmul.bf16.gmra.mxu0 %v1664
  %v3224 = vpop.f32.mrf.mxu0
  %v3225 = vadd.f32 %v2726, %v3224
  %v3226 = vpop.f32.mrf.mxu0
  %v3227 = vadd.f32 %v2728, %v3226
  %3228 = vmatmul.bf16.gmra.mxu0 %v1667
  %v3229 = vpop.f32.mrf.mxu0
  %v3230 = vadd.f32 %v2731, %v3229
  %v3231 = vpop.f32.mrf.mxu0
  %v3232 = vadd.f32 %v2733, %v3231
  %3233 = vmatmul.bf16.gmra.mxu0 %v1670
  %v3234 = vpop.f32.mrf.mxu0
  %v3235 = vadd.f32 %v2736, %v3234
  %v3236 = vpop.f32.mrf.mxu0
  %v3237 = vadd.f32 %v2738, %v3236
  %3238 = vmatmul.bf16.gmra.mxu0 %v1673
  %v3239 = vpop.f32.mrf.mxu0
  %v3240 = vadd.f32 %v2741, %v3239
  %v3241 = vpop.f32.mrf.mxu0
  %v3242 = vadd.f32 %v2743, %v3241
  %3243 = vmatmul.bf16.gmra.mxu0 %v1676
  %v3244 = vpop.f32.mrf.mxu0
  %v3245 = vadd.f32 %v2746, %v3244
  %v3246 = vpop.f32.mrf.mxu0
  %v3247 = vadd.f32 %v2748, %v3246
  %3248 = vmatmul.bf16.gmra.mxu0 %v1679
  %v3249 = vpop.f32.mrf.mxu0
  %v3250 = vadd.f32 %v2751, %v3249
  %v3251 = vpop.f32.mrf.mxu0
  %v3252 = vadd.f32 %v2753, %v3251
  %3253 = vmatmul.bf16.gmra.mxu0 %v1682
  %v3254 = vpop.f32.mrf.mxu0
  %v3255 = vadd.f32 %v2756, %v3254
  %v3256 = vpop.f32.mrf.mxu0
  %v3257 = vadd.f32 %v2758, %v3256
  %3258 = vmatmul.bf16.gmra.mxu0 %v1685
  %v3259 = vpop.f32.mrf.mxu0
  %v3260 = vadd.f32 %v2761, %v3259
  %v3261 = vpop.f32.mrf.mxu0
  %v3262 = vadd.f32 %v2763, %v3261
  %3263 = vmatmul.bf16.gmra.mxu0 %v1688
  %v3264 = vpop.f32.mrf.mxu0
  %v3265 = vadd.f32 %v2766, %v3264
  %v3266 = vpop.f32.mrf.mxu0
  %v3267 = vadd.f32 %v2768, %v3266
  %3268 = vmatmul.bf16.gmra.mxu0 %v1691
  %v3269 = vpop.f32.mrf.mxu0
  %v3270 = vadd.f32 %v2771, %v3269
  %v3271 = vpop.f32.mrf.mxu0
  %v3272 = vadd.f32 %v2773, %v3271
  %3273 = vmatmul.bf16.gmra.mxu0 %v1694
  %v3274 = vpop.f32.mrf.mxu0
  %v3275 = vadd.f32 %v2776, %v3274
  %v3276 = vpop.f32.mrf.mxu0
  %v3277 = vadd.f32 %v2778, %v3276
  %3278 = vmatmul.bf16.gmra.mxu0 %v1697
  %v3279 = vpop.f32.mrf.mxu0
  %v3280 = vadd.f32 %v2781, %v3279
  %v3281 = vpop.f32.mrf.mxu0
  %v3282 = vadd.f32 %v2783, %v3281
  %3283 = vmatmul.bf16.gmra.mxu0 %v1700
  %v3284 = vpop.f32.mrf.mxu0
  %v3285 = vadd.f32 %v2786, %v3284
  %v3286 = vpop.f32.mrf.mxu0
  %v3287 = vadd.f32 %v2788, %v3286
  %3288 = vmatmul.bf16.gmra.mxu0 %v1703
  %v3289 = vpop.f32.mrf.mxu0
  %v3290 = vadd.f32 %v2791, %v3289
  %v3291 = vpop.f32.mrf.mxu0
  %v3292 = vadd.f32 %v2793, %v3291
  %3293 = vmatmul.bf16.gmra.mxu0 %v1706
  %v3294 = vpop.f32.mrf.mxu0
  %v3295 = vadd.f32 %v2796, %v3294
  %v3296 = vpop.f32.mrf.mxu0
  %v3297 = vadd.f32 %v2798, %v3296
  %3298 = vmatmul.bf16.gmra.mxu0 %v1709
  %v3299 = vpop.f32.mrf.mxu0
  %v3300 = vadd.f32 %v2801, %v3299
  %v3301 = vpop.f32.mrf.mxu0
  %v3302 = vadd.f32 %v2803, %v3301
  %3303 = vmatmul.bf16.gmra.mxu0 %v1712
  %v3304 = vpop.f32.mrf.mxu0
  %v3305 = vadd.f32 %v2806, %v3304
  %v3306 = vpop.f32.mrf.mxu0
  %v3307 = vadd.f32 %v2808, %v3306
  %3308 = vmatmul.bf16.gmra.mxu0 %v1715
  %v3309 = vpop.f32.mrf.mxu0
  %v3310 = vadd.f32 %v2811, %v3309
  %v3311 = vpop.f32.mrf.mxu0
  %v3312 = vadd.f32 %v2813, %v3311
  %3313 = vdwg.mxu0
  %3314 = vmatpush.bf16.msra.mxu0 0
  %3315 = vmatpush.bf16.msra.mxu0 0
  %3316 = vmatpush.bf16.msra.mxu0 0
  %3317 = vmatpush.bf16.msra.mxu0 0
  %3318 = vmatpush.bf16.msra.mxu0 0
  %3319 = vmatpush.bf16.msra.mxu0 0
  %3320 = vmatpush.bf16.msra.mxu0 %v2002
  %3321 = vmatpush.bf16.msra.mxu0 %v2001
  %3322 = vmatmul.bf16.gmra.mxu0 %v2023
  %v3323 = vpop.f32.mrf.mxu0
  %v3324 = vadd.f32 %v2825, %v3323
  %v3325 = vpop.f32.mrf.mxu0
  %v3326 = vadd.f32 %v2827, %v3325
  %3327 = vmatmul.bf16.gmra.mxu0 %v2026
  %v3328 = vpop.f32.mrf.mxu0
  %v3329 = vadd.f32 %v2830, %v3328
  %v3330 = vpop.f32.mrf.mxu0
  %v3331 = vadd.f32 %v2832, %v3330
  %3332 = vmatmul.bf16.gmra.mxu0 %v2029
  %v3333 = vpop.f32.mrf.mxu0
  %v3334 = vadd.f32 %v2835, %v3333
  %v3335 = vpop.f32.mrf.mxu0
  %v3336 = vadd.f32 %v2837, %v3335
  %3337 = vmatmul.bf16.gmra.mxu0 %v2032
  %v3338 = vpop.f32.mrf.mxu0
  %v3339 = vadd.f32 %v2840, %v3338
  %v3340 = vpop.f32.mrf.mxu0
  %v3341 = vadd.f32 %v2842, %v3340
  %3342 = vmatmul.bf16.gmra.mxu0 %v2035
  %v3343 = vpop.f32.mrf.mxu0
  %v3344 = vadd.f32 %v2845, %v3343
  %v3345 = vpop.f32.mrf.mxu0
  %v3346 = vadd.f32 %v2847, %v3345
  %3347 = vmatmul.bf16.gmra.mxu0 %v2038
  %v3348 = vpop.f32.mrf.mxu0
  %v3349 = vadd.f32 %v2850, %v3348
  %v3350 = vpop.f32.mrf.mxu0
  %v3351 = vadd.f32 %v2852, %v3350
  %3352 = vmatmul.bf16.gmra.mxu0 %v2041
  %v3353 = vpop.f32.mrf.mxu0
  %v3354 = vadd.f32 %v2855, %v3353
  %v3355 = vpop.f32.mrf.mxu0
  %v3356 = vadd.f32 %v2857, %v3355
  %3357 = vmatmul.bf16.gmra.mxu0 %v2044
  %v3358 = vpop.f32.mrf.mxu0
  %v3359 = vadd.f32 %v2860, %v3358
  %v3360 = vpop.f32.mrf.mxu0
  %v3361 = vadd.f32 %v2862, %v3360
  %3362 = vmatmul.bf16.gmra.mxu0 %v2047
  %v3363 = vpop.f32.mrf.mxu0
  %v3364 = vadd.f32 %v2865, %v3363
  %v3365 = vpop.f32.mrf.mxu0
  %v3366 = vadd.f32 %v2867, %v3365
  %3367 = vmatmul.bf16.gmra.mxu0 %v2050
  %v3368 = vpop.f32.mrf.mxu0
  %v3369 = vadd.f32 %v2870, %v3368
  %v3370 = vpop.f32.mrf.mxu0
  %v3371 = vadd.f32 %v2872, %v3370
  %3372 = vmatmul.bf16.gmra.mxu0 %v2053
  %v3373 = vpop.f32.mrf.mxu0
  %v3374 = vadd.f32 %v2875, %v3373
  %v3375 = vpop.f32.mrf.mxu0
  %v3376 = vadd.f32 %v2877, %v3375
  %3377 = vmatmul.bf16.gmra.mxu0 %v2056
  %v3378 = vpop.f32.mrf.mxu0
  %v3379 = vadd.f32 %v2880, %v3378
  %v3380 = vpop.f32.mrf.mxu0
  %v3381 = vadd.f32 %v2882, %v3380
  %3382 = vmatmul.bf16.gmra.mxu0 %v2059
  %v3383 = vpop.f32.mrf.mxu0
  %v3384 = vadd.f32 %v2885, %v3383
  %v3385 = vpop.f32.mrf.mxu0
  %v3386 = vadd.f32 %v2887, %v3385
  %3387 = vmatmul.bf16.gmra.mxu0 %v2062
  %v3388 = vpop.f32.mrf.mxu0
  %v3389 = vadd.f32 %v2890, %v3388
  %v3390 = vpop.f32.mrf.mxu0
  %v3391 = vadd.f32 %v2892, %v3390
  %3392 = vmatmul.bf16.gmra.mxu0 %v2065
  %v3393 = vpop.f32.mrf.mxu0
  %v3394 = vadd.f32 %v2895, %v3393
  %v3395 = vpop.f32.mrf.mxu0
  %v3396 = vadd.f32 %v2897, %v3395
  %3397 = vmatmul.bf16.gmra.mxu0 %v2068
  %v3398 = vpop.f32.mrf.mxu0
  %v3399 = vadd.f32 %v2900, %v3398
  %v3400 = vpop.f32.mrf.mxu0
  %v3401 = vadd.f32 %v2902, %v3400
  %3402 = vmatmul.bf16.gmra.mxu0 %v2071
  %v3403 = vpop.f32.mrf.mxu0
  %v3404 = vadd.f32 %v2905, %v3403
  %v3405 = vpop.f32.mrf.mxu0
  %v3406 = vadd.f32 %v2907, %v3405
  %3407 = vmatmul.bf16.gmra.mxu0 %v2074
  %v3408 = vpop.f32.mrf.mxu0
  %v3409 = vadd.f32 %v2910, %v3408
  %v3410 = vpop.f32.mrf.mxu0
  %v3411 = vadd.f32 %v2912, %v3410
  %3412 = vmatmul.bf16.gmra.mxu0 %v2077
  %v3413 = vpop.f32.mrf.mxu0
  %v3414 = vadd.f32 %v2915, %v3413
  %v3415 = vpop.f32.mrf.mxu0
  %v3416 = vadd.f32 %v2917, %v3415
  %3417 = vmatmul.bf16.gmra.mxu0 %v2080
  %v3418 = vpop.f32.mrf.mxu0
  %v3419 = vadd.f32 %v2920, %v3418
  %v3420 = vpop.f32.mrf.mxu0
  %v3421 = vadd.f32 %v2922, %v3420
  %3422 = vmatmul.bf16.gmra.mxu0 %v2083
  %v3423 = vpop.f32.mrf.mxu0
  %v3424 = vadd.f32 %v2925, %v3423
  %v3425 = vpop.f32.mrf.mxu0
  %v3426 = vadd.f32 %v2927, %v3425
  %3427 = vmatmul.bf16.gmra.mxu0 %v2086
  %v3428 = vpop.f32.mrf.mxu0
  %v3429 = vadd.f32 %v2930, %v3428
  %v3430 = vpop.f32.mrf.mxu0
  %v3431 = vadd.f32 %v2932, %v3430
  %3432 = vmatmul.bf16.gmra.mxu0 %v2089
  %v3433 = vpop.f32.mrf.mxu0
  %v3434 = vadd.f32 %v2935, %v3433
  %v3435 = vpop.f32.mrf.mxu0
  %v3436 = vadd.f32 %v2937, %v3435
  %3437 = vmatmul.bf16.gmra.mxu0 %v2092
  %v3438 = vpop.f32.mrf.mxu0
  %v3439 = vadd.f32 %v2940, %v3438
  %v3440 = vpop.f32.mrf.mxu0
  %v3441 = vadd.f32 %v2942, %v3440
  %3442 = vmatmul.bf16.gmra.mxu0 %v2095
  %v3443 = vpop.f32.mrf.mxu0
  %v3444 = vadd.f32 %v2945, %v3443
  %v3445 = vpop.f32.mrf.mxu0
  %v3446 = vadd.f32 %v2947, %v3445
  %3447 = vmatmul.bf16.gmra.mxu0 %v2098
  %v3448 = vpop.f32.mrf.mxu0
  %v3449 = vadd.f32 %v2950, %v3448
  %v3450 = vpop.f32.mrf.mxu0
  %v3451 = vadd.f32 %v2952, %v3450
  %3452 = vmatmul.bf16.gmra.mxu0 %v2101
  %v3453 = vpop.f32.mrf.mxu0
  %v3454 = vadd.f32 %v2955, %v3453
  %v3455 = vpop.f32.mrf.mxu0
  %v3456 = vadd.f32 %v2957, %v3455
  %3457 = vmatmul.bf16.gmra.mxu0 %v2104
  %v3458 = vpop.f32.mrf.mxu0
  %v3459 = vadd.f32 %v2960, %v3458
  %v3460 = vpop.f32.mrf.mxu0
  %v3461 = vadd.f32 %v2962, %v3460
  %3462 = vmatmul.bf16.gmra.mxu0 %v2107
  %v3463 = vpop.f32.mrf.mxu0
  %v3464 = vadd.f32 %v2965, %v3463
  %v3465 = vpop.f32.mrf.mxu0
  %v3466 = vadd.f32 %v2967, %v3465
  %3467 = vmatmul.bf16.gmra.mxu0 %v2110
  %v3468 = vpop.f32.mrf.mxu0
  %v3469 = vadd.f32 %v2970, %v3468
  %v3470 = vpop.f32.mrf.mxu0
  %v3471 = vadd.f32 %v2972, %v3470
  %3472 = vmatmul.bf16.gmra.mxu0 %v2113
  %v3473 = vpop.f32.mrf.mxu0
  %v3474 = vadd.f32 %v2975, %v3473
  %v3475 = vpop.f32.mrf.mxu0
  %v3476 = vadd.f32 %v2977, %v3475
  %3477 = vmatmul.bf16.gmra.mxu0 %v2116
  %v3478 = vpop.f32.mrf.mxu0
  %v3479 = vadd.f32 %v2980, %v3478
  %v3480 = vpop.f32.mrf.mxu0
  %v3481 = vadd.f32 %v2982, %v3480
  %3482 = vmatmul.bf16.gmra.mxu0 %v2119
  %v3483 = vpop.f32.mrf.mxu0
  %v3484 = vadd.f32 %v2985, %v3483
  %v3485 = vpop.f32.mrf.mxu0
  %v3486 = vadd.f32 %v2987, %v3485
  %3487 = vmatmul.bf16.gmra.mxu0 %v2122
  %v3488 = vpop.f32.mrf.mxu0
  %v3489 = vadd.f32 %v2990, %v3488
  %v3490 = vpop.f32.mrf.mxu0
  %v3491 = vadd.f32 %v2992, %v3490
  %3492 = vmatmul.bf16.gmra.mxu0 %v2125
  %v3493 = vpop.f32.mrf.mxu0
  %v3494 = vadd.f32 %v2995, %v3493
  %v3495 = vpop.f32.mrf.mxu0
  %v3496 = vadd.f32 %v2997, %v3495
  %3497 = vmatmul.bf16.gmra.mxu0 %v2128
  %v3498 = vpop.f32.mrf.mxu0
  %v3499 = vadd.f32 %v3000, %v3498
  %v3500 = vpop.f32.mrf.mxu0
  %v3501 = vadd.f32 %v3002, %v3500
  %3502 = vmatmul.bf16.gmra.mxu0 %v2131
  %v3503 = vpop.f32.mrf.mxu0
  %v3504 = vadd.f32 %v3005, %v3503
  %v3505 = vpop.f32.mrf.mxu0
  %v3506 = vadd.f32 %v3007, %v3505
  %3507 = vmatmul.bf16.gmra.mxu0 %v2134
  %v3508 = vpop.f32.mrf.mxu0
  %v3509 = vadd.f32 %v3010, %v3508
  %v3510 = vpop.f32.mrf.mxu0
  %v3511 = vadd.f32 %v3012, %v3510
  %3512 = vmatmul.bf16.gmra.mxu0 %v2137
  %v3513 = vpop.f32.mrf.mxu0
  %v3514 = vadd.f32 %v3015, %v3513
  %v3515 = vpop.f32.mrf.mxu0
  %v3516 = vadd.f32 %v3017, %v3515
  %3517 = vmatmul.bf16.gmra.mxu0 %v2140
  %v3518 = vpop.f32.mrf.mxu0
  %v3519 = vadd.f32 %v3020, %v3518
  %v3520 = vpop.f32.mrf.mxu0
  %v3521 = vadd.f32 %v3022, %v3520
  %3522 = vmatmul.bf16.gmra.mxu0 %v2143
  %v3523 = vpop.f32.mrf.mxu0
  %v3524 = vadd.f32 %v3025, %v3523
  %v3525 = vpop.f32.mrf.mxu0
  %v3526 = vadd.f32 %v3027, %v3525
  %3527 = vmatmul.bf16.gmra.mxu0 %v2146
  %v3528 = vpop.f32.mrf.mxu0
  %v3529 = vadd.f32 %v3030, %v3528
  %v3530 = vpop.f32.mrf.mxu0
  %v3531 = vadd.f32 %v3032, %v3530
  %3532 = vmatmul.bf16.gmra.mxu0 %v2149
  %v3533 = vpop.f32.mrf.mxu0
  %v3534 = vadd.f32 %v3035, %v3533
  %v3535 = vpop.f32.mrf.mxu0
  %v3536 = vadd.f32 %v3037, %v3535
  %3537 = vmatmul.bf16.gmra.mxu0 %v2152
  %v3538 = vpop.f32.mrf.mxu0
  %v3539 = vadd.f32 %v3040, %v3538
  %v3540 = vpop.f32.mrf.mxu0
  %v3541 = vadd.f32 %v3042, %v3540
  %3542 = vmatmul.bf16.gmra.mxu0 %v2155
  %v3543 = vpop.f32.mrf.mxu0
  %v3544 = vadd.f32 %v3045, %v3543
  %v3545 = vpop.f32.mrf.mxu0
  %v3546 = vadd.f32 %v3047, %v3545
  %3547 = vmatmul.bf16.gmra.mxu0 %v2158
  %v3548 = vpop.f32.mrf.mxu0
  %v3549 = vadd.f32 %v3050, %v3548
  %v3550 = vpop.f32.mrf.mxu0
  %v3551 = vadd.f32 %v3052, %v3550
  %3552 = vmatmul.bf16.gmra.mxu0 %v2161
  %v3553 = vpop.f32.mrf.mxu0
  %v3554 = vadd.f32 %v3055, %v3553
  %v3555 = vpop.f32.mrf.mxu0
  %v3556 = vadd.f32 %v3057, %v3555
  %3557 = vmatmul.bf16.gmra.mxu0 %v2164
  %v3558 = vpop.f32.mrf.mxu0
  %v3559 = vadd.f32 %v3060, %v3558
  %v3560 = vpop.f32.mrf.mxu0
  %v3561 = vadd.f32 %v3062, %v3560
  %3562 = vmatmul.bf16.gmra.mxu0 %v2167
  %v3563 = vpop.f32.mrf.mxu0
  %v3564 = vadd.f32 %v3065, %v3563
  %v3565 = vpop.f32.mrf.mxu0
  %v3566 = vadd.f32 %v3067, %v3565
  %3567 = vmatmul.bf16.gmra.mxu0 %v2170
  %v3568 = vpop.f32.mrf.mxu0
  %v3569 = vadd.f32 %v3070, %v3568
  %v3570 = vpop.f32.mrf.mxu0
  %v3571 = vadd.f32 %v3072, %v3570
  %3572 = vmatmul.bf16.gmra.mxu0 %v2173
  %v3573 = vpop.f32.mrf.mxu0
  %v3574 = vadd.f32 %v3075, %v3573
  %v3575 = vpop.f32.mrf.mxu0
  %v3576 = vadd.f32 %v3077, %v3575
  %3577 = vmatmul.bf16.gmra.mxu0 %v2176
  %v3578 = vpop.f32.mrf.mxu0
  %v3579 = vadd.f32 %v3080, %v3578
  %v3580 = vpop.f32.mrf.mxu0
  %v3581 = vadd.f32 %v3082, %v3580
  %3582 = vmatmul.bf16.gmra.mxu0 %v2179
  %v3583 = vpop.f32.mrf.mxu0
  %v3584 = vadd.f32 %v3085, %v3583
  %v3585 = vpop.f32.mrf.mxu0
  %v3586 = vadd.f32 %v3087, %v3585
  %3587 = vmatmul.bf16.gmra.mxu0 %v2182
  %v3588 = vpop.f32.mrf.mxu0
  %v3589 = vadd.f32 %v3090, %v3588
  %v3590 = vpop.f32.mrf.mxu0
  %v3591 = vadd.f32 %v3092, %v3590
  %3592 = vmatmul.bf16.gmra.mxu0 %v2185
  %v3593 = vpop.f32.mrf.mxu0
  %v3594 = vadd.f32 %v3095, %v3593
  %v3595 = vpop.f32.mrf.mxu0
  %v3596 = vadd.f32 %v3097, %v3595
  %3597 = vmatmul.bf16.gmra.mxu0 %v2188
  %v3598 = vpop.f32.mrf.mxu0
  %v3599 = vadd.f32 %v3100, %v3598
  %v3600 = vpop.f32.mrf.mxu0
  %v3601 = vadd.f32 %v3102, %v3600
  %3602 = vmatmul.bf16.gmra.mxu0 %v2191
  %v3603 = vpop.f32.mrf.mxu0
  %v3604 = vadd.f32 %v3105, %v3603
  %v3605 = vpop.f32.mrf.mxu0
  %v3606 = vadd.f32 %v3107, %v3605
  %3607 = vmatmul.bf16.gmra.mxu0 %v2194
  %v3608 = vpop.f32.mrf.mxu0
  %v3609 = vadd.f32 %v3110, %v3608
  %v3610 = vpop.f32.mrf.mxu0
  %v3611 = vadd.f32 %v3112, %v3610
  %3612 = vmatmul.bf16.gmra.mxu0 %v2197
  %v3613 = vpop.f32.mrf.mxu0
  %v3614 = vadd.f32 %v3115, %v3613
  %v3615 = vpop.f32.mrf.mxu0
  %v3616 = vadd.f32 %v3117, %v3615
  %3617 = vmatmul.bf16.gmra.mxu0 %v2200
  %v3618 = vpop.f32.mrf.mxu0
  %v3619 = vadd.f32 %v3120, %v3618
  %v3620 = vpop.f32.mrf.mxu0
  %v3621 = vadd.f32 %v3122, %v3620
  %3622 = vmatmul.bf16.gmra.mxu0 %v2203
  %v3623 = vpop.f32.mrf.mxu0
  %v3624 = vadd.f32 %v3125, %v3623
  %v3625 = vpop.f32.mrf.mxu0
  %v3626 = vadd.f32 %v3127, %v3625
  %3627 = vmatmul.bf16.gmra.mxu0 %v2206
  %v3628 = vpop.f32.mrf.mxu0
  %v3629 = vadd.f32 %v3130, %v3628
  %v3630 = vpop.f32.mrf.mxu0
  %v3631 = vadd.f32 %v3132, %v3630
  %3632 = vmatmul.bf16.gmra.mxu0 %v2209
  %v3633 = vpop.f32.mrf.mxu0
  %v3634 = vadd.f32 %v3135, %v3633
  %v3635 = vpop.f32.mrf.mxu0
  %v3636 = vadd.f32 %v3137, %v3635
  %3637 = vmatmul.bf16.gmra.mxu0 %v2212
  %v3638 = vpop.f32.mrf.mxu0
  %v3639 = vadd.f32 %v3140, %v3638
  %v3640 = vpop.f32.mrf.mxu0
  %v3641 = vadd.f32 %v3142, %v3640
  %3642 = vmatmul.bf16.gmra.mxu0 %v2215
  %v3643 = vpop.f32.mrf.mxu0
  %v3644 = vadd.f32 %v3145, %v3643
  %v3645 = vpop.f32.mrf.mxu0
  %v3646 = vadd.f32 %v3147, %v3645
  %3647 = vmatmul.bf16.gmra.mxu0 %v2218
  %v3648 = vpop.f32.mrf.mxu0
  %v3649 = vadd.f32 %v3150, %v3648
  %v3650 = vpop.f32.mrf.mxu0
  %v3651 = vadd.f32 %v3152, %v3650
  %3652 = vmatmul.bf16.gmra.mxu0 %v2221
  %v3653 = vpop.f32.mrf.mxu0
  %v3654 = vadd.f32 %v3155, %v3653
  %v3655 = vpop.f32.mrf.mxu0
  %v3656 = vadd.f32 %v3157, %v3655
  %3657 = vmatmul.bf16.gmra.mxu0 %v2224
  %v3658 = vpop.f32.mrf.mxu0
  %v3659 = vadd.f32 %v3160, %v3658
  %v3660 = vpop.f32.mrf.mxu0
  %v3661 = vadd.f32 %v3162, %v3660
  %3662 = vmatmul.bf16.gmra.mxu0 %v2227
  %v3663 = vpop.f32.mrf.mxu0
  %v3664 = vadd.f32 %v3165, %v3663
  %v3665 = vpop.f32.mrf.mxu0
  %v3666 = vadd.f32 %v3167, %v3665
  %3667 = vmatmul.bf16.gmra.mxu0 %v2230
  %v3668 = vpop.f32.mrf.mxu0
  %v3669 = vadd.f32 %v3170, %v3668
  %v3670 = vpop.f32.mrf.mxu0
  %v3671 = vadd.f32 %v3172, %v3670
  %3672 = vmatmul.bf16.gmra.mxu0 %v2233
  %v3673 = vpop.f32.mrf.mxu0
  %v3674 = vadd.f32 %v3175, %v3673
  %v3675 = vpop.f32.mrf.mxu0
  %v3676 = vadd.f32 %v3177, %v3675
  %3677 = vmatmul.bf16.gmra.mxu0 %v2236
  %v3678 = vpop.f32.mrf.mxu0
  %v3679 = vadd.f32 %v3180, %v3678
  %v3680 = vpop.f32.mrf.mxu0
  %v3681 = vadd.f32 %v3182, %v3680
  %3682 = vmatmul.bf16.gmra.mxu0 %v2239
  %v3683 = vpop.f32.mrf.mxu0
  %v3684 = vadd.f32 %v3185, %v3683
  %v3685 = vpop.f32.mrf.mxu0
  %v3686 = vadd.f32 %v3187, %v3685
  %3687 = vmatmul.bf16.gmra.mxu0 %v2242
  %v3688 = vpop.f32.mrf.mxu0
  %v3689 = vadd.f32 %v3190, %v3688
  %v3690 = vpop.f32.mrf.mxu0
  %v3691 = vadd.f32 %v3192, %v3690
  %3692 = vmatmul.bf16.gmra.mxu0 %v2245
  %v3693 = vpop.f32.mrf.mxu0
  %v3694 = vadd.f32 %v3195, %v3693
  %v3695 = vpop.f32.mrf.mxu0
  %v3696 = vadd.f32 %v3197, %v3695
  %3697 = vmatmul.bf16.gmra.mxu0 %v2248
  %v3698 = vpop.f32.mrf.mxu0
  %v3699 = vadd.f32 %v3200, %v3698
  %v3700 = vpop.f32.mrf.mxu0
  %v3701 = vadd.f32 %v3202, %v3700
  %3702 = vmatmul.bf16.gmra.mxu0 %v2251
  %v3703 = vpop.f32.mrf.mxu0
  %v3704 = vadd.f32 %v3205, %v3703
  %v3705 = vpop.f32.mrf.mxu0
  %v3706 = vadd.f32 %v3207, %v3705
  %3707 = vmatmul.bf16.gmra.mxu0 %v2254
  %v3708 = vpop.f32.mrf.mxu0
  %v3709 = vadd.f32 %v3210, %v3708
  %v3710 = vpop.f32.mrf.mxu0
  %v3711 = vadd.f32 %v3212, %v3710
  %3712 = vmatmul.bf16.gmra.mxu0 %v2257
  %v3713 = vpop.f32.mrf.mxu0
  %v3714 = vadd.f32 %v3215, %v3713
  %v3715 = vpop.f32.mrf.mxu0
  %v3716 = vadd.f32 %v3217, %v3715
  %3717 = vmatmul.bf16.gmra.mxu0 %v2260
  %v3718 = vpop.f32.mrf.mxu0
  %v3719 = vadd.f32 %v3220, %v3718
  %v3720 = vpop.f32.mrf.mxu0
  %v3721 = vadd.f32 %v3222, %v3720
  %3722 = vmatmul.bf16.gmra.mxu0 %v2263
  %v3723 = vpop.f32.mrf.mxu0
  %v3724 = vadd.f32 %v3225, %v3723
  %v3725 = vpop.f32.mrf.mxu0
  %v3726 = vadd.f32 %v3227, %v3725
  %3727 = vmatmul.bf16.gmra.mxu0 %v2266
  %v3728 = vpop.f32.mrf.mxu0
  %v3729 = vadd.f32 %v3230, %v3728
  %v3730 = vpop.f32.mrf.mxu0
  %v3731 = vadd.f32 %v3232, %v3730
  %3732 = vmatmul.bf16.gmra.mxu0 %v2269
  %v3733 = vpop.f32.mrf.mxu0
  %v3734 = vadd.f32 %v3235, %v3733
  %v3735 = vpop.f32.mrf.mxu0
  %v3736 = vadd.f32 %v3237, %v3735
  %3737 = vmatmul.bf16.gmra.mxu0 %v2272
  %v3738 = vpop.f32.mrf.mxu0
  %v3739 = vadd.f32 %v3240, %v3738
  %v3740 = vpop.f32.mrf.mxu0
  %v3741 = vadd.f32 %v3242, %v3740
  %3742 = vmatmul.bf16.gmra.mxu0 %v2275
  %v3743 = vpop.f32.mrf.mxu0
  %v3744 = vadd.f32 %v3245, %v3743
  %v3745 = vpop.f32.mrf.mxu0
  %v3746 = vadd.f32 %v3247, %v3745
  %3747 = vmatmul.bf16.gmra.mxu0 %v2278
  %v3748 = vpop.f32.mrf.mxu0
  %v3749 = vadd.f32 %v3250, %v3748
  %v3750 = vpop.f32.mrf.mxu0
  %v3751 = vadd.f32 %v3252, %v3750
  %3752 = vmatmul.bf16.gmra.mxu0 %v2281
  %v3753 = vpop.f32.mrf.mxu0
  %v3754 = vadd.f32 %v3255, %v3753
  %v3755 = vpop.f32.mrf.mxu0
  %v3756 = vadd.f32 %v3257, %v3755
  %3757 = vmatmul.bf16.gmra.mxu0 %v2284
  %v3758 = vpop.f32.mrf.mxu0
  %v3759 = vadd.f32 %v3260, %v3758
  %v3760 = vpop.f32.mrf.mxu0
  %v3761 = vadd.f32 %v3262, %v3760
  %3762 = vmatmul.bf16.gmra.mxu0 %v2287
  %v3763 = vpop.f32.mrf.mxu0
  %v3764 = vadd.f32 %v3265, %v3763
  %v3765 = vpop.f32.mrf.mxu0
  %v3766 = vadd.f32 %v3267, %v3765
  %3767 = vmatmul.bf16.gmra.mxu0 %v2290
  %v3768 = vpop.f32.mrf.mxu0
  %v3769 = vadd.f32 %v3270, %v3768
  %v3770 = vpop.f32.mrf.mxu0
  %v3771 = vadd.f32 %v3272, %v3770
  %3772 = vmatmul.bf16.gmra.mxu0 %v2293
  %v3773 = vpop.f32.mrf.mxu0
  %v3774 = vadd.f32 %v3275, %v3773
  %v3775 = vpop.f32.mrf.mxu0
  %v3776 = vadd.f32 %v3277, %v3775
  %3777 = vmatmul.bf16.gmra.mxu0 %v2296
  %v3778 = vpop.f32.mrf.mxu0
  %v3779 = vadd.f32 %v3280, %v3778
  %v3780 = vpop.f32.mrf.mxu0
  %v3781 = vadd.f32 %v3282, %v3780
  %3782 = vmatmul.bf16.gmra.mxu0 %v2299
  %v3783 = vpop.f32.mrf.mxu0
  %v3784 = vadd.f32 %v3285, %v3783
  %v3785 = vpop.f32.mrf.mxu0
  %v3786 = vadd.f32 %v3287, %v3785
  %3787 = vmatmul.bf16.gmra.mxu0 %v2302
  %v3788 = vpop.f32.mrf.mxu0
  %v3789 = vadd.f32 %v3290, %v3788
  %v3790 = vpop.f32.mrf.mxu0
  %v3791 = vadd.f32 %v3292, %v3790
  %3792 = vmatmul.bf16.gmra.mxu0 %v2305
  %v3793 = vpop.f32.mrf.mxu0
  %v3794 = vadd.f32 %v3295, %v3793
  %v3795 = vpop.f32.mrf.mxu0
  %v3796 = vadd.f32 %v3297, %v3795
  %3797 = vmatmul.bf16.gmra.mxu0 %v2308
  %v3798 = vpop.f32.mrf.mxu0
  %v3799 = vadd.f32 %v3300, %v3798
  %v3800 = vpop.f32.mrf.mxu0
  %v3801 = vadd.f32 %v3302, %v3800
  %3802 = vmatmul.bf16.gmra.mxu0 %v2311
  %v3803 = vpop.f32.mrf.mxu0
  %v3804 = vadd.f32 %v3305, %v3803
  %v3805 = vpop.f32.mrf.mxu0
  %v3806 = vadd.f32 %v3307, %v3805
  %3807 = vmatmul.bf16.gmra.mxu0 %v2314
  %v3808 = vpop.f32.mrf.mxu0
  %v3809 = vadd.f32 %v3310, %v3808
  %v3810 = vpop.f32.mrf.mxu0
  %v3811 = vadd.f32 %v3312, %v3810
  %3812 = vdwg.mxu0
  %v3813 = vmax.f32 %v3324, %v3446
  %v3814 = vmax.f32 %v3326, %v3449
  %v3815 = vmax.f32 %v3329, %v3451
  %v3816 = vmax.f32 %v3331, %v3454
  %v3817 = vmax.f32 %v3334, %v3456
  %v3818 = vmax.f32 %v3336, %v3459
  %v3819 = vmax.f32 %v3339, %v3461
  %v3820 = vmax.f32 %v3341, %v3464
  %v3821 = vmax.f32 %v3344, %v3466
  %v3822 = vmax.f32 %v3346, %v3469
  %v3823 = vmax.f32 %v3349, %v3471
  %v3824 = vmax.f32 %v3351, %v3474
  %v3825 = vmax.f32 %v3354, %v3476
  %v3826 = vmax.f32 %v3356, %v3479
  %v3827 = vmax.f32 %v3359, %v3481
  %v3828 = vmax.f32 %v3361, %v3484
  %v3829 = vmax.f32 %v3364, %v3486
  %v3830 = vmax.f32 %v3366, %v3489
  %v3831 = vmax.f32 %v3369, %v3491
  %v3832 = vmax.f32 %v3371, %v3494
  %v3833 = vmax.f32 %v3374, %v3496
  %v3834 = vmax.f32 %v3376, %v3499
  %v3835 = vmax.f32 %v3379, %v3501
  %v3836 = vmax.f32 %v3381, %v3504
  %v3837 = vmax.f32 %v3384, %v3506
  %v3838 = vmax.f32 %v3386, %v3509
  %v3839 = vmax.f32 %v3389, %v3511
  %v3840 = vmax.f32 %v3391, %v3514
  %v3841 = vmax.f32 %v3394, %v3516
  %v3842 = vmax.f32 %v3396, %v3519
  %v3843 = vmax.f32 %v3399, %v3521
  %v3844 = vmax.f32 %v3401, %v3524
  %v3845 = vmax.f32 %v3404, %v3526
  %v3846 = vmax.f32 %v3406, %v3529
  %v3847 = vmax.f32 %v3409, %v3531
  %v3848 = vmax.f32 %v3411, %v3534
  %v3849 = vmax.f32 %v3414, %v3536
  %v3850 = vmax.f32 %v3416, %v3539
  %v3851 = vmax.f32 %v3419, %v3541
  %v3852 = vmax.f32 %v3421, %v3544
  %v3853 = vmax.f32 %v3424, %v3546
  %v3854 = vmax.f32 %v3426, %v3549
  %v3855 = vmax.f32 %v3429, %v3551
  %v3856 = vmax.f32 %v3431, %v3554
  %v3857 = vmax.f32 %v3434, %v3556
  %v3858 = vmax.f32 %v3436, %v3559
  %v3859 = vmax.f32 %v3439, %v3561
  %v3860 = vmax.f32 %v3441, %v3564
  %v3861 = vmax.f32 %v3444, %v3566
  %v3862 = vmax.f32 %v3569, %v3691
  %v3863 = vmax.f32 %v3571, %v3694
  %v3864 = vmax.f32 %v3574, %v3696
  %v3865 = vmax.f32 %v3576, %v3699
  %v3866 = vmax.f32 %v3579, %v3701
  %v3867 = vmax.f32 %v3581, %v3704
  %v3868 = vmax.f32 %v3584, %v3706
  %v3869 = vmax.f32 %v3586, %v3709
  %v3870 = vmax.f32 %v3589, %v3711
  %v3871 = vmax.f32 %v3591, %v3714
  %v3872 = vmax.f32 %v3594, %v3716
  %v3873 = vmax.f32 %v3596, %v3719
  %v3874 = vmax.f32 %v3599, %v3721
  %v3875 = vmax.f32 %v3601, %v3724
  %v3876 = vmax.f32 %v3604, %v3726
  %v3877 = vmax.f32 %v3606, %v3729
  %v3878 = vmax.f32 %v3609, %v3731
  %v3879 = vmax.f32 %v3611, %v3734
  %v3880 = vmax.f32 %v3614, %v3736
  %v3881 = vmax.f32 %v3616, %v3739
  %v3882 = vmax.f32 %v3619, %v3741
  %v3883 = vmax.f32 %v3621, %v3744
  %v3884 = vmax.f32 %v3624, %v3746
  %v3885 = vmax.f32 %v3626, %v3749
  %v3886 = vmax.f32 %v3629, %v3751
  %v3887 = vmax.f32 %v3631, %v3754
  %v3888 = vmax.f32 %v3634, %v3756
  %v3889 = vmax.f32 %v3636, %v3759
  %v3890 = vmax.f32 %v3639, %v3761
  %v3891 = vmax.f32 %v3641, %v3764
  %v3892 = vmax.f32 %v3644, %v3766
  %v3893 = vmax.f32 %v3646, %v3769
  %v3894 = vmax.f32 %v3649, %v3771
  %v3895 = vmax.f32 %v3651, %v3774
  %v3896 = vmax.f32 %v3654, %v3776
  %v3897 = vmax.f32 %v3656, %v3779
  %v3898 = vmax.f32 %v3659, %v3781
  %v3899 = vmax.f32 %v3661, %v3784
  %v3900 = vmax.f32 %v3664, %v3786
  %v3901 = vmax.f32 %v3666, %v3789
  %v3902 = vmax.f32 %v3669, %v3791
  %v3903 = vmax.f32 %v3671, %v3794
  %v3904 = vmax.f32 %v3674, %v3796
  %v3905 = vmax.f32 %v3676, %v3799
  %v3906 = vmax.f32 %v3679, %v3801
  %v3907 = vmax.f32 %v3681, %v3804
  %v3908 = vmax.f32 %v3684, %v3806
  %v3909 = vmax.f32 %v3686, %v3809
  %v3910 = vmax.f32 %v3689, %v3811
  %v3911 = vmax.f32 %v3813, %v3862
  %v3912 = vmax.f32 %v3814, %v3863
  %v3913 = vmax.f32 %v3815, %v3864
  %v3914 = vmax.f32 %v3816, %v3865
  %v3915 = vmax.f32 %v3817, %v3866
  %v3916 = vmax.f32 %v3818, %v3867
  %v3917 = vmax.f32 %v3819, %v3868
  %v3918 = vmax.f32 %v3820, %v3869
  %v3919 = vmax.f32 %v3821, %v3870
  %v3920 = vmax.f32 %v3822, %v3871
  %v3921 = vmax.f32 %v3823, %v3872
  %v3922 = vmax.f32 %v3824, %v3873
  %v3923 = vmax.f32 %v3825, %v3874
  %v3924 = vmax.f32 %v3826, %v3875
  %v3925 = vmax.f32 %v3827, %v3876
  %v3926 = vmax.f32 %v3828, %v3877
  %v3927 = vmax.f32 %v3829, %v3878
  %v3928 = vmax.f32 %v3830, %v3879
  %v3929 = vmax.f32 %v3831, %v3880
  %v3930 = vmax.f32 %v3832, %v3881
  %v3931 = vmax.f32 %v3833, %v3882
  %v3932 = vmax.f32 %v3834, %v3883
  %v3933 = vmax.f32 %v3835, %v3884
  %v3934 = vmax.f32 %v3836, %v3885
  %v3935 = vmax.f32 %v3837, %v3886
  %v3936 = vmax.f32 %v3838, %v3887
  %v3937 = vmax.f32 %v3839, %v3888
  %v3938 = vmax.f32 %v3840, %v3889
  %v3939 = vmax.f32 %v3841, %v3890
  %v3940 = vmax.f32 %v3842, %v3891
  %v3941 = vmax.f32 %v3843, %v3892
  %v3942 = vmax.f32 %v3844, %v3893
  %v3943 = vmax.f32 %v3845, %v3894
  %v3944 = vmax.f32 %v3846, %v3895
  %v3945 = vmax.f32 %v3847, %v3896
  %v3946 = vmax.f32 %v3848, %v3897
  %v3947 = vmax.f32 %v3849, %v3898
  %v3948 = vmax.f32 %v3850, %v3899
  %v3949 = vmax.f32 %v3851, %v3900
  %v3950 = vmax.f32 %v3852, %v3901
  %v3951 = vmax.f32 %v3853, %v3902
  %v3952 = vmax.f32 %v3854, %v3903
  %v3953 = vmax.f32 %v3855, %v3904
  %v3954 = vmax.f32 %v3856, %v3905
  %v3955 = vmax.f32 %v3857, %v3906
  %v3956 = vmax.f32 %v3858, %v3907
  %v3957 = vmax.f32 %v3859, %v3908
  %v3958 = vmax.f32 %v3860, %v3909
  %v3959 = vmax.f32 %v3861, %v3910
  %v3960 = vld [vmem:[%s2] sm:$0x1]
  %v3962 = vperm.slane %v3960, 0
  %v3964 = vadd.f32 %v3911, %v3962
  %v3965 = vadd.f32 %v3912, %v3962
  %v3966 = vadd.f32 %v3913, %v3962
  %v3967 = vadd.f32 %v3914, %v3962
  %v3968 = vadd.f32 %v3915, %v3962
  %v3969 = vadd.f32 %v3916, %v3962
  %v3970 = vadd.f32 %v3917, %v3962
  %v3971 = vadd.f32 %v3918, %v3962
  %v3972 = vadd.f32 %v3919, %v3962
  %v3973 = vadd.f32 %v3920, %v3962
  %v3974 = vadd.f32 %v3921, %v3962
  %v3975 = vadd.f32 %v3922, %v3962
  %v3976 = vadd.f32 %v3923, %v3962
  %v3977 = vadd.f32 %v3924, %v3962
  %v3978 = vadd.f32 %v3925, %v3962
  %v3979 = vadd.f32 %v3926, %v3962
  %v3980 = vadd.f32 %v3927, %v3962
  %v3981 = vadd.f32 %v3928, %v3962
  %v3982 = vadd.f32 %v3929, %v3962
  %v3983 = vadd.f32 %v3930, %v3962
  %v3984 = vadd.f32 %v3931, %v3962
  %v3985 = vadd.f32 %v3932, %v3962
  %v3986 = vadd.f32 %v3933, %v3962
  %v3987 = vadd.f32 %v3934, %v3962
  %v3988 = vadd.f32 %v3935, %v3962
  %v3989 = vadd.f32 %v3936, %v3962
  %v3990 = vadd.f32 %v3937, %v3962
  %v3991 = vadd.f32 %v3938, %v3962
  %v3992 = vadd.f32 %v3939, %v3962
  %v3993 = vadd.f32 %v3940, %v3962
  %v3994 = vadd.f32 %v3941, %v3962
  %v3995 = vadd.f32 %v3942, %v3962
  %v3996 = vadd.f32 %v3943, %v3962
  %v3997 = vadd.f32 %v3944, %v3962
  %v3998 = vadd.f32 %v3945, %v3962
  %v3999 = vadd.f32 %v3946, %v3962
  %v4000 = vadd.f32 %v3947, %v3962
  %v4001 = vadd.f32 %v3948, %v3962
  %v4002 = vadd.f32 %v3949, %v3962
  %v4003 = vadd.f32 %v3950, %v3962
  %v4004 = vadd.f32 %v3951, %v3962
  %v4005 = vadd.f32 %v3952, %v3962
  %v4006 = vadd.f32 %v3953, %v3962
  %v4007 = vadd.f32 %v3954, %v3962
  %v4008 = vadd.f32 %v3955, %v3962
  %v4009 = vadd.f32 %v3956, %v3962
  %v4010 = vadd.f32 %v3957, %v3962
  %v4011 = vadd.f32 %v3958, %v3962
  %v4012 = vadd.f32 %v3959, %v3962
  %v4013 = vmax.f32 %v3964, 0.0
  %v4014 = vmax.f32 %v3965, 0.0
  %v4015 = vmax.f32 %v3966, 0.0
  %v4016 = vmax.f32 %v3967, 0.0
  %v4017 = vmax.f32 %v3968, 0.0
  %v4018 = vmax.f32 %v3969, 0.0
  %v4019 = vmax.f32 %v3970, 0.0
  %v4020 = vmax.f32 %v3971, 0.0
  %v4021 = vmax.f32 %v3972, 0.0
  %v4022 = vmax.f32 %v3973, 0.0
  %v4023 = vmax.f32 %v3974, 0.0
  %v4024 = vmax.f32 %v3975, 0.0
  %v4025 = vmax.f32 %v3976, 0.0
  %v4026 = vmax.f32 %v3977, 0.0
  %v4027 = vmax.f32 %v3978, 0.0
  %v4028 = vmax.f32 %v3979, 0.0
  %v4029 = vmax.f32 %v3980, 0.0
  %v4030 = vmax.f32 %v3981, 0.0
  %v4031 = vmax.f32 %v3982, 0.0
  %v4032 = vmax.f32 %v3983, 0.0
  %v4033 = vmax.f32 %v3984, 0.0
  %v4034 = vmax.f32 %v3985, 0.0
  %v4035 = vmax.f32 %v3986, 0.0
  %v4036 = vmax.f32 %v3987, 0.0
  %v4037 = vmax.f32 %v3988, 0.0
  %v4038 = vmax.f32 %v3989, 0.0
  %v4039 = vmax.f32 %v3990, 0.0
  %v4040 = vmax.f32 %v3991, 0.0
  %v4041 = vmax.f32 %v3992, 0.0
  %v4042 = vmax.f32 %v3993, 0.0
  %v4043 = vmax.f32 %v3994, 0.0
  %v4044 = vmax.f32 %v3995, 0.0
  %v4045 = vmax.f32 %v3996, 0.0
  %v4046 = vmax.f32 %v3997, 0.0
  %v4047 = vmax.f32 %v3998, 0.0
  %v4048 = vmax.f32 %v3999, 0.0
  %v4049 = vmax.f32 %v4000, 0.0
  %v4050 = vmax.f32 %v4001, 0.0
  %v4051 = vmax.f32 %v4002, 0.0
  %v4052 = vmax.f32 %v4003, 0.0
  %v4053 = vmax.f32 %v4004, 0.0
  %v4054 = vmax.f32 %v4005, 0.0
  %v4055 = vmax.f32 %v4006, 0.0
  %v4056 = vmax.f32 %v4007, 0.0
  %v4057 = vmax.f32 %v4008, 0.0
  %v4058 = vmax.f32 %v4009, 0.0
  %v4059 = vmax.f32 %v4010, 0.0
  %v4060 = vmax.f32 %v4011, 0.0
  %v4061 = vmax.f32 %v4012, 0.0
  %v4062 = vpack.c.bf16 %v4013, %v4013
  %v4063 = vpack.c.bf16 %v4014, %v4014
  %v4064 = vpack.c.bf16 %v4015, %v4015
  %v4065 = vpack.c.bf16 %v4016, %v4016
  %v4066 = vpack.c.bf16 %v4017, %v4017
  %v4067 = vpack.c.bf16 %v4018, %v4018
  %v4068 = vpack.c.bf16 %v4019, %v4019
  %v4069 = vpack.c.bf16 %v4020, %v4020
  %v4070 = vpack.c.bf16 %v4021, %v4021
  %v4071 = vpack.c.bf16 %v4022, %v4022
  %v4072 = vpack.c.bf16 %v4023, %v4023
  %v4073 = vpack.c.bf16 %v4024, %v4024
  %v4074 = vpack.c.bf16 %v4025, %v4025
  %v4075 = vpack.c.bf16 %v4026, %v4026
  %v4076 = vpack.c.bf16 %v4027, %v4027
  %v4077 = vpack.c.bf16 %v4028, %v4028
  %v4078 = vpack.c.bf16 %v4029, %v4029
  %v4079 = vpack.c.bf16 %v4030, %v4030
  %v4080 = vpack.c.bf16 %v4031, %v4031
  %v4081 = vpack.c.bf16 %v4032, %v4032
  %v4082 = vpack.c.bf16 %v4033, %v4033
  %v4083 = vpack.c.bf16 %v4034, %v4034
  %v4084 = vpack.c.bf16 %v4035, %v4035
  %v4085 = vpack.c.bf16 %v4036, %v4036
  %v4086 = vpack.c.bf16 %v4037, %v4037
  %v4087 = vpack.c.bf16 %v4038, %v4038
  %v4088 = vpack.c.bf16 %v4039, %v4039
  %v4089 = vpack.c.bf16 %v4040, %v4040
  %v4090 = vpack.c.bf16 %v4041, %v4041
  %v4091 = vpack.c.bf16 %v4042, %v4042
  %v4092 = vpack.c.bf16 %v4043, %v4043
  %v4093 = vpack.c.bf16 %v4044, %v4044
  %v4094 = vpack.c.bf16 %v4045, %v4045
  %v4095 = vpack.c.bf16 %v4046, %v4046
  %v4096 = vpack.c.bf16 %v4047, %v4047
  %v4097 = vpack.c.bf16 %v4048, %v4048
  %v4098 = vpack.c.bf16 %v4049, %v4049
  %v4099 = vpack.c.bf16 %v4050, %v4050
  %v4100 = vpack.c.bf16 %v4051, %v4051
  %v4101 = vpack.c.bf16 %v4052, %v4052
  %v4102 = vpack.c.bf16 %v4053, %v4053
  %v4103 = vpack.c.bf16 %v4054, %v4054
  %v4104 = vpack.c.bf16 %v4055, %v4055
  %v4105 = vpack.c.bf16 %v4056, %v4056
  %v4106 = vpack.c.bf16 %v4057, %v4057
  %v4107 = vpack.c.bf16 %v4058, %v4058
  %v4108 = vpack.c.bf16 %v4059, %v4059
  %v4109 = vpack.c.bf16 %v4060, %v4060
  %v4110 = vpack.c.bf16 %v4061, %v4061
  %vm4111 = vcmask 257024
  %4112 = vst.msk [vmem:[%s3] sm:$0xf] %vm4111, %v4062
  %4113 = vst.msk [vmem:[%s3 + $0x4] sm:$0xf] %vm4111, %v4063
  %4114 = vst.msk [vmem:[%s3 + $0x8] sm:$0xf] %vm4111, %v4064
  %4115 = vst.msk [vmem:[%s3 + $0xc] sm:$0xf] %vm4111, %v4065
  %4116 = vst.msk [vmem:[%s3 + $0x10] sm:$0xf] %vm4111, %v4066
  %4117 = vst.msk [vmem:[%s3 + $0x14] sm:$0xf] %vm4111, %v4067
  %4118 = vst.msk [vmem:[%s3 + $0x18] sm:$0xf] %vm4111, %v4068
  %4119 = vst.msk [vmem:[%s3 + $0x1c] sm:$0xf] %vm4111, %v4069
  %4120 = vst.msk [vmem:[%s3 + $0x20] sm:$0xf] %vm4111, %v4070
  %4121 = vst.msk [vmem:[%s3 + $0x24] sm:$0xf] %vm4111, %v4071
  %4122 = vst.msk [vmem:[%s3 + $0x28] sm:$0xf] %vm4111, %v4072
  %4123 = vst.msk [vmem:[%s3 + $0x2c] sm:$0xf] %vm4111, %v4073
  %4124 = vst.msk [vmem:[%s3 + $0x30] sm:$0xf] %vm4111, %v4074
  %4125 = vst.msk [vmem:[%s3 + $0x34] sm:$0xf] %vm4111, %v4075
  %4126 = vst.msk [vmem:[%s3 + $0x38] sm:$0xf] %vm4111, %v4076
  %4127 = vst.msk [vmem:[%s3 + $0x3c] sm:$0xf] %vm4111, %v4077
  %4128 = vst.msk [vmem:[%s3 + $0x40] sm:$0xf] %vm4111, %v4078
  %4129 = vst.msk [vmem:[%s3 + $0x44] sm:$0xf] %vm4111, %v4079
  %4130 = vst.msk [vmem:[%s3 + $0x48] sm:$0xf] %vm4111, %v4080
  %4131 = vst.msk [vmem:[%s3 + $0x4c] sm:$0xf] %vm4111, %v4081
  %4132 = vst.msk [vmem:[%s3 + $0x50] sm:$0xf] %vm4111, %v4082
  %4133 = vst.msk [vmem:[%s3 + $0x54] sm:$0xf] %vm4111, %v4083
  %4134 = vst.msk [vmem:[%s3 + $0x58] sm:$0xf] %vm4111, %v4084
  %4135 = vst.msk [vmem:[%s3 + $0x5c] sm:$0xf] %vm4111, %v4085
  %4136 = vst.msk [vmem:[%s3 + $0x60] sm:$0xf] %vm4111, %v4086
  %4137 = vst.msk [vmem:[%s3 + $0x64] sm:$0xf] %vm4111, %v4087
  %4138 = vst.msk [vmem:[%s3 + $0x68] sm:$0xf] %vm4111, %v4088
  %4139 = vst.msk [vmem:[%s3 + $0x6c] sm:$0xf] %vm4111, %v4089
  %4140 = vst.msk [vmem:[%s3 + $0x70] sm:$0xf] %vm4111, %v4090
  %4141 = vst.msk [vmem:[%s3 + $0x74] sm:$0xf] %vm4111, %v4091
  %4142 = vst.msk [vmem:[%s3 + $0x78] sm:$0xf] %vm4111, %v4092
  %4143 = vst.msk [vmem:[%s3 + $0x7c] sm:$0xf] %vm4111, %v4093
  %4144 = vst.msk [vmem:[%s3 + $0x80] sm:$0xf] %vm4111, %v4094
  %4145 = vst.msk [vmem:[%s3 + $0x84] sm:$0xf] %vm4111, %v4095
  %4146 = vst.msk [vmem:[%s3 + $0x88] sm:$0xf] %vm4111, %v4096
  %4147 = vst.msk [vmem:[%s3 + $0x8c] sm:$0xf] %vm4111, %v4097
  %4148 = vst.msk [vmem:[%s3 + $0x90] sm:$0xf] %vm4111, %v4098
  %4149 = vst.msk [vmem:[%s3 + $0x94] sm:$0xf] %vm4111, %v4099
  %4150 = vst.msk [vmem:[%s3 + $0x98] sm:$0xf] %vm4111, %v4100
  %4151 = vst.msk [vmem:[%s3 + $0x9c] sm:$0xf] %vm4111, %v4101
  %4152 = vst.msk [vmem:[%s3 + $0xa0] sm:$0xf] %vm4111, %v4102
  %4153 = vst.msk [vmem:[%s3 + $0xa4] sm:$0xf] %vm4111, %v4103
  %4154 = vst.msk [vmem:[%s3 + $0xa8] sm:$0xf] %vm4111, %v4104
  %4155 = vst.msk [vmem:[%s3 + $0xac] sm:$0xf] %vm4111, %v4105
  %4156 = vst.msk [vmem:[%s3 + $0xb0] sm:$0xf] %vm4111, %v4106
  %4157 = vst.msk [vmem:[%s3 + $0xb4] sm:$0xf] %vm4111, %v4107
  %4158 = vst.msk [vmem:[%s3 + $0xb8] sm:$0xf] %vm4111, %v4108
  %4159 = vst.msk [vmem:[%s3 + $0xbc] sm:$0xf] %vm4111, %v4109
  %4160 = vst.msk [vmem:[%s3 + $0xc0] sm:$0xf] %vm4111, %v4110
  // Predicated region
  $region14: #{convnet4_forward.5} parent=0 // pred_check
    _
  $region15: #{convnet4_forward.5} parent=0 // pred_check_branch
    %4162 = sbr.rel (0) target = $region17
  $region16: #{convnet4_forward.5} parent=0 // pred_region
    _
  $region17: #{convnet4_forward.5} parent=0 // pred_fallthru
    _
  // Predicated region
  $region18: #{convnet4_forward.5} parent=0 // pred_check
    _
  $region19: #{convnet4_forward.5} parent=0 // pred_check_branch
    %4164 = sbr.rel (0) target = $region21
  $region20: #{convnet4_forward.5} parent=0 // pred_region
    _
  $region21: #{convnet4_forward.5} parent=0 // pred_fallthru
    _

// kernel: convnet4_forward.6
$region0: #{convnet4_forward.6}
  #allocation0 [shape = 'u32[]', space=smem, size = 0x4, offset = 0x4, fixed_abs, tag = 'smem constant byte address 0x4 - core index']
  #allocation1 [shape = 'u32[72,128]{1,0:T(1,128)}', space=vmem, size = 0x9000, scoped, tag = 'internal scratch']
  %s0 = inlined_call_operand.vmem [shape: bf16[288,288], index: 0, kind: input, shape index: {}]
  %s1 = inlined_call_operand.vmem [shape: bf16[288,32], index: 1, kind: input, shape index: {}]
  %s2 = inlined_call_operand.vmem [shape: f32[1,32], index: 2, kind: input, shape index: {}]
  %s3 = inlined_call_operand.vmem [shape: bf16[72,32], index: 3, kind: output, shape index: {}]
  %s4 = sld [smem:[#allocation0]]
  $region22: #{convnet4_forward.6} parent=0
    _
  %s6 = ssub.s32 1, %s4
  %s7 = scalar_select 0, %s6, %s4
  // Predicated region
  $region2: #{convnet4_forward.6} parent=0 // pred_check
    _
  $region3: #{convnet4_forward.6} parent=0 // pred_check_branch
    %9 = sbr.rel (0) target = $region5
  $region4: #{convnet4_forward.6} parent=0 // pred_region
    _
  $region5: #{convnet4_forward.6} parent=0 // pred_fallthru
    _
  // Predicated region
  $region6: #{convnet4_forward.6} parent=0 // pred_check
    _
  $region7: #{convnet4_forward.6} parent=0 // pred_check_branch
    %11 = sbr.rel (0) target = $region9
  $region8: #{convnet4_forward.6} parent=0 // pred_region
    _
  $region9: #{convnet4_forward.6} parent=0 // pred_fallthru
    _
  // Predicated region
  $region10: #{convnet4_forward.6} parent=0 // pred_check
    _
  $region11: #{convnet4_forward.6} parent=0 // pred_check_branch
    %13 = sbr.rel (0) target = $region13
  $region12: #{convnet4_forward.6} parent=0 // pred_region
    _
  $region13: #{convnet4_forward.6} parent=0 // pred_fallthru
    _
  %v15 = vld [vmem:[%s0] sm:$0xff]
  %v16 = vld [vmem:[%s0 + $0x8] sm:$0xf]
  %v17 = vld [vmem:[%s0 + $0xc] sm:$0xff]
  %v18 = vld [vmem:[%s0 + $0x14] sm:$0xf]
  %v19 = vld [vmem:[%s0 + $0x18] sm:$0xff]
  %v20 = vld [vmem:[%s0 + $0x20] sm:$0xf]
  %v21 = vld [vmem:[%s0 + $0x24] sm:$0xff]
  %v22 = vld [vmem:[%s0 + $0x2c] sm:$0xf]
  %v23 = vld [vmem:[%s0 + $0x30] sm:$0xff]
  %v24 = vld [vmem:[%s0 + $0x38] sm:$0xf]
  %v25 = vld [vmem:[%s0 + $0x3c] sm:$0xff]
  %v26 = vld [vmem:[%s0 + $0x44] sm:$0xf]
  %v27 = vld [vmem:[%s0 + $0x48] sm:$0xff]
  %v28 = vld [vmem:[%s0 + $0x50] sm:$0xf]
  %v29 = vld [vmem:[%s0 + $0x54] sm:$0xff]
  %v30 = vld [vmem:[%s0 + $0x5c] sm:$0xf]
  %v31 = vld [vmem:[%s0 + $0x60] sm:$0xff]
  %v32 = vld [vmem:[%s0 + $0x68] sm:$0xf]
  %v33 = vld [vmem:[%s0 + $0x6c] sm:$0xff]
  %v34 = vld [vmem:[%s0 + $0x74] sm:$0xf]
  %v35 = vld [vmem:[%s0 + $0x78] sm:$0xff]
  %v36 = vld [vmem:[%s0 + $0x80] sm:$0xf]
  %v37 = vld [vmem:[%s0 + $0x84] sm:$0xff]
  %v38 = vld [vmem:[%s0 + $0x8c] sm:$0xf]
  %v39 = vld [vmem:[%s0 + $0x90] sm:$0xff]
  %v40 = vld [vmem:[%s0 + $0x98] sm:$0xf]
  %v41 = vld [vmem:[%s0 + $0x9c] sm:$0xff]
  %v42 = vld [vmem:[%s0 + $0xa4] sm:$0xf]
  %v43 = vld [vmem:[%s0 + $0xa8] sm:$0xff]
  %v44 = vld [vmem:[%s0 + $0xb0] sm:$0xf]
  %v45 = vld [vmem:[%s0 + $0xb4] sm:$0xff]
  %v46 = vld [vmem:[%s0 + $0xbc] sm:$0xf]
  %v47 = vld [vmem:[%s0 + $0xc0] sm:$0xff]
  %v48 = vld [vmem:[%s0 + $0xc8] sm:$0xf]
  %v49 = vld [vmem:[%s0 + $0xcc] sm:$0xff]
  %v50 = vld [vmem:[%s0 + $0xd4] sm:$0xf]
  %v51 = vld [vmem:[%s0 + $0xd8] sm:$0xff]
  %v52 = vld [vmem:[%s0 + $0xe0] sm:$0xf]
  %v53 = vld [vmem:[%s0 + $0xe4] sm:$0xff]
  %v54 = vld [vmem:[%s0 + $0xec] sm:$0xf]
  %v55 = vld [vmem:[%s0 + $0xf0] sm:$0xff]
  %v56 = vld [vmem:[%s0 + $0xf8] sm:$0xf]
  %v57 = vld [vmem:[%s0 + $0xfc] sm:$0xff]
  %v58 = vld [vmem:[%s0 + $0x104] sm:$0xf]
  %v59 = vld [vmem:[%s0 + $0x108] sm:$0xff]
  %v60 = vld [vmem:[%s0 + $0x110] sm:$0xf]
  %v61 = vld [vmem:[%s0 + $0x114] sm:$0xff]
  %v62 = vld [vmem:[%s0 + $0x11c] sm:$0xf]
  %v63 = vld [vmem:[%s0 + $0x120] sm:$0xff]
  %v64 = vld [vmem:[%s0 + $0x128] sm:$0xf]
  %v65 = vld [vmem:[%s0 + $0x12c] sm:$0xff]
  %v66 = vld [vmem:[%s0 + $0x134] sm:$0xf]
  %v67 = vld [vmem:[%s0 + $0x138] sm:$0xff]
  %v68 = vld [vmem:[%s0 + $0x140] sm:$0xf]
  %v69 = vld [vmem:[%s0 + $0x144] sm:$0xff]
  %v70 = vld [vmem:[%s0 + $0x14c] sm:$0xf]
  %v71 = vld [vmem:[%s0 + $0x150] sm:$0xff]
  %v72 = vld [vmem:[%s0 + $0x158] sm:$0xf]
  %v73 = vld [vmem:[%s0 + $0x15c] sm:$0xff]
  %v74 = vld [vmem:[%s0 + $0x164] sm:$0xf]
  %v75 = vld [vmem:[%s0 + $0x168] sm:$0xff]
  %v76 = vld [vmem:[%s0 + $0x170] sm:$0xf]
  %v77 = vld [vmem:[%s0 + $0x174] sm:$0xff]
  %v78 = vld [vmem:[%s0 + $0x17c] sm:$0xf]
  %v79 = vld [vmem:[%s0 + $0x180] sm:$0xff]
  %v80 = vld [vmem:[%s0 + $0x188] sm:$0xf]
  %v81 = vld [vmem:[%s0 + $0x18c] sm:$0xff]
  %v82 = vld [vmem:[%s0 + $0x194] sm:$0xf]
  %v83 = vld [vmem:[%s0 + $0x198] sm:$0xff]
  %v84 = vld [vmem:[%s0 + $0x1a0] sm:$0xf]
  %v85 = vld [vmem:[%s0 + $0x1a4] sm:$0xff]
  %v86 = vld [vmem:[%s0 + $0x1ac] sm:$0xf]
  %v87 = vld [vmem:[%s1] sm:$0xf]
  %v88 = vld [vmem:[%s1 + $0x4] sm:$0xf]
  %v89 = vld [vmem:[%s1 + $0x8] sm:$0xf]
  %v90 = vld [vmem:[%s1 + $0xc] sm:$0xf]
  %v91 = vld [vmem:[%s1 + $0x10] sm:$0xf]
  %v92 = vld [vmem:[%s1 + $0x14] sm:$0xf]
  %v93 = vld [vmem:[%s1 + $0x18] sm:$0xf]
  %v94 = vld [vmem:[%s1 + $0x1c] sm:$0xf]
  %v95 = vld [vmem:[%s1 + $0x20] sm:$0xf]
  %v96 = vld [vmem:[%s1 + $0x24] sm:$0xf]
  %v97 = vld [vmem:[%s1 + $0x28] sm:$0xf]
  %v98 = vld [vmem:[%s1 + $0x2c] sm:$0xf]
  %v99 = vld [vmem:[%s1 + $0x30] sm:$0xf]
  %v100 = vld [vmem:[%s1 + $0x34] sm:$0xf]
  %v101 = vld [vmem:[%s1 + $0x38] sm:$0xf]
  %v102 = vld [vmem:[%s1 + $0x3c] sm:$0xf]
  %v103 = vld [vmem:[%s1 + $0x40] sm:$0xf]
  %v104 = vld [vmem:[%s1 + $0x44] sm:$0xf]
  %v105 = vld [vmem:[%s1 + $0x48] sm:$0xf]
  %v106 = vld [vmem:[%s1 + $0x4c] sm:$0xf]
  %v107 = vld [vmem:[%s1 + $0x50] sm:$0xf]
  %v108 = vld [vmem:[%s1 + $0x54] sm:$0xf]
  %v109 = vld [vmem:[%s1 + $0x58] sm:$0xf]
  %v110 = vld [vmem:[%s1 + $0x5c] sm:$0xf]
  %v111 = vld [vmem:[%s1 + $0x60] sm:$0xf]
  %v112 = vld [vmem:[%s1 + $0x64] sm:$0xf]
  %v113 = vld [vmem:[%s1 + $0x68] sm:$0xf]
  %v114 = vld [vmem:[%s1 + $0x6c] sm:$0xf]
  %v115 = vld [vmem:[%s1 + $0x70] sm:$0xf]
  %v116 = vld [vmem:[%s1 + $0x74] sm:$0xf]
  %v117 = vld [vmem:[%s1 + $0x78] sm:$0xf]
  %v118 = vld [vmem:[%s1 + $0x7c] sm:$0xf]
  %v119 = vld [vmem:[%s1 + $0x80] sm:$0xf]
  %v120 = vld [vmem:[%s1 + $0x84] sm:$0xf]
  %v121 = vld [vmem:[%s1 + $0x88] sm:$0xf]
  %v122 = vld [vmem:[%s1 + $0x8c] sm:$0xf]
  %v195 = vunpack.c.l.b16 %v15
  %v196 = vunpack.c.h.b16 %v15
  %v197 = vunpack.c.l.b16 %v16
  %v198 = vunpack.c.l.b16 %v17
  %v199 = vunpack.c.h.b16 %v17
  %v200 = vunpack.c.l.b16 %v18
  %v201 = vunpack.c.l.b16 %v19
  %v202 = vunpack.c.h.b16 %v19
  %v203 = vunpack.c.l.b16 %v20
  %v204 = vunpack.c.l.b16 %v21
  %v205 = vunpack.c.h.b16 %v21
  %v206 = vunpack.c.l.b16 %v22
  %v207 = vunpack.c.l.b16 %v23
  %v208 = vunpack.c.h.b16 %v23
  %v209 = vunpack.c.l.b16 %v24
  %v210 = vunpack.c.l.b16 %v25
  %v211 = vunpack.c.h.b16 %v25
  %v212 = vunpack.c.l.b16 %v26
  %v213 = vunpack.c.l.b16 %v27
  %v214 = vunpack.c.h.b16 %v27
  %v215 = vunpack.c.l.b16 %v28
  %v216 = vunpack.c.l.b16 %v29
  %v217 = vunpack.c.h.b16 %v29
  %v218 = vunpack.c.l.b16 %v30
  %v219 = vunpack.c.l.b16 %v31
  %v220 = vunpack.c.h.b16 %v31
  %v221 = vunpack.c.l.b16 %v32
  %v222 = vunpack.c.l.b16 %v33
  %v223 = vunpack.c.h.b16 %v33
  %v224 = vunpack.c.l.b16 %v34
  %v225 = vunpack.c.l.b16 %v35
  %v226 = vunpack.c.h.b16 %v35
  %v227 = vunpack.c.l.b16 %v36
  %v228 = vunpack.c.l.b16 %v37
  %v229 = vunpack.c.h.b16 %v37
  %v230 = vunpack.c.l.b16 %v38
  %v231 = vunpack.c.l.b16 %v39
  %v232 = vunpack.c.h.b16 %v39
  %v233 = vunpack.c.l.b16 %v40
  %v234 = vunpack.c.l.b16 %v41
  %v235 = vunpack.c.h.b16 %v41
  %v236 = vunpack.c.l.b16 %v42
  %v237 = vunpack.c.l.b16 %v43
  %v238 = vunpack.c.h.b16 %v43
  %v239 = vunpack.c.l.b16 %v44
  %v240 = vunpack.c.l.b16 %v45
  %v241 = vunpack.c.h.b16 %v45
  %v242 = vunpack.c.l.b16 %v46
  %v243 = vunpack.c.l.b16 %v47
  %v244 = vunpack.c.h.b16 %v47
  %v245 = vunpack.c.l.b16 %v48
  %v246 = vunpack.c.l.b16 %v49
  %v247 = vunpack.c.h.b16 %v49
  %v248 = vunpack.c.l.b16 %v50
  %v249 = vunpack.c.l.b16 %v51
  %v250 = vunpack.c.h.b16 %v51
  %v251 = vunpack.c.l.b16 %v52
  %v252 = vunpack.c.l.b16 %v53
  %v253 = vunpack.c.h.b16 %v53
  %v254 = vunpack.c.l.b16 %v54
  %v255 = vunpack.c.l.b16 %v55
  %v256 = vunpack.c.h.b16 %v55
  %v257 = vunpack.c.l.b16 %v56
  %v258 = vunpack.c.l.b16 %v57
  %v259 = vunpack.c.h.b16 %v57
  %v260 = vunpack.c.l.b16 %v58
  %v261 = vunpack.c.l.b16 %v59
  %v262 = vunpack.c.h.b16 %v59
  %v263 = vunpack.c.l.b16 %v60
  %v264 = vunpack.c.l.b16 %v61
  %v265 = vunpack.c.h.b16 %v61
  %v266 = vunpack.c.l.b16 %v62
  %v267 = vunpack.c.l.b16 %v63
  %v268 = vunpack.c.h.b16 %v63
  %v269 = vunpack.c.l.b16 %v64
  %v270 = vunpack.c.l.b16 %v65
  %v271 = vunpack.c.h.b16 %v65
  %v272 = vunpack.c.l.b16 %v66
  %v273 = vunpack.c.l.b16 %v67
  %v274 = vunpack.c.h.b16 %v67
  %v275 = vunpack.c.l.b16 %v68
  %v276 = vunpack.c.l.b16 %v69
  %v277 = vunpack.c.h.b16 %v69
  %v278 = vunpack.c.l.b16 %v70
  %v279 = vunpack.c.l.b16 %v71
  %v280 = vunpack.c.h.b16 %v71
  %v281 = vunpack.c.l.b16 %v72
  %v282 = vunpack.c.l.b16 %v73
  %v283 = vunpack.c.h.b16 %v73
  %v284 = vunpack.c.l.b16 %v74
  %v285 = vunpack.c.l.b16 %v75
  %v286 = vunpack.c.h.b16 %v75
  %v287 = vunpack.c.l.b16 %v76
  %v288 = vunpack.c.l.b16 %v77
  %v289 = vunpack.c.h.b16 %v77
  %v290 = vunpack.c.l.b16 %v78
  %v291 = vunpack.c.l.b16 %v79
  %v292 = vunpack.c.h.b16 %v79
  %v293 = vunpack.c.l.b16 %v80
  %v294 = vunpack.c.l.b16 %v81
  %v295 = vunpack.c.h.b16 %v81
  %v296 = vunpack.c.l.b16 %v82
  %v297 = vunpack.c.l.b16 %v83
  %v298 = vunpack.c.h.b16 %v83
  %v299 = vunpack.c.l.b16 %v84
  %v300 = vunpack.c.l.b16 %v85
  %v301 = vunpack.c.h.b16 %v85
  %v302 = vunpack.c.l.b16 %v86
  %v303 = vpack.c.b16 %v198, %v195
  %v304 = vpack.c.b16 %v199, %v196
  %v305 = vpack.c.b16 %v200, %v197
  %v306 = vpack.c.b16 %v204, %v201
  %v307 = vpack.c.b16 %v205, %v202
  %v308 = vpack.c.b16 %v206, %v203
  %v309 = vpack.c.b16 %v210, %v207
  %v310 = vpack.c.b16 %v211, %v208
  %v311 = vpack.c.b16 %v212, %v209
  %v312 = vpack.c.b16 %v216, %v213
  %v313 = vpack.c.b16 %v217, %v214
  %v314 = vpack.c.b16 %v218, %v215
  %v315 = vpack.c.b16 %v222, %v219
  %v316 = vpack.c.b16 %v223, %v220
  %v317 = vpack.c.b16 %v224, %v221
  %v318 = vpack.c.b16 %v228, %v225
  %v319 = vpack.c.b16 %v229, %v226
  %v320 = vpack.c.b16 %v230, %v227
  %v321 = vpack.c.b16 %v234, %v231
  %v322 = vpack.c.b16 %v235, %v232
  %v323 = vpack.c.b16 %v236, %v233
  %v324 = vpack.c.b16 %v240, %v237
  %v325 = vpack.c.b16 %v241, %v238
  %v326 = vpack.c.b16 %v242, %v239
  %v327 = vpack.c.b16 %v246, %v243
  %v328 = vpack.c.b16 %v247, %v244
  %v329 = vpack.c.b16 %v248, %v245
  %v330 = vpack.c.b16 %v252, %v249
  %v331 = vpack.c.b16 %v253, %v250
  %v332 = vpack.c.b16 %v254, %v251
  %v333 = vpack.c.b16 %v258, %v255
  %v334 = vpack.c.b16 %v259, %v256
  %v335 = vpack.c.b16 %v260, %v257
  %v336 = vpack.c.b16 %v264, %v261
  %v337 = vpack.c.b16 %v265, %v262
  %v338 = vpack.c.b16 %v266, %v263
  %v339 = vpack.c.b16 %v270, %v267
  %v340 = vpack.c.b16 %v271, %v268
  %v341 = vpack.c.b16 %v272, %v269
  %v342 = vpack.c.b16 %v276, %v273
  %v343 = vpack.c.b16 %v277, %v274
  %v344 = vpack.c.b16 %v278, %v275
  %v345 = vpack.c.b16 %v282, %v279
  %v346 = vpack.c.b16 %v283, %v280
  %v347 = vpack.c.b16 %v284, %v281
  %v348 = vpack.c.b16 %v288, %v285
  %v349 = vpack.c.b16 %v289, %v286
  %v350 = vpack.c.b16 %v290, %v287
  %v351 = vpack.c.b16 %v294, %v291
  %v352 = vpack.c.b16 %v295, %v292
  %v353 = vpack.c.b16 %v296, %v293
  %v354 = vpack.c.b16 %v300, %v297
  %v355 = vpack.c.b16 %v301, %v298
  %v356 = vpack.c.b16 %v302, %v299
  %v429 = vunpack.c.l.b16 %v87
  %v430 = vunpack.c.l.b16 %v88
  %v431 = vunpack.c.l.b16 %v89
  %v432 = vunpack.c.l.b16 %v90
  %v433 = vunpack.c.l.b16 %v91
  %v434 = vunpack.c.l.b16 %v92
  %v435 = vunpack.c.l.b16 %v93
  %v436 = vunpack.c.l.b16 %v94
  %v437 = vunpack.c.l.b16 %v95
  %v438 = vunpack.c.l.b16 %v96
  %v439 = vunpack.c.l.b16 %v97
  %v440 = vunpack.c.l.b16 %v98
  %v441 = vunpack.c.l.b16 %v99
  %v442 = vunpack.c.l.b16 %v100
  %v443 = vunpack.c.l.b16 %v101
  %v444 = vunpack.c.l.b16 %v102
  %v445 = vunpack.c.l.b16 %v103
  %v446 = vunpack.c.l.b16 %v104
  %v447 = vunpack.c.l.b16 %v105
  %v448 = vunpack.c.l.b16 %v106
  %v449 = vunpack.c.l.b16 %v107
  %v450 = vunpack.c.l.b16 %v108
  %v451 = vunpack.c.l.b16 %v109
  %v452 = vunpack.c.l.b16 %v110
  %v453 = vunpack.c.l.b16 %v111
  %v454 = vunpack.c.l.b16 %v112
  %v455 = vunpack.c.l.b16 %v113
  %v456 = vunpack.c.l.b16 %v114
  %v457 = vunpack.c.l.b16 %v115
  %v458 = vunpack.c.l.b16 %v116
  %v459 = vunpack.c.l.b16 %v117
  %v460 = vunpack.c.l.b16 %v118
  %v461 = vunpack.c.l.b16 %v119
  %v462 = vunpack.c.l.b16 %v120
  %v463 = vunpack.c.l.b16 %v121
  %v464 = vunpack.c.l.b16 %v122
  %v465 = vpack.c.b16 %v430, %v429
  %v466 = vpack.c.b16 %v432, %v431
  %v467 = vpack.c.b16 %v434, %v433
  %v468 = vpack.c.b16 %v436, %v435
  %v469 = vpack.c.b16 %v438, %v437
  %v470 = vpack.c.b16 %v440, %v439
  %v471 = vpack.c.b16 %v442, %v441
  %v472 = vpack.c.b16 %v444, %v443
  %v473 = vpack.c.b16 %v446, %v445
  %v474 = vpack.c.b16 %v448, %v447
  %v475 = vpack.c.b16 %v450, %v449
  %v476 = vpack.c.b16 %v452, %v451
  %v477 = vpack.c.b16 %v454, %v453
  %v478 = vpack.c.b16 %v456, %v455
  %v479 = vpack.c.b16 %v458, %v457
  %v480 = vpack.c.b16 %v460, %v459
  %v481 = vpack.c.b16 %v462, %v461
  %v482 = vpack.c.b16 %v464, %v463
  %vm501 = vcmask 261120
  %v503 = vsel %vm501, %v305, 0
  %v506 = vsel %vm501, %v308, 0
  %v509 = vsel %vm501, %v311, 0
  %v512 = vsel %vm501, %v314, 0
  %v515 = vsel %vm501, %v317, 0
  %v518 = vsel %vm501, %v320, 0
  %v521 = vsel %vm501, %v323, 0
  %v524 = vsel %vm501, %v326, 0
  %v527 = vsel %vm501, %v329, 0
  %v530 = vsel %vm501, %v332, 0
  %v533 = vsel %vm501, %v335, 0
  %v536 = vsel %vm501, %v338, 0
  %v539 = vsel %vm501, %v341, 0
  %v542 = vsel %vm501, %v344, 0
  %v545 = vsel %vm501, %v347, 0
  %v548 = vsel %vm501, %v350, 0
  %v551 = vsel %vm501, %v353, 0
  %v554 = vsel %vm501, %v356, 0
  %556 = vmatpush.bf16.msra.mxu0 %v472
  %557 = vmatpush.bf16.msra.mxu0 %v471
  %558 = vmatpush.bf16.msra.mxu0 %v470
  %559 = vmatpush.bf16.msra.mxu0 %v469
  %560 = vmatpush.bf16.msra.mxu0 %v468
  %561 = vmatpush.bf16.msra.mxu0 %v467
  %562 = vmatpush.bf16.msra.mxu0 %v466
  %563 = vmatpush.bf16.msra.mxu0 %v465
  %564 = vmatmul.bf16.gmra.mxu0 %v303
  %v565 = vpop.f32.mrf.mxu0
  %v566 = vadd.f32 0.0, %v565
  %v567 = vpop.f32.mrf.mxu0
  %v568 = vadd.f32 0.0, %v567
  %569 = vmatmul.bf16.gmra.mxu0 %v306
  %v570 = vpop.f32.mrf.mxu0
  %v571 = vadd.f32 0.0, %v570
  %v572 = vpop.f32.mrf.mxu0
  %v573 = vadd.f32 0.0, %v572
  %574 = vmatmul.bf16.gmra.mxu0 %v309
  %v575 = vpop.f32.mrf.mxu0
  %v576 = vadd.f32 0.0, %v575
  %v577 = vpop.f32.mrf.mxu0
  %v578 = vadd.f32 0.0, %v577
  %579 = vmatmul.bf16.gmra.mxu0 %v312
  %v580 = vpop.f32.mrf.mxu0
  %v581 = vadd.f32 0.0, %v580
  %v582 = vpop.f32.mrf.mxu0
  %v583 = vadd.f32 0.0, %v582
  %584 = vmatmul.bf16.gmra.mxu0 %v315
  %v585 = vpop.f32.mrf.mxu0
  %v586 = vadd.f32 0.0, %v585
  %v587 = vpop.f32.mrf.mxu0
  %v588 = vadd.f32 0.0, %v587
  %589 = vmatmul.bf16.gmra.mxu0 %v318
  %v590 = vpop.f32.mrf.mxu0
  %v591 = vadd.f32 0.0, %v590
  %v592 = vpop.f32.mrf.mxu0
  %v593 = vadd.f32 0.0, %v592
  %594 = vmatmul.bf16.gmra.mxu0 %v321
  %v595 = vpop.f32.mrf.mxu0
  %v596 = vadd.f32 0.0, %v595
  %v597 = vpop.f32.mrf.mxu0
  %v598 = vadd.f32 0.0, %v597
  %599 = vmatmul.bf16.gmra.mxu0 %v324
  %v600 = vpop.f32.mrf.mxu0
  %v601 = vadd.f32 0.0, %v600
  %v602 = vpop.f32.mrf.mxu0
  %v603 = vadd.f32 0.0, %v602
  %604 = vmatmul.bf16.gmra.mxu0 %v327
  %v605 = vpop.f32.mrf.mxu0
  %v606 = vadd.f32 0.0, %v605
  %v607 = vpop.f32.mrf.mxu0
  %v608 = vadd.f32 0.0, %v607
  %609 = vmatmul.bf16.gmra.mxu0 %v330
  %v610 = vpop.f32.mrf.mxu0
  %v611 = vadd.f32 0.0, %v610
  %v612 = vpop.f32.mrf.mxu0
  %v613 = vadd.f32 0.0, %v612
  %614 = vmatmul.bf16.gmra.mxu0 %v333
  %v615 = vpop.f32.mrf.mxu0
  %v616 = vadd.f32 0.0, %v615
  %v617 = vpop.f32.mrf.mxu0
  %v618 = vadd.f32 0.0, %v617
  %619 = vmatmul.bf16.gmra.mxu0 %v336
  %v620 = vpop.f32.mrf.mxu0
  %v621 = vadd.f32 0.0, %v620
  %v622 = vpop.f32.mrf.mxu0
  %v623 = vadd.f32 0.0, %v622
  %624 = vmatmul.bf16.gmra.mxu0 %v339
  %v625 = vpop.f32.mrf.mxu0
  %v626 = vadd.f32 0.0, %v625
  %v627 = vpop.f32.mrf.mxu0
  %v628 = vadd.f32 0.0, %v627
  %629 = vmatmul.bf16.gmra.mxu0 %v342
  %v630 = vpop.f32.mrf.mxu0
  %v631 = vadd.f32 0.0, %v630
  %v632 = vpop.f32.mrf.mxu0
  %v633 = vadd.f32 0.0, %v632
  %634 = vmatmul.bf16.gmra.mxu0 %v345
  %v635 = vpop.f32.mrf.mxu0
  %v636 = vadd.f32 0.0, %v635
  %v637 = vpop.f32.mrf.mxu0
  %v638 = vadd.f32 0.0, %v637
  %639 = vmatmul.bf16.gmra.mxu0 %v348
  %v640 = vpop.f32.mrf.mxu0
  %v641 = vadd.f32 0.0, %v640
  %v642 = vpop.f32.mrf.mxu0
  %v643 = vadd.f32 0.0, %v642
  %644 = vmatmul.bf16.gmra.mxu0 %v351
  %v645 = vpop.f32.mrf.mxu0
  %v646 = vadd.f32 0.0, %v645
  %v647 = vpop.f32.mrf.mxu0
  %v648 = vadd.f32 0.0, %v647
  %649 = vmatmul.bf16.gmra.mxu0 %v354
  %v650 = vpop.f32.mrf.mxu0
  %v651 = vadd.f32 0.0, %v650
  %v652 = vpop.f32.mrf.mxu0
  %v653 = vadd.f32 0.0, %v652
  %654 = vdwg.mxu0
  %655 = vmatpush.bf16.msra.mxu0 %v480
  %656 = vmatpush.bf16.msra.mxu0 %v479
  %657 = vmatpush.bf16.msra.mxu0 %v478
  %658 = vmatpush.bf16.msra.mxu0 %v477
  %659 = vmatpush.bf16.msra.mxu0 %v476
  %660 = vmatpush.bf16.msra.mxu0 %v475
  %661 = vmatpush.bf16.msra.mxu0 %v474
  %662 = vmatpush.bf16.msra.mxu0 %v473
  %663 = vmatmul.bf16.gmra.mxu0 %v304
  %v664 = vpop.f32.mrf.mxu0
  %v665 = vadd.f32 %v566, %v664
  %v666 = vpop.f32.mrf.mxu0
  %v667 = vadd.f32 %v568, %v666
  %668 = vmatmul.bf16.gmra.mxu0 %v307
  %v669 = vpop.f32.mrf.mxu0
  %v670 = vadd.f32 %v571, %v669
  %v671 = vpop.f32.mrf.mxu0
  %v672 = vadd.f32 %v573, %v671
  %673 = vmatmul.bf16.gmra.mxu0 %v310
  %v674 = vpop.f32.mrf.mxu0
  %v675 = vadd.f32 %v576, %v674
  %v676 = vpop.f32.mrf.mxu0
  %v677 = vadd.f32 %v578, %v676
  %678 = vmatmul.bf16.gmra.mxu0 %v313
  %v679 = vpop.f32.mrf.mxu0
  %v680 = vadd.f32 %v581, %v679
  %v681 = vpop.f32.mrf.mxu0
  %v682 = vadd.f32 %v583, %v681
  %683 = vmatmul.bf16.gmra.mxu0 %v316
  %v684 = vpop.f32.mrf.mxu0
  %v685 = vadd.f32 %v586, %v684
  %v686 = vpop.f32.mrf.mxu0
  %v687 = vadd.f32 %v588, %v686
  %688 = vmatmul.bf16.gmra.mxu0 %v319
  %v689 = vpop.f32.mrf.mxu0
  %v690 = vadd.f32 %v591, %v689
  %v691 = vpop.f32.mrf.mxu0
  %v692 = vadd.f32 %v593, %v691
  %693 = vmatmul.bf16.gmra.mxu0 %v322
  %v694 = vpop.f32.mrf.mxu0
  %v695 = vadd.f32 %v596, %v694
  %v696 = vpop.f32.mrf.mxu0
  %v697 = vadd.f32 %v598, %v696
  %698 = vmatmul.bf16.gmra.mxu0 %v325
  %v699 = vpop.f32.mrf.mxu0
  %v700 = vadd.f32 %v601, %v699
  %v701 = vpop.f32.mrf.mxu0
  %v702 = vadd.f32 %v603, %v701
  %703 = vmatmul.bf16.gmra.mxu0 %v328
  %v704 = vpop.f32.mrf.mxu0
  %v705 = vadd.f32 %v606, %v704
  %v706 = vpop.f32.mrf.mxu0
  %v707 = vadd.f32 %v608, %v706
  %708 = vmatmul.bf16.gmra.mxu0 %v331
  %v709 = vpop.f32.mrf.mxu0
  %v710 = vadd.f32 %v611, %v709
  %v711 = vpop.f32.mrf.mxu0
  %v712 = vadd.f32 %v613, %v711
  %713 = vmatmul.bf16.gmra.mxu0 %v334
  %v714 = vpop.f32.mrf.mxu0
  %v715 = vadd.f32 %v616, %v714
  %v716 = vpop.f32.mrf.mxu0
  %v717 = vadd.f32 %v618, %v716
  %718 = vmatmul.bf16.gmra.mxu0 %v337
  %v719 = vpop.f32.mrf.mxu0
  %v720 = vadd.f32 %v621, %v719
  %v721 = vpop.f32.mrf.mxu0
  %v722 = vadd.f32 %v623, %v721
  %723 = vmatmul.bf16.gmra.mxu0 %v340
  %v724 = vpop.f32.mrf.mxu0
  %v725 = vadd.f32 %v626, %v724
  %v726 = vpop.f32.mrf.mxu0
  %v727 = vadd.f32 %v628, %v726
  %728 = vmatmul.bf16.gmra.mxu0 %v343
  %v729 = vpop.f32.mrf.mxu0
  %v730 = vadd.f32 %v631, %v729
  %v731 = vpop.f32.mrf.mxu0
  %v732 = vadd.f32 %v633, %v731
  %733 = vmatmul.bf16.gmra.mxu0 %v346
  %v734 = vpop.f32.mrf.mxu0
  %v735 = vadd.f32 %v636, %v734
  %v736 = vpop.f32.mrf.mxu0
  %v737 = vadd.f32 %v638, %v736
  %738 = vmatmul.bf16.gmra.mxu0 %v349
  %v739 = vpop.f32.mrf.mxu0
  %v740 = vadd.f32 %v641, %v739
  %v741 = vpop.f32.mrf.mxu0
  %v742 = vadd.f32 %v643, %v741
  %743 = vmatmul.bf16.gmra.mxu0 %v352
  %v744 = vpop.f32.mrf.mxu0
  %v745 = vadd.f32 %v646, %v744
  %v746 = vpop.f32.mrf.mxu0
  %v747 = vadd.f32 %v648, %v746
  %748 = vmatmul.bf16.gmra.mxu0 %v355
  %v749 = vpop.f32.mrf.mxu0
  %v750 = vadd.f32 %v651, %v749
  %v751 = vpop.f32.mrf.mxu0
  %v752 = vadd.f32 %v653, %v751
  %753 = vdwg.mxu0
  %754 = vmatpush.bf16.msra.mxu0 0
  %755 = vmatpush.bf16.msra.mxu0 0
  %756 = vmatpush.bf16.msra.mxu0 0
  %757 = vmatpush.bf16.msra.mxu0 0
  %758 = vmatpush.bf16.msra.mxu0 0
  %759 = vmatpush.bf16.msra.mxu0 0
  %760 = vmatpush.bf16.msra.mxu0 %v482
  %761 = vmatpush.bf16.msra.mxu0 %v481
  %762 = vmatmul.bf16.gmra.mxu0 %v503
  %v763 = vpop.f32.mrf.mxu0
  %v764 = vadd.f32 %v665, %v763
  %v765 = vpop.f32.mrf.mxu0
  %v766 = vadd.f32 %v667, %v765
  %767 = vmatmul.bf16.gmra.mxu0 %v506
  %v768 = vpop.f32.mrf.mxu0
  %v769 = vadd.f32 %v670, %v768
  %v770 = vpop.f32.mrf.mxu0
  %v771 = vadd.f32 %v672, %v770
  %772 = vmatmul.bf16.gmra.mxu0 %v509
  %v773 = vpop.f32.mrf.mxu0
  %v774 = vadd.f32 %v675, %v773
  %v775 = vpop.f32.mrf.mxu0
  %v776 = vadd.f32 %v677, %v775
  %777 = vmatmul.bf16.gmra.mxu0 %v512
  %v778 = vpop.f32.mrf.mxu0
  %v779 = vadd.f32 %v680, %v778
  %v780 = vpop.f32.mrf.mxu0
  %v781 = vadd.f32 %v682, %v780
  %782 = vmatmul.bf16.gmra.mxu0 %v515
  %v783 = vpop.f32.mrf.mxu0
  %v784 = vadd.f32 %v685, %v783
  %v785 = vpop.f32.mrf.mxu0
  %v786 = vadd.f32 %v687, %v785
  %787 = vmatmul.bf16.gmra.mxu0 %v518
  %v788 = vpop.f32.mrf.mxu0
  %v789 = vadd.f32 %v690, %v788
  %v790 = vpop.f32.mrf.mxu0
  %v791 = vadd.f32 %v692, %v790
  %792 = vmatmul.bf16.gmra.mxu0 %v521
  %v793 = vpop.f32.mrf.mxu0
  %v794 = vadd.f32 %v695, %v793
  %v795 = vpop.f32.mrf.mxu0
  %v796 = vadd.f32 %v697, %v795
  %797 = vmatmul.bf16.gmra.mxu0 %v524
  %v798 = vpop.f32.mrf.mxu0
  %v799 = vadd.f32 %v700, %v798
  %v800 = vpop.f32.mrf.mxu0
  %v801 = vadd.f32 %v702, %v800
  %802 = vmatmul.bf16.gmra.mxu0 %v527
  %v803 = vpop.f32.mrf.mxu0
  %v804 = vadd.f32 %v705, %v803
  %v805 = vpop.f32.mrf.mxu0
  %v806 = vadd.f32 %v707, %v805
  %807 = vmatmul.bf16.gmra.mxu0 %v530
  %v808 = vpop.f32.mrf.mxu0
  %v809 = vadd.f32 %v710, %v808
  %v810 = vpop.f32.mrf.mxu0
  %v811 = vadd.f32 %v712, %v810
  %812 = vmatmul.bf16.gmra.mxu0 %v533
  %v813 = vpop.f32.mrf.mxu0
  %v814 = vadd.f32 %v715, %v813
  %v815 = vpop.f32.mrf.mxu0
  %v816 = vadd.f32 %v717, %v815
  %817 = vmatmul.bf16.gmra.mxu0 %v536
  %v818 = vpop.f32.mrf.mxu0
  %v819 = vadd.f32 %v720, %v818
  %v820 = vpop.f32.mrf.mxu0
  %v821 = vadd.f32 %v722, %v820
  %822 = vmatmul.bf16.gmra.mxu0 %v539
  %v823 = vpop.f32.mrf.mxu0
  %v824 = vadd.f32 %v725, %v823
  %v825 = vpop.f32.mrf.mxu0
  %v826 = vadd.f32 %v727, %v825
  %827 = vmatmul.bf16.gmra.mxu0 %v542
  %v828 = vpop.f32.mrf.mxu0
  %v829 = vadd.f32 %v730, %v828
  %v830 = vpop.f32.mrf.mxu0
  %v831 = vadd.f32 %v732, %v830
  %832 = vmatmul.bf16.gmra.mxu0 %v545
  %v833 = vpop.f32.mrf.mxu0
  %v834 = vadd.f32 %v735, %v833
  %v835 = vpop.f32.mrf.mxu0
  %v836 = vadd.f32 %v737, %v835
  %837 = vmatmul.bf16.gmra.mxu0 %v548
  %v838 = vpop.f32.mrf.mxu0
  %v839 = vadd.f32 %v740, %v838
  %v840 = vpop.f32.mrf.mxu0
  %v841 = vadd.f32 %v742, %v840
  %842 = vmatmul.bf16.gmra.mxu0 %v551
  %v843 = vpop.f32.mrf.mxu0
  %v844 = vadd.f32 %v745, %v843
  %v845 = vpop.f32.mrf.mxu0
  %v846 = vadd.f32 %v747, %v845
  %847 = vmatmul.bf16.gmra.mxu0 %v554
  %v848 = vpop.f32.mrf.mxu0
  %v849 = vadd.f32 %v750, %v848
  %v850 = vpop.f32.mrf.mxu0
  %v851 = vadd.f32 %v752, %v850
  %852 = vdwg.mxu0
  %v853 = vmax.f32 %v764, %v786
  %v854 = vmax.f32 %v766, %v789
  %v855 = vmax.f32 %v769, %v791
  %v856 = vmax.f32 %v771, %v794
  %v857 = vmax.f32 %v774, %v796
  %v858 = vmax.f32 %v776, %v799
  %v859 = vmax.f32 %v779, %v801
  %v860 = vmax.f32 %v781, %v804
  %v861 = vmax.f32 %v784, %v806
  %v862 = vmax.f32 %v809, %v831
  %v863 = vmax.f32 %v811, %v834
  %v864 = vmax.f32 %v814, %v836
  %v865 = vmax.f32 %v816, %v839
  %v866 = vmax.f32 %v819, %v841
  %v867 = vmax.f32 %v821, %v844
  %v868 = vmax.f32 %v824, %v846
  %v869 = vmax.f32 %v826, %v849
  %v870 = vmax.f32 %v829, %v851
  %v871 = vmax.f32 %v853, %v862
  %v872 = vmax.f32 %v854, %v863
  %v873 = vmax.f32 %v855, %v864
  %v874 = vmax.f32 %v856, %v865
  %v875 = vmax.f32 %v857, %v866
  %v876 = vmax.f32 %v858, %v867
  %v877 = vmax.f32 %v859, %v868
  %v878 = vmax.f32 %v860, %v869
  %v879 = vmax.f32 %v861, %v870
  %v880 = vld [vmem:[%s2] sm:$0x1]
  %v882 = vperm.slane %v880, 0
  %v884 = vadd.f32 %v871, %v882
  %v885 = vadd.f32 %v872, %v882
  %v886 = vadd.f32 %v873, %v882
  %v887 = vadd.f32 %v874, %v882
  %v888 = vadd.f32 %v875, %v882
  %v889 = vadd.f32 %v876, %v882
  %v890 = vadd.f32 %v877, %v882
  %v891 = vadd.f32 %v878, %v882
  %v892 = vadd.f32 %v879, %v882
  %v893 = vmax.f32 %v884, 0.0
  %v894 = vmax.f32 %v885, 0.0
  %v895 = vmax.f32 %v886, 0.0
  %v896 = vmax.f32 %v887, 0.0
  %v897 = vmax.f32 %v888, 0.0
  %v898 = vmax.f32 %v889, 0.0
  %v899 = vmax.f32 %v890, 0.0
  %v900 = vmax.f32 %v891, 0.0
  %v901 = vmax.f32 %v892, 0.0
  %v902 = vpack.c.bf16 %v893, %v893
  %v903 = vpack.c.bf16 %v894, %v894
  %v904 = vpack.c.bf16 %v895, %v895
  %v905 = vpack.c.bf16 %v896, %v896
  %v906 = vpack.c.bf16 %v897, %v897
  %v907 = vpack.c.bf16 %v898, %v898
  %v908 = vpack.c.bf16 %v899, %v899
  %v909 = vpack.c.bf16 %v900, %v900
  %v910 = vpack.c.bf16 %v901, %v901
  %vm911 = vcmask 257024
  %912 = vst.msk [vmem:[%s3] sm:$0xf] %vm911, %v902
  %913 = vst.msk [vmem:[%s3 + $0x4] sm:$0xf] %vm911, %v903
  %914 = vst.msk [vmem:[%s3 + $0x8] sm:$0xf] %vm911, %v904
  %915 = vst.msk [vmem:[%s3 + $0xc] sm:$0xf] %vm911, %v905
  %916 = vst.msk [vmem:[%s3 + $0x10] sm:$0xf] %vm911, %v906
  %917 = vst.msk [vmem:[%s3 + $0x14] sm:$0xf] %vm911, %v907
  %918 = vst.msk [vmem:[%s3 + $0x18] sm:$0xf] %vm911, %v908
  %919 = vst.msk [vmem:[%s3 + $0x1c] sm:$0xf] %vm911, %v909
  %920 = vst.msk [vmem:[%s3 + $0x20] sm:$0xf] %vm911, %v910
  // Predicated region
  $region14: #{convnet4_forward.6} parent=0 // pred_check
    _
  $region15: #{convnet4_forward.6} parent=0 // pred_check_branch
    %922 = sbr.rel (0) target = $region17
  $region16: #{convnet4_forward.6} parent=0 // pred_region
    _
  $region17: #{convnet4_forward.6} parent=0 // pred_fallthru
    _
  // Predicated region
  $region18: #{convnet4_forward.6} parent=0 // pred_check
    _
  $region19: #{convnet4_forward.6} parent=0 // pred_check_branch
    %924 = sbr.rel (0) target = $region21
  $region20: #{convnet4_forward.6} parent=0 // pred_region
    _
  $region21: #{convnet4_forward.6} parent=0 // pred_fallthru
    _

// kernel: convnet4_forward.7
$region0: #{convnet4_forward.7}
  #allocation0 [shape = 'u32[]', space=smem, size = 0x4, offset = 0x4, fixed_abs, tag = 'smem constant byte address 0x4 - core index']
  #allocation1 [shape = 'u32[72,128]{1,0:T(1,128)}', space=vmem, size = 0x9000, scoped, tag = 'internal scratch']
  %s0 = inlined_call_operand.vmem [shape: bf16[32,288], index: 0, kind: input, shape index: {}]
  %s1 = inlined_call_operand.vmem [shape: bf16[288,32], index: 1, kind: input, shape index: {}]
  %s2 = inlined_call_operand.vmem [shape: f32[1,32], index: 2, kind: input, shape index: {}]
  %s3 = inlined_call_operand.vmem [shape: f32[128,10], index: 3, kind: input, shape index: {}]
  %s4 = inlined_call_operand.vmem [shape: f32[1,10], index: 4, kind: input, shape index: {}]
  %s5 = inlined_call_operand.hbm [shape: f32[2,10], index: 5, kind: output, shape index: {}]
  %s6 = sld [smem:[#allocation0]]
  $region30: #{convnet4_forward.7} parent=0
    _
  %s8 = ssub.s32 1, %s6
  %s9 = scalar_select 0, %s8, %s6
  $region1: #{convnet4_forward.7} parent=0
    #allocation2 [shape = 'u8[1024]{0}', space=vmem, size = 0x400, scoped, tag = 'output window, operand 0, single buffered']
    #allocation3 [shape = 's32[1]{0}', space=sflag, size = 0x4, scoped, tag = 'scoped memory for convnet4_forward.7']
    %10 = vsyncpa [#allocation3], 0
    // Predicated region
    $region2: #{convnet4_forward.7} parent=1 // pred_check
      _
    $region3: #{convnet4_forward.7} parent=1 // pred_check_branch
      %12 = sbr.rel (0) target = $region5
    $region4: #{convnet4_forward.7} parent=1 // pred_region
      _
    $region5: #{convnet4_forward.7} parent=1 // pred_fallthru
      _
    // Predicated region
    $region6: #{convnet4_forward.7} parent=1 // pred_check
      _
    $region7: #{convnet4_forward.7} parent=1 // pred_check_branch
      %14 = sbr.rel (0) target = $region9
    $region8: #{convnet4_forward.7} parent=1 // pred_region
      _
    $region9: #{convnet4_forward.7} parent=1 // pred_fallthru
      _
    // Predicated region
    $region10: #{convnet4_forward.7} parent=1 // pred_check
      _
    $region11: #{convnet4_forward.7} parent=1 // pred_check_branch
      %16 = sbr.rel (0) target = $region13
    $region12: #{convnet4_forward.7} parent=1 // pred_region
      _
    $region13: #{convnet4_forward.7} parent=1 // pred_fallthru
      _
    // Predicated region
    $region14: #{convnet4_forward.7} parent=1 // pred_check
      _
    $region15: #{convnet4_forward.7} parent=1 // pred_check_branch
      %18 = sbr.rel (0) target = $region17
    $region16: #{convnet4_forward.7} parent=1 // pred_region
      _
    $region17: #{convnet4_forward.7} parent=1 // pred_fallthru
      _
    // Predicated region
    $region18: #{convnet4_forward.7} parent=1 // pred_check
      _
    $region19: #{convnet4_forward.7} parent=1 // pred_check_branch
      %20 = sbr.rel (0) target = $region21
    $region20: #{convnet4_forward.7} parent=1 // pred_region
      _
    $region21: #{convnet4_forward.7} parent=1 // pred_fallthru
      _
    %v22 = vld [vmem:[%s0] sm:$0xff]
    %v23 = vld [vmem:[%s0 + $0x8] sm:$0xf]
    %v24 = vld [vmem:[%s0 + $0xc] sm:$0xff]
    %v25 = vld [vmem:[%s0 + $0x14] sm:$0xf]
    %v26 = vld [vmem:[%s0 + $0x18] sm:$0xff]
    %v27 = vld [vmem:[%s0 + $0x20] sm:$0xf]
    %v28 = vld [vmem:[%s0 + $0x24] sm:$0xff]
    %v29 = vld [vmem:[%s0 + $0x2c] sm:$0xf]
    %v30 = vld [vmem:[%s1] sm:$0xf]
    %v31 = vld [vmem:[%s1 + $0x4] sm:$0xf]
    %v32 = vld [vmem:[%s1 + $0x8] sm:$0xf]
    %v33 = vld [vmem:[%s1 + $0xc] sm:$0xf]
    %v34 = vld [vmem:[%s1 + $0x10] sm:$0xf]
    %v35 = vld [vmem:[%s1 + $0x14] sm:$0xf]
    %v36 = vld [vmem:[%s1 + $0x18] sm:$0xf]
    %v37 = vld [vmem:[%s1 + $0x1c] sm:$0xf]
    %v38 = vld [vmem:[%s1 + $0x20] sm:$0xf]
    %v39 = vld [vmem:[%s1 + $0x24] sm:$0xf]
    %v40 = vld [vmem:[%s1 + $0x28] sm:$0xf]
    %v41 = vld [vmem:[%s1 + $0x2c] sm:$0xf]
    %v42 = vld [vmem:[%s1 + $0x30] sm:$0xf]
    %v43 = vld [vmem:[%s1 + $0x34] sm:$0xf]
    %v44 = vld [vmem:[%s1 + $0x38] sm:$0xf]
    %v45 = vld [vmem:[%s1 + $0x3c] sm:$0xf]
    %v46 = vld [vmem:[%s1 + $0x40] sm:$0xf]
    %v47 = vld [vmem:[%s1 + $0x44] sm:$0xf]
    %v48 = vld [vmem:[%s1 + $0x48] sm:$0xf]
    %v49 = vld [vmem:[%s1 + $0x4c] sm:$0xf]
    %v50 = vld [vmem:[%s1 + $0x50] sm:$0xf]
    %v51 = vld [vmem:[%s1 + $0x54] sm:$0xf]
    %v52 = vld [vmem:[%s1 + $0x58] sm:$0xf]
    %v53 = vld [vmem:[%s1 + $0x5c] sm:$0xf]
    %v54 = vld [vmem:[%s1 + $0x60] sm:$0xf]
    %v55 = vld [vmem:[%s1 + $0x64] sm:$0xf]
    %v56 = vld [vmem:[%s1 + $0x68] sm:$0xf]
    %v57 = vld [vmem:[%s1 + $0x6c] sm:$0xf]
    %v58 = vld [vmem:[%s1 + $0x70] sm:$0xf]
    %v59 = vld [vmem:[%s1 + $0x74] sm:$0xf]
    %v60 = vld [vmem:[%s1 + $0x78] sm:$0xf]
    %v61 = vld [vmem:[%s1 + $0x7c] sm:$0xf]
    %v62 = vld [vmem:[%s1 + $0x80] sm:$0xf]
    %v63 = vld [vmem:[%s1 + $0x84] sm:$0xf]
    %v64 = vld [vmem:[%s1 + $0x88] sm:$0xf]
    %v65 = vld [vmem:[%s1 + $0x8c] sm:$0xf]
    %v74 = vunpack.c.l.b16 %v22
    %v75 = vunpack.c.h.b16 %v22
    %v76 = vunpack.c.l.b16 %v23
    %v77 = vunpack.c.l.b16 %v24
    %v78 = vunpack.c.h.b16 %v24
    %v79 = vunpack.c.l.b16 %v25
    %v80 = vunpack.c.l.b16 %v26
    %v81 = vunpack.c.h.b16 %v26
    %v82 = vunpack.c.l.b16 %v27
    %v83 = vunpack.c.l.b16 %v28
    %v84 = vunpack.c.h.b16 %v28
    %v85 = vunpack.c.l.b16 %v29
    %v86 = vpack.c.b16 %v77, %v74
    %v87 = vpack.c.b16 %v78, %v75
    %v88 = vpack.c.b16 %v79, %v76
    %v89 = vpack.c.b16 %v83, %v80
    %v90 = vpack.c.b16 %v84, %v81
    %v91 = vpack.c.b16 %v85, %v82
    %v132 = vunpack.c.l.b16 %v30
    %v133 = vunpack.c.l.b16 %v31
    %v134 = vunpack.c.l.b16 %v32
    %v135 = vunpack.c.l.b16 %v33
    %v136 = vunpack.c.l.b16 %v34
    %v137 = vunpack.c.l.b16 %v35
    %v138 = vunpack.c.l.b16 %v36
    %v139 = vunpack.c.l.b16 %v37
    %v140 = vunpack.c.l.b16 %v38
    %v141 = vunpack.c.l.b16 %v39
    %v142 = vunpack.c.l.b16 %v40
    %v143 = vunpack.c.l.b16 %v41
    %v144 = vunpack.c.l.b16 %v42
    %v145 = vunpack.c.l.b16 %v43
    %v146 = vunpack.c.l.b16 %v44
    %v147 = vunpack.c.l.b16 %v45
    %v148 = vunpack.c.l.b16 %v46
    %v149 = vunpack.c.l.b16 %v47
    %v150 = vunpack.c.l.b16 %v48
    %v151 = vunpack.c.l.b16 %v49
    %v152 = vunpack.c.l.b16 %v50
    %v153 = vunpack.c.l.b16 %v51
    %v154 = vunpack.c.l.b16 %v52
    %v155 = vunpack.c.l.b16 %v53
    %v156 = vunpack.c.l.b16 %v54
    %v157 = vunpack.c.l.b16 %v55
    %v158 = vunpack.c.l.b16 %v56
    %v159 = vunpack.c.l.b16 %v57
    %v160 = vunpack.c.l.b16 %v58
    %v161 = vunpack.c.l.b16 %v59
    %v162 = vunpack.c.l.b16 %v60
    %v163 = vunpack.c.l.b16 %v61
    %v164 = vunpack.c.l.b16 %v62
    %v165 = vunpack.c.l.b16 %v63
    %v166 = vunpack.c.l.b16 %v64
    %v167 = vunpack.c.l.b16 %v65
    %v168 = vpack.c.b16 %v133, %v132
    %v169 = vpack.c.b16 %v135, %v134
    %v170 = vpack.c.b16 %v137, %v136
    %v171 = vpack.c.b16 %v139, %v138
    %v172 = vpack.c.b16 %v141, %v140
    %v173 = vpack.c.b16 %v143, %v142
    %v174 = vpack.c.b16 %v145, %v144
    %v175 = vpack.c.b16 %v147, %v146
    %v176 = vpack.c.b16 %v149, %v148
    %v177 = vpack.c.b16 %v151, %v150
    %v178 = vpack.c.b16 %v153, %v152
    %v179 = vpack.c.b16 %v155, %v154
    %v180 = vpack.c.b16 %v157, %v156
    %v181 = vpack.c.b16 %v159, %v158
    %v182 = vpack.c.b16 %v161, %v160
    %v183 = vpack.c.b16 %v163, %v162
    %v184 = vpack.c.b16 %v165, %v164
    %v185 = vpack.c.b16 %v167, %v166
    %vm204 = vcmask 261120
    %v206 = vsel %vm204, %v88, 0
    %v209 = vsel %vm204, %v91, 0
    %211 = vmatpush.bf16.msra.mxu0 %v175
    %212 = vmatpush.bf16.msra.mxu0 %v174
    %213 = vmatpush.bf16.msra.mxu0 %v173
    %214 = vmatpush.bf16.msra.mxu0 %v172
    %215 = vmatpush.bf16.msra.mxu0 %v171
    %216 = vmatpush.bf16.msra.mxu0 %v170
    %217 = vmatpush.bf16.msra.mxu0 %v169
    %218 = vmatpush.bf16.msra.mxu0 %v168
    %219 = vmatmul.bf16.gmra.mxu0 %v86
    %v220 = vpop.f32.mrf.mxu0
    %v221 = vadd.f32 0.0, %v220
    %v222 = vpop.f32.mrf.mxu0
    %v223 = vadd.f32 0.0, %v222
    %224 = vmatmul.bf16.gmra.mxu0 %v89
    %v225 = vpop.f32.mrf.mxu0
    %v226 = vadd.f32 0.0, %v225
    %v227 = vpop.f32.mrf.mxu0
    %v228 = vadd.f32 0.0, %v227
    %229 = vdwg.mxu0
    %230 = vmatpush.bf16.msra.mxu0 %v183
    %231 = vmatpush.bf16.msra.mxu0 %v182
    %232 = vmatpush.bf16.msra.mxu0 %v181
    %233 = vmatpush.bf16.msra.mxu0 %v180
    %234 = vmatpush.bf16.msra.mxu0 %v179
    %235 = vmatpush.bf16.msra.mxu0 %v178
    %236 = vmatpush.bf16.msra.mxu0 %v177
    %237 = vmatpush.bf16.msra.mxu0 %v176
    %238 = vmatmul.bf16.gmra.mxu0 %v87
    %v239 = vpop.f32.mrf.mxu0
    %v240 = vadd.f32 %v221, %v239
    %v241 = vpop.f32.mrf.mxu0
    %v242 = vadd.f32 %v223, %v241
    %243 = vmatmul.bf16.gmra.mxu0 %v90
    %v244 = vpop.f32.mrf.mxu0
    %v245 = vadd.f32 %v226, %v244
    %v246 = vpop.f32.mrf.mxu0
    %v247 = vadd.f32 %v228, %v246
    %248 = vdwg.mxu0
    %249 = vmatpush.bf16.msra.mxu0 0
    %250 = vmatpush.bf16.msra.mxu0 0
    %251 = vmatpush.bf16.msra.mxu0 0
    %252 = vmatpush.bf16.msra.mxu0 0
    %253 = vmatpush.bf16.msra.mxu0 0
    %254 = vmatpush.bf16.msra.mxu0 0
    %255 = vmatpush.bf16.msra.mxu0 %v185
    %256 = vmatpush.bf16.msra.mxu0 %v184
    %257 = vmatmul.bf16.gmra.mxu0 %v206
    %v258 = vpop.f32.mrf.mxu0
    %v259 = vadd.f32 %v240, %v258
    %v260 = vpop.f32.mrf.mxu0
    %v261 = vadd.f32 %v242, %v260
    %262 = vmatmul.bf16.gmra.mxu0 %v209
    %v263 = vpop.f32.mrf.mxu0
    %v264 = vadd.f32 %v245, %v263
    %v265 = vpop.f32.mrf.mxu0
    %v266 = vadd.f32 %v247, %v265
    %267 = vdwg.mxu0
    %v268 = vmax.f32 %v259, %v261
    %v269 = vmax.f32 %v264, %v266
    %v270 = vmax.f32 %v268, %v269
    %v271 = vld [vmem:[%s2] sm:$0x1]
    %v273 = vperm.slane %v271, 0
    %v275 = vadd.f32 %v270, %v273
    %v276 = vmax.f32 %v275, 0.0
    %v277 = vld [vmem:[%s3] sm:$0xff]
    %v278 = vld [vmem:[%s3 + $0x8] sm:$0xff]
    %v279 = vld [vmem:[%s3 + $0x10] sm:$0xff]
    %v280 = vld [vmem:[%s3 + $0x18] sm:$0xff]
    %v281 = vld [vmem:[%s3 + $0x20] sm:$0xff]
    %v282 = vld [vmem:[%s3 + $0x28] sm:$0xff]
    %v283 = vld [vmem:[%s3 + $0x30] sm:$0xff]
    %v284 = vld [vmem:[%s3 + $0x38] sm:$0xff]
    %v285 = vld [vmem:[%s3 + $0x40] sm:$0xff]
    %v286 = vld [vmem:[%s3 + $0x48] sm:$0xff]
    %v287 = vld [vmem:[%s3 + $0x50] sm:$0xff]
    %v288 = vld [vmem:[%s3 + $0x58] sm:$0xff]
    %v289 = vld [vmem:[%s3 + $0x60] sm:$0xff]
    %v290 = vld [vmem:[%s3 + $0x68] sm:$0xff]
    %v291 = vld [vmem:[%s3 + $0x70] sm:$0xff]
    %v292 = vld [vmem:[%s3 + $0x78] sm:$0xff]
    %v293 = vld [vmem:[%s4] sm:$0x1]
    %v295 = vsel %vm204, %v276, 0
    %297 = vmatpush.msra.mxu0 0.0
    %298 = vmatpush.msra.mxu0 0.0
    %299 = vmatpush.msra.mxu0 0.0
    %300 = vmatpush.msra.mxu0 0.0
    %301 = vmatpush.msra.mxu0 0.0
    %302 = vmatpush.msra.mxu0 0.0
    %303 = vmatpush.msra.mxu0 0.0
    %304 = vmatpush.msra.mxu0 0.0
    %305 = vmatpush.msra.mxu0 0.0
    %306 = vmatpush.msra.mxu0 0.0
    %307 = vmatpush.msra.mxu0 0.0
    %308 = vmatpush.msra.mxu0 0.0
    %309 = vmatpush.msra.mxu0 %v280
    %310 = vmatpush.msra.mxu0 %v279
    %311 = vmatpush.msra.mxu0 %v278
    %312 = vmatpush.msra.mxu0 %v277
    %313 = vmatmul.f32.gmra.mxu0 %v295
    %v314 = vpop.f32.mrf.mxu0
    %v315 = vadd.f32 0.0, %v314
    %316 = vdwg.mxu0
    %v318 = vperm.slane %v293, 0
    %v320 = vadd.f32 %v318, %v315
    %v321 = vrot.slane %v276, 2
    %v322 = vsel %vm204, %v321, 0
    %324 = vmatpush.msra.mxu0 0.0
    %325 = vmatpush.msra.mxu0 0.0
    %326 = vmatpush.msra.mxu0 0.0
    %327 = vmatpush.msra.mxu0 0.0
    %328 = vmatpush.msra.mxu0 0.0
    %329 = vmatpush.msra.mxu0 0.0
    %330 = vmatpush.msra.mxu0 0.0
    %331 = vmatpush.msra.mxu0 0.0
    %332 = vmatpush.msra.mxu0 0.0
    %333 = vmatpush.msra.mxu0 0.0
    %334 = vmatpush.msra.mxu0 0.0
    %335 = vmatpush.msra.mxu0 0.0
    %336 = vmatpush.msra.mxu0 %v284
    %337 = vmatpush.msra.mxu0 %v283
    %338 = vmatpush.msra.mxu0 %v282
    %339 = vmatpush.msra.mxu0 %v281
    %340 = vmatmul.f32.gmra.mxu0 %v322
    %v341 = vpop.f32.mrf.mxu0
    %v342 = vadd.f32 0.0, %v341
    %343 = vdwg.mxu0
    %v344 = vadd.f32 %v320, %v342
    %v345 = vrot.slane %v276, 4
    %v346 = vsel %vm204, %v345, 0
    %348 = vmatpush.msra.mxu0 0.0
    %349 = vmatpush.msra.mxu0 0.0
    %350 = vmatpush.msra.mxu0 0.0
    %351 = vmatpush.msra.mxu0 0.0
    %352 = vmatpush.msra.mxu0 0.0
    %353 = vmatpush.msra.mxu0 0.0
    %354 = vmatpush.msra.mxu0 0.0
    %355 = vmatpush.msra.mxu0 0.0
    %356 = vmatpush.msra.mxu0 0.0
    %357 = vmatpush.msra.mxu0 0.0
    %358 = vmatpush.msra.mxu0 0.0
    %359 = vmatpush.msra.mxu0 0.0
    %360 = vmatpush.msra.mxu0 %v288
    %361 = vmatpush.msra.mxu0 %v287
    %362 = vmatpush.msra.mxu0 %v286
    %363 = vmatpush.msra.mxu0 %v285
    %364 = vmatmul.f32.gmra.mxu0 %v346
    %v365 = vpop.f32.mrf.mxu0
    %v366 = vadd.f32 0.0, %v365
    %367 = vdwg.mxu0
    %v368 = vadd.f32 %v344, %v366
    %v369 = vrot.slane %v276, 6
    %v370 = vsel %vm204, %v369, 0
    %372 = vmatpush.msra.mxu0 0.0
    %373 = vmatpush.msra.mxu0 0.0
    %374 = vmatpush.msra.mxu0 0.0
    %375 = vmatpush.msra.mxu0 0.0
    %376 = vmatpush.msra.mxu0 0.0
    %377 = vmatpush.msra.mxu0 0.0
    %378 = vmatpush.msra.mxu0 0.0
    %379 = vmatpush.msra.mxu0 0.0
    %380 = vmatpush.msra.mxu0 0.0
    %381 = vmatpush.msra.mxu0 0.0
    %382 = vmatpush.msra.mxu0 0.0
    %383 = vmatpush.msra.mxu0 0.0
    %384 = vmatpush.msra.mxu0 %v292
    %385 = vmatpush.msra.mxu0 %v291
    %386 = vmatpush.msra.mxu0 %v290
    %387 = vmatpush.msra.mxu0 %v289
    %388 = vmatmul.f32.gmra.mxu0 %v370
    %v389 = vpop.f32.mrf.mxu0
    %v390 = vadd.f32 0.0, %v389
    %391 = vdwg.mxu0
    %v392 = vadd.f32 %v368, %v390
    %vm393 = vcmask 74752
    %394 = vst.msk [vmem:[#allocation2] sm:$0x3] %vm393, %v392
    // Predicated region
    $region22: #{convnet4_forward.7} parent=1 // pred_check
      _
    $region23: #{convnet4_forward.7} parent=1 // pred_check_branch
      %396 = sbr.rel (0) target = $region25
    $region24: #{convnet4_forward.7} parent=1 // pred_region
      %398 = vsyncadd [#allocation3], 0
      %s400 = sshll.u32 [#allocation2], 4
      %s401 = int_to_ptr.vmem [resolvable:$true] %s400
      %s402 = sshll.u32 %s5, 4
      %s403 = int_to_ptr.hbm [resolvable:$true] %s402
      %405 = dma.vmem_to_hbm [thread:$0]  %s401, 32, %s403, [#allocation3]
    $region25: #{convnet4_forward.7} parent=1 // pred_fallthru
      _
    // Predicated region
    $region26: #{convnet4_forward.7} parent=1 // pred_check
      _
    $region27: #{convnet4_forward.7} parent=1 // pred_check_branch
      %407 = sbr.rel (0) target = $region29
    $region28: #{convnet4_forward.7} parent=1 // pred_region
      %409 = dma.done [#allocation3], 32
    $region29: #{convnet4_forward.7} parent=1 // pred_fallthru
      _
    %410 = vsyncpa [#allocation3], 1

</llo_original>
